<compile_context>
chip_gen: v6e
topology: v6e:2x2x1
jax: 0.10.0
libtpu: 0.0.40
codegen_flags: <defaults>
</compile_context>

<pallas_src>
import functools

import numpy as np

import jax
import jax.numpy as jnp
from jax.experimental import pallas as pl
from jax.experimental.pallas import tpu as pltpu


def _round_up(n, m=128):
    return ((n + m - 1) // m) * m


# ------------------------------ fused kernel -------------------------------

def _tinyvgg_kernel(x_ref,
                    w1_ref, b1_ref, w2_ref, b2_ref,
                    w3_ref, b3_ref, w4_ref, b4_ref,
                    wfc_ref, bfc_ref,
                    mask1_ref, mask2_ref, pool1_ref, pool2_ref,
                    o_ref, *, width):
    """One grid step == one image.  Activations are (C, HW_padded) f32."""

    def conv3x3_relu(act, w_ref, b_ref, mask, w_spatial):
        # act: (Cin, HWp); w_ref: (9, Cout, Cin); b_ref: (Cout, 1);
        # mask: (9, HWp) 0/1 border masks (one per 3x3 tap, 0 in padding).
        cin, hw = act.shape
        cout = w_ref.shape[1]
        acc = jnp.zeros((cout, hw), jnp.float32)
        for t in range(9):
            oy, ox = t // 3 - 1, t % 3 - 1
            delta = oy * w_spatial + ox
            # shifted[p] = act[(p + delta) mod HWp]; wrap-around and the zero
            # "same" padding are both handled by the mask.
            shifted = act if delta == 0 else jnp.roll(act, -delta, axis=1)
            tap = shifted * mask[t:t + 1, :]
            wt = w_ref[t]                                   # (Cout, Cin)
            if cin == 1:
                acc = acc + wt * tap                        # VPU outer product
            else:
                acc = acc + jnp.dot(wt, tap,
                                    preferred_element_type=jnp.float32)
        return jnp.maximum(acc + b_ref[...], 0.0)

    def maxpool2x2(act, w_spatial, sel_ref):
        # (C, HWp_in) -> (C, HWp_out): fold each 2x2 window's max onto its
        # top-left flat position, then gather those positions on the MXU.
        a = jnp.maximum(act, jnp.roll(act, -1, axis=1))
        a = jnp.maximum(a, jnp.roll(a, -w_spatial, axis=1))
        return jnp.dot(a, sel_ref[...], preferred_element_type=jnp.float32)

    mask1 = mask1_ref[...]                                  # (9, 896)
    mask2 = mask2_ref[...]                                  # (9, 256)
    wh = width // 2

    a = x_ref[0]                                            # (Cin, 896)
    # conv_block_1
    a = conv3x3_relu(a, w1_ref, b1_ref, mask1, width)
    a = conv3x3_relu(a, w2_ref, b2_ref, mask1, width)
    a = maxpool2x2(a, width, pool1_ref)                     # (C, 256)
    # con_block_2
    a = conv3x3_relu(a, w3_ref, b3_ref, mask2, wh)
    a = conv3x3_relu(a, w4_ref, b4_ref, mask2, wh)
    a = maxpool2x2(a, wh, pool2_ref)                        # (C, 128)
    # classifier: PyTorch NCHW-Flatten order is baked into the host-side
    # (C, 128, 128) repack of the FC weight (zero-padded past 49 / 10).
    logits = bfc_ref[...]                                   # (1, 128)
    for c in range(a.shape[0]):
        logits = logits + jnp.dot(a[c:c + 1, :], wfc_ref[c],
                                  preferred_element_type=jnp.float32)
    o_ref[0] = logits


# ------------------------------ forward wrapper -----------------------------

def fashion_mnist_v2_forward(x_nchw, fp, *, num_classes):
    """Fused TinyVGG forward.  x_nchw: (N, Cin, H, W) f32; fp: prepared params."""
    n, cin, h, w = x_nchw.shape
    hw = h * w
    hw_pad = _round_up(hw)
    ncp = fp["bfc"].shape[1]                                # padded classes

    x = x_nchw.reshape(n, cin, hw)                          # free reshape
    if hw_pad != hw:
        x = jnp.pad(x, ((0, 0), (0, 0), (0, hw_pad - hw)))  # lane-align input

    def const_spec(arr):
        nd = arr.ndim
        return pl.BlockSpec(arr.shape, lambda i, _nd=nd: (0,) * _nd)

    const_names = ("w1", "b1", "w2", "b2", "w3", "b3", "w4", "b4",
                   "wfc", "bfc", "mask1", "mask2", "pool1", "pool2")
    consts = [fp[k] for k in const_names]

    out = pl.pallas_call(
        functools.partial(_tinyvgg_kernel, width=w),
        out_shape=jax.ShapeDtypeStruct((n, 1, ncp), jnp.float32),
        grid=(n,),
        in_specs=[pl.BlockSpec((1, cin, hw_pad), lambda i: (i, 0, 0))]
                 + [const_spec(c) for c in consts],
        out_specs=pl.BlockSpec((1, 1, ncp), lambda i: (i, 0, 0)),
        compiler_params=pltpu.CompilerParams(
            dimension_semantics=("parallel",)),
    )(x, *consts)
    return out[:, 0, :num_classes]


# ----------------------- host-side constant / weight prep ------------------

def _border_masks(h, w, pad_to):
    """(9, pad_to) 0/1 masks: mask[t, p] = 1 iff tap t at flat position p reads
    inside the image (zero 'same' padding); padding lanes are 0."""
    y, x = np.meshgrid(np.arange(h), np.arange(w), indexing="ij")
    masks = np.zeros((9, pad_to), np.float32)
    for t in range(9):
        oy, ox = t // 3 - 1, t % 3 - 1
        valid = (y + oy >= 0) & (y + oy < h) & (x + ox >= 0) & (x + ox < w)
        masks[t, :h * w] = valid.astype(np.float32).reshape(-1)
    return jnp.asarray(masks)


def _pool_select(h, w, in_pad, out_pad):
    """(in_pad, out_pad) 0/1 matrix gathering the top-left corner of every 2x2
    window (the window max has already been folded onto that corner)."""
    hh, wh = h // 2, w // 2
    sel = np.zeros((in_pad, out_pad), np.float32)
    for q in range(hh * wh):
        yq, xq = q // wh, q % wh
        sel[(2 * yq) * w + 2 * xq, q] = 1.0
    return jnp.asarray(sel)


def prepare_params(p, h, w):
    """One-time host-side repack of PyTorch-shaped params into kernel layout."""
    def conv_w(wt):                        # (Cout, Cin, 3, 3) -> (9, Cout, Cin)
        co, ci = wt.shape[0], wt.shape[1]
        return jnp.transpose(wt, (2, 3, 0, 1)).reshape(9, co, ci)

    num_classes, fc_in = p["wfc"].shape
    hidden = p["w2"].shape[0]
    hw_fc = fc_in // hidden                # 7*7 = 49
    hw1, hw2 = h * w, (h // 2) * (w // 2)
    hw1p, hw2p, hw3p = _round_up(hw1), _round_up(hw2), _round_up(hw_fc)
    ncp = _round_up(num_classes)

    # PyTorch Flatten of (N, C, 7, 7): flat index = c*49 + y*7 + x.
    wfc = jnp.transpose(p["wfc"].reshape(num_classes, hidden, hw_fc), (1, 2, 0))
    wfc = jnp.pad(wfc, ((0, 0), (0, hw3p - hw_fc), (0, ncp - num_classes)))
    bfc = jnp.pad(p["bfc"].reshape(1, -1), ((0, 0), (0, ncp - num_classes)))

    return {
        "w1": conv_w(p["w1"]), "b1": p["b1"].reshape(-1, 1),
        "w2": conv_w(p["w2"]), "b2": p["b2"].reshape(-1, 1),
        "w3": conv_w(p["w3"]), "b3": p["b3"].reshape(-1, 1),
        "w4": conv_w(p["w4"]), "b4": p["b4"].reshape(-1, 1),
        "wfc": wfc, "bfc": bfc,
        "mask1": _border_masks(h, w, hw1p),
        "mask2": _border_masks(h // 2, w // 2, hw2p),
        "pool1": _pool_select(h, w, hw1p, hw2p),
        "pool2": _pool_select(h // 2, w // 2, hw2p, hw3p),
    }


# --------------------------- parameter creation ----------------------------

def init_params(key, input_channels, hidden_units, output_shape):
    """Deterministic init mirroring the PyTorch module's parameter shapes."""
    ks = jax.random.split(key, 10)

    def uni(k, shape, fan_in):
        bound = 1.0 / jnp.sqrt(jnp.float32(fan_in))
        return jax.random.uniform(k, shape, jnp.float32, -bound, bound)

    p = {}
    p["w1"] = uni(ks[0], (hidden_units, input_channels, 3, 3),
                  input_channels * 9)
    p["b1"] = uni(ks[1], (hidden_units,), input_channels * 9)
    p["w2"] = uni(ks[2], (hidden_units, hidden_units, 3, 3), hidden_units * 9)
    p["b2"] = uni(ks[3], (hidden_units,), hidden_units * 9)
    p["w3"] = uni(ks[4], (hidden_units, hidden_units, 3, 3), hidden_units * 9)
    p["b3"] = uni(ks[5], (hidden_units,), hidden_units * 9)
    p["w4"] = uni(ks[6], (hidden_units, hidden_units, 3, 3), hidden_units * 9)
    p["b4"] = uni(ks[7], (hidden_units,), hidden_units * 9)
    fc_in = hidden_units * 7 * 7
    p["wfc"] = uni(ks[8], (output_shape, fc_in), fc_in)
    p["bfc"] = uni(ks[9], (output_shape,), fc_in)
    return p


# ------------------------------ XLA reference -------------------------------

def reference_forward(x_nchw, p):
    """Pure-JAX reference replicating FashionMNISTV2.forward (for checking)."""
    dn = ("NCHW", "OIHW", "NCHW")
    hi = jax.lax.Precision.HIGHEST

    def conv_relu(x, wt, b):
        y = jax.lax.conv_general_dilated(x, wt, (1, 1), ((1, 1), (1, 1)),
                                         dimension_numbers=dn, precision=hi)
        return jax.nn.relu(y + b[None, :, None, None])

    def pool(x):
        return jax.lax.reduce_window(x, -jnp.inf, jax.lax.max,
                                     (1, 1, 2, 2), (1, 1, 2, 2), "VALID")

    x = pool(conv_relu(conv_relu(x_nchw, p["w1"], p["b1"]), p["w2"], p["b2"]))
    x = pool(conv_relu(conv_relu(x, p["w3"], p["b3"]), p["w4"], p["b4"]))
    flat = x.reshape(x.shape[0], -1)
    return jnp.dot(flat, p["wfc"].T, precision=hi) + p["bfc"][None, :]


if __name__ == "__main__":
    input_channels = 1       # FashionMNIST grayscale
    hidden_units = 8
    num_classes = 10
    batch, H, W = 2, 28, 28  # classifier expects hidden_units * 7 * 7 -> 28x28

    key = jax.random.PRNGKey(0)
    kx, kp = jax.random.split(key)
    x = jax.random.normal(kx, (batch, input_channels, H, W), jnp.float32)
    params = init_params(kp, input_channels, hidden_units, num_classes)
    fused_params = prepare_params(params, H, W)   # one-time host-side repack

    fwd = jax.jit(functools.partial(fashion_mnist_v2_forward,
                                    num_classes=num_classes))
    logits = jax.block_until_ready(fwd(x, fused_params))

    assert logits.shape == (batch, num_classes), logits.shape
    assert bool(jnp.all(jnp.isfinite(logits)))
    ref = reference_forward(x, params)
    assert bool(jnp.allclose(logits, ref, atol=5e-2, rtol=5e-2)), (
        "max |diff| = %r" % float(jnp.max(jnp.abs(logits - ref))))
    print("KERNEL_OK")
</pallas_src>

<mosaic_0001>
module attributes {stable_mosaic.version = 11 : i64} {
  func.func @_tinyvgg_kernel(%arg0: i32, %arg1: memref<1x1x896xf32, #tpu.memory_space<vmem>>, %arg2: memref<9x8x1xf32, #tpu.memory_space<vmem>>, %arg3: memref<8x1xf32, #tpu.memory_space<vmem>>, %arg4: memref<9x8x8xf32, #tpu.memory_space<vmem>>, %arg5: memref<8x1xf32, #tpu.memory_space<vmem>>, %arg6: memref<9x8x8xf32, #tpu.memory_space<vmem>>, %arg7: memref<8x1xf32, #tpu.memory_space<vmem>>, %arg8: memref<9x8x8xf32, #tpu.memory_space<vmem>>, %arg9: memref<8x1xf32, #tpu.memory_space<vmem>>, %arg10: memref<8x128x128xf32, #tpu.memory_space<vmem>>, %arg11: memref<1x128xf32, #tpu.memory_space<vmem>>, %arg12: memref<9x896xf32, #tpu.memory_space<vmem>>, %arg13: memref<9x256xf32, #tpu.memory_space<vmem>>, %arg14: memref<896x256xf32, #tpu.memory_space<vmem>>, %arg15: memref<256x128xf32, #tpu.memory_space<vmem>>, %arg16: memref<1x1x128xf32, #tpu.memory_space<vmem>>) attributes {dimension_semantics = [#tpu.dimension_semantics<parallel>], iteration_bounds = array<i64: 2>, scalar_prefetch = 0 : i64, scratch_operands = 0 : i64, tpu.core_type = #tpu.core_type<tc>, window_params = [{transform_indices = @transform_0, window_bounds = array<i64: 1, 1, 896>}, {pipeline_mode = #tpu.pipeline_mode<synchronous>, transform_indices = @transform_1, window_bounds = array<i64: 9, 8, 1>}, {pipeline_mode = #tpu.pipeline_mode<synchronous>, transform_indices = @transform_2, window_bounds = array<i64: 8, 1>}, {pipeline_mode = #tpu.pipeline_mode<synchronous>, transform_indices = @transform_3, window_bounds = array<i64: 9, 8, 8>}, {pipeline_mode = #tpu.pipeline_mode<synchronous>, transform_indices = @transform_4, window_bounds = array<i64: 8, 1>}, {pipeline_mode = #tpu.pipeline_mode<synchronous>, transform_indices = @transform_5, window_bounds = array<i64: 9, 8, 8>}, {pipeline_mode = #tpu.pipeline_mode<synchronous>, transform_indices = @transform_6, window_bounds = array<i64: 8, 1>}, {pipeline_mode = #tpu.pipeline_mode<synchronous>, transform_indices = @transform_7, window_bounds = array<i64: 9, 8, 8>}, {pipeline_mode = #tpu.pipeline_mode<synchronous>, transform_indices = @transform_8, window_bounds = array<i64: 8, 1>}, {pipeline_mode = #tpu.pipeline_mode<synchronous>, transform_indices = @transform_9, window_bounds = array<i64: 8, 128, 128>}, {pipeline_mode = #tpu.pipeline_mode<synchronous>, transform_indices = @transform_10, window_bounds = array<i64: 1, 128>}, {pipeline_mode = #tpu.pipeline_mode<synchronous>, transform_indices = @transform_11, window_bounds = array<i64: 9, 896>}, {pipeline_mode = #tpu.pipeline_mode<synchronous>, transform_indices = @transform_12, window_bounds = array<i64: 9, 256>}, {pipeline_mode = #tpu.pipeline_mode<synchronous>, transform_indices = @transform_13, window_bounds = array<i64: 896, 256>}, {pipeline_mode = #tpu.pipeline_mode<synchronous>, transform_indices = @transform_14, window_bounds = array<i64: 256, 128>}, {transform_indices = @transform_15, window_bounds = array<i64: 1, 1, 128>}]} {
    %c0 = arith.constant 0 : index
    %c0_0 = arith.constant 0 : index
    %0 = vector.load %arg12[%c0, %c0_0] : memref<9x896xf32, #tpu.memory_space<vmem>>, vector<9x896xf32>
    %c0_1 = arith.constant 0 : index
    %c0_2 = arith.constant 0 : index
    %1 = vector.load %arg13[%c0_1, %c0_2] : memref<9x256xf32, #tpu.memory_space<vmem>>, vector<9x256xf32>
    %c0_3 = arith.constant 0 : index
    %c0_4 = arith.constant 0 : index
    %c0_5 = arith.constant 0 : index
    %2 = vector.load %arg1[%c0_3, %c0_4, %c0_5] : memref<1x1x896xf32, #tpu.memory_space<vmem>>, vector<1x1x896xf32>
    %3 = vector.shape_cast %2 : vector<1x1x896xf32> to vector<1x896xf32>
    %cst = arith.constant 0.000000e+00 : f32
    %4 = vector.broadcast %cst : f32 to vector<8x896xf32>
    %5 = vector.extract_strided_slice %3 {offsets = [0, 867], sizes = [1, 29], strides = [1, 1]} : vector<1x896xf32> to vector<1x29xf32>
    %6 = vector.extract_strided_slice %3 {offsets = [0, 0], sizes = [1, 867], strides = [1, 1]} : vector<1x896xf32> to vector<1x867xf32>
    %7 = tpu.concatenate %5, %6 in 1 : vector<1x29xf32>, vector<1x867xf32> -> vector<1x896xf32>
    %8 = vector.extract_strided_slice %0 {offsets = [0, 0], sizes = [1, 896], strides = [1, 1]} : vector<9x896xf32> to vector<1x896xf32>
    %9 = arith.mulf %7, %8 : vector<1x896xf32>
    %c0_6 = arith.constant 0 : index
    %c0_7 = arith.constant 0 : index
    %c0_8 = arith.constant 0 : index
    %10 = vector.load %arg2[%c0_6, %c0_7, %c0_8] : memref<9x8x1xf32, #tpu.memory_space<vmem>>, vector<1x8x1xf32>
    %11 = vector.shape_cast %10 : vector<1x8x1xf32> to vector<8x1xf32>
    %12 = vector.broadcast %11 : vector<8x1xf32> to vector<8x896xf32>
    %13 = vector.broadcast %9 : vector<1x896xf32> to vector<8x896xf32>
    %14 = arith.mulf %12, %13 : vector<8x896xf32>
    %15 = arith.addf %4, %14 : vector<8x896xf32>
    %16 = vector.extract_strided_slice %3 {offsets = [0, 868], sizes = [1, 28], strides = [1, 1]} : vector<1x896xf32> to vector<1x28xf32>
    %17 = vector.extract_strided_slice %3 {offsets = [0, 0], sizes = [1, 868], strides = [1, 1]} : vector<1x896xf32> to vector<1x868xf32>
    %18 = tpu.concatenate %16, %17 in 1 : vector<1x28xf32>, vector<1x868xf32> -> vector<1x896xf32>
    %19 = vector.extract_strided_slice %0 {offsets = [1, 0], sizes = [1, 896], strides = [1, 1]} : vector<9x896xf32> to vector<1x896xf32>
    %20 = arith.mulf %18, %19 : vector<1x896xf32>
    %c1 = arith.constant 1 : index
    %c0_9 = arith.constant 0 : index
    %c0_10 = arith.constant 0 : index
    %21 = vector.load %arg2[%c1, %c0_9, %c0_10] : memref<9x8x1xf32, #tpu.memory_space<vmem>>, vector<1x8x1xf32>
    %22 = vector.shape_cast %21 : vector<1x8x1xf32> to vector<8x1xf32>
    %23 = vector.broadcast %22 : vector<8x1xf32> to vector<8x896xf32>
    %24 = vector.broadcast %20 : vector<1x896xf32> to vector<8x896xf32>
    %25 = arith.mulf %23, %24 : vector<8x896xf32>
    %26 = arith.addf %15, %25 : vector<8x896xf32>
    %27 = vector.extract_strided_slice %3 {offsets = [0, 869], sizes = [1, 27], strides = [1, 1]} : vector<1x896xf32> to vector<1x27xf32>
    %28 = vector.extract_strided_slice %3 {offsets = [0, 0], sizes = [1, 869], strides = [1, 1]} : vector<1x896xf32> to vector<1x869xf32>
    %29 = tpu.concatenate %27, %28 in 1 : vector<1x27xf32>, vector<1x869xf32> -> vector<1x896xf32>
    %30 = vector.extract_strided_slice %0 {offsets = [2, 0], sizes = [1, 896], strides = [1, 1]} : vector<9x896xf32> to vector<1x896xf32>
    %31 = arith.mulf %29, %30 : vector<1x896xf32>
    %c2 = arith.constant 2 : index
    %c0_11 = arith.constant 0 : index
    %c0_12 = arith.constant 0 : index
    %32 = vector.load %arg2[%c2, %c0_11, %c0_12] : memref<9x8x1xf32, #tpu.memory_space<vmem>>, vector<1x8x1xf32>
    %33 = vector.shape_cast %32 : vector<1x8x1xf32> to vector<8x1xf32>
    %34 = vector.broadcast %33 : vector<8x1xf32> to vector<8x896xf32>
    %35 = vector.broadcast %31 : vector<1x896xf32> to vector<8x896xf32>
    %36 = arith.mulf %34, %35 : vector<8x896xf32>
    %37 = arith.addf %26, %36 : vector<8x896xf32>
    %38 = vector.extract_strided_slice %3 {offsets = [0, 895], sizes = [1, 1], strides = [1, 1]} : vector<1x896xf32> to vector<1x1xf32>
    %39 = vector.extract_strided_slice %3 {offsets = [0, 0], sizes = [1, 895], strides = [1, 1]} : vector<1x896xf32> to vector<1x895xf32>
    %40 = tpu.concatenate %38, %39 in 1 : vector<1x1xf32>, vector<1x895xf32> -> vector<1x896xf32>
    %41 = vector.extract_strided_slice %0 {offsets = [3, 0], sizes = [1, 896], strides = [1, 1]} : vector<9x896xf32> to vector<1x896xf32>
    %42 = arith.mulf %40, %41 : vector<1x896xf32>
    %c3 = arith.constant 3 : index
    %c0_13 = arith.constant 0 : index
    %c0_14 = arith.constant 0 : index
    %43 = vector.load %arg2[%c3, %c0_13, %c0_14] : memref<9x8x1xf32, #tpu.memory_space<vmem>>, vector<1x8x1xf32>
    %44 = vector.shape_cast %43 : vector<1x8x1xf32> to vector<8x1xf32>
    %45 = vector.broadcast %44 : vector<8x1xf32> to vector<8x896xf32>
    %46 = vector.broadcast %42 : vector<1x896xf32> to vector<8x896xf32>
    %47 = arith.mulf %45, %46 : vector<8x896xf32>
    %48 = arith.addf %37, %47 : vector<8x896xf32>
    %49 = vector.extract_strided_slice %0 {offsets = [4, 0], sizes = [1, 896], strides = [1, 1]} : vector<9x896xf32> to vector<1x896xf32>
    %50 = arith.mulf %3, %49 : vector<1x896xf32>
    %c4 = arith.constant 4 : index
    %c0_15 = arith.constant 0 : index
    %c0_16 = arith.constant 0 : index
    %51 = vector.load %arg2[%c4, %c0_15, %c0_16] : memref<9x8x1xf32, #tpu.memory_space<vmem>>, vector<1x8x1xf32>
    %52 = vector.shape_cast %51 : vector<1x8x1xf32> to vector<8x1xf32>
    %53 = vector.broadcast %52 : vector<8x1xf32> to vector<8x896xf32>
    %54 = vector.broadcast %50 : vector<1x896xf32> to vector<8x896xf32>
    %55 = arith.mulf %53, %54 : vector<8x896xf32>
    %56 = arith.addf %48, %55 : vector<8x896xf32>
    %57 = vector.extract_strided_slice %3 {offsets = [0, 1], sizes = [1, 895], strides = [1, 1]} : vector<1x896xf32> to vector<1x895xf32>
    %58 = vector.extract_strided_slice %3 {offsets = [0, 0], sizes = [1, 1], strides = [1, 1]} : vector<1x896xf32> to vector<1x1xf32>
    %59 = tpu.concatenate %57, %58 in 1 : vector<1x895xf32>, vector<1x1xf32> -> vector<1x896xf32>
    %60 = vector.extract_strided_slice %0 {offsets = [5, 0], sizes = [1, 896], strides = [1, 1]} : vector<9x896xf32> to vector<1x896xf32>
    %61 = arith.mulf %59, %60 : vector<1x896xf32>
    %c5 = arith.constant 5 : index
    %c0_17 = arith.constant 0 : index
    %c0_18 = arith.constant 0 : index
    %62 = vector.load %arg2[%c5, %c0_17, %c0_18] : memref<9x8x1xf32, #tpu.memory_space<vmem>>, vector<1x8x1xf32>
    %63 = vector.shape_cast %62 : vector<1x8x1xf32> to vector<8x1xf32>
    %64 = vector.broadcast %63 : vector<8x1xf32> to vector<8x896xf32>
    %65 = vector.broadcast %61 : vector<1x896xf32> to vector<8x896xf32>
    %66 = arith.mulf %64, %65 : vector<8x896xf32>
    %67 = arith.addf %56, %66 : vector<8x896xf32>
    %68 = vector.extract_strided_slice %3 {offsets = [0, 27], sizes = [1, 869], strides = [1, 1]} : vector<1x896xf32> to vector<1x869xf32>
    %69 = vector.extract_strided_slice %3 {offsets = [0, 0], sizes = [1, 27], strides = [1, 1]} : vector<1x896xf32> to vector<1x27xf32>
    %70 = tpu.concatenate %68, %69 in 1 : vector<1x869xf32>, vector<1x27xf32> -> vector<1x896xf32>
    %71 = vector.extract_strided_slice %0 {offsets = [6, 0], sizes = [1, 896], strides = [1, 1]} : vector<9x896xf32> to vector<1x896xf32>
    %72 = arith.mulf %70, %71 : vector<1x896xf32>
    %c6 = arith.constant 6 : index
    %c0_19 = arith.constant 0 : index
    %c0_20 = arith.constant 0 : index
    %73 = vector.load %arg2[%c6, %c0_19, %c0_20] : memref<9x8x1xf32, #tpu.memory_space<vmem>>, vector<1x8x1xf32>
    %74 = vector.shape_cast %73 : vector<1x8x1xf32> to vector<8x1xf32>
    %75 = vector.broadcast %74 : vector<8x1xf32> to vector<8x896xf32>
    %76 = vector.broadcast %72 : vector<1x896xf32> to vector<8x896xf32>
    %77 = arith.mulf %75, %76 : vector<8x896xf32>
    %78 = arith.addf %67, %77 : vector<8x896xf32>
    %79 = vector.extract_strided_slice %3 {offsets = [0, 28], sizes = [1, 868], strides = [1, 1]} : vector<1x896xf32> to vector<1x868xf32>
    %80 = vector.extract_strided_slice %3 {offsets = [0, 0], sizes = [1, 28], strides = [1, 1]} : vector<1x896xf32> to vector<1x28xf32>
    %81 = tpu.concatenate %79, %80 in 1 : vector<1x868xf32>, vector<1x28xf32> -> vector<1x896xf32>
    %82 = vector.extract_strided_slice %0 {offsets = [7, 0], sizes = [1, 896], strides = [1, 1]} : vector<9x896xf32> to vector<1x896xf32>
    %83 = arith.mulf %81, %82 : vector<1x896xf32>
    %c7 = arith.constant 7 : index
    %c0_21 = arith.constant 0 : index
    %c0_22 = arith.constant 0 : index
    %84 = vector.load %arg2[%c7, %c0_21, %c0_22] : memref<9x8x1xf32, #tpu.memory_space<vmem>>, vector<1x8x1xf32>
    %85 = vector.shape_cast %84 : vector<1x8x1xf32> to vector<8x1xf32>
    %86 = vector.broadcast %85 : vector<8x1xf32> to vector<8x896xf32>
    %87 = vector.broadcast %83 : vector<1x896xf32> to vector<8x896xf32>
    %88 = arith.mulf %86, %87 : vector<8x896xf32>
    %89 = arith.addf %78, %88 : vector<8x896xf32>
    %90 = vector.extract_strided_slice %3 {offsets = [0, 29], sizes = [1, 867], strides = [1, 1]} : vector<1x896xf32> to vector<1x867xf32>
    %91 = vector.extract_strided_slice %3 {offsets = [0, 0], sizes = [1, 29], strides = [1, 1]} : vector<1x896xf32> to vector<1x29xf32>
    %92 = tpu.concatenate %90, %91 in 1 : vector<1x867xf32>, vector<1x29xf32> -> vector<1x896xf32>
    %93 = vector.extract_strided_slice %0 {offsets = [8, 0], sizes = [1, 896], strides = [1, 1]} : vector<9x896xf32> to vector<1x896xf32>
    %94 = arith.mulf %92, %93 : vector<1x896xf32>
    %c8 = arith.constant 8 : index
    %c0_23 = arith.constant 0 : index
    %c0_24 = arith.constant 0 : index
    %95 = vector.load %arg2[%c8, %c0_23, %c0_24] : memref<9x8x1xf32, #tpu.memory_space<vmem>>, vector<1x8x1xf32>
    %96 = vector.shape_cast %95 : vector<1x8x1xf32> to vector<8x1xf32>
    %97 = vector.broadcast %96 : vector<8x1xf32> to vector<8x896xf32>
    %98 = vector.broadcast %94 : vector<1x896xf32> to vector<8x896xf32>
    %99 = arith.mulf %97, %98 : vector<8x896xf32>
    %100 = arith.addf %89, %99 : vector<8x896xf32>
    %c0_25 = arith.constant 0 : index
    %c0_26 = arith.constant 0 : index
    %101 = vector.load %arg3[%c0_25, %c0_26] : memref<8x1xf32, #tpu.memory_space<vmem>>, vector<8x1xf32>
    %102 = vector.broadcast %101 : vector<8x1xf32> to vector<8x896xf32>
    %103 = arith.addf %100, %102 : vector<8x896xf32>
    %cst_27 = arith.constant 0.000000e+00 : f32
    %104 = vector.broadcast %cst_27 : f32 to vector<8x896xf32>
    %105 = arith.maximumf %103, %104 : vector<8x896xf32>
    %cst_28 = arith.constant 0.000000e+00 : f32
    %106 = vector.broadcast %cst_28 : f32 to vector<8x896xf32>
    %107 = vector.extract_strided_slice %105 {offsets = [0, 867], sizes = [8, 29], strides = [1, 1]} : vector<8x896xf32> to vector<8x29xf32>
    %108 = vector.extract_strided_slice %105 {offsets = [0, 0], sizes = [8, 867], strides = [1, 1]} : vector<8x896xf32> to vector<8x867xf32>
    %109 = tpu.concatenate %107, %108 in 1 : vector<8x29xf32>, vector<8x867xf32> -> vector<8x896xf32>
    %110 = vector.extract_strided_slice %0 {offsets = [0, 0], sizes = [1, 896], strides = [1, 1]} : vector<9x896xf32> to vector<1x896xf32>
    %111 = vector.broadcast %110 : vector<1x896xf32> to vector<8x896xf32>
    %112 = arith.mulf %109, %111 : vector<8x896xf32>
    %c0_29 = arith.constant 0 : index
    %c0_30 = arith.constant 0 : index
    %c0_31 = arith.constant 0 : index
    %113 = vector.load %arg4[%c0_29, %c0_30, %c0_31] : memref<9x8x8xf32, #tpu.memory_space<vmem>>, vector<1x8x8xf32>
    %114 = vector.shape_cast %113 : vector<1x8x8xf32> to vector<8x8xf32>
    %cst_32 = arith.constant dense<0.000000e+00> : vector<8x896xf32>
    %115 = tpu.matmul %114, %112, %cst_32 {dimension_numbers = #tpu.dot_dimension_numbers<[1], [0], [0], [1], [0, 0, 1, 1], [], []>} : vector<8x8xf32>, vector<8x896xf32>, vector<8x896xf32> -> vector<8x896xf32>
    %116 = arith.addf %106, %115 : vector<8x896xf32>
    %117 = vector.extract_strided_slice %105 {offsets = [0, 868], sizes = [8, 28], strides = [1, 1]} : vector<8x896xf32> to vector<8x28xf32>
    %118 = vector.extract_strided_slice %105 {offsets = [0, 0], sizes = [8, 868], strides = [1, 1]} : vector<8x896xf32> to vector<8x868xf32>
    %119 = tpu.concatenate %117, %118 in 1 : vector<8x28xf32>, vector<8x868xf32> -> vector<8x896xf32>
    %120 = vector.extract_strided_slice %0 {offsets = [1, 0], sizes = [1, 896], strides = [1, 1]} : vector<9x896xf32> to vector<1x896xf32>
    %121 = vector.broadcast %120 : vector<1x896xf32> to vector<8x896xf32>
    %122 = arith.mulf %119, %121 : vector<8x896xf32>
    %c1_33 = arith.constant 1 : index
    %c0_34 = arith.constant 0 : index
    %c0_35 = arith.constant 0 : index
    %123 = vector.load %arg4[%c1_33, %c0_34, %c0_35] : memref<9x8x8xf32, #tpu.memory_space<vmem>>, vector<1x8x8xf32>
    %124 = vector.shape_cast %123 : vector<1x8x8xf32> to vector<8x8xf32>
    %cst_36 = arith.constant dense<0.000000e+00> : vector<8x896xf32>
    %125 = tpu.matmul %124, %122, %cst_36 {dimension_numbers = #tpu.dot_dimension_numbers<[1], [0], [0], [1], [0, 0, 1, 1], [], []>} : vector<8x8xf32>, vector<8x896xf32>, vector<8x896xf32> -> vector<8x896xf32>
    %126 = arith.addf %116, %125 : vector<8x896xf32>
    %127 = vector.extract_strided_slice %105 {offsets = [0, 869], sizes = [8, 27], strides = [1, 1]} : vector<8x896xf32> to vector<8x27xf32>
    %128 = vector.extract_strided_slice %105 {offsets = [0, 0], sizes = [8, 869], strides = [1, 1]} : vector<8x896xf32> to vector<8x869xf32>
    %129 = tpu.concatenate %127, %128 in 1 : vector<8x27xf32>, vector<8x869xf32> -> vector<8x896xf32>
    %130 = vector.extract_strided_slice %0 {offsets = [2, 0], sizes = [1, 896], strides = [1, 1]} : vector<9x896xf32> to vector<1x896xf32>
    %131 = vector.broadcast %130 : vector<1x896xf32> to vector<8x896xf32>
    %132 = arith.mulf %129, %131 : vector<8x896xf32>
    %c2_37 = arith.constant 2 : index
    %c0_38 = arith.constant 0 : index
    %c0_39 = arith.constant 0 : index
    %133 = vector.load %arg4[%c2_37, %c0_38, %c0_39] : memref<9x8x8xf32, #tpu.memory_space<vmem>>, vector<1x8x8xf32>
    %134 = vector.shape_cast %133 : vector<1x8x8xf32> to vector<8x8xf32>
    %cst_40 = arith.constant dense<0.000000e+00> : vector<8x896xf32>
    %135 = tpu.matmul %134, %132, %cst_40 {dimension_numbers = #tpu.dot_dimension_numbers<[1], [0], [0], [1], [0, 0, 1, 1], [], []>} : vector<8x8xf32>, vector<8x896xf32>, vector<8x896xf32> -> vector<8x896xf32>
    %136 = arith.addf %126, %135 : vector<8x896xf32>
    %137 = vector.extract_strided_slice %105 {offsets = [0, 895], sizes = [8, 1], strides = [1, 1]} : vector<8x896xf32> to vector<8x1xf32>
    %138 = vector.extract_strided_slice %105 {offsets = [0, 0], sizes = [8, 895], strides = [1, 1]} : vector<8x896xf32> to vector<8x895xf32>
    %139 = tpu.concatenate %137, %138 in 1 : vector<8x1xf32>, vector<8x895xf32> -> vector<8x896xf32>
    %140 = vector.extract_strided_slice %0 {offsets = [3, 0], sizes = [1, 896], strides = [1, 1]} : vector<9x896xf32> to vector<1x896xf32>
    %141 = vector.broadcast %140 : vector<1x896xf32> to vector<8x896xf32>
    %142 = arith.mulf %139, %141 : vector<8x896xf32>
    %c3_41 = arith.constant 3 : index
    %c0_42 = arith.constant 0 : index
    %c0_43 = arith.constant 0 : index
    %143 = vector.load %arg4[%c3_41, %c0_42, %c0_43] : memref<9x8x8xf32, #tpu.memory_space<vmem>>, vector<1x8x8xf32>
    %144 = vector.shape_cast %143 : vector<1x8x8xf32> to vector<8x8xf32>
    %cst_44 = arith.constant dense<0.000000e+00> : vector<8x896xf32>
    %145 = tpu.matmul %144, %142, %cst_44 {dimension_numbers = #tpu.dot_dimension_numbers<[1], [0], [0], [1], [0, 0, 1, 1], [], []>} : vector<8x8xf32>, vector<8x896xf32>, vector<8x896xf32> -> vector<8x896xf32>
    %146 = arith.addf %136, %145 : vector<8x896xf32>
    %147 = vector.extract_strided_slice %0 {offsets = [4, 0], sizes = [1, 896], strides = [1, 1]} : vector<9x896xf32> to vector<1x896xf32>
    %148 = vector.broadcast %147 : vector<1x896xf32> to vector<8x896xf32>
    %149 = arith.mulf %105, %148 : vector<8x896xf32>
    %c4_45 = arith.constant 4 : index
    %c0_46 = arith.constant 0 : index
    %c0_47 = arith.constant 0 : index
    %150 = vector.load %arg4[%c4_45, %c0_46, %c0_47] : memref<9x8x8xf32, #tpu.memory_space<vmem>>, vector<1x8x8xf32>
    %151 = vector.shape_cast %150 : vector<1x8x8xf32> to vector<8x8xf32>
    %cst_48 = arith.constant dense<0.000000e+00> : vector<8x896xf32>
    %152 = tpu.matmul %151, %149, %cst_48 {dimension_numbers = #tpu.dot_dimension_numbers<[1], [0], [0], [1], [0, 0, 1, 1], [], []>} : vector<8x8xf32>, vector<8x896xf32>, vector<8x896xf32> -> vector<8x896xf32>
    %153 = arith.addf %146, %152 : vector<8x896xf32>
    %154 = vector.extract_strided_slice %105 {offsets = [0, 1], sizes = [8, 895], strides = [1, 1]} : vector<8x896xf32> to vector<8x895xf32>
    %155 = vector.extract_strided_slice %105 {offsets = [0, 0], sizes = [8, 1], strides = [1, 1]} : vector<8x896xf32> to vector<8x1xf32>
    %156 = tpu.concatenate %154, %155 in 1 : vector<8x895xf32>, vector<8x1xf32> -> vector<8x896xf32>
    %157 = vector.extract_strided_slice %0 {offsets = [5, 0], sizes = [1, 896], strides = [1, 1]} : vector<9x896xf32> to vector<1x896xf32>
    %158 = vector.broadcast %157 : vector<1x896xf32> to vector<8x896xf32>
    %159 = arith.mulf %156, %158 : vector<8x896xf32>
    %c5_49 = arith.constant 5 : index
    %c0_50 = arith.constant 0 : index
    %c0_51 = arith.constant 0 : index
    %160 = vector.load %arg4[%c5_49, %c0_50, %c0_51] : memref<9x8x8xf32, #tpu.memory_space<vmem>>, vector<1x8x8xf32>
    %161 = vector.shape_cast %160 : vector<1x8x8xf32> to vector<8x8xf32>
    %cst_52 = arith.constant dense<0.000000e+00> : vector<8x896xf32>
    %162 = tpu.matmul %161, %159, %cst_52 {dimension_numbers = #tpu.dot_dimension_numbers<[1], [0], [0], [1], [0, 0, 1, 1], [], []>} : vector<8x8xf32>, vector<8x896xf32>, vector<8x896xf32> -> vector<8x896xf32>
    %163 = arith.addf %153, %162 : vector<8x896xf32>
    %164 = vector.extract_strided_slice %105 {offsets = [0, 27], sizes = [8, 869], strides = [1, 1]} : vector<8x896xf32> to vector<8x869xf32>
    %165 = vector.extract_strided_slice %105 {offsets = [0, 0], sizes = [8, 27], strides = [1, 1]} : vector<8x896xf32> to vector<8x27xf32>
    %166 = tpu.concatenate %164, %165 in 1 : vector<8x869xf32>, vector<8x27xf32> -> vector<8x896xf32>
    %167 = vector.extract_strided_slice %0 {offsets = [6, 0], sizes = [1, 896], strides = [1, 1]} : vector<9x896xf32> to vector<1x896xf32>
    %168 = vector.broadcast %167 : vector<1x896xf32> to vector<8x896xf32>
    %169 = arith.mulf %166, %168 : vector<8x896xf32>
    %c6_53 = arith.constant 6 : index
    %c0_54 = arith.constant 0 : index
    %c0_55 = arith.constant 0 : index
    %170 = vector.load %arg4[%c6_53, %c0_54, %c0_55] : memref<9x8x8xf32, #tpu.memory_space<vmem>>, vector<1x8x8xf32>
    %171 = vector.shape_cast %170 : vector<1x8x8xf32> to vector<8x8xf32>
    %cst_56 = arith.constant dense<0.000000e+00> : vector<8x896xf32>
    %172 = tpu.matmul %171, %169, %cst_56 {dimension_numbers = #tpu.dot_dimension_numbers<[1], [0], [0], [1], [0, 0, 1, 1], [], []>} : vector<8x8xf32>, vector<8x896xf32>, vector<8x896xf32> -> vector<8x896xf32>
    %173 = arith.addf %163, %172 : vector<8x896xf32>
    %174 = vector.extract_strided_slice %105 {offsets = [0, 28], sizes = [8, 868], strides = [1, 1]} : vector<8x896xf32> to vector<8x868xf32>
    %175 = vector.extract_strided_slice %105 {offsets = [0, 0], sizes = [8, 28], strides = [1, 1]} : vector<8x896xf32> to vector<8x28xf32>
    %176 = tpu.concatenate %174, %175 in 1 : vector<8x868xf32>, vector<8x28xf32> -> vector<8x896xf32>
    %177 = vector.extract_strided_slice %0 {offsets = [7, 0], sizes = [1, 896], strides = [1, 1]} : vector<9x896xf32> to vector<1x896xf32>
    %178 = vector.broadcast %177 : vector<1x896xf32> to vector<8x896xf32>
    %179 = arith.mulf %176, %178 : vector<8x896xf32>
    %c7_57 = arith.constant 7 : index
    %c0_58 = arith.constant 0 : index
    %c0_59 = arith.constant 0 : index
    %180 = vector.load %arg4[%c7_57, %c0_58, %c0_59] : memref<9x8x8xf32, #tpu.memory_space<vmem>>, vector<1x8x8xf32>
    %181 = vector.shape_cast %180 : vector<1x8x8xf32> to vector<8x8xf32>
    %cst_60 = arith.constant dense<0.000000e+00> : vector<8x896xf32>
    %182 = tpu.matmul %181, %179, %cst_60 {dimension_numbers = #tpu.dot_dimension_numbers<[1], [0], [0], [1], [0, 0, 1, 1], [], []>} : vector<8x8xf32>, vector<8x896xf32>, vector<8x896xf32> -> vector<8x896xf32>
    %183 = arith.addf %173, %182 : vector<8x896xf32>
    %184 = vector.extract_strided_slice %105 {offsets = [0, 29], sizes = [8, 867], strides = [1, 1]} : vector<8x896xf32> to vector<8x867xf32>
    %185 = vector.extract_strided_slice %105 {offsets = [0, 0], sizes = [8, 29], strides = [1, 1]} : vector<8x896xf32> to vector<8x29xf32>
    %186 = tpu.concatenate %184, %185 in 1 : vector<8x867xf32>, vector<8x29xf32> -> vector<8x896xf32>
    %187 = vector.extract_strided_slice %0 {offsets = [8, 0], sizes = [1, 896], strides = [1, 1]} : vector<9x896xf32> to vector<1x896xf32>
    %188 = vector.broadcast %187 : vector<1x896xf32> to vector<8x896xf32>
    %189 = arith.mulf %186, %188 : vector<8x896xf32>
    %c8_61 = arith.constant 8 : index
    %c0_62 = arith.constant 0 : index
    %c0_63 = arith.constant 0 : index
    %190 = vector.load %arg4[%c8_61, %c0_62, %c0_63] : memref<9x8x8xf32, #tpu.memory_space<vmem>>, vector<1x8x8xf32>
    %191 = vector.shape_cast %190 : vector<1x8x8xf32> to vector<8x8xf32>
    %cst_64 = arith.constant dense<0.000000e+00> : vector<8x896xf32>
    %192 = tpu.matmul %191, %189, %cst_64 {dimension_numbers = #tpu.dot_dimension_numbers<[1], [0], [0], [1], [0, 0, 1, 1], [], []>} : vector<8x8xf32>, vector<8x896xf32>, vector<8x896xf32> -> vector<8x896xf32>
    %193 = arith.addf %183, %192 : vector<8x896xf32>
    %c0_65 = arith.constant 0 : index
    %c0_66 = arith.constant 0 : index
    %194 = vector.load %arg5[%c0_65, %c0_66] : memref<8x1xf32, #tpu.memory_space<vmem>>, vector<8x1xf32>
    %195 = vector.broadcast %194 : vector<8x1xf32> to vector<8x896xf32>
    %196 = arith.addf %193, %195 : vector<8x896xf32>
    %cst_67 = arith.constant 0.000000e+00 : f32
    %197 = vector.broadcast %cst_67 : f32 to vector<8x896xf32>
    %198 = arith.maximumf %196, %197 : vector<8x896xf32>
    %199 = vector.extract_strided_slice %198 {offsets = [0, 1], sizes = [8, 895], strides = [1, 1]} : vector<8x896xf32> to vector<8x895xf32>
    %200 = vector.extract_strided_slice %198 {offsets = [0, 0], sizes = [8, 1], strides = [1, 1]} : vector<8x896xf32> to vector<8x1xf32>
    %201 = tpu.concatenate %199, %200 in 1 : vector<8x895xf32>, vector<8x1xf32> -> vector<8x896xf32>
    %202 = arith.maximumf %198, %201 : vector<8x896xf32>
    %203 = vector.extract_strided_slice %202 {offsets = [0, 28], sizes = [8, 868], strides = [1, 1]} : vector<8x896xf32> to vector<8x868xf32>
    %204 = vector.extract_strided_slice %202 {offsets = [0, 0], sizes = [8, 28], strides = [1, 1]} : vector<8x896xf32> to vector<8x28xf32>
    %205 = tpu.concatenate %203, %204 in 1 : vector<8x868xf32>, vector<8x28xf32> -> vector<8x896xf32>
    %206 = arith.maximumf %202, %205 : vector<8x896xf32>
    %c0_68 = arith.constant 0 : index
    %c0_69 = arith.constant 0 : index
    %207 = vector.load %arg14[%c0_68, %c0_69] : memref<896x256xf32, #tpu.memory_space<vmem>>, vector<896x256xf32>
    %cst_70 = arith.constant dense<0.000000e+00> : vector<8x256xf32>
    %208 = tpu.matmul %206, %207, %cst_70 {dimension_numbers = #tpu.dot_dimension_numbers<[1], [0], [0], [1], [0, 0, 1, 1], [], []>} : vector<8x896xf32>, vector<896x256xf32>, vector<8x256xf32> -> vector<8x256xf32>
    %cst_71 = arith.constant 0.000000e+00 : f32
    %209 = vector.broadcast %cst_71 : f32 to vector<8x256xf32>
    %210 = vector.extract_strided_slice %208 {offsets = [0, 241], sizes = [8, 15], strides = [1, 1]} : vector<8x256xf32> to vector<8x15xf32>
    %211 = vector.extract_strided_slice %208 {offsets = [0, 0], sizes = [8, 241], strides = [1, 1]} : vector<8x256xf32> to vector<8x241xf32>
    %212 = tpu.concatenate %210, %211 in 1 : vector<8x15xf32>, vector<8x241xf32> -> vector<8x256xf32>
    %213 = vector.extract_strided_slice %1 {offsets = [0, 0], sizes = [1, 256], strides = [1, 1]} : vector<9x256xf32> to vector<1x256xf32>
    %214 = vector.broadcast %213 : vector<1x256xf32> to vector<8x256xf32>
    %215 = arith.mulf %212, %214 : vector<8x256xf32>
    %c0_72 = arith.constant 0 : index
    %c0_73 = arith.constant 0 : index
    %c0_74 = arith.constant 0 : index
    %216 = vector.load %arg6[%c0_72, %c0_73, %c0_74] : memref<9x8x8xf32, #tpu.memory_space<vmem>>, vector<1x8x8xf32>
    %217 = vector.shape_cast %216 : vector<1x8x8xf32> to vector<8x8xf32>
    %cst_75 = arith.constant dense<0.000000e+00> : vector<8x256xf32>
    %218 = tpu.matmul %217, %215, %cst_75 {dimension_numbers = #tpu.dot_dimension_numbers<[1], [0], [0], [1], [0, 0, 1, 1], [], []>} : vector<8x8xf32>, vector<8x256xf32>, vector<8x256xf32> -> vector<8x256xf32>
    %219 = arith.addf %209, %218 : vector<8x256xf32>
    %220 = vector.extract_strided_slice %208 {offsets = [0, 242], sizes = [8, 14], strides = [1, 1]} : vector<8x256xf32> to vector<8x14xf32>
    %221 = vector.extract_strided_slice %208 {offsets = [0, 0], sizes = [8, 242], strides = [1, 1]} : vector<8x256xf32> to vector<8x242xf32>
    %222 = tpu.concatenate %220, %221 in 1 : vector<8x14xf32>, vector<8x242xf32> -> vector<8x256xf32>
    %223 = vector.extract_strided_slice %1 {offsets = [1, 0], sizes = [1, 256], strides = [1, 1]} : vector<9x256xf32> to vector<1x256xf32>
    %224 = vector.broadcast %223 : vector<1x256xf32> to vector<8x256xf32>
    %225 = arith.mulf %222, %224 : vector<8x256xf32>
    %c1_76 = arith.constant 1 : index
    %c0_77 = arith.constant 0 : index
    %c0_78 = arith.constant 0 : index
    %226 = vector.load %arg6[%c1_76, %c0_77, %c0_78] : memref<9x8x8xf32, #tpu.memory_space<vmem>>, vector<1x8x8xf32>
    %227 = vector.shape_cast %226 : vector<1x8x8xf32> to vector<8x8xf32>
    %cst_79 = arith.constant dense<0.000000e+00> : vector<8x256xf32>
    %228 = tpu.matmul %227, %225, %cst_79 {dimension_numbers = #tpu.dot_dimension_numbers<[1], [0], [0], [1], [0, 0, 1, 1], [], []>} : vector<8x8xf32>, vector<8x256xf32>, vector<8x256xf32> -> vector<8x256xf32>
    %229 = arith.addf %219, %228 : vector<8x256xf32>
    %230 = vector.extract_strided_slice %208 {offsets = [0, 243], sizes = [8, 13], strides = [1, 1]} : vector<8x256xf32> to vector<8x13xf32>
    %231 = vector.extract_strided_slice %208 {offsets = [0, 0], sizes = [8, 243], strides = [1, 1]} : vector<8x256xf32> to vector<8x243xf32>
    %232 = tpu.concatenate %230, %231 in 1 : vector<8x13xf32>, vector<8x243xf32> -> vector<8x256xf32>
    %233 = vector.extract_strided_slice %1 {offsets = [2, 0], sizes = [1, 256], strides = [1, 1]} : vector<9x256xf32> to vector<1x256xf32>
    %234 = vector.broadcast %233 : vector<1x256xf32> to vector<8x256xf32>
    %235 = arith.mulf %232, %234 : vector<8x256xf32>
    %c2_80 = arith.constant 2 : index
    %c0_81 = arith.constant 0 : index
    %c0_82 = arith.constant 0 : index
    %236 = vector.load %arg6[%c2_80, %c0_81, %c0_82] : memref<9x8x8xf32, #tpu.memory_space<vmem>>, vector<1x8x8xf32>
    %237 = vector.shape_cast %236 : vector<1x8x8xf32> to vector<8x8xf32>
    %cst_83 = arith.constant dense<0.000000e+00> : vector<8x256xf32>
    %238 = tpu.matmul %237, %235, %cst_83 {dimension_numbers = #tpu.dot_dimension_numbers<[1], [0], [0], [1], [0, 0, 1, 1], [], []>} : vector<8x8xf32>, vector<8x256xf32>, vector<8x256xf32> -> vector<8x256xf32>
    %239 = arith.addf %229, %238 : vector<8x256xf32>
    %240 = vector.extract_strided_slice %208 {offsets = [0, 255], sizes = [8, 1], strides = [1, 1]} : vector<8x256xf32> to vector<8x1xf32>
    %241 = vector.extract_strided_slice %208 {offsets = [0, 0], sizes = [8, 255], strides = [1, 1]} : vector<8x256xf32> to vector<8x255xf32>
    %242 = tpu.concatenate %240, %241 in 1 : vector<8x1xf32>, vector<8x255xf32> -> vector<8x256xf32>
    %243 = vector.extract_strided_slice %1 {offsets = [3, 0], sizes = [1, 256], strides = [1, 1]} : vector<9x256xf32> to vector<1x256xf32>
    %244 = vector.broadcast %243 : vector<1x256xf32> to vector<8x256xf32>
    %245 = arith.mulf %242, %244 : vector<8x256xf32>
    %c3_84 = arith.constant 3 : index
    %c0_85 = arith.constant 0 : index
    %c0_86 = arith.constant 0 : index
    %246 = vector.load %arg6[%c3_84, %c0_85, %c0_86] : memref<9x8x8xf32, #tpu.memory_space<vmem>>, vector<1x8x8xf32>
    %247 = vector.shape_cast %246 : vector<1x8x8xf32> to vector<8x8xf32>
    %cst_87 = arith.constant dense<0.000000e+00> : vector<8x256xf32>
    %248 = tpu.matmul %247, %245, %cst_87 {dimension_numbers = #tpu.dot_dimension_numbers<[1], [0], [0], [1], [0, 0, 1, 1], [], []>} : vector<8x8xf32>, vector<8x256xf32>, vector<8x256xf32> -> vector<8x256xf32>
    %249 = arith.addf %239, %248 : vector<8x256xf32>
    %250 = vector.extract_strided_slice %1 {offsets = [4, 0], sizes = [1, 256], strides = [1, 1]} : vector<9x256xf32> to vector<1x256xf32>
    %251 = vector.broadcast %250 : vector<1x256xf32> to vector<8x256xf32>
    %252 = arith.mulf %208, %251 : vector<8x256xf32>
    %c4_88 = arith.constant 4 : index
    %c0_89 = arith.constant 0 : index
    %c0_90 = arith.constant 0 : index
    %253 = vector.load %arg6[%c4_88, %c0_89, %c0_90] : memref<9x8x8xf32, #tpu.memory_space<vmem>>, vector<1x8x8xf32>
    %254 = vector.shape_cast %253 : vector<1x8x8xf32> to vector<8x8xf32>
    %cst_91 = arith.constant dense<0.000000e+00> : vector<8x256xf32>
    %255 = tpu.matmul %254, %252, %cst_91 {dimension_numbers = #tpu.dot_dimension_numbers<[1], [0], [0], [1], [0, 0, 1, 1], [], []>} : vector<8x8xf32>, vector<8x256xf32>, vector<8x256xf32> -> vector<8x256xf32>
    %256 = arith.addf %249, %255 : vector<8x256xf32>
    %257 = vector.extract_strided_slice %208 {offsets = [0, 1], sizes = [8, 255], strides = [1, 1]} : vector<8x256xf32> to vector<8x255xf32>
    %258 = vector.extract_strided_slice %208 {offsets = [0, 0], sizes = [8, 1], strides = [1, 1]} : vector<8x256xf32> to vector<8x1xf32>
    %259 = tpu.concatenate %257, %258 in 1 : vector<8x255xf32>, vector<8x1xf32> -> vector<8x256xf32>
    %260 = vector.extract_strided_slice %1 {offsets = [5, 0], sizes = [1, 256], strides = [1, 1]} : vector<9x256xf32> to vector<1x256xf32>
    %261 = vector.broadcast %260 : vector<1x256xf32> to vector<8x256xf32>
    %262 = arith.mulf %259, %261 : vector<8x256xf32>
    %c5_92 = arith.constant 5 : index
    %c0_93 = arith.constant 0 : index
    %c0_94 = arith.constant 0 : index
    %263 = vector.load %arg6[%c5_92, %c0_93, %c0_94] : memref<9x8x8xf32, #tpu.memory_space<vmem>>, vector<1x8x8xf32>
    %264 = vector.shape_cast %263 : vector<1x8x8xf32> to vector<8x8xf32>
    %cst_95 = arith.constant dense<0.000000e+00> : vector<8x256xf32>
    %265 = tpu.matmul %264, %262, %cst_95 {dimension_numbers = #tpu.dot_dimension_numbers<[1], [0], [0], [1], [0, 0, 1, 1], [], []>} : vector<8x8xf32>, vector<8x256xf32>, vector<8x256xf32> -> vector<8x256xf32>
    %266 = arith.addf %256, %265 : vector<8x256xf32>
    %267 = vector.extract_strided_slice %208 {offsets = [0, 13], sizes = [8, 243], strides = [1, 1]} : vector<8x256xf32> to vector<8x243xf32>
    %268 = vector.extract_strided_slice %208 {offsets = [0, 0], sizes = [8, 13], strides = [1, 1]} : vector<8x256xf32> to vector<8x13xf32>
    %269 = tpu.concatenate %267, %268 in 1 : vector<8x243xf32>, vector<8x13xf32> -> vector<8x256xf32>
    %270 = vector.extract_strided_slice %1 {offsets = [6, 0], sizes = [1, 256], strides = [1, 1]} : vector<9x256xf32> to vector<1x256xf32>
    %271 = vector.broadcast %270 : vector<1x256xf32> to vector<8x256xf32>
    %272 = arith.mulf %269, %271 : vector<8x256xf32>
    %c6_96 = arith.constant 6 : index
    %c0_97 = arith.constant 0 : index
    %c0_98 = arith.constant 0 : index
    %273 = vector.load %arg6[%c6_96, %c0_97, %c0_98] : memref<9x8x8xf32, #tpu.memory_space<vmem>>, vector<1x8x8xf32>
    %274 = vector.shape_cast %273 : vector<1x8x8xf32> to vector<8x8xf32>
    %cst_99 = arith.constant dense<0.000000e+00> : vector<8x256xf32>
    %275 = tpu.matmul %274, %272, %cst_99 {dimension_numbers = #tpu.dot_dimension_numbers<[1], [0], [0], [1], [0, 0, 1, 1], [], []>} : vector<8x8xf32>, vector<8x256xf32>, vector<8x256xf32> -> vector<8x256xf32>
    %276 = arith.addf %266, %275 : vector<8x256xf32>
    %277 = vector.extract_strided_slice %208 {offsets = [0, 14], sizes = [8, 242], strides = [1, 1]} : vector<8x256xf32> to vector<8x242xf32>
    %278 = vector.extract_strided_slice %208 {offsets = [0, 0], sizes = [8, 14], strides = [1, 1]} : vector<8x256xf32> to vector<8x14xf32>
    %279 = tpu.concatenate %277, %278 in 1 : vector<8x242xf32>, vector<8x14xf32> -> vector<8x256xf32>
    %280 = vector.extract_strided_slice %1 {offsets = [7, 0], sizes = [1, 256], strides = [1, 1]} : vector<9x256xf32> to vector<1x256xf32>
    %281 = vector.broadcast %280 : vector<1x256xf32> to vector<8x256xf32>
    %282 = arith.mulf %279, %281 : vector<8x256xf32>
    %c7_100 = arith.constant 7 : index
    %c0_101 = arith.constant 0 : index
    %c0_102 = arith.constant 0 : index
    %283 = vector.load %arg6[%c7_100, %c0_101, %c0_102] : memref<9x8x8xf32, #tpu.memory_space<vmem>>, vector<1x8x8xf32>
    %284 = vector.shape_cast %283 : vector<1x8x8xf32> to vector<8x8xf32>
    %cst_103 = arith.constant dense<0.000000e+00> : vector<8x256xf32>
    %285 = tpu.matmul %284, %282, %cst_103 {dimension_numbers = #tpu.dot_dimension_numbers<[1], [0], [0], [1], [0, 0, 1, 1], [], []>} : vector<8x8xf32>, vector<8x256xf32>, vector<8x256xf32> -> vector<8x256xf32>
    %286 = arith.addf %276, %285 : vector<8x256xf32>
    %287 = vector.extract_strided_slice %208 {offsets = [0, 15], sizes = [8, 241], strides = [1, 1]} : vector<8x256xf32> to vector<8x241xf32>
    %288 = vector.extract_strided_slice %208 {offsets = [0, 0], sizes = [8, 15], strides = [1, 1]} : vector<8x256xf32> to vector<8x15xf32>
    %289 = tpu.concatenate %287, %288 in 1 : vector<8x241xf32>, vector<8x15xf32> -> vector<8x256xf32>
    %290 = vector.extract_strided_slice %1 {offsets = [8, 0], sizes = [1, 256], strides = [1, 1]} : vector<9x256xf32> to vector<1x256xf32>
    %291 = vector.broadcast %290 : vector<1x256xf32> to vector<8x256xf32>
    %292 = arith.mulf %289, %291 : vector<8x256xf32>
    %c8_104 = arith.constant 8 : index
    %c0_105 = arith.constant 0 : index
    %c0_106 = arith.constant 0 : index
    %293 = vector.load %arg6[%c8_104, %c0_105, %c0_106] : memref<9x8x8xf32, #tpu.memory_space<vmem>>, vector<1x8x8xf32>
    %294 = vector.shape_cast %293 : vector<1x8x8xf32> to vector<8x8xf32>
    %cst_107 = arith.constant dense<0.000000e+00> : vector<8x256xf32>
    %295 = tpu.matmul %294, %292, %cst_107 {dimension_numbers = #tpu.dot_dimension_numbers<[1], [0], [0], [1], [0, 0, 1, 1], [], []>} : vector<8x8xf32>, vector<8x256xf32>, vector<8x256xf32> -> vector<8x256xf32>
    %296 = arith.addf %286, %295 : vector<8x256xf32>
    %c0_108 = arith.constant 0 : index
    %c0_109 = arith.constant 0 : index
    %297 = vector.load %arg7[%c0_108, %c0_109] : memref<8x1xf32, #tpu.memory_space<vmem>>, vector<8x1xf32>
    %298 = vector.broadcast %297 : vector<8x1xf32> to vector<8x256xf32>
    %299 = arith.addf %296, %298 : vector<8x256xf32>
    %cst_110 = arith.constant 0.000000e+00 : f32
    %300 = vector.broadcast %cst_110 : f32 to vector<8x256xf32>
    %301 = arith.maximumf %299, %300 : vector<8x256xf32>
    %cst_111 = arith.constant 0.000000e+00 : f32
    %302 = vector.broadcast %cst_111 : f32 to vector<8x256xf32>
    %303 = vector.extract_strided_slice %301 {offsets = [0, 241], sizes = [8, 15], strides = [1, 1]} : vector<8x256xf32> to vector<8x15xf32>
    %304 = vector.extract_strided_slice %301 {offsets = [0, 0], sizes = [8, 241], strides = [1, 1]} : vector<8x256xf32> to vector<8x241xf32>
    %305 = tpu.concatenate %303, %304 in 1 : vector<8x15xf32>, vector<8x241xf32> -> vector<8x256xf32>
    %306 = vector.extract_strided_slice %1 {offsets = [0, 0], sizes = [1, 256], strides = [1, 1]} : vector<9x256xf32> to vector<1x256xf32>
    %307 = vector.broadcast %306 : vector<1x256xf32> to vector<8x256xf32>
    %308 = arith.mulf %305, %307 : vector<8x256xf32>
    %c0_112 = arith.constant 0 : index
    %c0_113 = arith.constant 0 : index
    %c0_114 = arith.constant 0 : index
    %309 = vector.load %arg8[%c0_112, %c0_113, %c0_114] : memref<9x8x8xf32, #tpu.memory_space<vmem>>, vector<1x8x8xf32>
    %310 = vector.shape_cast %309 : vector<1x8x8xf32> to vector<8x8xf32>
    %cst_115 = arith.constant dense<0.000000e+00> : vector<8x256xf32>
    %311 = tpu.matmul %310, %308, %cst_115 {dimension_numbers = #tpu.dot_dimension_numbers<[1], [0], [0], [1], [0, 0, 1, 1], [], []>} : vector<8x8xf32>, vector<8x256xf32>, vector<8x256xf32> -> vector<8x256xf32>
    %312 = arith.addf %302, %311 : vector<8x256xf32>
    %313 = vector.extract_strided_slice %301 {offsets = [0, 242], sizes = [8, 14], strides = [1, 1]} : vector<8x256xf32> to vector<8x14xf32>
    %314 = vector.extract_strided_slice %301 {offsets = [0, 0], sizes = [8, 242], strides = [1, 1]} : vector<8x256xf32> to vector<8x242xf32>
    %315 = tpu.concatenate %313, %314 in 1 : vector<8x14xf32>, vector<8x242xf32> -> vector<8x256xf32>
    %316 = vector.extract_strided_slice %1 {offsets = [1, 0], sizes = [1, 256], strides = [1, 1]} : vector<9x256xf32> to vector<1x256xf32>
    %317 = vector.broadcast %316 : vector<1x256xf32> to vector<8x256xf32>
    %318 = arith.mulf %315, %317 : vector<8x256xf32>
    %c1_116 = arith.constant 1 : index
    %c0_117 = arith.constant 0 : index
    %c0_118 = arith.constant 0 : index
    %319 = vector.load %arg8[%c1_116, %c0_117, %c0_118] : memref<9x8x8xf32, #tpu.memory_space<vmem>>, vector<1x8x8xf32>
    %320 = vector.shape_cast %319 : vector<1x8x8xf32> to vector<8x8xf32>
    %cst_119 = arith.constant dense<0.000000e+00> : vector<8x256xf32>
    %321 = tpu.matmul %320, %318, %cst_119 {dimension_numbers = #tpu.dot_dimension_numbers<[1], [0], [0], [1], [0, 0, 1, 1], [], []>} : vector<8x8xf32>, vector<8x256xf32>, vector<8x256xf32> -> vector<8x256xf32>
    %322 = arith.addf %312, %321 : vector<8x256xf32>
    %323 = vector.extract_strided_slice %301 {offsets = [0, 243], sizes = [8, 13], strides = [1, 1]} : vector<8x256xf32> to vector<8x13xf32>
    %324 = vector.extract_strided_slice %301 {offsets = [0, 0], sizes = [8, 243], strides = [1, 1]} : vector<8x256xf32> to vector<8x243xf32>
    %325 = tpu.concatenate %323, %324 in 1 : vector<8x13xf32>, vector<8x243xf32> -> vector<8x256xf32>
    %326 = vector.extract_strided_slice %1 {offsets = [2, 0], sizes = [1, 256], strides = [1, 1]} : vector<9x256xf32> to vector<1x256xf32>
    %327 = vector.broadcast %326 : vector<1x256xf32> to vector<8x256xf32>
    %328 = arith.mulf %325, %327 : vector<8x256xf32>
    %c2_120 = arith.constant 2 : index
    %c0_121 = arith.constant 0 : index
    %c0_122 = arith.constant 0 : index
    %329 = vector.load %arg8[%c2_120, %c0_121, %c0_122] : memref<9x8x8xf32, #tpu.memory_space<vmem>>, vector<1x8x8xf32>
    %330 = vector.shape_cast %329 : vector<1x8x8xf32> to vector<8x8xf32>
    %cst_123 = arith.constant dense<0.000000e+00> : vector<8x256xf32>
    %331 = tpu.matmul %330, %328, %cst_123 {dimension_numbers = #tpu.dot_dimension_numbers<[1], [0], [0], [1], [0, 0, 1, 1], [], []>} : vector<8x8xf32>, vector<8x256xf32>, vector<8x256xf32> -> vector<8x256xf32>
    %332 = arith.addf %322, %331 : vector<8x256xf32>
    %333 = vector.extract_strided_slice %301 {offsets = [0, 255], sizes = [8, 1], strides = [1, 1]} : vector<8x256xf32> to vector<8x1xf32>
    %334 = vector.extract_strided_slice %301 {offsets = [0, 0], sizes = [8, 255], strides = [1, 1]} : vector<8x256xf32> to vector<8x255xf32>
    %335 = tpu.concatenate %333, %334 in 1 : vector<8x1xf32>, vector<8x255xf32> -> vector<8x256xf32>
    %336 = vector.extract_strided_slice %1 {offsets = [3, 0], sizes = [1, 256], strides = [1, 1]} : vector<9x256xf32> to vector<1x256xf32>
    %337 = vector.broadcast %336 : vector<1x256xf32> to vector<8x256xf32>
    %338 = arith.mulf %335, %337 : vector<8x256xf32>
    %c3_124 = arith.constant 3 : index
    %c0_125 = arith.constant 0 : index
    %c0_126 = arith.constant 0 : index
    %339 = vector.load %arg8[%c3_124, %c0_125, %c0_126] : memref<9x8x8xf32, #tpu.memory_space<vmem>>, vector<1x8x8xf32>
    %340 = vector.shape_cast %339 : vector<1x8x8xf32> to vector<8x8xf32>
    %cst_127 = arith.constant dense<0.000000e+00> : vector<8x256xf32>
    %341 = tpu.matmul %340, %338, %cst_127 {dimension_numbers = #tpu.dot_dimension_numbers<[1], [0], [0], [1], [0, 0, 1, 1], [], []>} : vector<8x8xf32>, vector<8x256xf32>, vector<8x256xf32> -> vector<8x256xf32>
    %342 = arith.addf %332, %341 : vector<8x256xf32>
    %343 = vector.extract_strided_slice %1 {offsets = [4, 0], sizes = [1, 256], strides = [1, 1]} : vector<9x256xf32> to vector<1x256xf32>
    %344 = vector.broadcast %343 : vector<1x256xf32> to vector<8x256xf32>
    %345 = arith.mulf %301, %344 : vector<8x256xf32>
    %c4_128 = arith.constant 4 : index
    %c0_129 = arith.constant 0 : index
    %c0_130 = arith.constant 0 : index
    %346 = vector.load %arg8[%c4_128, %c0_129, %c0_130] : memref<9x8x8xf32, #tpu.memory_space<vmem>>, vector<1x8x8xf32>
    %347 = vector.shape_cast %346 : vector<1x8x8xf32> to vector<8x8xf32>
    %cst_131 = arith.constant dense<0.000000e+00> : vector<8x256xf32>
    %348 = tpu.matmul %347, %345, %cst_131 {dimension_numbers = #tpu.dot_dimension_numbers<[1], [0], [0], [1], [0, 0, 1, 1], [], []>} : vector<8x8xf32>, vector<8x256xf32>, vector<8x256xf32> -> vector<8x256xf32>
    %349 = arith.addf %342, %348 : vector<8x256xf32>
    %350 = vector.extract_strided_slice %301 {offsets = [0, 1], sizes = [8, 255], strides = [1, 1]} : vector<8x256xf32> to vector<8x255xf32>
    %351 = vector.extract_strided_slice %301 {offsets = [0, 0], sizes = [8, 1], strides = [1, 1]} : vector<8x256xf32> to vector<8x1xf32>
    %352 = tpu.concatenate %350, %351 in 1 : vector<8x255xf32>, vector<8x1xf32> -> vector<8x256xf32>
    %353 = vector.extract_strided_slice %1 {offsets = [5, 0], sizes = [1, 256], strides = [1, 1]} : vector<9x256xf32> to vector<1x256xf32>
    %354 = vector.broadcast %353 : vector<1x256xf32> to vector<8x256xf32>
    %355 = arith.mulf %352, %354 : vector<8x256xf32>
    %c5_132 = arith.constant 5 : index
    %c0_133 = arith.constant 0 : index
    %c0_134 = arith.constant 0 : index
    %356 = vector.load %arg8[%c5_132, %c0_133, %c0_134] : memref<9x8x8xf32, #tpu.memory_space<vmem>>, vector<1x8x8xf32>
    %357 = vector.shape_cast %356 : vector<1x8x8xf32> to vector<8x8xf32>
    %cst_135 = arith.constant dense<0.000000e+00> : vector<8x256xf32>
    %358 = tpu.matmul %357, %355, %cst_135 {dimension_numbers = #tpu.dot_dimension_numbers<[1], [0], [0], [1], [0, 0, 1, 1], [], []>} : vector<8x8xf32>, vector<8x256xf32>, vector<8x256xf32> -> vector<8x256xf32>
    %359 = arith.addf %349, %358 : vector<8x256xf32>
    %360 = vector.extract_strided_slice %301 {offsets = [0, 13], sizes = [8, 243], strides = [1, 1]} : vector<8x256xf32> to vector<8x243xf32>
    %361 = vector.extract_strided_slice %301 {offsets = [0, 0], sizes = [8, 13], strides = [1, 1]} : vector<8x256xf32> to vector<8x13xf32>
    %362 = tpu.concatenate %360, %361 in 1 : vector<8x243xf32>, vector<8x13xf32> -> vector<8x256xf32>
    %363 = vector.extract_strided_slice %1 {offsets = [6, 0], sizes = [1, 256], strides = [1, 1]} : vector<9x256xf32> to vector<1x256xf32>
    %364 = vector.broadcast %363 : vector<1x256xf32> to vector<8x256xf32>
    %365 = arith.mulf %362, %364 : vector<8x256xf32>
    %c6_136 = arith.constant 6 : index
    %c0_137 = arith.constant 0 : index
    %c0_138 = arith.constant 0 : index
    %366 = vector.load %arg8[%c6_136, %c0_137, %c0_138] : memref<9x8x8xf32, #tpu.memory_space<vmem>>, vector<1x8x8xf32>
    %367 = vector.shape_cast %366 : vector<1x8x8xf32> to vector<8x8xf32>
    %cst_139 = arith.constant dense<0.000000e+00> : vector<8x256xf32>
    %368 = tpu.matmul %367, %365, %cst_139 {dimension_numbers = #tpu.dot_dimension_numbers<[1], [0], [0], [1], [0, 0, 1, 1], [], []>} : vector<8x8xf32>, vector<8x256xf32>, vector<8x256xf32> -> vector<8x256xf32>
    %369 = arith.addf %359, %368 : vector<8x256xf32>
    %370 = vector.extract_strided_slice %301 {offsets = [0, 14], sizes = [8, 242], strides = [1, 1]} : vector<8x256xf32> to vector<8x242xf32>
    %371 = vector.extract_strided_slice %301 {offsets = [0, 0], sizes = [8, 14], strides = [1, 1]} : vector<8x256xf32> to vector<8x14xf32>
    %372 = tpu.concatenate %370, %371 in 1 : vector<8x242xf32>, vector<8x14xf32> -> vector<8x256xf32>
    %373 = vector.extract_strided_slice %1 {offsets = [7, 0], sizes = [1, 256], strides = [1, 1]} : vector<9x256xf32> to vector<1x256xf32>
    %374 = vector.broadcast %373 : vector<1x256xf32> to vector<8x256xf32>
    %375 = arith.mulf %372, %374 : vector<8x256xf32>
    %c7_140 = arith.constant 7 : index
    %c0_141 = arith.constant 0 : index
    %c0_142 = arith.constant 0 : index
    %376 = vector.load %arg8[%c7_140, %c0_141, %c0_142] : memref<9x8x8xf32, #tpu.memory_space<vmem>>, vector<1x8x8xf32>
    %377 = vector.shape_cast %376 : vector<1x8x8xf32> to vector<8x8xf32>
    %cst_143 = arith.constant dense<0.000000e+00> : vector<8x256xf32>
    %378 = tpu.matmul %377, %375, %cst_143 {dimension_numbers = #tpu.dot_dimension_numbers<[1], [0], [0], [1], [0, 0, 1, 1], [], []>} : vector<8x8xf32>, vector<8x256xf32>, vector<8x256xf32> -> vector<8x256xf32>
    %379 = arith.addf %369, %378 : vector<8x256xf32>
    %380 = vector.extract_strided_slice %301 {offsets = [0, 15], sizes = [8, 241], strides = [1, 1]} : vector<8x256xf32> to vector<8x241xf32>
    %381 = vector.extract_strided_slice %301 {offsets = [0, 0], sizes = [8, 15], strides = [1, 1]} : vector<8x256xf32> to vector<8x15xf32>
    %382 = tpu.concatenate %380, %381 in 1 : vector<8x241xf32>, vector<8x15xf32> -> vector<8x256xf32>
    %383 = vector.extract_strided_slice %1 {offsets = [8, 0], sizes = [1, 256], strides = [1, 1]} : vector<9x256xf32> to vector<1x256xf32>
    %384 = vector.broadcast %383 : vector<1x256xf32> to vector<8x256xf32>
    %385 = arith.mulf %382, %384 : vector<8x256xf32>
    %c8_144 = arith.constant 8 : index
    %c0_145 = arith.constant 0 : index
    %c0_146 = arith.constant 0 : index
    %386 = vector.load %arg8[%c8_144, %c0_145, %c0_146] : memref<9x8x8xf32, #tpu.memory_space<vmem>>, vector<1x8x8xf32>
    %387 = vector.shape_cast %386 : vector<1x8x8xf32> to vector<8x8xf32>
    %cst_147 = arith.constant dense<0.000000e+00> : vector<8x256xf32>
    %388 = tpu.matmul %387, %385, %cst_147 {dimension_numbers = #tpu.dot_dimension_numbers<[1], [0], [0], [1], [0, 0, 1, 1], [], []>} : vector<8x8xf32>, vector<8x256xf32>, vector<8x256xf32> -> vector<8x256xf32>
    %389 = arith.addf %379, %388 : vector<8x256xf32>
    %c0_148 = arith.constant 0 : index
    %c0_149 = arith.constant 0 : index
    %390 = vector.load %arg9[%c0_148, %c0_149] : memref<8x1xf32, #tpu.memory_space<vmem>>, vector<8x1xf32>
    %391 = vector.broadcast %390 : vector<8x1xf32> to vector<8x256xf32>
    %392 = arith.addf %389, %391 : vector<8x256xf32>
    %cst_150 = arith.constant 0.000000e+00 : f32
    %393 = vector.broadcast %cst_150 : f32 to vector<8x256xf32>
    %394 = arith.maximumf %392, %393 : vector<8x256xf32>
    %395 = vector.extract_strided_slice %394 {offsets = [0, 1], sizes = [8, 255], strides = [1, 1]} : vector<8x256xf32> to vector<8x255xf32>
    %396 = vector.extract_strided_slice %394 {offsets = [0, 0], sizes = [8, 1], strides = [1, 1]} : vector<8x256xf32> to vector<8x1xf32>
    %397 = tpu.concatenate %395, %396 in 1 : vector<8x255xf32>, vector<8x1xf32> -> vector<8x256xf32>
    %398 = arith.maximumf %394, %397 : vector<8x256xf32>
    %399 = vector.extract_strided_slice %398 {offsets = [0, 14], sizes = [8, 242], strides = [1, 1]} : vector<8x256xf32> to vector<8x242xf32>
    %400 = vector.extract_strided_slice %398 {offsets = [0, 0], sizes = [8, 14], strides = [1, 1]} : vector<8x256xf32> to vector<8x14xf32>
    %401 = tpu.concatenate %399, %400 in 1 : vector<8x242xf32>, vector<8x14xf32> -> vector<8x256xf32>
    %402 = arith.maximumf %398, %401 : vector<8x256xf32>
    %c0_151 = arith.constant 0 : index
    %c0_152 = arith.constant 0 : index
    %403 = vector.load %arg15[%c0_151, %c0_152] : memref<256x128xf32, #tpu.memory_space<vmem>>, vector<256x128xf32>
    %cst_153 = arith.constant dense<0.000000e+00> : vector<8x128xf32>
    %404 = tpu.matmul %402, %403, %cst_153 {dimension_numbers = #tpu.dot_dimension_numbers<[1], [0], [0], [1], [0, 0, 1, 1], [], []>} : vector<8x256xf32>, vector<256x128xf32>, vector<8x128xf32> -> vector<8x128xf32>
    %c0_154 = arith.constant 0 : index
    %c0_155 = arith.constant 0 : index
    %405 = vector.load %arg11[%c0_154, %c0_155] : memref<1x128xf32, #tpu.memory_space<vmem>>, vector<1x128xf32>
    %406 = vector.extract_strided_slice %404 {offsets = [0, 0], sizes = [1, 128], strides = [1, 1]} : vector<8x128xf32> to vector<1x128xf32>
    %c0_156 = arith.constant 0 : index
    %c0_157 = arith.constant 0 : index
    %c0_158 = arith.constant 0 : index
    %407 = vector.load %arg10[%c0_156, %c0_157, %c0_158] : memref<8x128x128xf32, #tpu.memory_space<vmem>>, vector<1x128x128xf32>
    %408 = vector.shape_cast %407 : vector<1x128x128xf32> to vector<128x128xf32>
    %cst_159 = arith.constant dense<0.000000e+00> : vector<1x128xf32>
    %409 = tpu.matmul %406, %408, %cst_159 {dimension_numbers = #tpu.dot_dimension_numbers<[1], [0], [0], [1], [0, 0, 1, 1], [], []>} : vector<1x128xf32>, vector<128x128xf32>, vector<1x128xf32> -> vector<1x128xf32>
    %410 = arith.addf %405, %409 : vector<1x128xf32>
    %411 = vector.extract_strided_slice %404 {offsets = [1, 0], sizes = [1, 128], strides = [1, 1]} : vector<8x128xf32> to vector<1x128xf32>
    %c1_160 = arith.constant 1 : index
    %c0_161 = arith.constant 0 : index
    %c0_162 = arith.constant 0 : index
    %412 = vector.load %arg10[%c1_160, %c0_161, %c0_162] : memref<8x128x128xf32, #tpu.memory_space<vmem>>, vector<1x128x128xf32>
    %413 = vector.shape_cast %412 : vector<1x128x128xf32> to vector<128x128xf32>
    %cst_163 = arith.constant dense<0.000000e+00> : vector<1x128xf32>
    %414 = tpu.matmul %411, %413, %cst_163 {dimension_numbers = #tpu.dot_dimension_numbers<[1], [0], [0], [1], [0, 0, 1, 1], [], []>} : vector<1x128xf32>, vector<128x128xf32>, vector<1x128xf32> -> vector<1x128xf32>
    %415 = arith.addf %410, %414 : vector<1x128xf32>
    %416 = vector.extract_strided_slice %404 {offsets = [2, 0], sizes = [1, 128], strides = [1, 1]} : vector<8x128xf32> to vector<1x128xf32>
    %c2_164 = arith.constant 2 : index
    %c0_165 = arith.constant 0 : index
    %c0_166 = arith.constant 0 : index
    %417 = vector.load %arg10[%c2_164, %c0_165, %c0_166] : memref<8x128x128xf32, #tpu.memory_space<vmem>>, vector<1x128x128xf32>
    %418 = vector.shape_cast %417 : vector<1x128x128xf32> to vector<128x128xf32>
    %cst_167 = arith.constant dense<0.000000e+00> : vector<1x128xf32>
    %419 = tpu.matmul %416, %418, %cst_167 {dimension_numbers = #tpu.dot_dimension_numbers<[1], [0], [0], [1], [0, 0, 1, 1], [], []>} : vector<1x128xf32>, vector<128x128xf32>, vector<1x128xf32> -> vector<1x128xf32>
    %420 = arith.addf %415, %419 : vector<1x128xf32>
    %421 = vector.extract_strided_slice %404 {offsets = [3, 0], sizes = [1, 128], strides = [1, 1]} : vector<8x128xf32> to vector<1x128xf32>
    %c3_168 = arith.constant 3 : index
    %c0_169 = arith.constant 0 : index
    %c0_170 = arith.constant 0 : index
    %422 = vector.load %arg10[%c3_168, %c0_169, %c0_170] : memref<8x128x128xf32, #tpu.memory_space<vmem>>, vector<1x128x128xf32>
    %423 = vector.shape_cast %422 : vector<1x128x128xf32> to vector<128x128xf32>
    %cst_171 = arith.constant dense<0.000000e+00> : vector<1x128xf32>
    %424 = tpu.matmul %421, %423, %cst_171 {dimension_numbers = #tpu.dot_dimension_numbers<[1], [0], [0], [1], [0, 0, 1, 1], [], []>} : vector<1x128xf32>, vector<128x128xf32>, vector<1x128xf32> -> vector<1x128xf32>
    %425 = arith.addf %420, %424 : vector<1x128xf32>
    %426 = vector.extract_strided_slice %404 {offsets = [4, 0], sizes = [1, 128], strides = [1, 1]} : vector<8x128xf32> to vector<1x128xf32>
    %c4_172 = arith.constant 4 : index
    %c0_173 = arith.constant 0 : index
    %c0_174 = arith.constant 0 : index
    %427 = vector.load %arg10[%c4_172, %c0_173, %c0_174] : memref<8x128x128xf32, #tpu.memory_space<vmem>>, vector<1x128x128xf32>
    %428 = vector.shape_cast %427 : vector<1x128x128xf32> to vector<128x128xf32>
    %cst_175 = arith.constant dense<0.000000e+00> : vector<1x128xf32>
    %429 = tpu.matmul %426, %428, %cst_175 {dimension_numbers = #tpu.dot_dimension_numbers<[1], [0], [0], [1], [0, 0, 1, 1], [], []>} : vector<1x128xf32>, vector<128x128xf32>, vector<1x128xf32> -> vector<1x128xf32>
    %430 = arith.addf %425, %429 : vector<1x128xf32>
    %431 = vector.extract_strided_slice %404 {offsets = [5, 0], sizes = [1, 128], strides = [1, 1]} : vector<8x128xf32> to vector<1x128xf32>
    %c5_176 = arith.constant 5 : index
    %c0_177 = arith.constant 0 : index
    %c0_178 = arith.constant 0 : index
    %432 = vector.load %arg10[%c5_176, %c0_177, %c0_178] : memref<8x128x128xf32, #tpu.memory_space<vmem>>, vector<1x128x128xf32>
    %433 = vector.shape_cast %432 : vector<1x128x128xf32> to vector<128x128xf32>
    %cst_179 = arith.constant dense<0.000000e+00> : vector<1x128xf32>
    %434 = tpu.matmul %431, %433, %cst_179 {dimension_numbers = #tpu.dot_dimension_numbers<[1], [0], [0], [1], [0, 0, 1, 1], [], []>} : vector<1x128xf32>, vector<128x128xf32>, vector<1x128xf32> -> vector<1x128xf32>
    %435 = arith.addf %430, %434 : vector<1x128xf32>
    %436 = vector.extract_strided_slice %404 {offsets = [6, 0], sizes = [1, 128], strides = [1, 1]} : vector<8x128xf32> to vector<1x128xf32>
    %c6_180 = arith.constant 6 : index
    %c0_181 = arith.constant 0 : index
    %c0_182 = arith.constant 0 : index
    %437 = vector.load %arg10[%c6_180, %c0_181, %c0_182] : memref<8x128x128xf32, #tpu.memory_space<vmem>>, vector<1x128x128xf32>
    %438 = vector.shape_cast %437 : vector<1x128x128xf32> to vector<128x128xf32>
    %cst_183 = arith.constant dense<0.000000e+00> : vector<1x128xf32>
    %439 = tpu.matmul %436, %438, %cst_183 {dimension_numbers = #tpu.dot_dimension_numbers<[1], [0], [0], [1], [0, 0, 1, 1], [], []>} : vector<1x128xf32>, vector<128x128xf32>, vector<1x128xf32> -> vector<1x128xf32>
    %440 = arith.addf %435, %439 : vector<1x128xf32>
    %441 = vector.extract_strided_slice %404 {offsets = [7, 0], sizes = [1, 128], strides = [1, 1]} : vector<8x128xf32> to vector<1x128xf32>
    %c7_184 = arith.constant 7 : index
    %c0_185 = arith.constant 0 : index
    %c0_186 = arith.constant 0 : index
    %442 = vector.load %arg10[%c7_184, %c0_185, %c0_186] : memref<8x128x128xf32, #tpu.memory_space<vmem>>, vector<1x128x128xf32>
    %443 = vector.shape_cast %442 : vector<1x128x128xf32> to vector<128x128xf32>
    %cst_187 = arith.constant dense<0.000000e+00> : vector<1x128xf32>
    %444 = tpu.matmul %441, %443, %cst_187 {dimension_numbers = #tpu.dot_dimension_numbers<[1], [0], [0], [1], [0, 0, 1, 1], [], []>} : vector<1x128xf32>, vector<128x128xf32>, vector<1x128xf32> -> vector<1x128xf32>
    %445 = arith.addf %440, %444 : vector<1x128xf32>
    %c0_188 = arith.constant 0 : index
    %c0_189 = arith.constant 0 : index
    %c0_190 = arith.constant 0 : index
    %446 = vector.load %arg16[%c0_188, %c0_189, %c0_190] : memref<1x1x128xf32, #tpu.memory_space<vmem>>, vector<1x1x128xf32>
    %447 = vector.shape_cast %446 : vector<1x1x128xf32> to vector<1x128xf32>
    %448 = vector.shape_cast %445 : vector<1x128xf32> to vector<1x1x128xf32>
    tpu.vector_store %arg16[%c0_188, %c0_189, %c0_190], %448 {strides = array<i32>} : memref<1x1x128xf32, #tpu.memory_space<vmem>>, vector<1x1x128xf32>,
    return
  }
  func.func @transform_0(%arg0: i32) -> (i32, i32, i32) {
    %c0_i32 = arith.constant 0 : i32
    %c0_i32_0 = arith.constant 0 : i32
    %c0_i32_1 = arith.constant 0 : i32
    return %arg0, %c0_i32, %c0_i32_0 : i32, i32, i32
  }
  func.func @transform_1(%arg0: i32) -> (i32, i32, i32) {
    %c0_i32 = arith.constant 0 : i32
    %c0_i32_0 = arith.constant 0 : i32
    %c0_i32_1 = arith.constant 0 : i32
    %c0_i32_2 = arith.constant 0 : i32
    return %c0_i32, %c0_i32_0, %c0_i32_1 : i32, i32, i32
  }
  func.func @transform_2(%arg0: i32) -> (i32, i32) {
    %c0_i32 = arith.constant 0 : i32
    %c0_i32_0 = arith.constant 0 : i32
    %c0_i32_1 = arith.constant 0 : i32
    return %c0_i32, %c0_i32_0 : i32, i32
  }
  func.func @transform_3(%arg0: i32) -> (i32, i32, i32) {
    %c0_i32 = arith.constant 0 : i32
    %c0_i32_0 = arith.constant 0 : i32
    %c0_i32_1 = arith.constant 0 : i32
    %c0_i32_2 = arith.constant 0 : i32
    return %c0_i32, %c0_i32_0, %c0_i32_1 : i32, i32, i32
  }
  func.func @transform_4(%arg0: i32) -> (i32, i32) {
    %c0_i32 = arith.constant 0 : i32
    %c0_i32_0 = arith.constant 0 : i32
    %c0_i32_1 = arith.constant 0 : i32
    return %c0_i32, %c0_i32_0 : i32, i32
  }
  func.func @transform_5(%arg0: i32) -> (i32, i32, i32) {
    %c0_i32 = arith.constant 0 : i32
    %c0_i32_0 = arith.constant 0 : i32
    %c0_i32_1 = arith.constant 0 : i32
    %c0_i32_2 = arith.constant 0 : i32
    return %c0_i32, %c0_i32_0, %c0_i32_1 : i32, i32, i32
  }
  func.func @transform_6(%arg0: i32) -> (i32, i32) {
    %c0_i32 = arith.constant 0 : i32
    %c0_i32_0 = arith.constant 0 : i32
    %c0_i32_1 = arith.constant 0 : i32
    return %c0_i32, %c0_i32_0 : i32, i32
  }
  func.func @transform_7(%arg0: i32) -> (i32, i32, i32) {
    %c0_i32 = arith.constant 0 : i32
    %c0_i32_0 = arith.constant 0 : i32
    %c0_i32_1 = arith.constant 0 : i32
    %c0_i32_2 = arith.constant 0 : i32
    return %c0_i32, %c0_i32_0, %c0_i32_1 : i32, i32, i32
  }
  func.func @transform_8(%arg0: i32) -> (i32, i32) {
    %c0_i32 = arith.constant 0 : i32
    %c0_i32_0 = arith.constant 0 : i32
    %c0_i32_1 = arith.constant 0 : i32
    return %c0_i32, %c0_i32_0 : i32, i32
  }
  func.func @transform_9(%arg0: i32) -> (i32, i32, i32) {
    %c0_i32 = arith.constant 0 : i32
    %c0_i32_0 = arith.constant 0 : i32
    %c0_i32_1 = arith.constant 0 : i32
    %c0_i32_2 = arith.constant 0 : i32
    return %c0_i32, %c0_i32_0, %c0_i32_1 : i32, i32, i32
  }
  func.func @transform_10(%arg0: i32) -> (i32, i32) {
    %c0_i32 = arith.constant 0 : i32
    %c0_i32_0 = arith.constant 0 : i32
    %c0_i32_1 = arith.constant 0 : i32
    return %c0_i32, %c0_i32_0 : i32, i32
  }
  func.func @transform_11(%arg0: i32) -> (i32, i32) {
    %c0_i32 = arith.constant 0 : i32
    %c0_i32_0 = arith.constant 0 : i32
    %c0_i32_1 = arith.constant 0 : i32
    return %c0_i32, %c0_i32_0 : i32, i32
  }
  func.func @transform_12(%arg0: i32) -> (i32, i32) {
    %c0_i32 = arith.constant 0 : i32
    %c0_i32_0 = arith.constant 0 : i32
    %c0_i32_1 = arith.constant 0 : i32
    return %c0_i32, %c0_i32_0 : i32, i32
  }
  func.func @transform_13(%arg0: i32) -> (i32, i32) {
    %c0_i32 = arith.constant 0 : i32
    %c0_i32_0 = arith.constant 0 : i32
    %c0_i32_1 = arith.constant 0 : i32
    return %c0_i32, %c0_i32_0 : i32, i32
  }
  func.func @transform_14(%arg0: i32) -> (i32, i32) {
    %c0_i32 = arith.constant 0 : i32
    %c0_i32_0 = arith.constant 0 : i32
    %c0_i32_1 = arith.constant 0 : i32
    return %c0_i32, %c0_i32_0 : i32, i32
  }
  func.func @transform_15(%arg0: i32) -> (i32, i32, i32) {
    %c0_i32 = arith.constant 0 : i32
    %c0_i32_0 = arith.constant 0 : i32
    %c0_i32_1 = arith.constant 0 : i32
    return %arg0, %c0_i32, %c0_i32_0 : i32, i32, i32
  }
}

</mosaic_0001>

<llo_original>
// kernel: fashion_mnist_v2_forward.1
$region0: #{fashion_mnist_v2_forward.1}
  #allocation0 [shape = 'u32[]', space=smem, size = 0x4, offset = 0x4, fixed_abs, tag = 'smem constant byte address 0x4 - core index']
  #allocation1 [shape = 'u32[144,128]{1,0:T(1,128)}', space=vmem, size = 0x12000, scoped, tag = 'internal scratch']
  %s0 = inlined_call_operand.vmem [shape: f32[2,1,896], index: 0, kind: input, shape index: {}]
  %s1 = inlined_call_operand.vmem [shape: f32[9,8,1], index: 1, kind: input, shape index: {}]
  %s2 = inlined_call_operand.vmem [shape: f32[8,1], index: 2, kind: input, shape index: {}]
  %s3 = inlined_call_operand.vmem [shape: f32[9,8,8], index: 3, kind: input, shape index: {}]
  %s4 = inlined_call_operand.vmem [shape: f32[8,1], index: 4, kind: input, shape index: {}]
  %s5 = inlined_call_operand.vmem [shape: f32[9,8,8], index: 5, kind: input, shape index: {}]
  %s6 = inlined_call_operand.vmem [shape: f32[8,1], index: 6, kind: input, shape index: {}]
  %s7 = inlined_call_operand.vmem [shape: f32[9,8,8], index: 7, kind: input, shape index: {}]
  %s8 = inlined_call_operand.vmem [shape: f32[8,1], index: 8, kind: input, shape index: {}]
  %s9 = inlined_call_operand.hbm [shape: f32[8,128,128], index: 9, kind: input, shape index: {}]
  %s10 = inlined_call_operand.vmem [shape: f32[1,128], index: 10, kind: input, shape index: {}]
  %s11 = inlined_call_operand.vmem [shape: f32[9,896], index: 11, kind: input, shape index: {}]
  %s12 = inlined_call_operand.vmem [shape: f32[9,256], index: 12, kind: input, shape index: {}]
  %s13 = inlined_call_operand.hbm [shape: f32[896,256], index: 13, kind: input, shape index: {}]
  %s14 = inlined_call_operand.vmem [shape: f32[256,128], index: 14, kind: input, shape index: {}]
  %s15 = inlined_call_operand.hbm [shape: f32[2,1,128], index: 15, kind: output, shape index: {}]
  %s16 = sld [smem:[#allocation0]]
  $region101: #{fashion_mnist_v2_forward.1} parent=0
    _
  %s18 = ssub.s32 1, %s16
  %s19 = scalar_select 0, %s18, %s16
  $region1: #{fashion_mnist_v2_forward.1} parent=0
    #allocation2 [shape = 'u8[524288]{0}', space=vmem, size = 0x80000, scoped, tag = 'input window, operand 9, single buffered']
    #allocation3 [shape = 's32[2]{0}', space=sflag, size = 0x8, scoped, tag = 'scoped memory for fashion_mnist_v2_forward.1']
    #allocation4 [shape = 's32[2]{0}', space=sflag, size = 0x8, scoped, tag = 'scoped memory for fashion_mnist_v2_forward.1']
    #allocation5 [shape = 'u8[917504]{0}', space=vmem, size = 0xe0000, scoped, tag = 'input window, operand 13, single buffered']
    #allocation6 [shape = 's32[1]{0}', space=sflag, size = 0x4, scoped, tag = 'scoped memory for fashion_mnist_v2_forward.1']
    #allocation7 [shape = 'u8[1024]{0}', space=vmem, size = 0x400, scoped, tag = 'output window, operand 0']
    %20 = vsyncpa [#allocation3], 0
    %21 = vsyncpa [#allocation6], 0
    %22 = vsyncpa [#allocation4], 0
    %s23 = scalar_lea.sflag [#allocation4], 1
    %24 = vsyncpa %s23, 0
    loop: start=0, step=1, limit=4
    $region2: #{fashion_mnist_v2_forward.1} parent=1 // loop_pre_header
      _
    $region3: #{fashion_mnist_v2_forward.1} parent=1 // loop_header
      %s26 = sphi 0, %s30
      %p27 = scmp.ge.s32.totalorder %s26, 4
      %s36 = sphi 0, %s38
      %s39 = sphi 0, %s36
      %s40 = sphi 0, %s39
      %s56 = sphi 0, %s40
      %s60 = sphi 0, %s60
      %s62 = sphi 0, %s60
      %s63 = sphi 0, %s62
      %s77 = sphi 0, %s63
      %s81 = sphi 0, %s81
      %s83 = sphi 0, %s81
      %s84 = sphi 0, %s83
      %s98 = sphi 0, %s84
      %s102 = sphi 0, %s102
      %s104 = sphi 0, %s102
      %s105 = sphi 0, %s104
      %s119 = sphi 0, %s105
      %s123 = sphi 0, %s123
      %s125 = sphi 0, %s123
      %s126 = sphi 0, %s125
      %s140 = sphi 0, %s126
      %s144 = sphi 0, %s144
      %s146 = sphi 0, %s144
      %s147 = sphi 0, %s146
      %s161 = sphi 0, %s147
      %s165 = sphi 0, %s165
      %s167 = sphi 0, %s165
      %s168 = sphi 0, %s167
      %s182 = sphi 0, %s168
      %s186 = sphi 0, %s186
      %s188 = sphi 0, %s186
      %s189 = sphi 0, %s188
      %s203 = sphi 0, %s189
      %s207 = sphi 0, %s207
      %s209 = sphi 0, %s207
      %s210 = sphi 0, %s209
      %s224 = sphi 0, %s210
      %s228 = sphi 0, %s228
      %s230 = sphi 0, %s228
      %s231 = sphi 0, %s230
      %s245 = sphi 0, %s231
      %s249 = sphi 0, %s249
      %s251 = sphi 0, %s249
      %s252 = sphi 0, %s251
      %s266 = sphi 0, %s252
      %s270 = sphi 0, %s270
      %s272 = sphi 0, %s270
      %s273 = sphi 0, %s272
      %s287 = sphi 0, %s273
      %s291 = sphi 0, %s291
      %s293 = sphi 0, %s291
      %s294 = sphi 0, %s293
      %s308 = sphi 0, %s294
      %s312 = sphi 0, %s312
      %s314 = sphi 0, %s312
      %s315 = sphi 0, %s314
      %s329 = sphi 0, %s315
      %s333 = sphi 0, %s333
      %s335 = sphi 0, %s333
      %s336 = sphi 0, %s335
      %s350 = sphi 0, %s336
      %s356 = sphi 0, %s358
      %s359 = sphi 0, %s356
      %s360 = sphi 0, %s359
      %s376 = sphi 0, %s360
    $region4: #{fashion_mnist_v2_forward.1} parent=1 // loop_header_branch
      %29 = sbr.rel (%p27) target = $region8
    $region5: #{fashion_mnist_v2_forward.1} parent=1 // loop_body
      %s31 = ssub.s32 %s26, 1
      %s32 = ssub.s32 %s26, 2
      %s33 = sadd.s32 %s26, 1
      %s34 = ssub.s32 %s26, %s33
      %p35 = scmp.eq.s32.totalorder %s34, 0
      %s37 = sadd.s32 %s36, 1
      %s38 = scalar_select %p35, %s36, %s37
      %p41 = pneg %p35
      %p42 = scmp.eq.s32.totalorder %s26, 1
      %p43 = por %p41, %p42
      %p44 = scmp.ne.s32.totalorder %s36, %s39
      %p45 = scmp.eq.s32.totalorder %s26, 0
      %p46 = por %p44, %p45
      %p47 = scmp.ne.s32.totalorder %s36, %s39
      %p48 = scmp.eq.s32.totalorder %s31, 1
      %p49 = por %p47, %p48
      %p50 = scmp.ne.s32.totalorder %s39, %s40
      %p51 = scmp.eq.s32.totalorder %s31, 0
      %p52 = por %p50, %p51
      %p53 = scmp.ne.s32.totalorder %s39, %s40
      %p54 = scmp.eq.s32.totalorder %s32, 1
      %p55 = por %p53, %p54
      %p57 = scmp.ne.s32.totalorder %s40, %s56
      %p58 = scmp.eq.s32.totalorder %s32, 0
      %p59 = por %p57, %p58
      %s61 = sadd.s32 %s60, 1
      %p64 = scmp.eq.s32.totalorder %s26, 1
      %p65 = scmp.ne.s32.totalorder %s60, %s62
      %p66 = scmp.eq.s32.totalorder %s26, 0
      %p67 = por %p65, %p66
      %p68 = scmp.ne.s32.totalorder %s60, %s62
      %p69 = scmp.eq.s32.totalorder %s31, 1
      %p70 = por %p68, %p69
      %p71 = scmp.ne.s32.totalorder %s62, %s63
      %p72 = scmp.eq.s32.totalorder %s31, 0
      %p73 = por %p71, %p72
      %p74 = scmp.ne.s32.totalorder %s62, %s63
      %p75 = scmp.eq.s32.totalorder %s32, 1
      %p76 = por %p74, %p75
      %p78 = scmp.ne.s32.totalorder %s63, %s77
      %p79 = scmp.eq.s32.totalorder %s32, 0
      %p80 = por %p78, %p79
      %s82 = sadd.s32 %s81, 1
      %p85 = scmp.eq.s32.totalorder %s26, 1
      %p86 = scmp.ne.s32.totalorder %s81, %s83
      %p87 = scmp.eq.s32.totalorder %s26, 0
      %p88 = por %p86, %p87
      %p89 = scmp.ne.s32.totalorder %s81, %s83
      %p90 = scmp.eq.s32.totalorder %s31, 1
      %p91 = por %p89, %p90
      %p92 = scmp.ne.s32.totalorder %s83, %s84
      %p93 = scmp.eq.s32.totalorder %s31, 0
      %p94 = por %p92, %p93
      %p95 = scmp.ne.s32.totalorder %s83, %s84
      %p96 = scmp.eq.s32.totalorder %s32, 1
      %p97 = por %p95, %p96
      %p99 = scmp.ne.s32.totalorder %s84, %s98
      %p100 = scmp.eq.s32.totalorder %s32, 0
      %p101 = por %p99, %p100
      %s103 = sadd.s32 %s102, 1
      %p106 = scmp.eq.s32.totalorder %s26, 1
      %p107 = scmp.ne.s32.totalorder %s102, %s104
      %p108 = scmp.eq.s32.totalorder %s26, 0
      %p109 = por %p107, %p108
      %p110 = scmp.ne.s32.totalorder %s102, %s104
      %p111 = scmp.eq.s32.totalorder %s31, 1
      %p112 = por %p110, %p111
      %p113 = scmp.ne.s32.totalorder %s104, %s105
      %p114 = scmp.eq.s32.totalorder %s31, 0
      %p115 = por %p113, %p114
      %p116 = scmp.ne.s32.totalorder %s104, %s105
      %p117 = scmp.eq.s32.totalorder %s32, 1
      %p118 = por %p116, %p117
      %p120 = scmp.ne.s32.totalorder %s105, %s119
      %p121 = scmp.eq.s32.totalorder %s32, 0
      %p122 = por %p120, %p121
      %s124 = sadd.s32 %s123, 1
      %p127 = scmp.eq.s32.totalorder %s26, 1
      %p128 = scmp.ne.s32.totalorder %s123, %s125
      %p129 = scmp.eq.s32.totalorder %s26, 0
      %p130 = por %p128, %p129
      %p131 = scmp.ne.s32.totalorder %s123, %s125
      %p132 = scmp.eq.s32.totalorder %s31, 1
      %p133 = por %p131, %p132
      %p134 = scmp.ne.s32.totalorder %s125, %s126
      %p135 = scmp.eq.s32.totalorder %s31, 0
      %p136 = por %p134, %p135
      %p137 = scmp.ne.s32.totalorder %s125, %s126
      %p138 = scmp.eq.s32.totalorder %s32, 1
      %p139 = por %p137, %p138
      %p141 = scmp.ne.s32.totalorder %s126, %s140
      %p142 = scmp.eq.s32.totalorder %s32, 0
      %p143 = por %p141, %p142
      %s145 = sadd.s32 %s144, 1
      %p148 = scmp.eq.s32.totalorder %s26, 1
      %p149 = scmp.ne.s32.totalorder %s144, %s146
      %p150 = scmp.eq.s32.totalorder %s26, 0
      %p151 = por %p149, %p150
      %p152 = scmp.ne.s32.totalorder %s144, %s146
      %p153 = scmp.eq.s32.totalorder %s31, 1
      %p154 = por %p152, %p153
      %p155 = scmp.ne.s32.totalorder %s146, %s147
      %p156 = scmp.eq.s32.totalorder %s31, 0
      %p157 = por %p155, %p156
      %p158 = scmp.ne.s32.totalorder %s146, %s147
      %p159 = scmp.eq.s32.totalorder %s32, 1
      %p160 = por %p158, %p159
      %p162 = scmp.ne.s32.totalorder %s147, %s161
      %p163 = scmp.eq.s32.totalorder %s32, 0
      %p164 = por %p162, %p163
      %s166 = sadd.s32 %s165, 1
      %p169 = scmp.eq.s32.totalorder %s26, 1
      %p170 = scmp.ne.s32.totalorder %s165, %s167
      %p171 = scmp.eq.s32.totalorder %s26, 0
      %p172 = por %p170, %p171
      %p173 = scmp.ne.s32.totalorder %s165, %s167
      %p174 = scmp.eq.s32.totalorder %s31, 1
      %p175 = por %p173, %p174
      %p176 = scmp.ne.s32.totalorder %s167, %s168
      %p177 = scmp.eq.s32.totalorder %s31, 0
      %p178 = por %p176, %p177
      %p179 = scmp.ne.s32.totalorder %s167, %s168
      %p180 = scmp.eq.s32.totalorder %s32, 1
      %p181 = por %p179, %p180
      %p183 = scmp.ne.s32.totalorder %s168, %s182
      %p184 = scmp.eq.s32.totalorder %s32, 0
      %p185 = por %p183, %p184
      %s187 = sadd.s32 %s186, 1
      %p190 = scmp.eq.s32.totalorder %s26, 1
      %p191 = scmp.ne.s32.totalorder %s186, %s188
      %p192 = scmp.eq.s32.totalorder %s26, 0
      %p193 = por %p191, %p192
      %p194 = scmp.ne.s32.totalorder %s186, %s188
      %p195 = scmp.eq.s32.totalorder %s31, 1
      %p196 = por %p194, %p195
      %p197 = scmp.ne.s32.totalorder %s188, %s189
      %p198 = scmp.eq.s32.totalorder %s31, 0
      %p199 = por %p197, %p198
      %p200 = scmp.ne.s32.totalorder %s188, %s189
      %p201 = scmp.eq.s32.totalorder %s32, 1
      %p202 = por %p200, %p201
      %p204 = scmp.ne.s32.totalorder %s189, %s203
      %p205 = scmp.eq.s32.totalorder %s32, 0
      %p206 = por %p204, %p205
      %s208 = sadd.s32 %s207, 1
      %p211 = scmp.eq.s32.totalorder %s26, 1
      %p212 = scmp.ne.s32.totalorder %s207, %s209
      %p213 = scmp.eq.s32.totalorder %s26, 0
      %p214 = por %p212, %p213
      %p215 = scmp.ne.s32.totalorder %s207, %s209
      %p216 = scmp.eq.s32.totalorder %s31, 1
      %p217 = por %p215, %p216
      %p218 = scmp.ne.s32.totalorder %s209, %s210
      %p219 = scmp.eq.s32.totalorder %s31, 0
      %p220 = por %p218, %p219
      %p221 = scmp.ne.s32.totalorder %s209, %s210
      %p222 = scmp.eq.s32.totalorder %s32, 1
      %p223 = por %p221, %p222
      %p225 = scmp.ne.s32.totalorder %s210, %s224
      %p226 = scmp.eq.s32.totalorder %s32, 0
      %p227 = por %p225, %p226
      %s229 = sadd.s32 %s228, 1
      %p232 = scmp.eq.s32.totalorder %s26, 1
      %p233 = scmp.ne.s32.totalorder %s228, %s230
      %p234 = scmp.eq.s32.totalorder %s26, 0
      %p235 = por %p233, %p234
      %p236 = scmp.ne.s32.totalorder %s228, %s230
      %p237 = scmp.eq.s32.totalorder %s31, 1
      %p238 = por %p236, %p237
      %p239 = scmp.ne.s32.totalorder %s230, %s231
      %p240 = scmp.eq.s32.totalorder %s31, 0
      %p241 = por %p239, %p240
      %p242 = scmp.ne.s32.totalorder %s230, %s231
      %p243 = scmp.eq.s32.totalorder %s32, 1
      %p244 = por %p242, %p243
      %p246 = scmp.ne.s32.totalorder %s231, %s245
      %p247 = scmp.eq.s32.totalorder %s32, 0
      %p248 = por %p246, %p247
      %s250 = sadd.s32 %s249, 1
      %p253 = scmp.eq.s32.totalorder %s26, 1
      %p254 = scmp.ne.s32.totalorder %s249, %s251
      %p255 = scmp.eq.s32.totalorder %s26, 0
      %p256 = por %p254, %p255
      %p257 = scmp.ne.s32.totalorder %s249, %s251
      %p258 = scmp.eq.s32.totalorder %s31, 1
      %p259 = por %p257, %p258
      %p260 = scmp.ne.s32.totalorder %s251, %s252
      %p261 = scmp.eq.s32.totalorder %s31, 0
      %p262 = por %p260, %p261
      %p263 = scmp.ne.s32.totalorder %s251, %s252
      %p264 = scmp.eq.s32.totalorder %s32, 1
      %p265 = por %p263, %p264
      %p267 = scmp.ne.s32.totalorder %s252, %s266
      %p268 = scmp.eq.s32.totalorder %s32, 0
      %p269 = por %p267, %p268
      %s271 = sadd.s32 %s270, 1
      %p274 = scmp.eq.s32.totalorder %s26, 1
      %p275 = scmp.ne.s32.totalorder %s270, %s272
      %p276 = scmp.eq.s32.totalorder %s26, 0
      %p277 = por %p275, %p276
      %p278 = scmp.ne.s32.totalorder %s270, %s272
      %p279 = scmp.eq.s32.totalorder %s31, 1
      %p280 = por %p278, %p279
      %p281 = scmp.ne.s32.totalorder %s272, %s273
      %p282 = scmp.eq.s32.totalorder %s31, 0
      %p283 = por %p281, %p282
      %p284 = scmp.ne.s32.totalorder %s272, %s273
      %p285 = scmp.eq.s32.totalorder %s32, 1
      %p286 = por %p284, %p285
      %p288 = scmp.ne.s32.totalorder %s273, %s287
      %p289 = scmp.eq.s32.totalorder %s32, 0
      %p290 = por %p288, %p289
      %s292 = sadd.s32 %s291, 1
      %p295 = scmp.eq.s32.totalorder %s26, 1
      %p296 = scmp.ne.s32.totalorder %s291, %s293
      %p297 = scmp.eq.s32.totalorder %s26, 0
      %p298 = por %p296, %p297
      %p299 = scmp.ne.s32.totalorder %s291, %s293
      %p300 = scmp.eq.s32.totalorder %s31, 1
      %p301 = por %p299, %p300
      %p302 = scmp.ne.s32.totalorder %s293, %s294
      %p303 = scmp.eq.s32.totalorder %s31, 0
      %p304 = por %p302, %p303
      %p305 = scmp.ne.s32.totalorder %s293, %s294
      %p306 = scmp.eq.s32.totalorder %s32, 1
      %p307 = por %p305, %p306
      %p309 = scmp.ne.s32.totalorder %s294, %s308
      %p310 = scmp.eq.s32.totalorder %s32, 0
      %p311 = por %p309, %p310
      %s313 = sadd.s32 %s312, 1
      %p316 = scmp.eq.s32.totalorder %s26, 1
      %p317 = scmp.ne.s32.totalorder %s312, %s314
      %p318 = scmp.eq.s32.totalorder %s26, 0
      %p319 = por %p317, %p318
      %p320 = scmp.ne.s32.totalorder %s312, %s314
      %p321 = scmp.eq.s32.totalorder %s31, 1
      %p322 = por %p320, %p321
      %p323 = scmp.ne.s32.totalorder %s314, %s315
      %p324 = scmp.eq.s32.totalorder %s31, 0
      %p325 = por %p323, %p324
      %p326 = scmp.ne.s32.totalorder %s314, %s315
      %p327 = scmp.eq.s32.totalorder %s32, 1
      %p328 = por %p326, %p327
      %p330 = scmp.ne.s32.totalorder %s315, %s329
      %p331 = scmp.eq.s32.totalorder %s32, 0
      %p332 = por %p330, %p331
      %s334 = sadd.s32 %s333, 1
      %p337 = scmp.eq.s32.totalorder %s26, 1
      %p338 = scmp.ne.s32.totalorder %s333, %s335
      %p339 = scmp.eq.s32.totalorder %s26, 0
      %p340 = por %p338, %p339
      %p341 = scmp.ne.s32.totalorder %s333, %s335
      %p342 = scmp.eq.s32.totalorder %s31, 1
      %p343 = por %p341, %p342
      %p344 = scmp.ne.s32.totalorder %s335, %s336
      %p345 = scmp.eq.s32.totalorder %s31, 0
      %p346 = por %p344, %p345
      %p347 = scmp.ne.s32.totalorder %s335, %s336
      %p348 = scmp.eq.s32.totalorder %s32, 1
      %p349 = por %p347, %p348
      %p351 = scmp.ne.s32.totalorder %s336, %s350
      %p352 = scmp.eq.s32.totalorder %s32, 0
      %p353 = por %p351, %p352
      %s354 = ssub.s32 %s26, %s33
      %p355 = scmp.eq.s32.totalorder %s354, 0
      %s357 = sadd.s32 %s356, 1
      %s358 = scalar_select %p355, %s356, %s357
      %p361 = pneg %p355
      %p362 = scmp.eq.s32.totalorder %s26, 1
      %p363 = por %p361, %p362
      %p364 = scmp.ne.s32.totalorder %s356, %s359
      %p365 = scmp.eq.s32.totalorder %s26, 0
      %p366 = por %p364, %p365
      %p367 = scmp.ne.s32.totalorder %s356, %s359
      %p368 = scmp.eq.s32.totalorder %s31, 1
      %p369 = por %p367, %p368
      %p370 = scmp.ne.s32.totalorder %s359, %s360
      %p371 = scmp.eq.s32.totalorder %s31, 0
      %p372 = por %p370, %p371
      %p373 = scmp.ne.s32.totalorder %s359, %s360
      %p374 = scmp.eq.s32.totalorder %s32, 1
      %p375 = por %p373, %p374
      %p377 = scmp.ne.s32.totalorder %s360, %s376
      %p378 = scmp.eq.s32.totalorder %s32, 0
      %p379 = por %p377, %p378
      %p380 = scmp.le.s32.totalorder 1, %s26
      %p381 = scmp.lt.s32.totalorder %s26, 3
      %p382 = pnand %p380, %p381
      %p383 = pneg %p382
      // Predicated region
      $region9: #{fashion_mnist_v2_forward.1} parent=5 // pred_check
        _
      $region10: #{fashion_mnist_v2_forward.1} parent=5 // pred_check_branch
        %385 = sbr.rel (%p382) target = $region12
      $region11: #{fashion_mnist_v2_forward.1} parent=5 // pred_region
        %s386 = ssub.s32 %s26, 1
        // Predicated region
        $region13: #{fashion_mnist_v2_forward.1} parent=11 // pred_check
          %p387 = pneg %p73
        $region14: #{fashion_mnist_v2_forward.1} parent=11 // pred_check_branch
          %389 = sbr.rel (%p387) target = $region16
        $region15: #{fashion_mnist_v2_forward.1} parent=11 // pred_region
          _
        $region16: #{fashion_mnist_v2_forward.1} parent=11 // pred_fallthru
          _
        // Predicated region
        $region17: #{fashion_mnist_v2_forward.1} parent=11 // pred_check
          %p390 = pneg %p94
        $region18: #{fashion_mnist_v2_forward.1} parent=11 // pred_check_branch
          %392 = sbr.rel (%p390) target = $region20
        $region19: #{fashion_mnist_v2_forward.1} parent=11 // pred_region
          _
        $region20: #{fashion_mnist_v2_forward.1} parent=11 // pred_fallthru
          _
        // Predicated region
        $region21: #{fashion_mnist_v2_forward.1} parent=11 // pred_check
          %p393 = pneg %p115
        $region22: #{fashion_mnist_v2_forward.1} parent=11 // pred_check_branch
          %395 = sbr.rel (%p393) target = $region24
        $region23: #{fashion_mnist_v2_forward.1} parent=11 // pred_region
          _
        $region24: #{fashion_mnist_v2_forward.1} parent=11 // pred_fallthru
          _
        // Predicated region
        $region25: #{fashion_mnist_v2_forward.1} parent=11 // pred_check
          %p396 = pneg %p136
        $region26: #{fashion_mnist_v2_forward.1} parent=11 // pred_check_branch
          %398 = sbr.rel (%p396) target = $region28
        $region27: #{fashion_mnist_v2_forward.1} parent=11 // pred_region
          _
        $region28: #{fashion_mnist_v2_forward.1} parent=11 // pred_fallthru
          _
        // Predicated region
        $region29: #{fashion_mnist_v2_forward.1} parent=11 // pred_check
          %p399 = pneg %p157
        $region30: #{fashion_mnist_v2_forward.1} parent=11 // pred_check_branch
          %401 = sbr.rel (%p399) target = $region32
        $region31: #{fashion_mnist_v2_forward.1} parent=11 // pred_region
          _
        $region32: #{fashion_mnist_v2_forward.1} parent=11 // pred_fallthru
          _
        // Predicated region
        $region33: #{fashion_mnist_v2_forward.1} parent=11 // pred_check
          %p402 = pneg %p178
        $region34: #{fashion_mnist_v2_forward.1} parent=11 // pred_check_branch
          %404 = sbr.rel (%p402) target = $region36
        $region35: #{fashion_mnist_v2_forward.1} parent=11 // pred_region
          _
        $region36: #{fashion_mnist_v2_forward.1} parent=11 // pred_fallthru
          _
        // Predicated region
        $region37: #{fashion_mnist_v2_forward.1} parent=11 // pred_check
          %p405 = pneg %p199
        $region38: #{fashion_mnist_v2_forward.1} parent=11 // pred_check_branch
          %407 = sbr.rel (%p405) target = $region40
        $region39: #{fashion_mnist_v2_forward.1} parent=11 // pred_region
          _
        $region40: #{fashion_mnist_v2_forward.1} parent=11 // pred_fallthru
          _
        // Predicated region
        $region41: #{fashion_mnist_v2_forward.1} parent=11 // pred_check
          %p408 = pneg %p220
        $region42: #{fashion_mnist_v2_forward.1} parent=11 // pred_check_branch
          %410 = sbr.rel (%p408) target = $region44
        $region43: #{fashion_mnist_v2_forward.1} parent=11 // pred_region
          _
        $region44: #{fashion_mnist_v2_forward.1} parent=11 // pred_fallthru
          _
        // Predicated region
        $region45: #{fashion_mnist_v2_forward.1} parent=11 // pred_check
          %p411 = pneg %p241
        $region46: #{fashion_mnist_v2_forward.1} parent=11 // pred_check_branch
          %413 = sbr.rel (%p411) target = $region48
        $region47: #{fashion_mnist_v2_forward.1} parent=11 // pred_region
          %s415 = ssub.s32 16384, 16384
          %416 = vsyncadd [#allocation3], %s415
          %s417 = sshll.u32 [#allocation2], 4
          %s418 = int_to_ptr.vmem [resolvable:$true] %s417
          %423 = dma.hbm_to_vmem [thread:$0]  %s9, 16384, %s418, [#allocation3], 128, 128, 8
        $region48: #{fashion_mnist_v2_forward.1} parent=11 // pred_fallthru
          _
        // Predicated region
        $region49: #{fashion_mnist_v2_forward.1} parent=11 // pred_check
          %p424 = pneg %p262
        $region50: #{fashion_mnist_v2_forward.1} parent=11 // pred_check_branch
          %426 = sbr.rel (%p424) target = $region52
        $region51: #{fashion_mnist_v2_forward.1} parent=11 // pred_region
          _
        $region52: #{fashion_mnist_v2_forward.1} parent=11 // pred_fallthru
          _
        // Predicated region
        $region53: #{fashion_mnist_v2_forward.1} parent=11 // pred_check
          %p427 = pneg %p283
        $region54: #{fashion_mnist_v2_forward.1} parent=11 // pred_check_branch
          %429 = sbr.rel (%p427) target = $region56
        $region55: #{fashion_mnist_v2_forward.1} parent=11 // pred_region
          _
        $region56: #{fashion_mnist_v2_forward.1} parent=11 // pred_fallthru
          _
        // Predicated region
        $region57: #{fashion_mnist_v2_forward.1} parent=11 // pred_check
          %p430 = pneg %p304
        $region58: #{fashion_mnist_v2_forward.1} parent=11 // pred_check_branch
          %432 = sbr.rel (%p430) target = $region60
        $region59: #{fashion_mnist_v2_forward.1} parent=11 // pred_region
          _
        $region60: #{fashion_mnist_v2_forward.1} parent=11 // pred_fallthru
          _
        // Predicated region
        $region61: #{fashion_mnist_v2_forward.1} parent=11 // pred_check
          %p433 = pneg %p325
        $region62: #{fashion_mnist_v2_forward.1} parent=11 // pred_check_branch
          %435 = sbr.rel (%p433) target = $region64
        $region63: #{fashion_mnist_v2_forward.1} parent=11 // pred_region
          %s437 = ssub.s32 28672, 28672
          %438 = vsyncadd [#allocation6], %s437
          %s439 = sshll.u32 [#allocation5], 4
          %s440 = int_to_ptr.vmem [resolvable:$true] %s439
          %445 = dma.hbm_to_vmem [thread:$0]  %s13, 28672, %s440, [#allocation6], 256, 256, 16
        $region64: #{fashion_mnist_v2_forward.1} parent=11 // pred_fallthru
          _
        // Predicated region
        $region65: #{fashion_mnist_v2_forward.1} parent=11 // pred_check
          %p446 = pneg %p346
        $region66: #{fashion_mnist_v2_forward.1} parent=11 // pred_check_branch
          %448 = sbr.rel (%p446) target = $region68
        $region67: #{fashion_mnist_v2_forward.1} parent=11 // pred_region
          _
        $region68: #{fashion_mnist_v2_forward.1} parent=11 // pred_fallthru
          _
      $region12: #{fashion_mnist_v2_forward.1} parent=5 // pred_fallthru
        _
      %p449 = scmp.lt.s32.totalorder %s26, 2
      // Predicated region
      $region69: #{fashion_mnist_v2_forward.1} parent=5 // pred_check
        %p450 = pneg %p449
      $region70: #{fashion_mnist_v2_forward.1} parent=5 // pred_check_branch
        %452 = sbr.rel (%p450) target = $region72
      $region71: #{fashion_mnist_v2_forward.1} parent=5 // pred_region
        // Predicated region
        $region73: #{fashion_mnist_v2_forward.1} parent=71 // pred_check
          %p453 = pneg %p46
        $region74: #{fashion_mnist_v2_forward.1} parent=71 // pred_check_branch
          %455 = sbr.rel (%p453) target = $region76
        $region75: #{fashion_mnist_v2_forward.1} parent=71 // pred_region
          %p456 = scmp.lt.s32.totalorder %s26, 1
          %s457 = scalar_select %p456, %s26, 1
          %s458 = smul.addr %s457, 7
          %s459 = scalar_lea.vmem %s0, %s458
        $region76: #{fashion_mnist_v2_forward.1} parent=71 // pred_fallthru
          _
      $region72: #{fashion_mnist_v2_forward.1} parent=5 // pred_fallthru
        _
      %p460 = scmp.le.s32.totalorder 1, %s26
      %p461 = scmp.lt.s32.totalorder %s26, 3
      %p462 = pnand %p460, %p461
      %p463 = pneg %p462
      // Predicated region
      $region77: #{fashion_mnist_v2_forward.1} parent=5 // pred_check
        _
      $region78: #{fashion_mnist_v2_forward.1} parent=5 // pred_check_branch
        %465 = sbr.rel (%p462) target = $region80
      $region79: #{fashion_mnist_v2_forward.1} parent=5 // pred_region
        %s466 = ssub.s32 %s26, 1
        // Predicated region
        $region81: #{fashion_mnist_v2_forward.1} parent=79 // pred_check
          %p467 = pneg %p241
        $region82: #{fashion_mnist_v2_forward.1} parent=79 // pred_check_branch
          %469 = sbr.rel (%p467) target = $region84
        $region83: #{fashion_mnist_v2_forward.1} parent=79 // pred_region
          %470 = dma.done [#allocation3], 16384
        $region84: #{fashion_mnist_v2_forward.1} parent=79 // pred_fallthru
          _
        // Predicated region
        $region85: #{fashion_mnist_v2_forward.1} parent=79 // pred_check
          %p471 = pneg %p325
        $region86: #{fashion_mnist_v2_forward.1} parent=79 // pred_check_branch
          %473 = sbr.rel (%p471) target = $region88
        $region87: #{fashion_mnist_v2_forward.1} parent=79 // pred_region
          %474 = dma.done [#allocation6], 28672
        $region88: #{fashion_mnist_v2_forward.1} parent=79 // pred_fallthru
          _
        %p475 = scmp.lt.s32.totalorder %s31, 1
        %s476 = scalar_select %p475, %s31, 1
        %s477 = smul.addr %s476, 7
        %s478 = scalar_lea.vmem %s0, %s477
        %p479 = pneg %p52
        %p480 = pneg %p49
        %p481 = pneg %p73
        %p482 = pneg %p70
        %p483 = pneg %p94
        %p484 = pneg %p91
        %p485 = pneg %p115
        %p486 = pneg %p112
        %p487 = pneg %p136
        %p488 = pneg %p133
        %p489 = pneg %p157
        %p490 = pneg %p154
        %p491 = pneg %p178
        %p492 = pneg %p175
        %p493 = pneg %p199
        %p494 = pneg %p196
        %p495 = pneg %p220
        %p496 = pneg %p217
        %p497 = pneg %p241
        %p498 = pneg %p238
        %p499 = pneg %p262
        %p500 = pneg %p259
        %p501 = pneg %p283
        %p502 = pneg %p280
        %p503 = pneg %p304
        %p504 = pneg %p301
        %p505 = pneg %p325
        %p506 = pneg %p322
        %p507 = pneg %p346
        %p508 = pneg %p343
        %p509 = pneg %p372
        %p510 = pneg %p369
        %s511 = sand.u32 %s359, 1
        %s512 = scalar_lea.sflag [#allocation4], %s511
        %s513 = sand.u32 %s359, 1
        %s514 = scalar_lea.vmem [#allocation7], %s513
        %p515 = scmp.lt.s32.totalorder %s31, 1
        %s516 = scalar_select %p515, %s31, 1
        %s517 = smul.addr %s516, 7
        %s518 = scalar_lea.vmem %s0, %s517
        %v519 = vld [vmem:[%s11] sm:$0xff]
        %v520 = vld [vmem:[%s11 + $0x8] sm:$0xff]
        %v521 = vld [vmem:[%s11 + $0x10] sm:$0xff]
        %v522 = vld [vmem:[%s11 + $0x18] sm:$0xff]
        %v523 = vld [vmem:[%s11 + $0x20] sm:$0xff]
        %v524 = vld [vmem:[%s11 + $0x28] sm:$0xff]
        %v525 = vld [vmem:[%s11 + $0x30] sm:$0xff]
        %v526 = vld [vmem:[%s11 + $0x38] sm:$0x1]
        %v527 = vld [vmem:[%s11 + $0x40] sm:$0x1]
        %v528 = vld [vmem:[%s11 + $0x48] sm:$0x1]
        %v529 = vld [vmem:[%s11 + $0x50] sm:$0x1]
        %v530 = vld [vmem:[%s11 + $0x58] sm:$0x1]
        %v531 = vld [vmem:[%s11 + $0x60] sm:$0x1]
        %v532 = vld [vmem:[%s11 + $0x68] sm:$0x1]
        %v533 = vld [vmem:[%s12] sm:$0xff]
        %v534 = vld [vmem:[%s12 + $0x8] sm:$0xff]
        %v535 = vld [vmem:[%s12 + $0x10] sm:$0x1]
        %v536 = vld [vmem:[%s12 + $0x18] sm:$0x1]
        %v537 = vld [vmem:[%s518] sm:$0xff]
        %v539 = vlaneseq
        %v540 = vshrl.u32 %v539, 7
        %v541 = vsub.s32 6, %v540
        %v542 = vrot.slane %v537, %v541
        %543 = vrot.lane.b32.xlu0 %v542, 29
        %v544 = vpop.permute.xlu0 %543
        %v546 = vlaneseq
        %v547 = vshrl.u32 %v546, 7
        %v548 = vsub.s32 0, %v547
        %v549 = vrot.slane %v537, %v548
        %v550 = vlaneseq
        %v551 = vshrl.u32 %v550, 7
        %v552 = vsub.s32 1, %v551
        %v553 = vrot.slane %v537, %v552
        %v554 = vlaneseq
        %v555 = vshrl.u32 %v554, 7
        %v556 = vsub.s32 2, %v555
        %v557 = vrot.slane %v537, %v556
        %v558 = vlaneseq
        %v559 = vshrl.u32 %v558, 7
        %v560 = vsub.s32 3, %v559
        %v561 = vrot.slane %v537, %v560
        %v562 = vlaneseq
        %v563 = vshrl.u32 %v562, 7
        %v564 = vsub.s32 4, %v563
        %v565 = vrot.slane %v537, %v564
        %v566 = vlaneseq
        %v567 = vshrl.u32 %v566, 7
        %v568 = vsub.s32 5, %v567
        %v569 = vrot.slane %v537, %v568
        %570 = vrot.lane.b32.xlu0 %v549, 29
        %v571 = vpop.permute.xlu0 %570
        %572 = vrot.lane.b32.xlu0 %v553, 29
        %v573 = vpop.permute.xlu0 %572
        %574 = vrot.lane.b32.xlu0 %v557, 29
        %v575 = vpop.permute.xlu0 %574
        %576 = vrot.lane.b32.xlu0 %v561, 29
        %v577 = vpop.permute.xlu0 %576
        %578 = vrot.lane.b32.xlu0 %v565, 29
        %v579 = vpop.permute.xlu0 %578
        %580 = vrot.lane.b32.xlu0 %v569, 29
        %v581 = vpop.permute.xlu0 %580
        %vm582 = vcmask 236544
        %v583 = vsel %vm582, %v571, %v573
        %v584 = vsel %vm582, %v573, %v575
        %v585 = vsel %vm582, %v575, %v577
        %v586 = vsel %vm582, %v577, %v579
        %v587 = vsel %vm582, %v579, %v581
        %v588 = vsel %vm582, %v581, %v544
        %v596 = vsel %vm582, %v544, %v571
        %v597 = vmul.f32 %v596, %v519
        %v598 = vmul.f32 %v583, %v520
        %v599 = vmul.f32 %v584, %v521
        %v600 = vmul.f32 %v585, %v522
        %v601 = vmul.f32 %v586, %v523
        %v602 = vmul.f32 %v587, %v524
        %v603 = vmul.f32 %v588, %v525
        %v604 = vld [vmem:[%s1] sm:$0xff]
        %606 = vset.pattern.permute.xlu0 0
        %607 = vperm.xlu0 %606, %v604
        %v608 = vpop.permute.xlu0 %607
        %v610 = vlaneseq
        %v611 = vshrl.u32 %v610, 7
        %v612 = vsub.s32 0, %v611
        %v613 = vrot.slane %v597, %v612
        %v614 = vlaneseq
        %v615 = vshrl.u32 %v614, 7
        %v616 = vsub.s32 0, %v615
        %v617 = vrot.slane %v598, %v616
        %v618 = vlaneseq
        %v619 = vshrl.u32 %v618, 7
        %v620 = vsub.s32 0, %v619
        %v621 = vrot.slane %v599, %v620
        %v622 = vlaneseq
        %v623 = vshrl.u32 %v622, 7
        %v624 = vsub.s32 0, %v623
        %v625 = vrot.slane %v600, %v624
        %v626 = vlaneseq
        %v627 = vshrl.u32 %v626, 7
        %v628 = vsub.s32 0, %v627
        %v629 = vrot.slane %v601, %v628
        %v630 = vlaneseq
        %v631 = vshrl.u32 %v630, 7
        %v632 = vsub.s32 0, %v631
        %v633 = vrot.slane %v602, %v632
        %v634 = vlaneseq
        %v635 = vshrl.u32 %v634, 7
        %v636 = vsub.s32 0, %v635
        %v637 = vrot.slane %v603, %v636
        %v638 = vmul.f32 %v608, %v613
        %v639 = vmul.f32 %v608, %v617
        %v640 = vmul.f32 %v608, %v621
        %v641 = vmul.f32 %v608, %v625
        %v642 = vmul.f32 %v608, %v629
        %v643 = vmul.f32 %v608, %v633
        %v644 = vmul.f32 %v608, %v637
        %v645 = vadd.f32 %v638, 0.0
        %v646 = vadd.f32 %v639, 0.0
        %v647 = vadd.f32 %v640, 0.0
        %v648 = vadd.f32 %v641, 0.0
        %v649 = vadd.f32 %v642, 0.0
        %v650 = vadd.f32 %v643, 0.0
        %v651 = vadd.f32 %v644, 0.0
        %652 = vrot.lane.b32.xlu0 %v542, 28
        %v653 = vpop.permute.xlu0 %652
        %655 = vrot.lane.b32.xlu0 %v549, 28
        %v656 = vpop.permute.xlu0 %655
        %657 = vrot.lane.b32.xlu0 %v553, 28
        %v658 = vpop.permute.xlu0 %657
        %659 = vrot.lane.b32.xlu0 %v557, 28
        %v660 = vpop.permute.xlu0 %659
        %661 = vrot.lane.b32.xlu0 %v561, 28
        %v662 = vpop.permute.xlu0 %661
        %663 = vrot.lane.b32.xlu0 %v565, 28
        %v664 = vpop.permute.xlu0 %663
        %665 = vrot.lane.b32.xlu0 %v569, 28
        %v666 = vpop.permute.xlu0 %665
        %vm667 = vcmask 228352
        %v668 = vsel %vm667, %v656, %v658
        %v669 = vsel %vm667, %v658, %v660
        %v670 = vsel %vm667, %v660, %v662
        %v671 = vsel %vm667, %v662, %v664
        %v672 = vsel %vm667, %v664, %v666
        %v673 = vsel %vm667, %v666, %v653
        %v681 = vsel %vm667, %v653, %v656
        %v689 = vrot.slane %v519, 1
        %v690 = vrot.slane %v520, 1
        %v691 = vrot.slane %v521, 1
        %v692 = vrot.slane %v522, 1
        %v693 = vrot.slane %v523, 1
        %v694 = vrot.slane %v524, 1
        %v695 = vrot.slane %v525, 1
        %v703 = vmul.f32 %v681, %v689
        %v704 = vmul.f32 %v668, %v690
        %v705 = vmul.f32 %v669, %v691
        %v706 = vmul.f32 %v670, %v692
        %v707 = vmul.f32 %v671, %v693
        %v708 = vmul.f32 %v672, %v694
        %v709 = vmul.f32 %v673, %v695
        %s710 = scalar_lea.vmem %s1, 8
        %v711 = vld [vmem:[%s710] sm:$0xff]
        %713 = vset.pattern.permute.xlu0 0
        %714 = vperm.xlu0 %713, %v711
        %v715 = vpop.permute.xlu0 %714
        %v717 = vlaneseq
        %v718 = vshrl.u32 %v717, 7
        %v719 = vsub.s32 0, %v718
        %v720 = vrot.slane %v703, %v719
        %v721 = vlaneseq
        %v722 = vshrl.u32 %v721, 7
        %v723 = vsub.s32 0, %v722
        %v724 = vrot.slane %v704, %v723
        %v725 = vlaneseq
        %v726 = vshrl.u32 %v725, 7
        %v727 = vsub.s32 0, %v726
        %v728 = vrot.slane %v705, %v727
        %v729 = vlaneseq
        %v730 = vshrl.u32 %v729, 7
        %v731 = vsub.s32 0, %v730
        %v732 = vrot.slane %v706, %v731
        %v733 = vlaneseq
        %v734 = vshrl.u32 %v733, 7
        %v735 = vsub.s32 0, %v734
        %v736 = vrot.slane %v707, %v735
        %v737 = vlaneseq
        %v738 = vshrl.u32 %v737, 7
        %v739 = vsub.s32 0, %v738
        %v740 = vrot.slane %v708, %v739
        %v741 = vlaneseq
        %v742 = vshrl.u32 %v741, 7
        %v743 = vsub.s32 0, %v742
        %v744 = vrot.slane %v709, %v743
        %v745 = vmul.f32 %v715, %v720
        %v746 = vmul.f32 %v715, %v724
        %v747 = vmul.f32 %v715, %v728
        %v748 = vmul.f32 %v715, %v732
        %v749 = vmul.f32 %v715, %v736
        %v750 = vmul.f32 %v715, %v740
        %v751 = vmul.f32 %v715, %v744
        %v752 = vadd.f32 %v645, %v745
        %v753 = vadd.f32 %v646, %v746
        %v754 = vadd.f32 %v647, %v747
        %v755 = vadd.f32 %v648, %v748
        %v756 = vadd.f32 %v649, %v749
        %v757 = vadd.f32 %v650, %v750
        %v758 = vadd.f32 %v651, %v751
        %759 = vrot.lane.b32.xlu0 %v542, 27
        %v760 = vpop.permute.xlu0 %759
        %762 = vrot.lane.b32.xlu0 %v549, 27
        %v763 = vpop.permute.xlu0 %762
        %764 = vrot.lane.b32.xlu0 %v553, 27
        %v765 = vpop.permute.xlu0 %764
        %766 = vrot.lane.b32.xlu0 %v557, 27
        %v767 = vpop.permute.xlu0 %766
        %768 = vrot.lane.b32.xlu0 %v561, 27
        %v769 = vpop.permute.xlu0 %768
        %770 = vrot.lane.b32.xlu0 %v565, 27
        %v771 = vpop.permute.xlu0 %770
        %772 = vrot.lane.b32.xlu0 %v569, 27
        %v773 = vpop.permute.xlu0 %772
        %vm774 = vcmask 220160
        %v775 = vsel %vm774, %v763, %v765
        %v776 = vsel %vm774, %v765, %v767
        %v777 = vsel %vm774, %v767, %v769
        %v778 = vsel %vm774, %v769, %v771
        %v779 = vsel %vm774, %v771, %v773
        %v780 = vsel %vm774, %v773, %v760
        %v788 = vsel %vm774, %v760, %v763
        %v789 = vrot.slane %v519, 2
        %v790 = vrot.slane %v520, 2
        %v791 = vrot.slane %v521, 2
        %v792 = vrot.slane %v522, 2
        %v793 = vrot.slane %v523, 2
        %v794 = vrot.slane %v524, 2
        %v795 = vrot.slane %v525, 2
        %v803 = vmul.f32 %v788, %v789
        %v804 = vmul.f32 %v775, %v790
        %v805 = vmul.f32 %v776, %v791
        %v806 = vmul.f32 %v777, %v792
        %v807 = vmul.f32 %v778, %v793
        %v808 = vmul.f32 %v779, %v794
        %v809 = vmul.f32 %v780, %v795
        %s810 = scalar_lea.vmem %s1, 16
        %v811 = vld [vmem:[%s810] sm:$0xff]
        %813 = vset.pattern.permute.xlu0 0
        %814 = vperm.xlu0 %813, %v811
        %v815 = vpop.permute.xlu0 %814
        %v817 = vlaneseq
        %v818 = vshrl.u32 %v817, 7
        %v819 = vsub.s32 0, %v818
        %v820 = vrot.slane %v803, %v819
        %v821 = vlaneseq
        %v822 = vshrl.u32 %v821, 7
        %v823 = vsub.s32 0, %v822
        %v824 = vrot.slane %v804, %v823
        %v825 = vlaneseq
        %v826 = vshrl.u32 %v825, 7
        %v827 = vsub.s32 0, %v826
        %v828 = vrot.slane %v805, %v827
        %v829 = vlaneseq
        %v830 = vshrl.u32 %v829, 7
        %v831 = vsub.s32 0, %v830
        %v832 = vrot.slane %v806, %v831
        %v833 = vlaneseq
        %v834 = vshrl.u32 %v833, 7
        %v835 = vsub.s32 0, %v834
        %v836 = vrot.slane %v807, %v835
        %v837 = vlaneseq
        %v838 = vshrl.u32 %v837, 7
        %v839 = vsub.s32 0, %v838
        %v840 = vrot.slane %v808, %v839
        %v841 = vlaneseq
        %v842 = vshrl.u32 %v841, 7
        %v843 = vsub.s32 0, %v842
        %v844 = vrot.slane %v809, %v843
        %v845 = vmul.f32 %v815, %v820
        %v846 = vmul.f32 %v815, %v824
        %v847 = vmul.f32 %v815, %v828
        %v848 = vmul.f32 %v815, %v832
        %v849 = vmul.f32 %v815, %v836
        %v850 = vmul.f32 %v815, %v840
        %v851 = vmul.f32 %v815, %v844
        %v852 = vadd.f32 %v752, %v845
        %v853 = vadd.f32 %v753, %v846
        %v854 = vadd.f32 %v754, %v847
        %v855 = vadd.f32 %v755, %v848
        %v856 = vadd.f32 %v756, %v849
        %v857 = vadd.f32 %v757, %v850
        %v858 = vadd.f32 %v758, %v851
        %859 = vrot.lane.b32.xlu0 %v542, 1
        %v860 = vpop.permute.xlu0 %859
        %862 = vrot.lane.b32.xlu0 %v549, 1
        %v863 = vpop.permute.xlu0 %862
        %864 = vrot.lane.b32.xlu0 %v553, 1
        %v865 = vpop.permute.xlu0 %864
        %866 = vrot.lane.b32.xlu0 %v557, 1
        %v867 = vpop.permute.xlu0 %866
        %868 = vrot.lane.b32.xlu0 %v561, 1
        %v869 = vpop.permute.xlu0 %868
        %870 = vrot.lane.b32.xlu0 %v565, 1
        %v871 = vpop.permute.xlu0 %870
        %872 = vrot.lane.b32.xlu0 %v569, 1
        %v873 = vpop.permute.xlu0 %872
        %vm874 = vcmask 7168
        %v875 = vsel %vm874, %v863, %v865
        %v876 = vsel %vm874, %v865, %v867
        %v877 = vsel %vm874, %v867, %v869
        %v878 = vsel %vm874, %v869, %v871
        %v879 = vsel %vm874, %v871, %v873
        %v880 = vsel %vm874, %v873, %v860
        %v888 = vsel %vm874, %v860, %v863
        %v889 = vrot.slane %v519, 3
        %v890 = vrot.slane %v520, 3
        %v891 = vrot.slane %v521, 3
        %v892 = vrot.slane %v522, 3
        %v893 = vrot.slane %v523, 3
        %v894 = vrot.slane %v524, 3
        %v895 = vrot.slane %v525, 3
        %v903 = vmul.f32 %v888, %v889
        %v904 = vmul.f32 %v875, %v890
        %v905 = vmul.f32 %v876, %v891
        %v906 = vmul.f32 %v877, %v892
        %v907 = vmul.f32 %v878, %v893
        %v908 = vmul.f32 %v879, %v894
        %v909 = vmul.f32 %v880, %v895
        %s910 = scalar_lea.vmem %s1, 24
        %v911 = vld [vmem:[%s910] sm:$0xff]
        %913 = vset.pattern.permute.xlu0 0
        %914 = vperm.xlu0 %913, %v911
        %v915 = vpop.permute.xlu0 %914
        %v917 = vlaneseq
        %v918 = vshrl.u32 %v917, 7
        %v919 = vsub.s32 0, %v918
        %v920 = vrot.slane %v903, %v919
        %v921 = vlaneseq
        %v922 = vshrl.u32 %v921, 7
        %v923 = vsub.s32 0, %v922
        %v924 = vrot.slane %v904, %v923
        %v925 = vlaneseq
        %v926 = vshrl.u32 %v925, 7
        %v927 = vsub.s32 0, %v926
        %v928 = vrot.slane %v905, %v927
        %v929 = vlaneseq
        %v930 = vshrl.u32 %v929, 7
        %v931 = vsub.s32 0, %v930
        %v932 = vrot.slane %v906, %v931
        %v933 = vlaneseq
        %v934 = vshrl.u32 %v933, 7
        %v935 = vsub.s32 0, %v934
        %v936 = vrot.slane %v907, %v935
        %v937 = vlaneseq
        %v938 = vshrl.u32 %v937, 7
        %v939 = vsub.s32 0, %v938
        %v940 = vrot.slane %v908, %v939
        %v941 = vlaneseq
        %v942 = vshrl.u32 %v941, 7
        %v943 = vsub.s32 0, %v942
        %v944 = vrot.slane %v909, %v943
        %v945 = vmul.f32 %v915, %v920
        %v946 = vmul.f32 %v915, %v924
        %v947 = vmul.f32 %v915, %v928
        %v948 = vmul.f32 %v915, %v932
        %v949 = vmul.f32 %v915, %v936
        %v950 = vmul.f32 %v915, %v940
        %v951 = vmul.f32 %v915, %v944
        %v952 = vadd.f32 %v852, %v945
        %v953 = vadd.f32 %v853, %v946
        %v954 = vadd.f32 %v854, %v947
        %v955 = vadd.f32 %v855, %v948
        %v956 = vadd.f32 %v856, %v949
        %v957 = vadd.f32 %v857, %v950
        %v958 = vadd.f32 %v858, %v951
        %v959 = vcombine.high %v519, %v520
        %v960 = vcombine.high %v521, %v522
        %v961 = vcombine.high %v523, %v524
        %v962 = vcombine.high %v525, %v525
        %v964 = vunpack.c.l.s4 1966171168
        %v965 = vunpack.c.0.s8 %v964
        %v966 = vlaneseq
        %v967 = vshrl.u32 %v966, 7
        %v968 = vsub.s32 %v965, %v967
        %v969 = vrot.slane %v959, %v968
        %v971 = vunpack.c.l.s4 1966171168
        %v972 = vunpack.c.0.s8 %v971
        %v973 = vlaneseq
        %v974 = vshrl.u32 %v973, 7
        %v975 = vsub.s32 %v972, %v974
        %v976 = vrot.slane %v960, %v975
        %v978 = vunpack.c.l.s4 1966171168
        %v979 = vunpack.c.0.s8 %v978
        %v980 = vlaneseq
        %v981 = vshrl.u32 %v980, 7
        %v982 = vsub.s32 %v979, %v981
        %v983 = vrot.slane %v961, %v982
        %v985 = vunpack.c.l.s4 1966171168
        %v986 = vunpack.c.0.s8 %v985
        %v987 = vlaneseq
        %v988 = vshrl.u32 %v987, 7
        %v989 = vsub.s32 %v986, %v988
        %v990 = vrot.slane %v962, %v989
        %v991 = vcombine.low %v969, %v976
        %v992 = vcombine.low %v983, %v990
        %v994 = vunpack.c.l.s4 1966171168
        %v995 = vunpack.c.0.s8 %v994
        %v996 = vlaneseq
        %v997 = vshrl.u32 %v996, 7
        %v998 = vsub.s32 %v995, %v997
        %v999 = vrot.slane %v991, %v998
        %v1001 = vunpack.c.l.s4 1966171168
        %v1002 = vunpack.c.0.s8 %v1001
        %v1003 = vlaneseq
        %v1004 = vshrl.u32 %v1003, 7
        %v1005 = vsub.s32 %v1002, %v1004
        %v1006 = vrot.slane %v992, %v1005
        %v1007 = vcombine.low %v999, %v1006
        %v1009 = vmul.f32 %v537, %v1007
        %s1010 = scalar_lea.vmem %s1, 32
        %v1011 = vld [vmem:[%s1010] sm:$0xff]
        %1013 = vset.pattern.permute.xlu0 0
        %1014 = vperm.xlu0 %1013, %v1011
        %v1015 = vpop.permute.xlu0 %1014
        %v1018 = vlaneseq
        %v1019 = vshrl.u32 %v1018, 7
        %v1020 = vsub.s32 0, %v1019
        %v1021 = vrot.slane %v1009, %v1020
        %v1022 = vlaneseq
        %v1023 = vshrl.u32 %v1022, 7
        %v1024 = vsub.s32 1, %v1023
        %v1025 = vrot.slane %v1009, %v1024
        %v1026 = vlaneseq
        %v1027 = vshrl.u32 %v1026, 7
        %v1028 = vsub.s32 2, %v1027
        %v1029 = vrot.slane %v1009, %v1028
        %v1030 = vlaneseq
        %v1031 = vshrl.u32 %v1030, 7
        %v1032 = vsub.s32 3, %v1031
        %v1033 = vrot.slane %v1009, %v1032
        %v1034 = vlaneseq
        %v1035 = vshrl.u32 %v1034, 7
        %v1036 = vsub.s32 4, %v1035
        %v1037 = vrot.slane %v1009, %v1036
        %v1038 = vlaneseq
        %v1039 = vshrl.u32 %v1038, 7
        %v1040 = vsub.s32 5, %v1039
        %v1041 = vrot.slane %v1009, %v1040
        %v1042 = vlaneseq
        %v1043 = vshrl.u32 %v1042, 7
        %v1044 = vsub.s32 6, %v1043
        %v1045 = vrot.slane %v1009, %v1044
        %v1053 = vmul.f32 %v1015, %v1021
        %v1054 = vmul.f32 %v1015, %v1025
        %v1055 = vmul.f32 %v1015, %v1029
        %v1056 = vmul.f32 %v1015, %v1033
        %v1057 = vmul.f32 %v1015, %v1037
        %v1058 = vmul.f32 %v1015, %v1041
        %v1059 = vmul.f32 %v1015, %v1045
        %v1060 = vadd.f32 %v952, %v1053
        %v1061 = vadd.f32 %v953, %v1054
        %v1062 = vadd.f32 %v954, %v1055
        %v1063 = vadd.f32 %v955, %v1056
        %v1064 = vadd.f32 %v956, %v1057
        %v1065 = vadd.f32 %v957, %v1058
        %v1066 = vadd.f32 %v958, %v1059
        %1067 = vrot.lane.b32.xlu0 %v549, 127
        %v1068 = vpop.permute.xlu0 %1067
        %1069 = vrot.lane.b32.xlu0 %v553, 127
        %v1070 = vpop.permute.xlu0 %1069
        %1071 = vrot.lane.b32.xlu0 %v557, 127
        %v1072 = vpop.permute.xlu0 %1071
        %1073 = vrot.lane.b32.xlu0 %v561, 127
        %v1074 = vpop.permute.xlu0 %1073
        %1075 = vrot.lane.b32.xlu0 %v565, 127
        %v1076 = vpop.permute.xlu0 %1075
        %1077 = vrot.lane.b32.xlu0 %v569, 127
        %v1078 = vpop.permute.xlu0 %1077
        %1079 = vrot.lane.b32.xlu0 %v542, 127
        %v1080 = vpop.permute.xlu0 %1079
        %vm1081 = vcmask 1039360
        %v1082 = vsel %vm1081, %v1068, %v1070
        %v1083 = vsel %vm1081, %v1070, %v1072
        %v1084 = vsel %vm1081, %v1072, %v1074
        %v1085 = vsel %vm1081, %v1074, %v1076
        %v1086 = vsel %vm1081, %v1076, %v1078
        %v1087 = vsel %vm1081, %v1078, %v1080
        %v1096 = vsel %vm1081, %v1080, %v1068
        %v1097 = vrot.slane %v519, 5
        %v1098 = vrot.slane %v520, 5
        %v1099 = vrot.slane %v521, 5
        %v1100 = vrot.slane %v522, 5
        %v1101 = vrot.slane %v523, 5
        %v1102 = vrot.slane %v524, 5
        %v1103 = vrot.slane %v525, 5
        %v1111 = vmul.f32 %v1082, %v1097
        %v1112 = vmul.f32 %v1083, %v1098
        %v1113 = vmul.f32 %v1084, %v1099
        %v1114 = vmul.f32 %v1085, %v1100
        %v1115 = vmul.f32 %v1086, %v1101
        %v1116 = vmul.f32 %v1087, %v1102
        %v1117 = vmul.f32 %v1096, %v1103
        %s1118 = scalar_lea.vmem %s1, 40
        %v1119 = vld [vmem:[%s1118] sm:$0xff]
        %1121 = vset.pattern.permute.xlu0 0
        %1122 = vperm.xlu0 %1121, %v1119
        %v1123 = vpop.permute.xlu0 %1122
        %v1125 = vlaneseq
        %v1126 = vshrl.u32 %v1125, 7
        %v1127 = vsub.s32 0, %v1126
        %v1128 = vrot.slane %v1111, %v1127
        %v1129 = vlaneseq
        %v1130 = vshrl.u32 %v1129, 7
        %v1131 = vsub.s32 0, %v1130
        %v1132 = vrot.slane %v1112, %v1131
        %v1133 = vlaneseq
        %v1134 = vshrl.u32 %v1133, 7
        %v1135 = vsub.s32 0, %v1134
        %v1136 = vrot.slane %v1113, %v1135
        %v1137 = vlaneseq
        %v1138 = vshrl.u32 %v1137, 7
        %v1139 = vsub.s32 0, %v1138
        %v1140 = vrot.slane %v1114, %v1139
        %v1141 = vlaneseq
        %v1142 = vshrl.u32 %v1141, 7
        %v1143 = vsub.s32 0, %v1142
        %v1144 = vrot.slane %v1115, %v1143
        %v1145 = vlaneseq
        %v1146 = vshrl.u32 %v1145, 7
        %v1147 = vsub.s32 0, %v1146
        %v1148 = vrot.slane %v1116, %v1147
        %v1149 = vlaneseq
        %v1150 = vshrl.u32 %v1149, 7
        %v1151 = vsub.s32 0, %v1150
        %v1152 = vrot.slane %v1117, %v1151
        %v1153 = vmul.f32 %v1123, %v1128
        %v1154 = vmul.f32 %v1123, %v1132
        %v1155 = vmul.f32 %v1123, %v1136
        %v1156 = vmul.f32 %v1123, %v1140
        %v1157 = vmul.f32 %v1123, %v1144
        %v1158 = vmul.f32 %v1123, %v1148
        %v1159 = vmul.f32 %v1123, %v1152
        %v1160 = vadd.f32 %v1060, %v1153
        %v1161 = vadd.f32 %v1061, %v1154
        %v1162 = vadd.f32 %v1062, %v1155
        %v1163 = vadd.f32 %v1063, %v1156
        %v1164 = vadd.f32 %v1064, %v1157
        %v1165 = vadd.f32 %v1065, %v1158
        %v1166 = vadd.f32 %v1066, %v1159
        %1167 = vrot.lane.b32.xlu0 %v549, 101
        %v1168 = vpop.permute.xlu0 %1167
        %1169 = vrot.lane.b32.xlu0 %v553, 101
        %v1170 = vpop.permute.xlu0 %1169
        %1171 = vrot.lane.b32.xlu0 %v557, 101
        %v1172 = vpop.permute.xlu0 %1171
        %1173 = vrot.lane.b32.xlu0 %v561, 101
        %v1174 = vpop.permute.xlu0 %1173
        %1175 = vrot.lane.b32.xlu0 %v565, 101
        %v1176 = vpop.permute.xlu0 %1175
        %1177 = vrot.lane.b32.xlu0 %v569, 101
        %v1178 = vpop.permute.xlu0 %1177
        %1179 = vrot.lane.b32.xlu0 %v542, 101
        %v1180 = vpop.permute.xlu0 %1179
        %vm1181 = vcmask 826368
        %v1182 = vsel %vm1181, %v1168, %v1170
        %v1183 = vsel %vm1181, %v1170, %v1172
        %v1184 = vsel %vm1181, %v1172, %v1174
        %v1185 = vsel %vm1181, %v1174, %v1176
        %v1186 = vsel %vm1181, %v1176, %v1178
        %v1187 = vsel %vm1181, %v1178, %v1180
        %v1196 = vsel %vm1181, %v1180, %v1168
        %v1197 = vrot.slane %v519, 6
        %v1198 = vrot.slane %v520, 6
        %v1199 = vrot.slane %v521, 6
        %v1200 = vrot.slane %v522, 6
        %v1201 = vrot.slane %v523, 6
        %v1202 = vrot.slane %v524, 6
        %v1203 = vrot.slane %v525, 6
        %v1211 = vmul.f32 %v1182, %v1197
        %v1212 = vmul.f32 %v1183, %v1198
        %v1213 = vmul.f32 %v1184, %v1199
        %v1214 = vmul.f32 %v1185, %v1200
        %v1215 = vmul.f32 %v1186, %v1201
        %v1216 = vmul.f32 %v1187, %v1202
        %v1217 = vmul.f32 %v1196, %v1203
        %s1218 = scalar_lea.vmem %s1, 48
        %v1219 = vld [vmem:[%s1218] sm:$0xff]
        %1221 = vset.pattern.permute.xlu0 0
        %1222 = vperm.xlu0 %1221, %v1219
        %v1223 = vpop.permute.xlu0 %1222
        %v1225 = vlaneseq
        %v1226 = vshrl.u32 %v1225, 7
        %v1227 = vsub.s32 0, %v1226
        %v1228 = vrot.slane %v1211, %v1227
        %v1229 = vlaneseq
        %v1230 = vshrl.u32 %v1229, 7
        %v1231 = vsub.s32 0, %v1230
        %v1232 = vrot.slane %v1212, %v1231
        %v1233 = vlaneseq
        %v1234 = vshrl.u32 %v1233, 7
        %v1235 = vsub.s32 0, %v1234
        %v1236 = vrot.slane %v1213, %v1235
        %v1237 = vlaneseq
        %v1238 = vshrl.u32 %v1237, 7
        %v1239 = vsub.s32 0, %v1238
        %v1240 = vrot.slane %v1214, %v1239
        %v1241 = vlaneseq
        %v1242 = vshrl.u32 %v1241, 7
        %v1243 = vsub.s32 0, %v1242
        %v1244 = vrot.slane %v1215, %v1243
        %v1245 = vlaneseq
        %v1246 = vshrl.u32 %v1245, 7
        %v1247 = vsub.s32 0, %v1246
        %v1248 = vrot.slane %v1216, %v1247
        %v1249 = vlaneseq
        %v1250 = vshrl.u32 %v1249, 7
        %v1251 = vsub.s32 0, %v1250
        %v1252 = vrot.slane %v1217, %v1251
        %v1253 = vmul.f32 %v1223, %v1228
        %v1254 = vmul.f32 %v1223, %v1232
        %v1255 = vmul.f32 %v1223, %v1236
        %v1256 = vmul.f32 %v1223, %v1240
        %v1257 = vmul.f32 %v1223, %v1244
        %v1258 = vmul.f32 %v1223, %v1248
        %v1259 = vmul.f32 %v1223, %v1252
        %v1260 = vadd.f32 %v1160, %v1253
        %v1261 = vadd.f32 %v1161, %v1254
        %v1262 = vadd.f32 %v1162, %v1255
        %v1263 = vadd.f32 %v1163, %v1256
        %v1264 = vadd.f32 %v1164, %v1257
        %v1265 = vadd.f32 %v1165, %v1258
        %v1266 = vadd.f32 %v1166, %v1259
        %1267 = vrot.lane.b32.xlu0 %v549, 100
        %v1268 = vpop.permute.xlu0 %1267
        %1269 = vrot.lane.b32.xlu0 %v553, 100
        %v1270 = vpop.permute.xlu0 %1269
        %1271 = vrot.lane.b32.xlu0 %v557, 100
        %v1272 = vpop.permute.xlu0 %1271
        %1273 = vrot.lane.b32.xlu0 %v561, 100
        %v1274 = vpop.permute.xlu0 %1273
        %1275 = vrot.lane.b32.xlu0 %v565, 100
        %v1276 = vpop.permute.xlu0 %1275
        %1277 = vrot.lane.b32.xlu0 %v569, 100
        %v1278 = vpop.permute.xlu0 %1277
        %1279 = vrot.lane.b32.xlu0 %v542, 100
        %v1280 = vpop.permute.xlu0 %1279
        %vm1281 = vcmask 818176
        %v1282 = vsel %vm1281, %v1268, %v1270
        %v1283 = vsel %vm1281, %v1270, %v1272
        %v1284 = vsel %vm1281, %v1272, %v1274
        %v1285 = vsel %vm1281, %v1274, %v1276
        %v1286 = vsel %vm1281, %v1276, %v1278
        %v1287 = vsel %vm1281, %v1278, %v1280
        %v1296 = vsel %vm1281, %v1280, %v1268
        %v1297 = vrot.slane %v519, 7
        %v1298 = vrot.slane %v520, 7
        %v1299 = vrot.slane %v521, 7
        %v1300 = vrot.slane %v522, 7
        %v1301 = vrot.slane %v523, 7
        %v1302 = vrot.slane %v524, 7
        %v1303 = vrot.slane %v525, 7
        %v1311 = vmul.f32 %v1282, %v1297
        %v1312 = vmul.f32 %v1283, %v1298
        %v1313 = vmul.f32 %v1284, %v1299
        %v1314 = vmul.f32 %v1285, %v1300
        %v1315 = vmul.f32 %v1286, %v1301
        %v1316 = vmul.f32 %v1287, %v1302
        %v1317 = vmul.f32 %v1296, %v1303
        %s1318 = scalar_lea.vmem %s1, 56
        %v1319 = vld [vmem:[%s1318] sm:$0xff]
        %1321 = vset.pattern.permute.xlu0 0
        %1322 = vperm.xlu0 %1321, %v1319
        %v1323 = vpop.permute.xlu0 %1322
        %v1325 = vlaneseq
        %v1326 = vshrl.u32 %v1325, 7
        %v1327 = vsub.s32 0, %v1326
        %v1328 = vrot.slane %v1311, %v1327
        %v1329 = vlaneseq
        %v1330 = vshrl.u32 %v1329, 7
        %v1331 = vsub.s32 0, %v1330
        %v1332 = vrot.slane %v1312, %v1331
        %v1333 = vlaneseq
        %v1334 = vshrl.u32 %v1333, 7
        %v1335 = vsub.s32 0, %v1334
        %v1336 = vrot.slane %v1313, %v1335
        %v1337 = vlaneseq
        %v1338 = vshrl.u32 %v1337, 7
        %v1339 = vsub.s32 0, %v1338
        %v1340 = vrot.slane %v1314, %v1339
        %v1341 = vlaneseq
        %v1342 = vshrl.u32 %v1341, 7
        %v1343 = vsub.s32 0, %v1342
        %v1344 = vrot.slane %v1315, %v1343
        %v1345 = vlaneseq
        %v1346 = vshrl.u32 %v1345, 7
        %v1347 = vsub.s32 0, %v1346
        %v1348 = vrot.slane %v1316, %v1347
        %v1349 = vlaneseq
        %v1350 = vshrl.u32 %v1349, 7
        %v1351 = vsub.s32 0, %v1350
        %v1352 = vrot.slane %v1317, %v1351
        %v1353 = vmul.f32 %v1323, %v1328
        %v1354 = vmul.f32 %v1323, %v1332
        %v1355 = vmul.f32 %v1323, %v1336
        %v1356 = vmul.f32 %v1323, %v1340
        %v1357 = vmul.f32 %v1323, %v1344
        %v1358 = vmul.f32 %v1323, %v1348
        %v1359 = vmul.f32 %v1323, %v1352
        %v1360 = vadd.f32 %v1260, %v1353
        %v1361 = vadd.f32 %v1261, %v1354
        %v1362 = vadd.f32 %v1262, %v1355
        %v1363 = vadd.f32 %v1263, %v1356
        %v1364 = vadd.f32 %v1264, %v1357
        %v1365 = vadd.f32 %v1265, %v1358
        %v1366 = vadd.f32 %v1266, %v1359
        %1367 = vrot.lane.b32.xlu0 %v549, 99
        %v1368 = vpop.permute.xlu0 %1367
        %1369 = vrot.lane.b32.xlu0 %v553, 99
        %v1370 = vpop.permute.xlu0 %1369
        %1371 = vrot.lane.b32.xlu0 %v557, 99
        %v1372 = vpop.permute.xlu0 %1371
        %1373 = vrot.lane.b32.xlu0 %v561, 99
        %v1374 = vpop.permute.xlu0 %1373
        %1375 = vrot.lane.b32.xlu0 %v565, 99
        %v1376 = vpop.permute.xlu0 %1375
        %1377 = vrot.lane.b32.xlu0 %v569, 99
        %v1378 = vpop.permute.xlu0 %1377
        %1379 = vrot.lane.b32.xlu0 %v542, 99
        %v1380 = vpop.permute.xlu0 %1379
        %vm1381 = vcmask 809984
        %v1382 = vsel %vm1381, %v1368, %v1370
        %v1383 = vsel %vm1381, %v1370, %v1372
        %v1384 = vsel %vm1381, %v1372, %v1374
        %v1385 = vsel %vm1381, %v1374, %v1376
        %v1386 = vsel %vm1381, %v1376, %v1378
        %v1387 = vsel %vm1381, %v1378, %v1380
        %v1396 = vsel %vm1381, %v1380, %v1368
        %v1397 = vmul.f32 %v1382, %v526
        %v1398 = vmul.f32 %v1383, %v527
        %v1399 = vmul.f32 %v1384, %v528
        %v1400 = vmul.f32 %v1385, %v529
        %v1401 = vmul.f32 %v1386, %v530
        %v1402 = vmul.f32 %v1387, %v531
        %v1403 = vmul.f32 %v1396, %v532
        %s1404 = scalar_lea.vmem %s1, 64
        %v1405 = vld [vmem:[%s1404] sm:$0xff]
        %1407 = vset.pattern.permute.xlu0 0
        %1408 = vperm.xlu0 %1407, %v1405
        %v1409 = vpop.permute.xlu0 %1408
        %v1411 = vlaneseq
        %v1412 = vshrl.u32 %v1411, 7
        %v1413 = vsub.s32 0, %v1412
        %v1414 = vrot.slane %v1397, %v1413
        %v1415 = vlaneseq
        %v1416 = vshrl.u32 %v1415, 7
        %v1417 = vsub.s32 0, %v1416
        %v1418 = vrot.slane %v1398, %v1417
        %v1419 = vlaneseq
        %v1420 = vshrl.u32 %v1419, 7
        %v1421 = vsub.s32 0, %v1420
        %v1422 = vrot.slane %v1399, %v1421
        %v1423 = vlaneseq
        %v1424 = vshrl.u32 %v1423, 7
        %v1425 = vsub.s32 0, %v1424
        %v1426 = vrot.slane %v1400, %v1425
        %v1427 = vlaneseq
        %v1428 = vshrl.u32 %v1427, 7
        %v1429 = vsub.s32 0, %v1428
        %v1430 = vrot.slane %v1401, %v1429
        %v1431 = vlaneseq
        %v1432 = vshrl.u32 %v1431, 7
        %v1433 = vsub.s32 0, %v1432
        %v1434 = vrot.slane %v1402, %v1433
        %v1435 = vlaneseq
        %v1436 = vshrl.u32 %v1435, 7
        %v1437 = vsub.s32 0, %v1436
        %v1438 = vrot.slane %v1403, %v1437
        %v1439 = vmul.f32 %v1409, %v1414
        %v1440 = vmul.f32 %v1409, %v1418
        %v1441 = vmul.f32 %v1409, %v1422
        %v1442 = vmul.f32 %v1409, %v1426
        %v1443 = vmul.f32 %v1409, %v1430
        %v1444 = vmul.f32 %v1409, %v1434
        %v1445 = vmul.f32 %v1409, %v1438
        %v1446 = vadd.f32 %v1360, %v1439
        %v1447 = vadd.f32 %v1361, %v1440
        %v1448 = vadd.f32 %v1362, %v1441
        %v1449 = vadd.f32 %v1363, %v1442
        %v1450 = vadd.f32 %v1364, %v1443
        %v1451 = vadd.f32 %v1365, %v1444
        %v1452 = vadd.f32 %v1366, %v1445
        %v1453 = vld [vmem:[%s2] sm:$0xff]
        %1455 = vset.pattern.permute.xlu0 0
        %1456 = vperm.xlu0 %1455, %v1453
        %v1457 = vpop.permute.xlu0 %1456
        %v1459 = vadd.f32 %v1446, %v1457
        %v1460 = vadd.f32 %v1447, %v1457
        %v1461 = vadd.f32 %v1448, %v1457
        %v1462 = vadd.f32 %v1449, %v1457
        %v1463 = vadd.f32 %v1450, %v1457
        %v1464 = vadd.f32 %v1451, %v1457
        %v1465 = vadd.f32 %v1452, %v1457
        %v1466 = vmax.f32 %v1459, 0.0
        %v1467 = vmax.f32 %v1460, 0.0
        %v1468 = vmax.f32 %v1461, 0.0
        %v1469 = vmax.f32 %v1462, 0.0
        %v1470 = vmax.f32 %v1463, 0.0
        %v1471 = vmax.f32 %v1464, 0.0
        %v1472 = vmax.f32 %v1465, 0.0
        %1474 = vrot.lane.b32.xlu0 %v1472, 29
        %v1475 = vpop.permute.xlu0 %1474
        %1483 = vrot.lane.b32.xlu0 %v1466, 29
        %v1484 = vpop.permute.xlu0 %1483
        %1485 = vrot.lane.b32.xlu0 %v1467, 29
        %v1486 = vpop.permute.xlu0 %1485
        %1487 = vrot.lane.b32.xlu0 %v1468, 29
        %v1488 = vpop.permute.xlu0 %1487
        %1489 = vrot.lane.b32.xlu0 %v1469, 29
        %v1490 = vpop.permute.xlu0 %1489
        %1491 = vrot.lane.b32.xlu0 %v1470, 29
        %v1492 = vpop.permute.xlu0 %1491
        %1493 = vrot.lane.b32.xlu0 %v1471, 29
        %v1494 = vpop.permute.xlu0 %1493
        %v1495 = vsel %vm582, %v1484, %v1486
        %v1496 = vsel %vm582, %v1486, %v1488
        %v1497 = vsel %vm582, %v1488, %v1490
        %v1498 = vsel %vm582, %v1490, %v1492
        %v1499 = vsel %vm582, %v1492, %v1494
        %v1500 = vsel %vm582, %v1494, %v1475
        %v1508 = vsel %vm582, %v1475, %v1484
        %v1509 = vlaneseq
        %v1510 = vshrl.u32 %v1509, 7
        %v1511 = vsub.s32 0, %v1510
        %v1512 = vrot.slane %v519, %v1511
        %v1513 = vlaneseq
        %v1514 = vshrl.u32 %v1513, 7
        %v1515 = vsub.s32 0, %v1514
        %v1516 = vrot.slane %v520, %v1515
        %v1517 = vlaneseq
        %v1518 = vshrl.u32 %v1517, 7
        %v1519 = vsub.s32 0, %v1518
        %v1520 = vrot.slane %v521, %v1519
        %v1521 = vlaneseq
        %v1522 = vshrl.u32 %v1521, 7
        %v1523 = vsub.s32 0, %v1522
        %v1524 = vrot.slane %v522, %v1523
        %v1525 = vlaneseq
        %v1526 = vshrl.u32 %v1525, 7
        %v1527 = vsub.s32 0, %v1526
        %v1528 = vrot.slane %v523, %v1527
        %v1529 = vlaneseq
        %v1530 = vshrl.u32 %v1529, 7
        %v1531 = vsub.s32 0, %v1530
        %v1532 = vrot.slane %v524, %v1531
        %v1533 = vlaneseq
        %v1534 = vshrl.u32 %v1533, 7
        %v1535 = vsub.s32 0, %v1534
        %v1536 = vrot.slane %v525, %v1535
        %v1537 = vmul.f32 %v1508, %v1512
        %v1538 = vmul.f32 %v1495, %v1516
        %v1539 = vmul.f32 %v1496, %v1520
        %v1540 = vmul.f32 %v1497, %v1524
        %v1541 = vmul.f32 %v1498, %v1528
        %v1542 = vmul.f32 %v1499, %v1532
        %v1543 = vmul.f32 %v1500, %v1536
        %v1544 = vld [vmem:[%s3] sm:$0xff]
        %1545 = vrot.lane.b32.xlu0 %v1472, 28
        %v1546 = vpop.permute.xlu0 %1545
        %1548 = vrot.lane.b32.xlu0 %v1466, 28
        %v1549 = vpop.permute.xlu0 %1548
        %1550 = vrot.lane.b32.xlu0 %v1467, 28
        %v1551 = vpop.permute.xlu0 %1550
        %1552 = vrot.lane.b32.xlu0 %v1468, 28
        %v1553 = vpop.permute.xlu0 %1552
        %1554 = vrot.lane.b32.xlu0 %v1469, 28
        %v1555 = vpop.permute.xlu0 %1554
        %1556 = vrot.lane.b32.xlu0 %v1470, 28
        %v1557 = vpop.permute.xlu0 %1556
        %1558 = vrot.lane.b32.xlu0 %v1471, 28
        %v1559 = vpop.permute.xlu0 %1558
        %v1560 = vsel %vm667, %v1549, %v1551
        %v1561 = vsel %vm667, %v1551, %v1553
        %v1562 = vsel %vm667, %v1553, %v1555
        %v1563 = vsel %vm667, %v1555, %v1557
        %v1564 = vsel %vm667, %v1557, %v1559
        %v1565 = vsel %vm667, %v1559, %v1546
        %v1573 = vsel %vm667, %v1546, %v1549
        %v1574 = vlaneseq
        %v1575 = vshrl.u32 %v1574, 7
        %v1576 = vsub.s32 1, %v1575
        %v1577 = vrot.slane %v519, %v1576
        %v1578 = vlaneseq
        %v1579 = vshrl.u32 %v1578, 7
        %v1580 = vsub.s32 1, %v1579
        %v1581 = vrot.slane %v520, %v1580
        %v1582 = vlaneseq
        %v1583 = vshrl.u32 %v1582, 7
        %v1584 = vsub.s32 1, %v1583
        %v1585 = vrot.slane %v521, %v1584
        %v1586 = vlaneseq
        %v1587 = vshrl.u32 %v1586, 7
        %v1588 = vsub.s32 1, %v1587
        %v1589 = vrot.slane %v522, %v1588
        %v1590 = vlaneseq
        %v1591 = vshrl.u32 %v1590, 7
        %v1592 = vsub.s32 1, %v1591
        %v1593 = vrot.slane %v523, %v1592
        %v1594 = vlaneseq
        %v1595 = vshrl.u32 %v1594, 7
        %v1596 = vsub.s32 1, %v1595
        %v1597 = vrot.slane %v524, %v1596
        %v1598 = vlaneseq
        %v1599 = vshrl.u32 %v1598, 7
        %v1600 = vsub.s32 1, %v1599
        %v1601 = vrot.slane %v525, %v1600
        %v1602 = vmul.f32 %v1573, %v1577
        %v1603 = vmul.f32 %v1560, %v1581
        %v1604 = vmul.f32 %v1561, %v1585
        %v1605 = vmul.f32 %v1562, %v1589
        %v1606 = vmul.f32 %v1563, %v1593
        %v1607 = vmul.f32 %v1564, %v1597
        %v1608 = vmul.f32 %v1565, %v1601
        %s1609 = scalar_lea.vmem %s3, 8
        %v1610 = vld [vmem:[%s1609] sm:$0xff]
        %vm1611 = vcmask 64512
        %v1613 = vsel %vm1611, %v1610, 0
        %1615 = vmatprep.subr.mxu0 0.0
        %1616 = vmatpush1.msra.mxu0 0.0
        %1617 = vmatprep.subr.mxu0 0.0
        %1618 = vmatpush1.msra.mxu0 0.0
        %1619 = vmatprep.subr.mxu0 0.0
        %1620 = vmatpush1.msra.mxu0 0.0
        %1621 = vmatprep.subr.mxu0 0.0
        %1622 = vmatpush1.msra.mxu0 0.0
        %1623 = vmatprep.subr.mxu0 0.0
        %1624 = vmatpush1.msra.mxu0 0.0
        %1625 = vmatprep.subr.mxu0 0.0
        %1626 = vmatpush1.msra.mxu0 0.0
        %1627 = vmatprep.subr.mxu0 0.0
        %1628 = vmatpush1.msra.mxu0 0.0
        %1629 = vmatprep.subr.mxu0 0.0
        %1630 = vmatpush1.msra.mxu0 0.0
        %1631 = vmatprep.subr.mxu0 0.0
        %1632 = vmatpush1.msra.mxu0 0.0
        %1633 = vmatprep.subr.mxu0 0.0
        %1634 = vmatpush1.msra.mxu0 0.0
        %1635 = vmatprep.subr.mxu0 0.0
        %1636 = vmatpush1.msra.mxu0 0.0
        %1637 = vmatprep.subr.mxu0 0.0
        %1638 = vmatpush1.msra.mxu0 0.0
        %1639 = vmatprep.subr.mxu0 0.0
        %1640 = vmatpush1.msra.mxu0 0.0
        %1641 = vmatprep.subr.mxu0 0.0
        %1642 = vmatpush1.msra.mxu0 0.0
        %1643 = vmatprep.subr.mxu0 0.0
        %1644 = vmatpush1.msra.mxu0 0.0
        %1645 = vmatprep.subr.mxu0 %v1603
        %1646 = vmatpush1.msra.mxu0 %v1602
        %1647 = vmatprep.subr.mxu0 0.0
        %1648 = vmatpush2.msra.mxu0 0.0
        %1649 = vmatprep.subr.mxu0 0.0
        %1650 = vmatpush2.msra.mxu0 0.0
        %1651 = vmatprep.subr.mxu0 0.0
        %1652 = vmatpush2.msra.mxu0 0.0
        %1653 = vmatprep.subr.mxu0 0.0
        %1654 = vmatpush2.msra.mxu0 0.0
        %1655 = vmatprep.subr.mxu0 0.0
        %1656 = vmatpush2.msra.mxu0 0.0
        %1657 = vmatprep.subr.mxu0 0.0
        %1658 = vmatpush2.msra.mxu0 0.0
        %1659 = vmatprep.subr.mxu0 0.0
        %1660 = vmatpush2.msra.mxu0 0.0
        %1661 = vmatprep.subr.mxu0 0.0
        %1662 = vmatpush2.msra.mxu0 0.0
        %1663 = vmatprep.subr.mxu0 0.0
        %1664 = vmatpush2.msra.mxu0 0.0
        %1665 = vmatprep.subr.mxu0 0.0
        %1666 = vmatpush2.msra.mxu0 0.0
        %1667 = vmatprep.subr.mxu0 0.0
        %1668 = vmatpush2.msra.mxu0 0.0
        %1669 = vmatprep.subr.mxu0 0.0
        %1670 = vmatpush2.msra.mxu0 0.0
        %1671 = vmatprep.subr.mxu0 0.0
        %1672 = vmatpush2.msra.mxu0 0.0
        %1673 = vmatprep.subr.mxu0 0.0
        %1674 = vmatpush2.msra.mxu0 0.0
        %1675 = vmatprep.subr.mxu0 0.0
        %1676 = vmatpush2.msra.mxu0 0.0
        %1677 = vmatprep.subr.mxu0 0.0
        %1678 = vmatpush2.msra.mxu0 0.0
        %1679 = vmatprep.mubr.f32.mxu0 0.0
        %1680 = vmatmul.mubr.f32.gmra.mxu0 %v1613
        %v1681 = vpop.f32.mrf.mxu0
        %v1682 = vadd.f32 0.0, %v1681
        %v1683 = vpop.f32.mrf.mxu0
        %v1684 = vadd.f32 0.0, %v1683
        %1685 = vdwg.mxu0
        %1686 = vmatprep.subr.mxu0 0.0
        %1687 = vmatpush1.msra.mxu0 0.0
        %1688 = vmatprep.subr.mxu0 0.0
        %1689 = vmatpush1.msra.mxu0 0.0
        %1690 = vmatprep.subr.mxu0 0.0
        %1691 = vmatpush1.msra.mxu0 0.0
        %1692 = vmatprep.subr.mxu0 0.0
        %1693 = vmatpush1.msra.mxu0 0.0
        %1694 = vmatprep.subr.mxu0 0.0
        %1695 = vmatpush1.msra.mxu0 0.0
        %1696 = vmatprep.subr.mxu0 0.0
        %1697 = vmatpush1.msra.mxu0 0.0
        %1698 = vmatprep.subr.mxu0 0.0
        %1699 = vmatpush1.msra.mxu0 0.0
        %1700 = vmatprep.subr.mxu0 0.0
        %1701 = vmatpush1.msra.mxu0 0.0
        %1702 = vmatprep.subr.mxu0 0.0
        %1703 = vmatpush1.msra.mxu0 0.0
        %1704 = vmatprep.subr.mxu0 0.0
        %1705 = vmatpush1.msra.mxu0 0.0
        %1706 = vmatprep.subr.mxu0 0.0
        %1707 = vmatpush1.msra.mxu0 0.0
        %1708 = vmatprep.subr.mxu0 0.0
        %1709 = vmatpush1.msra.mxu0 0.0
        %1710 = vmatprep.subr.mxu0 0.0
        %1711 = vmatpush1.msra.mxu0 0.0
        %1712 = vmatprep.subr.mxu0 0.0
        %1713 = vmatpush1.msra.mxu0 0.0
        %1714 = vmatprep.subr.mxu0 0.0
        %1715 = vmatpush1.msra.mxu0 0.0
        %1716 = vmatprep.subr.mxu0 %v1605
        %1717 = vmatpush1.msra.mxu0 %v1604
        %1718 = vmatprep.subr.mxu0 0.0
        %1719 = vmatpush2.msra.mxu0 0.0
        %1720 = vmatprep.subr.mxu0 0.0
        %1721 = vmatpush2.msra.mxu0 0.0
        %1722 = vmatprep.subr.mxu0 0.0
        %1723 = vmatpush2.msra.mxu0 0.0
        %1724 = vmatprep.subr.mxu0 0.0
        %1725 = vmatpush2.msra.mxu0 0.0
        %1726 = vmatprep.subr.mxu0 0.0
        %1727 = vmatpush2.msra.mxu0 0.0
        %1728 = vmatprep.subr.mxu0 0.0
        %1729 = vmatpush2.msra.mxu0 0.0
        %1730 = vmatprep.subr.mxu0 0.0
        %1731 = vmatpush2.msra.mxu0 0.0
        %1732 = vmatprep.subr.mxu0 0.0
        %1733 = vmatpush2.msra.mxu0 0.0
        %1734 = vmatprep.subr.mxu0 0.0
        %1735 = vmatpush2.msra.mxu0 0.0
        %1736 = vmatprep.subr.mxu0 0.0
        %1737 = vmatpush2.msra.mxu0 0.0
        %1738 = vmatprep.subr.mxu0 0.0
        %1739 = vmatpush2.msra.mxu0 0.0
        %1740 = vmatprep.subr.mxu0 0.0
        %1741 = vmatpush2.msra.mxu0 0.0
        %1742 = vmatprep.subr.mxu0 0.0
        %1743 = vmatpush2.msra.mxu0 0.0
        %1744 = vmatprep.subr.mxu0 0.0
        %1745 = vmatpush2.msra.mxu0 0.0
        %1746 = vmatprep.subr.mxu0 0.0
        %1747 = vmatpush2.msra.mxu0 0.0
        %1748 = vmatprep.subr.mxu0 0.0
        %1749 = vmatpush2.msra.mxu0 0.0
        %1750 = vmatprep.mubr.f32.mxu0 0.0
        %1751 = vmatmul.mubr.f32.gmra.mxu0 %v1613
        %v1752 = vpop.f32.mrf.mxu0
        %v1753 = vadd.f32 0.0, %v1752
        %v1754 = vpop.f32.mrf.mxu0
        %v1755 = vadd.f32 0.0, %v1754
        %1756 = vdwg.mxu0
        %1757 = vmatprep.subr.mxu0 0.0
        %1758 = vmatpush1.msra.mxu0 0.0
        %1759 = vmatprep.subr.mxu0 0.0
        %1760 = vmatpush1.msra.mxu0 0.0
        %1761 = vmatprep.subr.mxu0 0.0
        %1762 = vmatpush1.msra.mxu0 0.0
        %1763 = vmatprep.subr.mxu0 0.0
        %1764 = vmatpush1.msra.mxu0 0.0
        %1765 = vmatprep.subr.mxu0 0.0
        %1766 = vmatpush1.msra.mxu0 0.0
        %1767 = vmatprep.subr.mxu0 0.0
        %1768 = vmatpush1.msra.mxu0 0.0
        %1769 = vmatprep.subr.mxu0 0.0
        %1770 = vmatpush1.msra.mxu0 0.0
        %1771 = vmatprep.subr.mxu0 0.0
        %1772 = vmatpush1.msra.mxu0 0.0
        %1773 = vmatprep.subr.mxu0 0.0
        %1774 = vmatpush1.msra.mxu0 0.0
        %1775 = vmatprep.subr.mxu0 0.0
        %1776 = vmatpush1.msra.mxu0 0.0
        %1777 = vmatprep.subr.mxu0 0.0
        %1778 = vmatpush1.msra.mxu0 0.0
        %1779 = vmatprep.subr.mxu0 0.0
        %1780 = vmatpush1.msra.mxu0 0.0
        %1781 = vmatprep.subr.mxu0 0.0
        %1782 = vmatpush1.msra.mxu0 0.0
        %1783 = vmatprep.subr.mxu0 0.0
        %1784 = vmatpush1.msra.mxu0 0.0
        %1785 = vmatprep.subr.mxu0 0.0
        %1786 = vmatpush1.msra.mxu0 0.0
        %1787 = vmatprep.subr.mxu0 %v1607
        %1788 = vmatpush1.msra.mxu0 %v1606
        %1789 = vmatprep.subr.mxu0 0.0
        %1790 = vmatpush2.msra.mxu0 0.0
        %1791 = vmatprep.subr.mxu0 0.0
        %1792 = vmatpush2.msra.mxu0 0.0
        %1793 = vmatprep.subr.mxu0 0.0
        %1794 = vmatpush2.msra.mxu0 0.0
        %1795 = vmatprep.subr.mxu0 0.0
        %1796 = vmatpush2.msra.mxu0 0.0
        %1797 = vmatprep.subr.mxu0 0.0
        %1798 = vmatpush2.msra.mxu0 0.0
        %1799 = vmatprep.subr.mxu0 0.0
        %1800 = vmatpush2.msra.mxu0 0.0
        %1801 = vmatprep.subr.mxu0 0.0
        %1802 = vmatpush2.msra.mxu0 0.0
        %1803 = vmatprep.subr.mxu0 0.0
        %1804 = vmatpush2.msra.mxu0 0.0
        %1805 = vmatprep.subr.mxu0 0.0
        %1806 = vmatpush2.msra.mxu0 0.0
        %1807 = vmatprep.subr.mxu0 0.0
        %1808 = vmatpush2.msra.mxu0 0.0
        %1809 = vmatprep.subr.mxu0 0.0
        %1810 = vmatpush2.msra.mxu0 0.0
        %1811 = vmatprep.subr.mxu0 0.0
        %1812 = vmatpush2.msra.mxu0 0.0
        %1813 = vmatprep.subr.mxu0 0.0
        %1814 = vmatpush2.msra.mxu0 0.0
        %1815 = vmatprep.subr.mxu0 0.0
        %1816 = vmatpush2.msra.mxu0 0.0
        %1817 = vmatprep.subr.mxu0 0.0
        %1818 = vmatpush2.msra.mxu0 0.0
        %1819 = vmatprep.subr.mxu0 0.0
        %1820 = vmatpush2.msra.mxu0 0.0
        %1821 = vmatprep.mubr.f32.mxu0 0.0
        %1822 = vmatmul.mubr.f32.gmra.mxu0 %v1613
        %v1823 = vpop.f32.mrf.mxu0
        %v1824 = vadd.f32 0.0, %v1823
        %v1825 = vpop.f32.mrf.mxu0
        %v1826 = vadd.f32 0.0, %v1825
        %1827 = vdwg.mxu0
        %1828 = vmatprep.subr.mxu0 0.0
        %1829 = vmatpush1.msra.mxu0 0.0
        %1830 = vmatprep.subr.mxu0 0.0
        %1831 = vmatpush1.msra.mxu0 0.0
        %1832 = vmatprep.subr.mxu0 0.0
        %1833 = vmatpush1.msra.mxu0 0.0
        %1834 = vmatprep.subr.mxu0 0.0
        %1835 = vmatpush1.msra.mxu0 0.0
        %1836 = vmatprep.subr.mxu0 0.0
        %1837 = vmatpush1.msra.mxu0 0.0
        %1838 = vmatprep.subr.mxu0 0.0
        %1839 = vmatpush1.msra.mxu0 0.0
        %1840 = vmatprep.subr.mxu0 0.0
        %1841 = vmatpush1.msra.mxu0 0.0
        %1842 = vmatprep.subr.mxu0 0.0
        %1843 = vmatpush1.msra.mxu0 0.0
        %1844 = vmatprep.subr.mxu0 0.0
        %1845 = vmatpush1.msra.mxu0 0.0
        %1846 = vmatprep.subr.mxu0 0.0
        %1847 = vmatpush1.msra.mxu0 0.0
        %1848 = vmatprep.subr.mxu0 0.0
        %1849 = vmatpush1.msra.mxu0 0.0
        %1850 = vmatprep.subr.mxu0 0.0
        %1851 = vmatpush1.msra.mxu0 0.0
        %1852 = vmatprep.subr.mxu0 0.0
        %1853 = vmatpush1.msra.mxu0 0.0
        %1854 = vmatprep.subr.mxu0 0.0
        %1855 = vmatpush1.msra.mxu0 0.0
        %1856 = vmatprep.subr.mxu0 0.0
        %1857 = vmatpush1.msra.mxu0 0.0
        %1858 = vmatprep.subr.mxu0 0.0
        %1859 = vmatpush1.msra.mxu0 %v1608
        %1860 = vmatprep.subr.mxu0 0.0
        %1861 = vmatpush2.msra.mxu0 0.0
        %1862 = vmatprep.subr.mxu0 0.0
        %1863 = vmatpush2.msra.mxu0 0.0
        %1864 = vmatprep.subr.mxu0 0.0
        %1865 = vmatpush2.msra.mxu0 0.0
        %1866 = vmatprep.subr.mxu0 0.0
        %1867 = vmatpush2.msra.mxu0 0.0
        %1868 = vmatprep.subr.mxu0 0.0
        %1869 = vmatpush2.msra.mxu0 0.0
        %1870 = vmatprep.subr.mxu0 0.0
        %1871 = vmatpush2.msra.mxu0 0.0
        %1872 = vmatprep.subr.mxu0 0.0
        %1873 = vmatpush2.msra.mxu0 0.0
        %1874 = vmatprep.subr.mxu0 0.0
        %1875 = vmatpush2.msra.mxu0 0.0
        %1876 = vmatprep.subr.mxu0 0.0
        %1877 = vmatpush2.msra.mxu0 0.0
        %1878 = vmatprep.subr.mxu0 0.0
        %1879 = vmatpush2.msra.mxu0 0.0
        %1880 = vmatprep.subr.mxu0 0.0
        %1881 = vmatpush2.msra.mxu0 0.0
        %1882 = vmatprep.subr.mxu0 0.0
        %1883 = vmatpush2.msra.mxu0 0.0
        %1884 = vmatprep.subr.mxu0 0.0
        %1885 = vmatpush2.msra.mxu0 0.0
        %1886 = vmatprep.subr.mxu0 0.0
        %1887 = vmatpush2.msra.mxu0 0.0
        %1888 = vmatprep.subr.mxu0 0.0
        %1889 = vmatpush2.msra.mxu0 0.0
        %1890 = vmatprep.subr.mxu0 0.0
        %1891 = vmatpush2.msra.mxu0 0.0
        %1892 = vmatprep.mubr.f32.mxu0 0.0
        %1893 = vmatmul.mubr.f32.gmra.mxu0 %v1613
        %v1894 = vpop.f32.mrf.mxu0
        %v1895 = vadd.f32 0.0, %v1894
        %v1896 = vpop.f32.mrf.mxu0
        %1897 = vdwg.mxu0
        %v1899 = vsel %vm1611, %v1544, 0
        %1901 = vmatprep.subr.mxu0 0.0
        %1902 = vmatpush1.msra.mxu0 0.0
        %1903 = vmatprep.subr.mxu0 0.0
        %1904 = vmatpush1.msra.mxu0 0.0
        %1905 = vmatprep.subr.mxu0 0.0
        %1906 = vmatpush1.msra.mxu0 0.0
        %1907 = vmatprep.subr.mxu0 0.0
        %1908 = vmatpush1.msra.mxu0 0.0
        %1909 = vmatprep.subr.mxu0 0.0
        %1910 = vmatpush1.msra.mxu0 0.0
        %1911 = vmatprep.subr.mxu0 0.0
        %1912 = vmatpush1.msra.mxu0 0.0
        %1913 = vmatprep.subr.mxu0 0.0
        %1914 = vmatpush1.msra.mxu0 0.0
        %1915 = vmatprep.subr.mxu0 0.0
        %1916 = vmatpush1.msra.mxu0 0.0
        %1917 = vmatprep.subr.mxu0 0.0
        %1918 = vmatpush1.msra.mxu0 0.0
        %1919 = vmatprep.subr.mxu0 0.0
        %1920 = vmatpush1.msra.mxu0 0.0
        %1921 = vmatprep.subr.mxu0 0.0
        %1922 = vmatpush1.msra.mxu0 0.0
        %1923 = vmatprep.subr.mxu0 0.0
        %1924 = vmatpush1.msra.mxu0 0.0
        %1925 = vmatprep.subr.mxu0 0.0
        %1926 = vmatpush1.msra.mxu0 0.0
        %1927 = vmatprep.subr.mxu0 0.0
        %1928 = vmatpush1.msra.mxu0 0.0
        %1929 = vmatprep.subr.mxu0 0.0
        %1930 = vmatpush1.msra.mxu0 0.0
        %1931 = vmatprep.subr.mxu0 %v1538
        %1932 = vmatpush1.msra.mxu0 %v1537
        %1933 = vmatprep.subr.mxu0 0.0
        %1934 = vmatpush2.msra.mxu0 0.0
        %1935 = vmatprep.subr.mxu0 0.0
        %1936 = vmatpush2.msra.mxu0 0.0
        %1937 = vmatprep.subr.mxu0 0.0
        %1938 = vmatpush2.msra.mxu0 0.0
        %1939 = vmatprep.subr.mxu0 0.0
        %1940 = vmatpush2.msra.mxu0 0.0
        %1941 = vmatprep.subr.mxu0 0.0
        %1942 = vmatpush2.msra.mxu0 0.0
        %1943 = vmatprep.subr.mxu0 0.0
        %1944 = vmatpush2.msra.mxu0 0.0
        %1945 = vmatprep.subr.mxu0 0.0
        %1946 = vmatpush2.msra.mxu0 0.0
        %1947 = vmatprep.subr.mxu0 0.0
        %1948 = vmatpush2.msra.mxu0 0.0
        %1949 = vmatprep.subr.mxu0 0.0
        %1950 = vmatpush2.msra.mxu0 0.0
        %1951 = vmatprep.subr.mxu0 0.0
        %1952 = vmatpush2.msra.mxu0 0.0
        %1953 = vmatprep.subr.mxu0 0.0
        %1954 = vmatpush2.msra.mxu0 0.0
        %1955 = vmatprep.subr.mxu0 0.0
        %1956 = vmatpush2.msra.mxu0 0.0
        %1957 = vmatprep.subr.mxu0 0.0
        %1958 = vmatpush2.msra.mxu0 0.0
        %1959 = vmatprep.subr.mxu0 0.0
        %1960 = vmatpush2.msra.mxu0 0.0
        %1961 = vmatprep.subr.mxu0 0.0
        %1962 = vmatpush2.msra.mxu0 0.0
        %1963 = vmatprep.subr.mxu0 0.0
        %1964 = vmatpush2.msra.mxu0 0.0
        %1965 = vmatprep.mubr.f32.mxu0 0.0
        %1966 = vmatmul.mubr.f32.gmra.mxu0 %v1899
        %v1967 = vpop.f32.mrf.mxu0
        %v1968 = vadd.f32 %v1682, %v1967
        %v1969 = vpop.f32.mrf.mxu0
        %v1970 = vadd.f32 %v1684, %v1969
        %1971 = vdwg.mxu0
        %1972 = vmatprep.subr.mxu0 0.0
        %1973 = vmatpush1.msra.mxu0 0.0
        %1974 = vmatprep.subr.mxu0 0.0
        %1975 = vmatpush1.msra.mxu0 0.0
        %1976 = vmatprep.subr.mxu0 0.0
        %1977 = vmatpush1.msra.mxu0 0.0
        %1978 = vmatprep.subr.mxu0 0.0
        %1979 = vmatpush1.msra.mxu0 0.0
        %1980 = vmatprep.subr.mxu0 0.0
        %1981 = vmatpush1.msra.mxu0 0.0
        %1982 = vmatprep.subr.mxu0 0.0
        %1983 = vmatpush1.msra.mxu0 0.0
        %1984 = vmatprep.subr.mxu0 0.0
        %1985 = vmatpush1.msra.mxu0 0.0
        %1986 = vmatprep.subr.mxu0 0.0
        %1987 = vmatpush1.msra.mxu0 0.0
        %1988 = vmatprep.subr.mxu0 0.0
        %1989 = vmatpush1.msra.mxu0 0.0
        %1990 = vmatprep.subr.mxu0 0.0
        %1991 = vmatpush1.msra.mxu0 0.0
        %1992 = vmatprep.subr.mxu0 0.0
        %1993 = vmatpush1.msra.mxu0 0.0
        %1994 = vmatprep.subr.mxu0 0.0
        %1995 = vmatpush1.msra.mxu0 0.0
        %1996 = vmatprep.subr.mxu0 0.0
        %1997 = vmatpush1.msra.mxu0 0.0
        %1998 = vmatprep.subr.mxu0 0.0
        %1999 = vmatpush1.msra.mxu0 0.0
        %2000 = vmatprep.subr.mxu0 0.0
        %2001 = vmatpush1.msra.mxu0 0.0
        %2002 = vmatprep.subr.mxu0 %v1540
        %2003 = vmatpush1.msra.mxu0 %v1539
        %2004 = vmatprep.subr.mxu0 0.0
        %2005 = vmatpush2.msra.mxu0 0.0
        %2006 = vmatprep.subr.mxu0 0.0
        %2007 = vmatpush2.msra.mxu0 0.0
        %2008 = vmatprep.subr.mxu0 0.0
        %2009 = vmatpush2.msra.mxu0 0.0
        %2010 = vmatprep.subr.mxu0 0.0
        %2011 = vmatpush2.msra.mxu0 0.0
        %2012 = vmatprep.subr.mxu0 0.0
        %2013 = vmatpush2.msra.mxu0 0.0
        %2014 = vmatprep.subr.mxu0 0.0
        %2015 = vmatpush2.msra.mxu0 0.0
        %2016 = vmatprep.subr.mxu0 0.0
        %2017 = vmatpush2.msra.mxu0 0.0
        %2018 = vmatprep.subr.mxu0 0.0
        %2019 = vmatpush2.msra.mxu0 0.0
        %2020 = vmatprep.subr.mxu0 0.0
        %2021 = vmatpush2.msra.mxu0 0.0
        %2022 = vmatprep.subr.mxu0 0.0
        %2023 = vmatpush2.msra.mxu0 0.0
        %2024 = vmatprep.subr.mxu0 0.0
        %2025 = vmatpush2.msra.mxu0 0.0
        %2026 = vmatprep.subr.mxu0 0.0
        %2027 = vmatpush2.msra.mxu0 0.0
        %2028 = vmatprep.subr.mxu0 0.0
        %2029 = vmatpush2.msra.mxu0 0.0
        %2030 = vmatprep.subr.mxu0 0.0
        %2031 = vmatpush2.msra.mxu0 0.0
        %2032 = vmatprep.subr.mxu0 0.0
        %2033 = vmatpush2.msra.mxu0 0.0
        %2034 = vmatprep.subr.mxu0 0.0
        %2035 = vmatpush2.msra.mxu0 0.0
        %2036 = vmatprep.mubr.f32.mxu0 0.0
        %2037 = vmatmul.mubr.f32.gmra.mxu0 %v1899
        %v2038 = vpop.f32.mrf.mxu0
        %v2039 = vadd.f32 %v1753, %v2038
        %v2040 = vpop.f32.mrf.mxu0
        %v2041 = vadd.f32 %v1755, %v2040
        %2042 = vdwg.mxu0
        %2043 = vmatprep.subr.mxu0 0.0
        %2044 = vmatpush1.msra.mxu0 0.0
        %2045 = vmatprep.subr.mxu0 0.0
        %2046 = vmatpush1.msra.mxu0 0.0
        %2047 = vmatprep.subr.mxu0 0.0
        %2048 = vmatpush1.msra.mxu0 0.0
        %2049 = vmatprep.subr.mxu0 0.0
        %2050 = vmatpush1.msra.mxu0 0.0
        %2051 = vmatprep.subr.mxu0 0.0
        %2052 = vmatpush1.msra.mxu0 0.0
        %2053 = vmatprep.subr.mxu0 0.0
        %2054 = vmatpush1.msra.mxu0 0.0
        %2055 = vmatprep.subr.mxu0 0.0
        %2056 = vmatpush1.msra.mxu0 0.0
        %2057 = vmatprep.subr.mxu0 0.0
        %2058 = vmatpush1.msra.mxu0 0.0
        %2059 = vmatprep.subr.mxu0 0.0
        %2060 = vmatpush1.msra.mxu0 0.0
        %2061 = vmatprep.subr.mxu0 0.0
        %2062 = vmatpush1.msra.mxu0 0.0
        %2063 = vmatprep.subr.mxu0 0.0
        %2064 = vmatpush1.msra.mxu0 0.0
        %2065 = vmatprep.subr.mxu0 0.0
        %2066 = vmatpush1.msra.mxu0 0.0
        %2067 = vmatprep.subr.mxu0 0.0
        %2068 = vmatpush1.msra.mxu0 0.0
        %2069 = vmatprep.subr.mxu0 0.0
        %2070 = vmatpush1.msra.mxu0 0.0
        %2071 = vmatprep.subr.mxu0 0.0
        %2072 = vmatpush1.msra.mxu0 0.0
        %2073 = vmatprep.subr.mxu0 %v1542
        %2074 = vmatpush1.msra.mxu0 %v1541
        %2075 = vmatprep.subr.mxu0 0.0
        %2076 = vmatpush2.msra.mxu0 0.0
        %2077 = vmatprep.subr.mxu0 0.0
        %2078 = vmatpush2.msra.mxu0 0.0
        %2079 = vmatprep.subr.mxu0 0.0
        %2080 = vmatpush2.msra.mxu0 0.0
        %2081 = vmatprep.subr.mxu0 0.0
        %2082 = vmatpush2.msra.mxu0 0.0
        %2083 = vmatprep.subr.mxu0 0.0
        %2084 = vmatpush2.msra.mxu0 0.0
        %2085 = vmatprep.subr.mxu0 0.0
        %2086 = vmatpush2.msra.mxu0 0.0
        %2087 = vmatprep.subr.mxu0 0.0
        %2088 = vmatpush2.msra.mxu0 0.0
        %2089 = vmatprep.subr.mxu0 0.0
        %2090 = vmatpush2.msra.mxu0 0.0
        %2091 = vmatprep.subr.mxu0 0.0
        %2092 = vmatpush2.msra.mxu0 0.0
        %2093 = vmatprep.subr.mxu0 0.0
        %2094 = vmatpush2.msra.mxu0 0.0
        %2095 = vmatprep.subr.mxu0 0.0
        %2096 = vmatpush2.msra.mxu0 0.0
        %2097 = vmatprep.subr.mxu0 0.0
        %2098 = vmatpush2.msra.mxu0 0.0
        %2099 = vmatprep.subr.mxu0 0.0
        %2100 = vmatpush2.msra.mxu0 0.0
        %2101 = vmatprep.subr.mxu0 0.0
        %2102 = vmatpush2.msra.mxu0 0.0
        %2103 = vmatprep.subr.mxu0 0.0
        %2104 = vmatpush2.msra.mxu0 0.0
        %2105 = vmatprep.subr.mxu0 0.0
        %2106 = vmatpush2.msra.mxu0 0.0
        %2107 = vmatprep.mubr.f32.mxu0 0.0
        %2108 = vmatmul.mubr.f32.gmra.mxu0 %v1899
        %v2109 = vpop.f32.mrf.mxu0
        %v2110 = vadd.f32 %v1824, %v2109
        %v2111 = vpop.f32.mrf.mxu0
        %v2112 = vadd.f32 %v1826, %v2111
        %2113 = vdwg.mxu0
        %2114 = vmatprep.subr.mxu0 0.0
        %2115 = vmatpush1.msra.mxu0 0.0
        %2116 = vmatprep.subr.mxu0 0.0
        %2117 = vmatpush1.msra.mxu0 0.0
        %2118 = vmatprep.subr.mxu0 0.0
        %2119 = vmatpush1.msra.mxu0 0.0
        %2120 = vmatprep.subr.mxu0 0.0
        %2121 = vmatpush1.msra.mxu0 0.0
        %2122 = vmatprep.subr.mxu0 0.0
        %2123 = vmatpush1.msra.mxu0 0.0
        %2124 = vmatprep.subr.mxu0 0.0
        %2125 = vmatpush1.msra.mxu0 0.0
        %2126 = vmatprep.subr.mxu0 0.0
        %2127 = vmatpush1.msra.mxu0 0.0
        %2128 = vmatprep.subr.mxu0 0.0
        %2129 = vmatpush1.msra.mxu0 0.0
        %2130 = vmatprep.subr.mxu0 0.0
        %2131 = vmatpush1.msra.mxu0 0.0
        %2132 = vmatprep.subr.mxu0 0.0
        %2133 = vmatpush1.msra.mxu0 0.0
        %2134 = vmatprep.subr.mxu0 0.0
        %2135 = vmatpush1.msra.mxu0 0.0
        %2136 = vmatprep.subr.mxu0 0.0
        %2137 = vmatpush1.msra.mxu0 0.0
        %2138 = vmatprep.subr.mxu0 0.0
        %2139 = vmatpush1.msra.mxu0 0.0
        %2140 = vmatprep.subr.mxu0 0.0
        %2141 = vmatpush1.msra.mxu0 0.0
        %2142 = vmatprep.subr.mxu0 0.0
        %2143 = vmatpush1.msra.mxu0 0.0
        %2144 = vmatprep.subr.mxu0 0.0
        %2145 = vmatpush1.msra.mxu0 %v1543
        %2146 = vmatprep.subr.mxu0 0.0
        %2147 = vmatpush2.msra.mxu0 0.0
        %2148 = vmatprep.subr.mxu0 0.0
        %2149 = vmatpush2.msra.mxu0 0.0
        %2150 = vmatprep.subr.mxu0 0.0
        %2151 = vmatpush2.msra.mxu0 0.0
        %2152 = vmatprep.subr.mxu0 0.0
        %2153 = vmatpush2.msra.mxu0 0.0
        %2154 = vmatprep.subr.mxu0 0.0
        %2155 = vmatpush2.msra.mxu0 0.0
        %2156 = vmatprep.subr.mxu0 0.0
        %2157 = vmatpush2.msra.mxu0 0.0
        %2158 = vmatprep.subr.mxu0 0.0
        %2159 = vmatpush2.msra.mxu0 0.0
        %2160 = vmatprep.subr.mxu0 0.0
        %2161 = vmatpush2.msra.mxu0 0.0
        %2162 = vmatprep.subr.mxu0 0.0
        %2163 = vmatpush2.msra.mxu0 0.0
        %2164 = vmatprep.subr.mxu0 0.0
        %2165 = vmatpush2.msra.mxu0 0.0
        %2166 = vmatprep.subr.mxu0 0.0
        %2167 = vmatpush2.msra.mxu0 0.0
        %2168 = vmatprep.subr.mxu0 0.0
        %2169 = vmatpush2.msra.mxu0 0.0
        %2170 = vmatprep.subr.mxu0 0.0
        %2171 = vmatpush2.msra.mxu0 0.0
        %2172 = vmatprep.subr.mxu0 0.0
        %2173 = vmatpush2.msra.mxu0 0.0
        %2174 = vmatprep.subr.mxu0 0.0
        %2175 = vmatpush2.msra.mxu0 0.0
        %2176 = vmatprep.subr.mxu0 0.0
        %2177 = vmatpush2.msra.mxu0 0.0
        %2178 = vmatprep.mubr.f32.mxu0 0.0
        %2179 = vmatmul.mubr.f32.gmra.mxu0 %v1899
        %v2180 = vpop.f32.mrf.mxu0
        %v2181 = vadd.f32 %v1895, %v2180
        %v2182 = vpop.f32.mrf.mxu0
        %2183 = vdwg.mxu0
        %2184 = vrot.lane.b32.xlu0 %v1472, 27
        %v2185 = vpop.permute.xlu0 %2184
        %2187 = vrot.lane.b32.xlu0 %v1466, 27
        %v2188 = vpop.permute.xlu0 %2187
        %2189 = vrot.lane.b32.xlu0 %v1467, 27
        %v2190 = vpop.permute.xlu0 %2189
        %2191 = vrot.lane.b32.xlu0 %v1468, 27
        %v2192 = vpop.permute.xlu0 %2191
        %2193 = vrot.lane.b32.xlu0 %v1469, 27
        %v2194 = vpop.permute.xlu0 %2193
        %2195 = vrot.lane.b32.xlu0 %v1470, 27
        %v2196 = vpop.permute.xlu0 %2195
        %2197 = vrot.lane.b32.xlu0 %v1471, 27
        %v2198 = vpop.permute.xlu0 %2197
        %v2199 = vsel %vm774, %v2188, %v2190
        %v2200 = vsel %vm774, %v2190, %v2192
        %v2201 = vsel %vm774, %v2192, %v2194
        %v2202 = vsel %vm774, %v2194, %v2196
        %v2203 = vsel %vm774, %v2196, %v2198
        %v2204 = vsel %vm774, %v2198, %v2185
        %v2212 = vsel %vm774, %v2185, %v2188
        %v2213 = vlaneseq
        %v2214 = vshrl.u32 %v2213, 7
        %v2215 = vsub.s32 2, %v2214
        %v2216 = vrot.slane %v519, %v2215
        %v2217 = vlaneseq
        %v2218 = vshrl.u32 %v2217, 7
        %v2219 = vsub.s32 2, %v2218
        %v2220 = vrot.slane %v520, %v2219
        %v2221 = vlaneseq
        %v2222 = vshrl.u32 %v2221, 7
        %v2223 = vsub.s32 2, %v2222
        %v2224 = vrot.slane %v521, %v2223
        %v2225 = vlaneseq
        %v2226 = vshrl.u32 %v2225, 7
        %v2227 = vsub.s32 2, %v2226
        %v2228 = vrot.slane %v522, %v2227
        %v2229 = vlaneseq
        %v2230 = vshrl.u32 %v2229, 7
        %v2231 = vsub.s32 2, %v2230
        %v2232 = vrot.slane %v523, %v2231
        %v2233 = vlaneseq
        %v2234 = vshrl.u32 %v2233, 7
        %v2235 = vsub.s32 2, %v2234
        %v2236 = vrot.slane %v524, %v2235
        %v2237 = vlaneseq
        %v2238 = vshrl.u32 %v2237, 7
        %v2239 = vsub.s32 2, %v2238
        %v2240 = vrot.slane %v525, %v2239
        %v2241 = vmul.f32 %v2212, %v2216
        %v2242 = vmul.f32 %v2199, %v2220
        %v2243 = vmul.f32 %v2200, %v2224
        %v2244 = vmul.f32 %v2201, %v2228
        %v2245 = vmul.f32 %v2202, %v2232
        %v2246 = vmul.f32 %v2203, %v2236
        %v2247 = vmul.f32 %v2204, %v2240
        %s2248 = scalar_lea.vmem %s3, 16
        %v2249 = vld [vmem:[%s2248] sm:$0xff]
        %v2251 = vsel %vm1611, %v2249, 0
        %2253 = vmatprep.subr.mxu0 0.0
        %2254 = vmatpush1.msra.mxu0 0.0
        %2255 = vmatprep.subr.mxu0 0.0
        %2256 = vmatpush1.msra.mxu0 0.0
        %2257 = vmatprep.subr.mxu0 0.0
        %2258 = vmatpush1.msra.mxu0 0.0
        %2259 = vmatprep.subr.mxu0 0.0
        %2260 = vmatpush1.msra.mxu0 0.0
        %2261 = vmatprep.subr.mxu0 0.0
        %2262 = vmatpush1.msra.mxu0 0.0
        %2263 = vmatprep.subr.mxu0 0.0
        %2264 = vmatpush1.msra.mxu0 0.0
        %2265 = vmatprep.subr.mxu0 0.0
        %2266 = vmatpush1.msra.mxu0 0.0
        %2267 = vmatprep.subr.mxu0 0.0
        %2268 = vmatpush1.msra.mxu0 0.0
        %2269 = vmatprep.subr.mxu0 0.0
        %2270 = vmatpush1.msra.mxu0 0.0
        %2271 = vmatprep.subr.mxu0 0.0
        %2272 = vmatpush1.msra.mxu0 0.0
        %2273 = vmatprep.subr.mxu0 0.0
        %2274 = vmatpush1.msra.mxu0 0.0
        %2275 = vmatprep.subr.mxu0 0.0
        %2276 = vmatpush1.msra.mxu0 0.0
        %2277 = vmatprep.subr.mxu0 0.0
        %2278 = vmatpush1.msra.mxu0 0.0
        %2279 = vmatprep.subr.mxu0 0.0
        %2280 = vmatpush1.msra.mxu0 0.0
        %2281 = vmatprep.subr.mxu0 0.0
        %2282 = vmatpush1.msra.mxu0 0.0
        %2283 = vmatprep.subr.mxu0 %v2242
        %2284 = vmatpush1.msra.mxu0 %v2241
        %2285 = vmatprep.subr.mxu0 0.0
        %2286 = vmatpush2.msra.mxu0 0.0
        %2287 = vmatprep.subr.mxu0 0.0
        %2288 = vmatpush2.msra.mxu0 0.0
        %2289 = vmatprep.subr.mxu0 0.0
        %2290 = vmatpush2.msra.mxu0 0.0
        %2291 = vmatprep.subr.mxu0 0.0
        %2292 = vmatpush2.msra.mxu0 0.0
        %2293 = vmatprep.subr.mxu0 0.0
        %2294 = vmatpush2.msra.mxu0 0.0
        %2295 = vmatprep.subr.mxu0 0.0
        %2296 = vmatpush2.msra.mxu0 0.0
        %2297 = vmatprep.subr.mxu0 0.0
        %2298 = vmatpush2.msra.mxu0 0.0
        %2299 = vmatprep.subr.mxu0 0.0
        %2300 = vmatpush2.msra.mxu0 0.0
        %2301 = vmatprep.subr.mxu0 0.0
        %2302 = vmatpush2.msra.mxu0 0.0
        %2303 = vmatprep.subr.mxu0 0.0
        %2304 = vmatpush2.msra.mxu0 0.0
        %2305 = vmatprep.subr.mxu0 0.0
        %2306 = vmatpush2.msra.mxu0 0.0
        %2307 = vmatprep.subr.mxu0 0.0
        %2308 = vmatpush2.msra.mxu0 0.0
        %2309 = vmatprep.subr.mxu0 0.0
        %2310 = vmatpush2.msra.mxu0 0.0
        %2311 = vmatprep.subr.mxu0 0.0
        %2312 = vmatpush2.msra.mxu0 0.0
        %2313 = vmatprep.subr.mxu0 0.0
        %2314 = vmatpush2.msra.mxu0 0.0
        %2315 = vmatprep.subr.mxu0 0.0
        %2316 = vmatpush2.msra.mxu0 0.0
        %2317 = vmatprep.mubr.f32.mxu0 0.0
        %2318 = vmatmul.mubr.f32.gmra.mxu0 %v2251
        %v2319 = vpop.f32.mrf.mxu0
        %v2320 = vadd.f32 0.0, %v2319
        %v2321 = vpop.f32.mrf.mxu0
        %v2322 = vadd.f32 0.0, %v2321
        %2323 = vdwg.mxu0
        %2324 = vmatprep.subr.mxu0 0.0
        %2325 = vmatpush1.msra.mxu0 0.0
        %2326 = vmatprep.subr.mxu0 0.0
        %2327 = vmatpush1.msra.mxu0 0.0
        %2328 = vmatprep.subr.mxu0 0.0
        %2329 = vmatpush1.msra.mxu0 0.0
        %2330 = vmatprep.subr.mxu0 0.0
        %2331 = vmatpush1.msra.mxu0 0.0
        %2332 = vmatprep.subr.mxu0 0.0
        %2333 = vmatpush1.msra.mxu0 0.0
        %2334 = vmatprep.subr.mxu0 0.0
        %2335 = vmatpush1.msra.mxu0 0.0
        %2336 = vmatprep.subr.mxu0 0.0
        %2337 = vmatpush1.msra.mxu0 0.0
        %2338 = vmatprep.subr.mxu0 0.0
        %2339 = vmatpush1.msra.mxu0 0.0
        %2340 = vmatprep.subr.mxu0 0.0
        %2341 = vmatpush1.msra.mxu0 0.0
        %2342 = vmatprep.subr.mxu0 0.0
        %2343 = vmatpush1.msra.mxu0 0.0
        %2344 = vmatprep.subr.mxu0 0.0
        %2345 = vmatpush1.msra.mxu0 0.0
        %2346 = vmatprep.subr.mxu0 0.0
        %2347 = vmatpush1.msra.mxu0 0.0
        %2348 = vmatprep.subr.mxu0 0.0
        %2349 = vmatpush1.msra.mxu0 0.0
        %2350 = vmatprep.subr.mxu0 0.0
        %2351 = vmatpush1.msra.mxu0 0.0
        %2352 = vmatprep.subr.mxu0 0.0
        %2353 = vmatpush1.msra.mxu0 0.0
        %2354 = vmatprep.subr.mxu0 %v2244
        %2355 = vmatpush1.msra.mxu0 %v2243
        %2356 = vmatprep.subr.mxu0 0.0
        %2357 = vmatpush2.msra.mxu0 0.0
        %2358 = vmatprep.subr.mxu0 0.0
        %2359 = vmatpush2.msra.mxu0 0.0
        %2360 = vmatprep.subr.mxu0 0.0
        %2361 = vmatpush2.msra.mxu0 0.0
        %2362 = vmatprep.subr.mxu0 0.0
        %2363 = vmatpush2.msra.mxu0 0.0
        %2364 = vmatprep.subr.mxu0 0.0
        %2365 = vmatpush2.msra.mxu0 0.0
        %2366 = vmatprep.subr.mxu0 0.0
        %2367 = vmatpush2.msra.mxu0 0.0
        %2368 = vmatprep.subr.mxu0 0.0
        %2369 = vmatpush2.msra.mxu0 0.0
        %2370 = vmatprep.subr.mxu0 0.0
        %2371 = vmatpush2.msra.mxu0 0.0
        %2372 = vmatprep.subr.mxu0 0.0
        %2373 = vmatpush2.msra.mxu0 0.0
        %2374 = vmatprep.subr.mxu0 0.0
        %2375 = vmatpush2.msra.mxu0 0.0
        %2376 = vmatprep.subr.mxu0 0.0
        %2377 = vmatpush2.msra.mxu0 0.0
        %2378 = vmatprep.subr.mxu0 0.0
        %2379 = vmatpush2.msra.mxu0 0.0
        %2380 = vmatprep.subr.mxu0 0.0
        %2381 = vmatpush2.msra.mxu0 0.0
        %2382 = vmatprep.subr.mxu0 0.0
        %2383 = vmatpush2.msra.mxu0 0.0
        %2384 = vmatprep.subr.mxu0 0.0
        %2385 = vmatpush2.msra.mxu0 0.0
        %2386 = vmatprep.subr.mxu0 0.0
        %2387 = vmatpush2.msra.mxu0 0.0
        %2388 = vmatprep.mubr.f32.mxu0 0.0
        %2389 = vmatmul.mubr.f32.gmra.mxu0 %v2251
        %v2390 = vpop.f32.mrf.mxu0
        %v2391 = vadd.f32 0.0, %v2390
        %v2392 = vpop.f32.mrf.mxu0
        %v2393 = vadd.f32 0.0, %v2392
        %2394 = vdwg.mxu0
        %2395 = vmatprep.subr.mxu0 0.0
        %2396 = vmatpush1.msra.mxu0 0.0
        %2397 = vmatprep.subr.mxu0 0.0
        %2398 = vmatpush1.msra.mxu0 0.0
        %2399 = vmatprep.subr.mxu0 0.0
        %2400 = vmatpush1.msra.mxu0 0.0
        %2401 = vmatprep.subr.mxu0 0.0
        %2402 = vmatpush1.msra.mxu0 0.0
        %2403 = vmatprep.subr.mxu0 0.0
        %2404 = vmatpush1.msra.mxu0 0.0
        %2405 = vmatprep.subr.mxu0 0.0
        %2406 = vmatpush1.msra.mxu0 0.0
        %2407 = vmatprep.subr.mxu0 0.0
        %2408 = vmatpush1.msra.mxu0 0.0
        %2409 = vmatprep.subr.mxu0 0.0
        %2410 = vmatpush1.msra.mxu0 0.0
        %2411 = vmatprep.subr.mxu0 0.0
        %2412 = vmatpush1.msra.mxu0 0.0
        %2413 = vmatprep.subr.mxu0 0.0
        %2414 = vmatpush1.msra.mxu0 0.0
        %2415 = vmatprep.subr.mxu0 0.0
        %2416 = vmatpush1.msra.mxu0 0.0
        %2417 = vmatprep.subr.mxu0 0.0
        %2418 = vmatpush1.msra.mxu0 0.0
        %2419 = vmatprep.subr.mxu0 0.0
        %2420 = vmatpush1.msra.mxu0 0.0
        %2421 = vmatprep.subr.mxu0 0.0
        %2422 = vmatpush1.msra.mxu0 0.0
        %2423 = vmatprep.subr.mxu0 0.0
        %2424 = vmatpush1.msra.mxu0 0.0
        %2425 = vmatprep.subr.mxu0 %v2246
        %2426 = vmatpush1.msra.mxu0 %v2245
        %2427 = vmatprep.subr.mxu0 0.0
        %2428 = vmatpush2.msra.mxu0 0.0
        %2429 = vmatprep.subr.mxu0 0.0
        %2430 = vmatpush2.msra.mxu0 0.0
        %2431 = vmatprep.subr.mxu0 0.0
        %2432 = vmatpush2.msra.mxu0 0.0
        %2433 = vmatprep.subr.mxu0 0.0
        %2434 = vmatpush2.msra.mxu0 0.0
        %2435 = vmatprep.subr.mxu0 0.0
        %2436 = vmatpush2.msra.mxu0 0.0
        %2437 = vmatprep.subr.mxu0 0.0
        %2438 = vmatpush2.msra.mxu0 0.0
        %2439 = vmatprep.subr.mxu0 0.0
        %2440 = vmatpush2.msra.mxu0 0.0
        %2441 = vmatprep.subr.mxu0 0.0
        %2442 = vmatpush2.msra.mxu0 0.0
        %2443 = vmatprep.subr.mxu0 0.0
        %2444 = vmatpush2.msra.mxu0 0.0
        %2445 = vmatprep.subr.mxu0 0.0
        %2446 = vmatpush2.msra.mxu0 0.0
        %2447 = vmatprep.subr.mxu0 0.0
        %2448 = vmatpush2.msra.mxu0 0.0
        %2449 = vmatprep.subr.mxu0 0.0
        %2450 = vmatpush2.msra.mxu0 0.0
        %2451 = vmatprep.subr.mxu0 0.0
        %2452 = vmatpush2.msra.mxu0 0.0
        %2453 = vmatprep.subr.mxu0 0.0
        %2454 = vmatpush2.msra.mxu0 0.0
        %2455 = vmatprep.subr.mxu0 0.0
        %2456 = vmatpush2.msra.mxu0 0.0
        %2457 = vmatprep.subr.mxu0 0.0
        %2458 = vmatpush2.msra.mxu0 0.0
        %2459 = vmatprep.mubr.f32.mxu0 0.0
        %2460 = vmatmul.mubr.f32.gmra.mxu0 %v2251
        %v2461 = vpop.f32.mrf.mxu0
        %v2462 = vadd.f32 0.0, %v2461
        %v2463 = vpop.f32.mrf.mxu0
        %v2464 = vadd.f32 0.0, %v2463
        %2465 = vdwg.mxu0
        %2466 = vmatprep.subr.mxu0 0.0
        %2467 = vmatpush1.msra.mxu0 0.0
        %2468 = vmatprep.subr.mxu0 0.0
        %2469 = vmatpush1.msra.mxu0 0.0
        %2470 = vmatprep.subr.mxu0 0.0
        %2471 = vmatpush1.msra.mxu0 0.0
        %2472 = vmatprep.subr.mxu0 0.0
        %2473 = vmatpush1.msra.mxu0 0.0
        %2474 = vmatprep.subr.mxu0 0.0
        %2475 = vmatpush1.msra.mxu0 0.0
        %2476 = vmatprep.subr.mxu0 0.0
        %2477 = vmatpush1.msra.mxu0 0.0
        %2478 = vmatprep.subr.mxu0 0.0
        %2479 = vmatpush1.msra.mxu0 0.0
        %2480 = vmatprep.subr.mxu0 0.0
        %2481 = vmatpush1.msra.mxu0 0.0
        %2482 = vmatprep.subr.mxu0 0.0
        %2483 = vmatpush1.msra.mxu0 0.0
        %2484 = vmatprep.subr.mxu0 0.0
        %2485 = vmatpush1.msra.mxu0 0.0
        %2486 = vmatprep.subr.mxu0 0.0
        %2487 = vmatpush1.msra.mxu0 0.0
        %2488 = vmatprep.subr.mxu0 0.0
        %2489 = vmatpush1.msra.mxu0 0.0
        %2490 = vmatprep.subr.mxu0 0.0
        %2491 = vmatpush1.msra.mxu0 0.0
        %2492 = vmatprep.subr.mxu0 0.0
        %2493 = vmatpush1.msra.mxu0 0.0
        %2494 = vmatprep.subr.mxu0 0.0
        %2495 = vmatpush1.msra.mxu0 0.0
        %2496 = vmatprep.subr.mxu0 0.0
        %2497 = vmatpush1.msra.mxu0 %v2247
        %2498 = vmatprep.subr.mxu0 0.0
        %2499 = vmatpush2.msra.mxu0 0.0
        %2500 = vmatprep.subr.mxu0 0.0
        %2501 = vmatpush2.msra.mxu0 0.0
        %2502 = vmatprep.subr.mxu0 0.0
        %2503 = vmatpush2.msra.mxu0 0.0
        %2504 = vmatprep.subr.mxu0 0.0
        %2505 = vmatpush2.msra.mxu0 0.0
        %2506 = vmatprep.subr.mxu0 0.0
        %2507 = vmatpush2.msra.mxu0 0.0
        %2508 = vmatprep.subr.mxu0 0.0
        %2509 = vmatpush2.msra.mxu0 0.0
        %2510 = vmatprep.subr.mxu0 0.0
        %2511 = vmatpush2.msra.mxu0 0.0
        %2512 = vmatprep.subr.mxu0 0.0
        %2513 = vmatpush2.msra.mxu0 0.0
        %2514 = vmatprep.subr.mxu0 0.0
        %2515 = vmatpush2.msra.mxu0 0.0
        %2516 = vmatprep.subr.mxu0 0.0
        %2517 = vmatpush2.msra.mxu0 0.0
        %2518 = vmatprep.subr.mxu0 0.0
        %2519 = vmatpush2.msra.mxu0 0.0
        %2520 = vmatprep.subr.mxu0 0.0
        %2521 = vmatpush2.msra.mxu0 0.0
        %2522 = vmatprep.subr.mxu0 0.0
        %2523 = vmatpush2.msra.mxu0 0.0
        %2524 = vmatprep.subr.mxu0 0.0
        %2525 = vmatpush2.msra.mxu0 0.0
        %2526 = vmatprep.subr.mxu0 0.0
        %2527 = vmatpush2.msra.mxu0 0.0
        %2528 = vmatprep.subr.mxu0 0.0
        %2529 = vmatpush2.msra.mxu0 0.0
        %2530 = vmatprep.mubr.f32.mxu0 0.0
        %2531 = vmatmul.mubr.f32.gmra.mxu0 %v2251
        %v2532 = vpop.f32.mrf.mxu0
        %v2533 = vadd.f32 0.0, %v2532
        %v2534 = vpop.f32.mrf.mxu0
        %2535 = vdwg.mxu0
        %v2536 = vadd.f32 %v1968, %v2320
        %v2537 = vadd.f32 %v1970, %v2322
        %v2538 = vadd.f32 %v2039, %v2391
        %v2539 = vadd.f32 %v2041, %v2393
        %v2540 = vadd.f32 %v2110, %v2462
        %v2541 = vadd.f32 %v2112, %v2464
        %v2542 = vadd.f32 %v2181, %v2533
        %2543 = vrot.lane.b32.xlu0 %v1472, 1
        %v2544 = vpop.permute.xlu0 %2543
        %2546 = vrot.lane.b32.xlu0 %v1466, 1
        %v2547 = vpop.permute.xlu0 %2546
        %2548 = vrot.lane.b32.xlu0 %v1467, 1
        %v2549 = vpop.permute.xlu0 %2548
        %2550 = vrot.lane.b32.xlu0 %v1468, 1
        %v2551 = vpop.permute.xlu0 %2550
        %2552 = vrot.lane.b32.xlu0 %v1469, 1
        %v2553 = vpop.permute.xlu0 %2552
        %2554 = vrot.lane.b32.xlu0 %v1470, 1
        %v2555 = vpop.permute.xlu0 %2554
        %2556 = vrot.lane.b32.xlu0 %v1471, 1
        %v2557 = vpop.permute.xlu0 %2556
        %v2558 = vsel %vm874, %v2547, %v2549
        %v2559 = vsel %vm874, %v2549, %v2551
        %v2560 = vsel %vm874, %v2551, %v2553
        %v2561 = vsel %vm874, %v2553, %v2555
        %v2562 = vsel %vm874, %v2555, %v2557
        %v2563 = vsel %vm874, %v2557, %v2544
        %v2571 = vsel %vm874, %v2544, %v2547
        %v2572 = vlaneseq
        %v2573 = vshrl.u32 %v2572, 7
        %v2574 = vsub.s32 3, %v2573
        %v2575 = vrot.slane %v519, %v2574
        %v2576 = vlaneseq
        %v2577 = vshrl.u32 %v2576, 7
        %v2578 = vsub.s32 3, %v2577
        %v2579 = vrot.slane %v520, %v2578
        %v2580 = vlaneseq
        %v2581 = vshrl.u32 %v2580, 7
        %v2582 = vsub.s32 3, %v2581
        %v2583 = vrot.slane %v521, %v2582
        %v2584 = vlaneseq
        %v2585 = vshrl.u32 %v2584, 7
        %v2586 = vsub.s32 3, %v2585
        %v2587 = vrot.slane %v522, %v2586
        %v2588 = vlaneseq
        %v2589 = vshrl.u32 %v2588, 7
        %v2590 = vsub.s32 3, %v2589
        %v2591 = vrot.slane %v523, %v2590
        %v2592 = vlaneseq
        %v2593 = vshrl.u32 %v2592, 7
        %v2594 = vsub.s32 3, %v2593
        %v2595 = vrot.slane %v524, %v2594
        %v2596 = vlaneseq
        %v2597 = vshrl.u32 %v2596, 7
        %v2598 = vsub.s32 3, %v2597
        %v2599 = vrot.slane %v525, %v2598
        %v2600 = vmul.f32 %v2571, %v2575
        %v2601 = vmul.f32 %v2558, %v2579
        %v2602 = vmul.f32 %v2559, %v2583
        %v2603 = vmul.f32 %v2560, %v2587
        %v2604 = vmul.f32 %v2561, %v2591
        %v2605 = vmul.f32 %v2562, %v2595
        %v2606 = vmul.f32 %v2563, %v2599
        %s2607 = scalar_lea.vmem %s3, 24
        %v2608 = vld [vmem:[%s2607] sm:$0xff]
        %v2610 = vsel %vm1611, %v2608, 0
        %2612 = vmatprep.subr.mxu0 0.0
        %2613 = vmatpush1.msra.mxu0 0.0
        %2614 = vmatprep.subr.mxu0 0.0
        %2615 = vmatpush1.msra.mxu0 0.0
        %2616 = vmatprep.subr.mxu0 0.0
        %2617 = vmatpush1.msra.mxu0 0.0
        %2618 = vmatprep.subr.mxu0 0.0
        %2619 = vmatpush1.msra.mxu0 0.0
        %2620 = vmatprep.subr.mxu0 0.0
        %2621 = vmatpush1.msra.mxu0 0.0
        %2622 = vmatprep.subr.mxu0 0.0
        %2623 = vmatpush1.msra.mxu0 0.0
        %2624 = vmatprep.subr.mxu0 0.0
        %2625 = vmatpush1.msra.mxu0 0.0
        %2626 = vmatprep.subr.mxu0 0.0
        %2627 = vmatpush1.msra.mxu0 0.0
        %2628 = vmatprep.subr.mxu0 0.0
        %2629 = vmatpush1.msra.mxu0 0.0
        %2630 = vmatprep.subr.mxu0 0.0
        %2631 = vmatpush1.msra.mxu0 0.0
        %2632 = vmatprep.subr.mxu0 0.0
        %2633 = vmatpush1.msra.mxu0 0.0
        %2634 = vmatprep.subr.mxu0 0.0
        %2635 = vmatpush1.msra.mxu0 0.0
        %2636 = vmatprep.subr.mxu0 0.0
        %2637 = vmatpush1.msra.mxu0 0.0
        %2638 = vmatprep.subr.mxu0 0.0
        %2639 = vmatpush1.msra.mxu0 0.0
        %2640 = vmatprep.subr.mxu0 0.0
        %2641 = vmatpush1.msra.mxu0 0.0
        %2642 = vmatprep.subr.mxu0 %v2601
        %2643 = vmatpush1.msra.mxu0 %v2600
        %2644 = vmatprep.subr.mxu0 0.0
        %2645 = vmatpush2.msra.mxu0 0.0
        %2646 = vmatprep.subr.mxu0 0.0
        %2647 = vmatpush2.msra.mxu0 0.0
        %2648 = vmatprep.subr.mxu0 0.0
        %2649 = vmatpush2.msra.mxu0 0.0
        %2650 = vmatprep.subr.mxu0 0.0
        %2651 = vmatpush2.msra.mxu0 0.0
        %2652 = vmatprep.subr.mxu0 0.0
        %2653 = vmatpush2.msra.mxu0 0.0
        %2654 = vmatprep.subr.mxu0 0.0
        %2655 = vmatpush2.msra.mxu0 0.0
        %2656 = vmatprep.subr.mxu0 0.0
        %2657 = vmatpush2.msra.mxu0 0.0
        %2658 = vmatprep.subr.mxu0 0.0
        %2659 = vmatpush2.msra.mxu0 0.0
        %2660 = vmatprep.subr.mxu0 0.0
        %2661 = vmatpush2.msra.mxu0 0.0
        %2662 = vmatprep.subr.mxu0 0.0
        %2663 = vmatpush2.msra.mxu0 0.0
        %2664 = vmatprep.subr.mxu0 0.0
        %2665 = vmatpush2.msra.mxu0 0.0
        %2666 = vmatprep.subr.mxu0 0.0
        %2667 = vmatpush2.msra.mxu0 0.0
        %2668 = vmatprep.subr.mxu0 0.0
        %2669 = vmatpush2.msra.mxu0 0.0
        %2670 = vmatprep.subr.mxu0 0.0
        %2671 = vmatpush2.msra.mxu0 0.0
        %2672 = vmatprep.subr.mxu0 0.0
        %2673 = vmatpush2.msra.mxu0 0.0
        %2674 = vmatprep.subr.mxu0 0.0
        %2675 = vmatpush2.msra.mxu0 0.0
        %2676 = vmatprep.mubr.f32.mxu0 0.0
        %2677 = vmatmul.mubr.f32.gmra.mxu0 %v2610
        %v2678 = vpop.f32.mrf.mxu0
        %v2679 = vadd.f32 0.0, %v2678
        %v2680 = vpop.f32.mrf.mxu0
        %v2681 = vadd.f32 0.0, %v2680
        %2682 = vdwg.mxu0
        %2683 = vmatprep.subr.mxu0 0.0
        %2684 = vmatpush1.msra.mxu0 0.0
        %2685 = vmatprep.subr.mxu0 0.0
        %2686 = vmatpush1.msra.mxu0 0.0
        %2687 = vmatprep.subr.mxu0 0.0
        %2688 = vmatpush1.msra.mxu0 0.0
        %2689 = vmatprep.subr.mxu0 0.0
        %2690 = vmatpush1.msra.mxu0 0.0
        %2691 = vmatprep.subr.mxu0 0.0
        %2692 = vmatpush1.msra.mxu0 0.0
        %2693 = vmatprep.subr.mxu0 0.0
        %2694 = vmatpush1.msra.mxu0 0.0
        %2695 = vmatprep.subr.mxu0 0.0
        %2696 = vmatpush1.msra.mxu0 0.0
        %2697 = vmatprep.subr.mxu0 0.0
        %2698 = vmatpush1.msra.mxu0 0.0
        %2699 = vmatprep.subr.mxu0 0.0
        %2700 = vmatpush1.msra.mxu0 0.0
        %2701 = vmatprep.subr.mxu0 0.0
        %2702 = vmatpush1.msra.mxu0 0.0
        %2703 = vmatprep.subr.mxu0 0.0
        %2704 = vmatpush1.msra.mxu0 0.0
        %2705 = vmatprep.subr.mxu0 0.0
        %2706 = vmatpush1.msra.mxu0 0.0
        %2707 = vmatprep.subr.mxu0 0.0
        %2708 = vmatpush1.msra.mxu0 0.0
        %2709 = vmatprep.subr.mxu0 0.0
        %2710 = vmatpush1.msra.mxu0 0.0
        %2711 = vmatprep.subr.mxu0 0.0
        %2712 = vmatpush1.msra.mxu0 0.0
        %2713 = vmatprep.subr.mxu0 %v2603
        %2714 = vmatpush1.msra.mxu0 %v2602
        %2715 = vmatprep.subr.mxu0 0.0
        %2716 = vmatpush2.msra.mxu0 0.0
        %2717 = vmatprep.subr.mxu0 0.0
        %2718 = vmatpush2.msra.mxu0 0.0
        %2719 = vmatprep.subr.mxu0 0.0
        %2720 = vmatpush2.msra.mxu0 0.0
        %2721 = vmatprep.subr.mxu0 0.0
        %2722 = vmatpush2.msra.mxu0 0.0
        %2723 = vmatprep.subr.mxu0 0.0
        %2724 = vmatpush2.msra.mxu0 0.0
        %2725 = vmatprep.subr.mxu0 0.0
        %2726 = vmatpush2.msra.mxu0 0.0
        %2727 = vmatprep.subr.mxu0 0.0
        %2728 = vmatpush2.msra.mxu0 0.0
        %2729 = vmatprep.subr.mxu0 0.0
        %2730 = vmatpush2.msra.mxu0 0.0
        %2731 = vmatprep.subr.mxu0 0.0
        %2732 = vmatpush2.msra.mxu0 0.0
        %2733 = vmatprep.subr.mxu0 0.0
        %2734 = vmatpush2.msra.mxu0 0.0
        %2735 = vmatprep.subr.mxu0 0.0
        %2736 = vmatpush2.msra.mxu0 0.0
        %2737 = vmatprep.subr.mxu0 0.0
        %2738 = vmatpush2.msra.mxu0 0.0
        %2739 = vmatprep.subr.mxu0 0.0
        %2740 = vmatpush2.msra.mxu0 0.0
        %2741 = vmatprep.subr.mxu0 0.0
        %2742 = vmatpush2.msra.mxu0 0.0
        %2743 = vmatprep.subr.mxu0 0.0
        %2744 = vmatpush2.msra.mxu0 0.0
        %2745 = vmatprep.subr.mxu0 0.0
        %2746 = vmatpush2.msra.mxu0 0.0
        %2747 = vmatprep.mubr.f32.mxu0 0.0
        %2748 = vmatmul.mubr.f32.gmra.mxu0 %v2610
        %v2749 = vpop.f32.mrf.mxu0
        %v2750 = vadd.f32 0.0, %v2749
        %v2751 = vpop.f32.mrf.mxu0
        %v2752 = vadd.f32 0.0, %v2751
        %2753 = vdwg.mxu0
        %2754 = vmatprep.subr.mxu0 0.0
        %2755 = vmatpush1.msra.mxu0 0.0
        %2756 = vmatprep.subr.mxu0 0.0
        %2757 = vmatpush1.msra.mxu0 0.0
        %2758 = vmatprep.subr.mxu0 0.0
        %2759 = vmatpush1.msra.mxu0 0.0
        %2760 = vmatprep.subr.mxu0 0.0
        %2761 = vmatpush1.msra.mxu0 0.0
        %2762 = vmatprep.subr.mxu0 0.0
        %2763 = vmatpush1.msra.mxu0 0.0
        %2764 = vmatprep.subr.mxu0 0.0
        %2765 = vmatpush1.msra.mxu0 0.0
        %2766 = vmatprep.subr.mxu0 0.0
        %2767 = vmatpush1.msra.mxu0 0.0
        %2768 = vmatprep.subr.mxu0 0.0
        %2769 = vmatpush1.msra.mxu0 0.0
        %2770 = vmatprep.subr.mxu0 0.0
        %2771 = vmatpush1.msra.mxu0 0.0
        %2772 = vmatprep.subr.mxu0 0.0
        %2773 = vmatpush1.msra.mxu0 0.0
        %2774 = vmatprep.subr.mxu0 0.0
        %2775 = vmatpush1.msra.mxu0 0.0
        %2776 = vmatprep.subr.mxu0 0.0
        %2777 = vmatpush1.msra.mxu0 0.0
        %2778 = vmatprep.subr.mxu0 0.0
        %2779 = vmatpush1.msra.mxu0 0.0
        %2780 = vmatprep.subr.mxu0 0.0
        %2781 = vmatpush1.msra.mxu0 0.0
        %2782 = vmatprep.subr.mxu0 0.0
        %2783 = vmatpush1.msra.mxu0 0.0
        %2784 = vmatprep.subr.mxu0 %v2605
        %2785 = vmatpush1.msra.mxu0 %v2604
        %2786 = vmatprep.subr.mxu0 0.0
        %2787 = vmatpush2.msra.mxu0 0.0
        %2788 = vmatprep.subr.mxu0 0.0
        %2789 = vmatpush2.msra.mxu0 0.0
        %2790 = vmatprep.subr.mxu0 0.0
        %2791 = vmatpush2.msra.mxu0 0.0
        %2792 = vmatprep.subr.mxu0 0.0
        %2793 = vmatpush2.msra.mxu0 0.0
        %2794 = vmatprep.subr.mxu0 0.0
        %2795 = vmatpush2.msra.mxu0 0.0
        %2796 = vmatprep.subr.mxu0 0.0
        %2797 = vmatpush2.msra.mxu0 0.0
        %2798 = vmatprep.subr.mxu0 0.0
        %2799 = vmatpush2.msra.mxu0 0.0
        %2800 = vmatprep.subr.mxu0 0.0
        %2801 = vmatpush2.msra.mxu0 0.0
        %2802 = vmatprep.subr.mxu0 0.0
        %2803 = vmatpush2.msra.mxu0 0.0
        %2804 = vmatprep.subr.mxu0 0.0
        %2805 = vmatpush2.msra.mxu0 0.0
        %2806 = vmatprep.subr.mxu0 0.0
        %2807 = vmatpush2.msra.mxu0 0.0
        %2808 = vmatprep.subr.mxu0 0.0
        %2809 = vmatpush2.msra.mxu0 0.0
        %2810 = vmatprep.subr.mxu0 0.0
        %2811 = vmatpush2.msra.mxu0 0.0
        %2812 = vmatprep.subr.mxu0 0.0
        %2813 = vmatpush2.msra.mxu0 0.0
        %2814 = vmatprep.subr.mxu0 0.0
        %2815 = vmatpush2.msra.mxu0 0.0
        %2816 = vmatprep.subr.mxu0 0.0
        %2817 = vmatpush2.msra.mxu0 0.0
        %2818 = vmatprep.mubr.f32.mxu0 0.0
        %2819 = vmatmul.mubr.f32.gmra.mxu0 %v2610
        %v2820 = vpop.f32.mrf.mxu0
        %v2821 = vadd.f32 0.0, %v2820
        %v2822 = vpop.f32.mrf.mxu0
        %v2823 = vadd.f32 0.0, %v2822
        %2824 = vdwg.mxu0
        %2825 = vmatprep.subr.mxu0 0.0
        %2826 = vmatpush1.msra.mxu0 0.0
        %2827 = vmatprep.subr.mxu0 0.0
        %2828 = vmatpush1.msra.mxu0 0.0
        %2829 = vmatprep.subr.mxu0 0.0
        %2830 = vmatpush1.msra.mxu0 0.0
        %2831 = vmatprep.subr.mxu0 0.0
        %2832 = vmatpush1.msra.mxu0 0.0
        %2833 = vmatprep.subr.mxu0 0.0
        %2834 = vmatpush1.msra.mxu0 0.0
        %2835 = vmatprep.subr.mxu0 0.0
        %2836 = vmatpush1.msra.mxu0 0.0
        %2837 = vmatprep.subr.mxu0 0.0
        %2838 = vmatpush1.msra.mxu0 0.0
        %2839 = vmatprep.subr.mxu0 0.0
        %2840 = vmatpush1.msra.mxu0 0.0
        %2841 = vmatprep.subr.mxu0 0.0
        %2842 = vmatpush1.msra.mxu0 0.0
        %2843 = vmatprep.subr.mxu0 0.0
        %2844 = vmatpush1.msra.mxu0 0.0
        %2845 = vmatprep.subr.mxu0 0.0
        %2846 = vmatpush1.msra.mxu0 0.0
        %2847 = vmatprep.subr.mxu0 0.0
        %2848 = vmatpush1.msra.mxu0 0.0
        %2849 = vmatprep.subr.mxu0 0.0
        %2850 = vmatpush1.msra.mxu0 0.0
        %2851 = vmatprep.subr.mxu0 0.0
        %2852 = vmatpush1.msra.mxu0 0.0
        %2853 = vmatprep.subr.mxu0 0.0
        %2854 = vmatpush1.msra.mxu0 0.0
        %2855 = vmatprep.subr.mxu0 0.0
        %2856 = vmatpush1.msra.mxu0 %v2606
        %2857 = vmatprep.subr.mxu0 0.0
        %2858 = vmatpush2.msra.mxu0 0.0
        %2859 = vmatprep.subr.mxu0 0.0
        %2860 = vmatpush2.msra.mxu0 0.0
        %2861 = vmatprep.subr.mxu0 0.0
        %2862 = vmatpush2.msra.mxu0 0.0
        %2863 = vmatprep.subr.mxu0 0.0
        %2864 = vmatpush2.msra.mxu0 0.0
        %2865 = vmatprep.subr.mxu0 0.0
        %2866 = vmatpush2.msra.mxu0 0.0
        %2867 = vmatprep.subr.mxu0 0.0
        %2868 = vmatpush2.msra.mxu0 0.0
        %2869 = vmatprep.subr.mxu0 0.0
        %2870 = vmatpush2.msra.mxu0 0.0
        %2871 = vmatprep.subr.mxu0 0.0
        %2872 = vmatpush2.msra.mxu0 0.0
        %2873 = vmatprep.subr.mxu0 0.0
        %2874 = vmatpush2.msra.mxu0 0.0
        %2875 = vmatprep.subr.mxu0 0.0
        %2876 = vmatpush2.msra.mxu0 0.0
        %2877 = vmatprep.subr.mxu0 0.0
        %2878 = vmatpush2.msra.mxu0 0.0
        %2879 = vmatprep.subr.mxu0 0.0
        %2880 = vmatpush2.msra.mxu0 0.0
        %2881 = vmatprep.subr.mxu0 0.0
        %2882 = vmatpush2.msra.mxu0 0.0
        %2883 = vmatprep.subr.mxu0 0.0
        %2884 = vmatpush2.msra.mxu0 0.0
        %2885 = vmatprep.subr.mxu0 0.0
        %2886 = vmatpush2.msra.mxu0 0.0
        %2887 = vmatprep.subr.mxu0 0.0
        %2888 = vmatpush2.msra.mxu0 0.0
        %2889 = vmatprep.mubr.f32.mxu0 0.0
        %2890 = vmatmul.mubr.f32.gmra.mxu0 %v2610
        %v2891 = vpop.f32.mrf.mxu0
        %v2892 = vadd.f32 0.0, %v2891
        %v2893 = vpop.f32.mrf.mxu0
        %2894 = vdwg.mxu0
        %v2895 = vadd.f32 %v2536, %v2679
        %v2896 = vadd.f32 %v2537, %v2681
        %v2897 = vadd.f32 %v2538, %v2750
        %v2898 = vadd.f32 %v2539, %v2752
        %v2899 = vadd.f32 %v2540, %v2821
        %v2900 = vadd.f32 %v2541, %v2823
        %v2901 = vadd.f32 %v2542, %v2892
        %v2902 = vlaneseq
        %v2903 = vshrl.u32 %v2902, 7
        %v2904 = vsub.s32 4, %v2903
        %v2905 = vrot.slane %v519, %v2904
        %v2906 = vlaneseq
        %v2907 = vshrl.u32 %v2906, 7
        %v2908 = vsub.s32 4, %v2907
        %v2909 = vrot.slane %v520, %v2908
        %v2910 = vlaneseq
        %v2911 = vshrl.u32 %v2910, 7
        %v2912 = vsub.s32 4, %v2911
        %v2913 = vrot.slane %v521, %v2912
        %v2914 = vlaneseq
        %v2915 = vshrl.u32 %v2914, 7
        %v2916 = vsub.s32 4, %v2915
        %v2917 = vrot.slane %v522, %v2916
        %v2918 = vlaneseq
        %v2919 = vshrl.u32 %v2918, 7
        %v2920 = vsub.s32 4, %v2919
        %v2921 = vrot.slane %v523, %v2920
        %v2922 = vlaneseq
        %v2923 = vshrl.u32 %v2922, 7
        %v2924 = vsub.s32 4, %v2923
        %v2925 = vrot.slane %v524, %v2924
        %v2926 = vlaneseq
        %v2927 = vshrl.u32 %v2926, 7
        %v2928 = vsub.s32 4, %v2927
        %v2929 = vrot.slane %v525, %v2928
        %v2930 = vmul.f32 %v1466, %v2905
        %v2931 = vmul.f32 %v1467, %v2909
        %v2932 = vmul.f32 %v1468, %v2913
        %v2933 = vmul.f32 %v1469, %v2917
        %v2934 = vmul.f32 %v1470, %v2921
        %v2935 = vmul.f32 %v1471, %v2925
        %v2936 = vmul.f32 %v1472, %v2929
        %s2937 = scalar_lea.vmem %s3, 32
        %v2938 = vld [vmem:[%s2937] sm:$0xff]
        %v2940 = vsel %vm1611, %v2938, 0
        %2942 = vmatprep.subr.mxu0 0.0
        %2943 = vmatpush1.msra.mxu0 0.0
        %2944 = vmatprep.subr.mxu0 0.0
        %2945 = vmatpush1.msra.mxu0 0.0
        %2946 = vmatprep.subr.mxu0 0.0
        %2947 = vmatpush1.msra.mxu0 0.0
        %2948 = vmatprep.subr.mxu0 0.0
        %2949 = vmatpush1.msra.mxu0 0.0
        %2950 = vmatprep.subr.mxu0 0.0
        %2951 = vmatpush1.msra.mxu0 0.0
        %2952 = vmatprep.subr.mxu0 0.0
        %2953 = vmatpush1.msra.mxu0 0.0
        %2954 = vmatprep.subr.mxu0 0.0
        %2955 = vmatpush1.msra.mxu0 0.0
        %2956 = vmatprep.subr.mxu0 0.0
        %2957 = vmatpush1.msra.mxu0 0.0
        %2958 = vmatprep.subr.mxu0 0.0
        %2959 = vmatpush1.msra.mxu0 0.0
        %2960 = vmatprep.subr.mxu0 0.0
        %2961 = vmatpush1.msra.mxu0 0.0
        %2962 = vmatprep.subr.mxu0 0.0
        %2963 = vmatpush1.msra.mxu0 0.0
        %2964 = vmatprep.subr.mxu0 0.0
        %2965 = vmatpush1.msra.mxu0 0.0
        %2966 = vmatprep.subr.mxu0 0.0
        %2967 = vmatpush1.msra.mxu0 0.0
        %2968 = vmatprep.subr.mxu0 0.0
        %2969 = vmatpush1.msra.mxu0 0.0
        %2970 = vmatprep.subr.mxu0 0.0
        %2971 = vmatpush1.msra.mxu0 0.0
        %2972 = vmatprep.subr.mxu0 %v2931
        %2973 = vmatpush1.msra.mxu0 %v2930
        %2974 = vmatprep.subr.mxu0 0.0
        %2975 = vmatpush2.msra.mxu0 0.0
        %2976 = vmatprep.subr.mxu0 0.0
        %2977 = vmatpush2.msra.mxu0 0.0
        %2978 = vmatprep.subr.mxu0 0.0
        %2979 = vmatpush2.msra.mxu0 0.0
        %2980 = vmatprep.subr.mxu0 0.0
        %2981 = vmatpush2.msra.mxu0 0.0
        %2982 = vmatprep.subr.mxu0 0.0
        %2983 = vmatpush2.msra.mxu0 0.0
        %2984 = vmatprep.subr.mxu0 0.0
        %2985 = vmatpush2.msra.mxu0 0.0
        %2986 = vmatprep.subr.mxu0 0.0
        %2987 = vmatpush2.msra.mxu0 0.0
        %2988 = vmatprep.subr.mxu0 0.0
        %2989 = vmatpush2.msra.mxu0 0.0
        %2990 = vmatprep.subr.mxu0 0.0
        %2991 = vmatpush2.msra.mxu0 0.0
        %2992 = vmatprep.subr.mxu0 0.0
        %2993 = vmatpush2.msra.mxu0 0.0
        %2994 = vmatprep.subr.mxu0 0.0
        %2995 = vmatpush2.msra.mxu0 0.0
        %2996 = vmatprep.subr.mxu0 0.0
        %2997 = vmatpush2.msra.mxu0 0.0
        %2998 = vmatprep.subr.mxu0 0.0
        %2999 = vmatpush2.msra.mxu0 0.0
        %3000 = vmatprep.subr.mxu0 0.0
        %3001 = vmatpush2.msra.mxu0 0.0
        %3002 = vmatprep.subr.mxu0 0.0
        %3003 = vmatpush2.msra.mxu0 0.0
        %3004 = vmatprep.subr.mxu0 0.0
        %3005 = vmatpush2.msra.mxu0 0.0
        %3006 = vmatprep.mubr.f32.mxu0 0.0
        %3007 = vmatmul.mubr.f32.gmra.mxu0 %v2940
        %v3008 = vpop.f32.mrf.mxu0
        %v3009 = vadd.f32 0.0, %v3008
        %v3010 = vpop.f32.mrf.mxu0
        %v3011 = vadd.f32 0.0, %v3010
        %3012 = vdwg.mxu0
        %3013 = vmatprep.subr.mxu0 0.0
        %3014 = vmatpush1.msra.mxu0 0.0
        %3015 = vmatprep.subr.mxu0 0.0
        %3016 = vmatpush1.msra.mxu0 0.0
        %3017 = vmatprep.subr.mxu0 0.0
        %3018 = vmatpush1.msra.mxu0 0.0
        %3019 = vmatprep.subr.mxu0 0.0
        %3020 = vmatpush1.msra.mxu0 0.0
        %3021 = vmatprep.subr.mxu0 0.0
        %3022 = vmatpush1.msra.mxu0 0.0
        %3023 = vmatprep.subr.mxu0 0.0
        %3024 = vmatpush1.msra.mxu0 0.0
        %3025 = vmatprep.subr.mxu0 0.0
        %3026 = vmatpush1.msra.mxu0 0.0
        %3027 = vmatprep.subr.mxu0 0.0
        %3028 = vmatpush1.msra.mxu0 0.0
        %3029 = vmatprep.subr.mxu0 0.0
        %3030 = vmatpush1.msra.mxu0 0.0
        %3031 = vmatprep.subr.mxu0 0.0
        %3032 = vmatpush1.msra.mxu0 0.0
        %3033 = vmatprep.subr.mxu0 0.0
        %3034 = vmatpush1.msra.mxu0 0.0
        %3035 = vmatprep.subr.mxu0 0.0
        %3036 = vmatpush1.msra.mxu0 0.0
        %3037 = vmatprep.subr.mxu0 0.0
        %3038 = vmatpush1.msra.mxu0 0.0
        %3039 = vmatprep.subr.mxu0 0.0
        %3040 = vmatpush1.msra.mxu0 0.0
        %3041 = vmatprep.subr.mxu0 0.0
        %3042 = vmatpush1.msra.mxu0 0.0
        %3043 = vmatprep.subr.mxu0 %v2933
        %3044 = vmatpush1.msra.mxu0 %v2932
        %3045 = vmatprep.subr.mxu0 0.0
        %3046 = vmatpush2.msra.mxu0 0.0
        %3047 = vmatprep.subr.mxu0 0.0
        %3048 = vmatpush2.msra.mxu0 0.0
        %3049 = vmatprep.subr.mxu0 0.0
        %3050 = vmatpush2.msra.mxu0 0.0
        %3051 = vmatprep.subr.mxu0 0.0
        %3052 = vmatpush2.msra.mxu0 0.0
        %3053 = vmatprep.subr.mxu0 0.0
        %3054 = vmatpush2.msra.mxu0 0.0
        %3055 = vmatprep.subr.mxu0 0.0
        %3056 = vmatpush2.msra.mxu0 0.0
        %3057 = vmatprep.subr.mxu0 0.0
        %3058 = vmatpush2.msra.mxu0 0.0
        %3059 = vmatprep.subr.mxu0 0.0
        %3060 = vmatpush2.msra.mxu0 0.0
        %3061 = vmatprep.subr.mxu0 0.0
        %3062 = vmatpush2.msra.mxu0 0.0
        %3063 = vmatprep.subr.mxu0 0.0
        %3064 = vmatpush2.msra.mxu0 0.0
        %3065 = vmatprep.subr.mxu0 0.0
        %3066 = vmatpush2.msra.mxu0 0.0
        %3067 = vmatprep.subr.mxu0 0.0
        %3068 = vmatpush2.msra.mxu0 0.0
        %3069 = vmatprep.subr.mxu0 0.0
        %3070 = vmatpush2.msra.mxu0 0.0
        %3071 = vmatprep.subr.mxu0 0.0
        %3072 = vmatpush2.msra.mxu0 0.0
        %3073 = vmatprep.subr.mxu0 0.0
        %3074 = vmatpush2.msra.mxu0 0.0
        %3075 = vmatprep.subr.mxu0 0.0
        %3076 = vmatpush2.msra.mxu0 0.0
        %3077 = vmatprep.mubr.f32.mxu0 0.0
        %3078 = vmatmul.mubr.f32.gmra.mxu0 %v2940
        %v3079 = vpop.f32.mrf.mxu0
        %v3080 = vadd.f32 0.0, %v3079
        %v3081 = vpop.f32.mrf.mxu0
        %v3082 = vadd.f32 0.0, %v3081
        %3083 = vdwg.mxu0
        %3084 = vmatprep.subr.mxu0 0.0
        %3085 = vmatpush1.msra.mxu0 0.0
        %3086 = vmatprep.subr.mxu0 0.0
        %3087 = vmatpush1.msra.mxu0 0.0
        %3088 = vmatprep.subr.mxu0 0.0
        %3089 = vmatpush1.msra.mxu0 0.0
        %3090 = vmatprep.subr.mxu0 0.0
        %3091 = vmatpush1.msra.mxu0 0.0
        %3092 = vmatprep.subr.mxu0 0.0
        %3093 = vmatpush1.msra.mxu0 0.0
        %3094 = vmatprep.subr.mxu0 0.0
        %3095 = vmatpush1.msra.mxu0 0.0
        %3096 = vmatprep.subr.mxu0 0.0
        %3097 = vmatpush1.msra.mxu0 0.0
        %3098 = vmatprep.subr.mxu0 0.0
        %3099 = vmatpush1.msra.mxu0 0.0
        %3100 = vmatprep.subr.mxu0 0.0
        %3101 = vmatpush1.msra.mxu0 0.0
        %3102 = vmatprep.subr.mxu0 0.0
        %3103 = vmatpush1.msra.mxu0 0.0
        %3104 = vmatprep.subr.mxu0 0.0
        %3105 = vmatpush1.msra.mxu0 0.0
        %3106 = vmatprep.subr.mxu0 0.0
        %3107 = vmatpush1.msra.mxu0 0.0
        %3108 = vmatprep.subr.mxu0 0.0
        %3109 = vmatpush1.msra.mxu0 0.0
        %3110 = vmatprep.subr.mxu0 0.0
        %3111 = vmatpush1.msra.mxu0 0.0
        %3112 = vmatprep.subr.mxu0 0.0
        %3113 = vmatpush1.msra.mxu0 0.0
        %3114 = vmatprep.subr.mxu0 %v2935
        %3115 = vmatpush1.msra.mxu0 %v2934
        %3116 = vmatprep.subr.mxu0 0.0
        %3117 = vmatpush2.msra.mxu0 0.0
        %3118 = vmatprep.subr.mxu0 0.0
        %3119 = vmatpush2.msra.mxu0 0.0
        %3120 = vmatprep.subr.mxu0 0.0
        %3121 = vmatpush2.msra.mxu0 0.0
        %3122 = vmatprep.subr.mxu0 0.0
        %3123 = vmatpush2.msra.mxu0 0.0
        %3124 = vmatprep.subr.mxu0 0.0
        %3125 = vmatpush2.msra.mxu0 0.0
        %3126 = vmatprep.subr.mxu0 0.0
        %3127 = vmatpush2.msra.mxu0 0.0
        %3128 = vmatprep.subr.mxu0 0.0
        %3129 = vmatpush2.msra.mxu0 0.0
        %3130 = vmatprep.subr.mxu0 0.0
        %3131 = vmatpush2.msra.mxu0 0.0
        %3132 = vmatprep.subr.mxu0 0.0
        %3133 = vmatpush2.msra.mxu0 0.0
        %3134 = vmatprep.subr.mxu0 0.0
        %3135 = vmatpush2.msra.mxu0 0.0
        %3136 = vmatprep.subr.mxu0 0.0
        %3137 = vmatpush2.msra.mxu0 0.0
        %3138 = vmatprep.subr.mxu0 0.0
        %3139 = vmatpush2.msra.mxu0 0.0
        %3140 = vmatprep.subr.mxu0 0.0
        %3141 = vmatpush2.msra.mxu0 0.0
        %3142 = vmatprep.subr.mxu0 0.0
        %3143 = vmatpush2.msra.mxu0 0.0
        %3144 = vmatprep.subr.mxu0 0.0
        %3145 = vmatpush2.msra.mxu0 0.0
        %3146 = vmatprep.subr.mxu0 0.0
        %3147 = vmatpush2.msra.mxu0 0.0
        %3148 = vmatprep.mubr.f32.mxu0 0.0
        %3149 = vmatmul.mubr.f32.gmra.mxu0 %v2940
        %v3150 = vpop.f32.mrf.mxu0
        %v3151 = vadd.f32 0.0, %v3150
        %v3152 = vpop.f32.mrf.mxu0
        %v3153 = vadd.f32 0.0, %v3152
        %3154 = vdwg.mxu0
        %3155 = vmatprep.subr.mxu0 0.0
        %3156 = vmatpush1.msra.mxu0 0.0
        %3157 = vmatprep.subr.mxu0 0.0
        %3158 = vmatpush1.msra.mxu0 0.0
        %3159 = vmatprep.subr.mxu0 0.0
        %3160 = vmatpush1.msra.mxu0 0.0
        %3161 = vmatprep.subr.mxu0 0.0
        %3162 = vmatpush1.msra.mxu0 0.0
        %3163 = vmatprep.subr.mxu0 0.0
        %3164 = vmatpush1.msra.mxu0 0.0
        %3165 = vmatprep.subr.mxu0 0.0
        %3166 = vmatpush1.msra.mxu0 0.0
        %3167 = vmatprep.subr.mxu0 0.0
        %3168 = vmatpush1.msra.mxu0 0.0
        %3169 = vmatprep.subr.mxu0 0.0
        %3170 = vmatpush1.msra.mxu0 0.0
        %3171 = vmatprep.subr.mxu0 0.0
        %3172 = vmatpush1.msra.mxu0 0.0
        %3173 = vmatprep.subr.mxu0 0.0
        %3174 = vmatpush1.msra.mxu0 0.0
        %3175 = vmatprep.subr.mxu0 0.0
        %3176 = vmatpush1.msra.mxu0 0.0
        %3177 = vmatprep.subr.mxu0 0.0
        %3178 = vmatpush1.msra.mxu0 0.0
        %3179 = vmatprep.subr.mxu0 0.0
        %3180 = vmatpush1.msra.mxu0 0.0
        %3181 = vmatprep.subr.mxu0 0.0
        %3182 = vmatpush1.msra.mxu0 0.0
        %3183 = vmatprep.subr.mxu0 0.0
        %3184 = vmatpush1.msra.mxu0 0.0
        %3185 = vmatprep.subr.mxu0 0.0
        %3186 = vmatpush1.msra.mxu0 %v2936
        %3187 = vmatprep.subr.mxu0 0.0
        %3188 = vmatpush2.msra.mxu0 0.0
        %3189 = vmatprep.subr.mxu0 0.0
        %3190 = vmatpush2.msra.mxu0 0.0
        %3191 = vmatprep.subr.mxu0 0.0
        %3192 = vmatpush2.msra.mxu0 0.0
        %3193 = vmatprep.subr.mxu0 0.0
        %3194 = vmatpush2.msra.mxu0 0.0
        %3195 = vmatprep.subr.mxu0 0.0
        %3196 = vmatpush2.msra.mxu0 0.0
        %3197 = vmatprep.subr.mxu0 0.0
        %3198 = vmatpush2.msra.mxu0 0.0
        %3199 = vmatprep.subr.mxu0 0.0
        %3200 = vmatpush2.msra.mxu0 0.0
        %3201 = vmatprep.subr.mxu0 0.0
        %3202 = vmatpush2.msra.mxu0 0.0
        %3203 = vmatprep.subr.mxu0 0.0
        %3204 = vmatpush2.msra.mxu0 0.0
        %3205 = vmatprep.subr.mxu0 0.0
        %3206 = vmatpush2.msra.mxu0 0.0
        %3207 = vmatprep.subr.mxu0 0.0
        %3208 = vmatpush2.msra.mxu0 0.0
        %3209 = vmatprep.subr.mxu0 0.0
        %3210 = vmatpush2.msra.mxu0 0.0
        %3211 = vmatprep.subr.mxu0 0.0
        %3212 = vmatpush2.msra.mxu0 0.0
        %3213 = vmatprep.subr.mxu0 0.0
        %3214 = vmatpush2.msra.mxu0 0.0
        %3215 = vmatprep.subr.mxu0 0.0
        %3216 = vmatpush2.msra.mxu0 0.0
        %3217 = vmatprep.subr.mxu0 0.0
        %3218 = vmatpush2.msra.mxu0 0.0
        %3219 = vmatprep.mubr.f32.mxu0 0.0
        %3220 = vmatmul.mubr.f32.gmra.mxu0 %v2940
        %v3221 = vpop.f32.mrf.mxu0
        %v3222 = vadd.f32 0.0, %v3221
        %v3223 = vpop.f32.mrf.mxu0
        %3224 = vdwg.mxu0
        %v3225 = vadd.f32 %v2895, %v3009
        %v3226 = vadd.f32 %v2896, %v3011
        %v3227 = vadd.f32 %v2897, %v3080
        %v3228 = vadd.f32 %v2898, %v3082
        %v3229 = vadd.f32 %v2899, %v3151
        %v3230 = vadd.f32 %v2900, %v3153
        %v3231 = vadd.f32 %v2901, %v3222
        %3232 = vrot.lane.b32.xlu0 %v1466, 127
        %v3233 = vpop.permute.xlu0 %3232
        %3234 = vrot.lane.b32.xlu0 %v1467, 127
        %v3235 = vpop.permute.xlu0 %3234
        %3236 = vrot.lane.b32.xlu0 %v1468, 127
        %v3237 = vpop.permute.xlu0 %3236
        %3238 = vrot.lane.b32.xlu0 %v1469, 127
        %v3239 = vpop.permute.xlu0 %3238
        %3240 = vrot.lane.b32.xlu0 %v1470, 127
        %v3241 = vpop.permute.xlu0 %3240
        %3242 = vrot.lane.b32.xlu0 %v1471, 127
        %v3243 = vpop.permute.xlu0 %3242
        %3244 = vrot.lane.b32.xlu0 %v1472, 127
        %v3245 = vpop.permute.xlu0 %3244
        %v3246 = vsel %vm1081, %v3233, %v3235
        %v3247 = vsel %vm1081, %v3235, %v3237
        %v3248 = vsel %vm1081, %v3237, %v3239
        %v3249 = vsel %vm1081, %v3239, %v3241
        %v3250 = vsel %vm1081, %v3241, %v3243
        %v3251 = vsel %vm1081, %v3243, %v3245
        %v3260 = vsel %vm1081, %v3245, %v3233
        %v3261 = vlaneseq
        %v3262 = vshrl.u32 %v3261, 7
        %v3263 = vsub.s32 5, %v3262
        %v3264 = vrot.slane %v519, %v3263
        %v3265 = vlaneseq
        %v3266 = vshrl.u32 %v3265, 7
        %v3267 = vsub.s32 5, %v3266
        %v3268 = vrot.slane %v520, %v3267
        %v3269 = vlaneseq
        %v3270 = vshrl.u32 %v3269, 7
        %v3271 = vsub.s32 5, %v3270
        %v3272 = vrot.slane %v521, %v3271
        %v3273 = vlaneseq
        %v3274 = vshrl.u32 %v3273, 7
        %v3275 = vsub.s32 5, %v3274
        %v3276 = vrot.slane %v522, %v3275
        %v3277 = vlaneseq
        %v3278 = vshrl.u32 %v3277, 7
        %v3279 = vsub.s32 5, %v3278
        %v3280 = vrot.slane %v523, %v3279
        %v3281 = vlaneseq
        %v3282 = vshrl.u32 %v3281, 7
        %v3283 = vsub.s32 5, %v3282
        %v3284 = vrot.slane %v524, %v3283
        %v3285 = vlaneseq
        %v3286 = vshrl.u32 %v3285, 7
        %v3287 = vsub.s32 5, %v3286
        %v3288 = vrot.slane %v525, %v3287
        %v3289 = vmul.f32 %v3246, %v3264
        %v3290 = vmul.f32 %v3247, %v3268
        %v3291 = vmul.f32 %v3248, %v3272
        %v3292 = vmul.f32 %v3249, %v3276
        %v3293 = vmul.f32 %v3250, %v3280
        %v3294 = vmul.f32 %v3251, %v3284
        %v3295 = vmul.f32 %v3260, %v3288
        %s3296 = scalar_lea.vmem %s3, 40
        %v3297 = vld [vmem:[%s3296] sm:$0xff]
        %v3299 = vsel %vm1611, %v3297, 0
        %3301 = vmatprep.subr.mxu0 0.0
        %3302 = vmatpush1.msra.mxu0 0.0
        %3303 = vmatprep.subr.mxu0 0.0
        %3304 = vmatpush1.msra.mxu0 0.0
        %3305 = vmatprep.subr.mxu0 0.0
        %3306 = vmatpush1.msra.mxu0 0.0
        %3307 = vmatprep.subr.mxu0 0.0
        %3308 = vmatpush1.msra.mxu0 0.0
        %3309 = vmatprep.subr.mxu0 0.0
        %3310 = vmatpush1.msra.mxu0 0.0
        %3311 = vmatprep.subr.mxu0 0.0
        %3312 = vmatpush1.msra.mxu0 0.0
        %3313 = vmatprep.subr.mxu0 0.0
        %3314 = vmatpush1.msra.mxu0 0.0
        %3315 = vmatprep.subr.mxu0 0.0
        %3316 = vmatpush1.msra.mxu0 0.0
        %3317 = vmatprep.subr.mxu0 0.0
        %3318 = vmatpush1.msra.mxu0 0.0
        %3319 = vmatprep.subr.mxu0 0.0
        %3320 = vmatpush1.msra.mxu0 0.0
        %3321 = vmatprep.subr.mxu0 0.0
        %3322 = vmatpush1.msra.mxu0 0.0
        %3323 = vmatprep.subr.mxu0 0.0
        %3324 = vmatpush1.msra.mxu0 0.0
        %3325 = vmatprep.subr.mxu0 0.0
        %3326 = vmatpush1.msra.mxu0 0.0
        %3327 = vmatprep.subr.mxu0 0.0
        %3328 = vmatpush1.msra.mxu0 0.0
        %3329 = vmatprep.subr.mxu0 0.0
        %3330 = vmatpush1.msra.mxu0 0.0
        %3331 = vmatprep.subr.mxu0 %v3290
        %3332 = vmatpush1.msra.mxu0 %v3289
        %3333 = vmatprep.subr.mxu0 0.0
        %3334 = vmatpush2.msra.mxu0 0.0
        %3335 = vmatprep.subr.mxu0 0.0
        %3336 = vmatpush2.msra.mxu0 0.0
        %3337 = vmatprep.subr.mxu0 0.0
        %3338 = vmatpush2.msra.mxu0 0.0
        %3339 = vmatprep.subr.mxu0 0.0
        %3340 = vmatpush2.msra.mxu0 0.0
        %3341 = vmatprep.subr.mxu0 0.0
        %3342 = vmatpush2.msra.mxu0 0.0
        %3343 = vmatprep.subr.mxu0 0.0
        %3344 = vmatpush2.msra.mxu0 0.0
        %3345 = vmatprep.subr.mxu0 0.0
        %3346 = vmatpush2.msra.mxu0 0.0
        %3347 = vmatprep.subr.mxu0 0.0
        %3348 = vmatpush2.msra.mxu0 0.0
        %3349 = vmatprep.subr.mxu0 0.0
        %3350 = vmatpush2.msra.mxu0 0.0
        %3351 = vmatprep.subr.mxu0 0.0
        %3352 = vmatpush2.msra.mxu0 0.0
        %3353 = vmatprep.subr.mxu0 0.0
        %3354 = vmatpush2.msra.mxu0 0.0
        %3355 = vmatprep.subr.mxu0 0.0
        %3356 = vmatpush2.msra.mxu0 0.0
        %3357 = vmatprep.subr.mxu0 0.0
        %3358 = vmatpush2.msra.mxu0 0.0
        %3359 = vmatprep.subr.mxu0 0.0
        %3360 = vmatpush2.msra.mxu0 0.0
        %3361 = vmatprep.subr.mxu0 0.0
        %3362 = vmatpush2.msra.mxu0 0.0
        %3363 = vmatprep.subr.mxu0 0.0
        %3364 = vmatpush2.msra.mxu0 0.0
        %3365 = vmatprep.mubr.f32.mxu0 0.0
        %3366 = vmatmul.mubr.f32.gmra.mxu0 %v3299
        %v3367 = vpop.f32.mrf.mxu0
        %v3368 = vadd.f32 0.0, %v3367
        %v3369 = vpop.f32.mrf.mxu0
        %v3370 = vadd.f32 0.0, %v3369
        %3371 = vdwg.mxu0
        %3372 = vmatprep.subr.mxu0 0.0
        %3373 = vmatpush1.msra.mxu0 0.0
        %3374 = vmatprep.subr.mxu0 0.0
        %3375 = vmatpush1.msra.mxu0 0.0
        %3376 = vmatprep.subr.mxu0 0.0
        %3377 = vmatpush1.msra.mxu0 0.0
        %3378 = vmatprep.subr.mxu0 0.0
        %3379 = vmatpush1.msra.mxu0 0.0
        %3380 = vmatprep.subr.mxu0 0.0
        %3381 = vmatpush1.msra.mxu0 0.0
        %3382 = vmatprep.subr.mxu0 0.0
        %3383 = vmatpush1.msra.mxu0 0.0
        %3384 = vmatprep.subr.mxu0 0.0
        %3385 = vmatpush1.msra.mxu0 0.0
        %3386 = vmatprep.subr.mxu0 0.0
        %3387 = vmatpush1.msra.mxu0 0.0
        %3388 = vmatprep.subr.mxu0 0.0
        %3389 = vmatpush1.msra.mxu0 0.0
        %3390 = vmatprep.subr.mxu0 0.0
        %3391 = vmatpush1.msra.mxu0 0.0
        %3392 = vmatprep.subr.mxu0 0.0
        %3393 = vmatpush1.msra.mxu0 0.0
        %3394 = vmatprep.subr.mxu0 0.0
        %3395 = vmatpush1.msra.mxu0 0.0
        %3396 = vmatprep.subr.mxu0 0.0
        %3397 = vmatpush1.msra.mxu0 0.0
        %3398 = vmatprep.subr.mxu0 0.0
        %3399 = vmatpush1.msra.mxu0 0.0
        %3400 = vmatprep.subr.mxu0 0.0
        %3401 = vmatpush1.msra.mxu0 0.0
        %3402 = vmatprep.subr.mxu0 %v3292
        %3403 = vmatpush1.msra.mxu0 %v3291
        %3404 = vmatprep.subr.mxu0 0.0
        %3405 = vmatpush2.msra.mxu0 0.0
        %3406 = vmatprep.subr.mxu0 0.0
        %3407 = vmatpush2.msra.mxu0 0.0
        %3408 = vmatprep.subr.mxu0 0.0
        %3409 = vmatpush2.msra.mxu0 0.0
        %3410 = vmatprep.subr.mxu0 0.0
        %3411 = vmatpush2.msra.mxu0 0.0
        %3412 = vmatprep.subr.mxu0 0.0
        %3413 = vmatpush2.msra.mxu0 0.0
        %3414 = vmatprep.subr.mxu0 0.0
        %3415 = vmatpush2.msra.mxu0 0.0
        %3416 = vmatprep.subr.mxu0 0.0
        %3417 = vmatpush2.msra.mxu0 0.0
        %3418 = vmatprep.subr.mxu0 0.0
        %3419 = vmatpush2.msra.mxu0 0.0
        %3420 = vmatprep.subr.mxu0 0.0
        %3421 = vmatpush2.msra.mxu0 0.0
        %3422 = vmatprep.subr.mxu0 0.0
        %3423 = vmatpush2.msra.mxu0 0.0
        %3424 = vmatprep.subr.mxu0 0.0
        %3425 = vmatpush2.msra.mxu0 0.0
        %3426 = vmatprep.subr.mxu0 0.0
        %3427 = vmatpush2.msra.mxu0 0.0
        %3428 = vmatprep.subr.mxu0 0.0
        %3429 = vmatpush2.msra.mxu0 0.0
        %3430 = vmatprep.subr.mxu0 0.0
        %3431 = vmatpush2.msra.mxu0 0.0
        %3432 = vmatprep.subr.mxu0 0.0
        %3433 = vmatpush2.msra.mxu0 0.0
        %3434 = vmatprep.subr.mxu0 0.0
        %3435 = vmatpush2.msra.mxu0 0.0
        %3436 = vmatprep.mubr.f32.mxu0 0.0
        %3437 = vmatmul.mubr.f32.gmra.mxu0 %v3299
        %v3438 = vpop.f32.mrf.mxu0
        %v3439 = vadd.f32 0.0, %v3438
        %v3440 = vpop.f32.mrf.mxu0
        %v3441 = vadd.f32 0.0, %v3440
        %3442 = vdwg.mxu0
        %3443 = vmatprep.subr.mxu0 0.0
        %3444 = vmatpush1.msra.mxu0 0.0
        %3445 = vmatprep.subr.mxu0 0.0
        %3446 = vmatpush1.msra.mxu0 0.0
        %3447 = vmatprep.subr.mxu0 0.0
        %3448 = vmatpush1.msra.mxu0 0.0
        %3449 = vmatprep.subr.mxu0 0.0
        %3450 = vmatpush1.msra.mxu0 0.0
        %3451 = vmatprep.subr.mxu0 0.0
        %3452 = vmatpush1.msra.mxu0 0.0
        %3453 = vmatprep.subr.mxu0 0.0
        %3454 = vmatpush1.msra.mxu0 0.0
        %3455 = vmatprep.subr.mxu0 0.0
        %3456 = vmatpush1.msra.mxu0 0.0
        %3457 = vmatprep.subr.mxu0 0.0
        %3458 = vmatpush1.msra.mxu0 0.0
        %3459 = vmatprep.subr.mxu0 0.0
        %3460 = vmatpush1.msra.mxu0 0.0
        %3461 = vmatprep.subr.mxu0 0.0
        %3462 = vmatpush1.msra.mxu0 0.0
        %3463 = vmatprep.subr.mxu0 0.0
        %3464 = vmatpush1.msra.mxu0 0.0
        %3465 = vmatprep.subr.mxu0 0.0
        %3466 = vmatpush1.msra.mxu0 0.0
        %3467 = vmatprep.subr.mxu0 0.0
        %3468 = vmatpush1.msra.mxu0 0.0
        %3469 = vmatprep.subr.mxu0 0.0
        %3470 = vmatpush1.msra.mxu0 0.0
        %3471 = vmatprep.subr.mxu0 0.0
        %3472 = vmatpush1.msra.mxu0 0.0
        %3473 = vmatprep.subr.mxu0 %v3294
        %3474 = vmatpush1.msra.mxu0 %v3293
        %3475 = vmatprep.subr.mxu0 0.0
        %3476 = vmatpush2.msra.mxu0 0.0
        %3477 = vmatprep.subr.mxu0 0.0
        %3478 = vmatpush2.msra.mxu0 0.0
        %3479 = vmatprep.subr.mxu0 0.0
        %3480 = vmatpush2.msra.mxu0 0.0
        %3481 = vmatprep.subr.mxu0 0.0
        %3482 = vmatpush2.msra.mxu0 0.0
        %3483 = vmatprep.subr.mxu0 0.0
        %3484 = vmatpush2.msra.mxu0 0.0
        %3485 = vmatprep.subr.mxu0 0.0
        %3486 = vmatpush2.msra.mxu0 0.0
        %3487 = vmatprep.subr.mxu0 0.0
        %3488 = vmatpush2.msra.mxu0 0.0
        %3489 = vmatprep.subr.mxu0 0.0
        %3490 = vmatpush2.msra.mxu0 0.0
        %3491 = vmatprep.subr.mxu0 0.0
        %3492 = vmatpush2.msra.mxu0 0.0
        %3493 = vmatprep.subr.mxu0 0.0
        %3494 = vmatpush2.msra.mxu0 0.0
        %3495 = vmatprep.subr.mxu0 0.0
        %3496 = vmatpush2.msra.mxu0 0.0
        %3497 = vmatprep.subr.mxu0 0.0
        %3498 = vmatpush2.msra.mxu0 0.0
        %3499 = vmatprep.subr.mxu0 0.0
        %3500 = vmatpush2.msra.mxu0 0.0
        %3501 = vmatprep.subr.mxu0 0.0
        %3502 = vmatpush2.msra.mxu0 0.0
        %3503 = vmatprep.subr.mxu0 0.0
        %3504 = vmatpush2.msra.mxu0 0.0
        %3505 = vmatprep.subr.mxu0 0.0
        %3506 = vmatpush2.msra.mxu0 0.0
        %3507 = vmatprep.mubr.f32.mxu0 0.0
        %3508 = vmatmul.mubr.f32.gmra.mxu0 %v3299
        %v3509 = vpop.f32.mrf.mxu0
        %v3510 = vadd.f32 0.0, %v3509
        %v3511 = vpop.f32.mrf.mxu0
        %v3512 = vadd.f32 0.0, %v3511
        %3513 = vdwg.mxu0
        %3514 = vmatprep.subr.mxu0 0.0
        %3515 = vmatpush1.msra.mxu0 0.0
        %3516 = vmatprep.subr.mxu0 0.0
        %3517 = vmatpush1.msra.mxu0 0.0
        %3518 = vmatprep.subr.mxu0 0.0
        %3519 = vmatpush1.msra.mxu0 0.0
        %3520 = vmatprep.subr.mxu0 0.0
        %3521 = vmatpush1.msra.mxu0 0.0
        %3522 = vmatprep.subr.mxu0 0.0
        %3523 = vmatpush1.msra.mxu0 0.0
        %3524 = vmatprep.subr.mxu0 0.0
        %3525 = vmatpush1.msra.mxu0 0.0
        %3526 = vmatprep.subr.mxu0 0.0
        %3527 = vmatpush1.msra.mxu0 0.0
        %3528 = vmatprep.subr.mxu0 0.0
        %3529 = vmatpush1.msra.mxu0 0.0
        %3530 = vmatprep.subr.mxu0 0.0
        %3531 = vmatpush1.msra.mxu0 0.0
        %3532 = vmatprep.subr.mxu0 0.0
        %3533 = vmatpush1.msra.mxu0 0.0
        %3534 = vmatprep.subr.mxu0 0.0
        %3535 = vmatpush1.msra.mxu0 0.0
        %3536 = vmatprep.subr.mxu0 0.0
        %3537 = vmatpush1.msra.mxu0 0.0
        %3538 = vmatprep.subr.mxu0 0.0
        %3539 = vmatpush1.msra.mxu0 0.0
        %3540 = vmatprep.subr.mxu0 0.0
        %3541 = vmatpush1.msra.mxu0 0.0
        %3542 = vmatprep.subr.mxu0 0.0
        %3543 = vmatpush1.msra.mxu0 0.0
        %3544 = vmatprep.subr.mxu0 0.0
        %3545 = vmatpush1.msra.mxu0 %v3295
        %3546 = vmatprep.subr.mxu0 0.0
        %3547 = vmatpush2.msra.mxu0 0.0
        %3548 = vmatprep.subr.mxu0 0.0
        %3549 = vmatpush2.msra.mxu0 0.0
        %3550 = vmatprep.subr.mxu0 0.0
        %3551 = vmatpush2.msra.mxu0 0.0
        %3552 = vmatprep.subr.mxu0 0.0
        %3553 = vmatpush2.msra.mxu0 0.0
        %3554 = vmatprep.subr.mxu0 0.0
        %3555 = vmatpush2.msra.mxu0 0.0
        %3556 = vmatprep.subr.mxu0 0.0
        %3557 = vmatpush2.msra.mxu0 0.0
        %3558 = vmatprep.subr.mxu0 0.0
        %3559 = vmatpush2.msra.mxu0 0.0
        %3560 = vmatprep.subr.mxu0 0.0
        %3561 = vmatpush2.msra.mxu0 0.0
        %3562 = vmatprep.subr.mxu0 0.0
        %3563 = vmatpush2.msra.mxu0 0.0
        %3564 = vmatprep.subr.mxu0 0.0
        %3565 = vmatpush2.msra.mxu0 0.0
        %3566 = vmatprep.subr.mxu0 0.0
        %3567 = vmatpush2.msra.mxu0 0.0
        %3568 = vmatprep.subr.mxu0 0.0
        %3569 = vmatpush2.msra.mxu0 0.0
        %3570 = vmatprep.subr.mxu0 0.0
        %3571 = vmatpush2.msra.mxu0 0.0
        %3572 = vmatprep.subr.mxu0 0.0
        %3573 = vmatpush2.msra.mxu0 0.0
        %3574 = vmatprep.subr.mxu0 0.0
        %3575 = vmatpush2.msra.mxu0 0.0
        %3576 = vmatprep.subr.mxu0 0.0
        %3577 = vmatpush2.msra.mxu0 0.0
        %3578 = vmatprep.mubr.f32.mxu0 0.0
        %3579 = vmatmul.mubr.f32.gmra.mxu0 %v3299
        %v3580 = vpop.f32.mrf.mxu0
        %v3581 = vadd.f32 0.0, %v3580
        %v3582 = vpop.f32.mrf.mxu0
        %3583 = vdwg.mxu0
        %v3584 = vadd.f32 %v3225, %v3368
        %v3585 = vadd.f32 %v3226, %v3370
        %v3586 = vadd.f32 %v3227, %v3439
        %v3587 = vadd.f32 %v3228, %v3441
        %v3588 = vadd.f32 %v3229, %v3510
        %v3589 = vadd.f32 %v3230, %v3512
        %v3590 = vadd.f32 %v3231, %v3581
        %3591 = vrot.lane.b32.xlu0 %v1466, 101
        %v3592 = vpop.permute.xlu0 %3591
        %3593 = vrot.lane.b32.xlu0 %v1467, 101
        %v3594 = vpop.permute.xlu0 %3593
        %3595 = vrot.lane.b32.xlu0 %v1468, 101
        %v3596 = vpop.permute.xlu0 %3595
        %3597 = vrot.lane.b32.xlu0 %v1469, 101
        %v3598 = vpop.permute.xlu0 %3597
        %3599 = vrot.lane.b32.xlu0 %v1470, 101
        %v3600 = vpop.permute.xlu0 %3599
        %3601 = vrot.lane.b32.xlu0 %v1471, 101
        %v3602 = vpop.permute.xlu0 %3601
        %3603 = vrot.lane.b32.xlu0 %v1472, 101
        %v3604 = vpop.permute.xlu0 %3603
        %v3605 = vsel %vm1181, %v3592, %v3594
        %v3606 = vsel %vm1181, %v3594, %v3596
        %v3607 = vsel %vm1181, %v3596, %v3598
        %v3608 = vsel %vm1181, %v3598, %v3600
        %v3609 = vsel %vm1181, %v3600, %v3602
        %v3610 = vsel %vm1181, %v3602, %v3604
        %v3619 = vsel %vm1181, %v3604, %v3592
        %v3620 = vlaneseq
        %v3621 = vshrl.u32 %v3620, 7
        %v3622 = vsub.s32 6, %v3621
        %v3623 = vrot.slane %v519, %v3622
        %v3624 = vlaneseq
        %v3625 = vshrl.u32 %v3624, 7
        %v3626 = vsub.s32 6, %v3625
        %v3627 = vrot.slane %v520, %v3626
        %v3628 = vlaneseq
        %v3629 = vshrl.u32 %v3628, 7
        %v3630 = vsub.s32 6, %v3629
        %v3631 = vrot.slane %v521, %v3630
        %v3632 = vlaneseq
        %v3633 = vshrl.u32 %v3632, 7
        %v3634 = vsub.s32 6, %v3633
        %v3635 = vrot.slane %v522, %v3634
        %v3636 = vlaneseq
        %v3637 = vshrl.u32 %v3636, 7
        %v3638 = vsub.s32 6, %v3637
        %v3639 = vrot.slane %v523, %v3638
        %v3640 = vlaneseq
        %v3641 = vshrl.u32 %v3640, 7
        %v3642 = vsub.s32 6, %v3641
        %v3643 = vrot.slane %v524, %v3642
        %v3644 = vlaneseq
        %v3645 = vshrl.u32 %v3644, 7
        %v3646 = vsub.s32 6, %v3645
        %v3647 = vrot.slane %v525, %v3646
        %v3648 = vmul.f32 %v3605, %v3623
        %v3649 = vmul.f32 %v3606, %v3627
        %v3650 = vmul.f32 %v3607, %v3631
        %v3651 = vmul.f32 %v3608, %v3635
        %v3652 = vmul.f32 %v3609, %v3639
        %v3653 = vmul.f32 %v3610, %v3643
        %v3654 = vmul.f32 %v3619, %v3647
        %s3655 = scalar_lea.vmem %s3, 48
        %v3656 = vld [vmem:[%s3655] sm:$0xff]
        %v3658 = vsel %vm1611, %v3656, 0
        %3660 = vmatprep.subr.mxu0 0.0
        %3661 = vmatpush1.msra.mxu0 0.0
        %3662 = vmatprep.subr.mxu0 0.0
        %3663 = vmatpush1.msra.mxu0 0.0
        %3664 = vmatprep.subr.mxu0 0.0
        %3665 = vmatpush1.msra.mxu0 0.0
        %3666 = vmatprep.subr.mxu0 0.0
        %3667 = vmatpush1.msra.mxu0 0.0
        %3668 = vmatprep.subr.mxu0 0.0
        %3669 = vmatpush1.msra.mxu0 0.0
        %3670 = vmatprep.subr.mxu0 0.0
        %3671 = vmatpush1.msra.mxu0 0.0
        %3672 = vmatprep.subr.mxu0 0.0
        %3673 = vmatpush1.msra.mxu0 0.0
        %3674 = vmatprep.subr.mxu0 0.0
        %3675 = vmatpush1.msra.mxu0 0.0
        %3676 = vmatprep.subr.mxu0 0.0
        %3677 = vmatpush1.msra.mxu0 0.0
        %3678 = vmatprep.subr.mxu0 0.0
        %3679 = vmatpush1.msra.mxu0 0.0
        %3680 = vmatprep.subr.mxu0 0.0
        %3681 = vmatpush1.msra.mxu0 0.0
        %3682 = vmatprep.subr.mxu0 0.0
        %3683 = vmatpush1.msra.mxu0 0.0
        %3684 = vmatprep.subr.mxu0 0.0
        %3685 = vmatpush1.msra.mxu0 0.0
        %3686 = vmatprep.subr.mxu0 0.0
        %3687 = vmatpush1.msra.mxu0 0.0
        %3688 = vmatprep.subr.mxu0 0.0
        %3689 = vmatpush1.msra.mxu0 0.0
        %3690 = vmatprep.subr.mxu0 %v3649
        %3691 = vmatpush1.msra.mxu0 %v3648
        %3692 = vmatprep.subr.mxu0 0.0
        %3693 = vmatpush2.msra.mxu0 0.0
        %3694 = vmatprep.subr.mxu0 0.0
        %3695 = vmatpush2.msra.mxu0 0.0
        %3696 = vmatprep.subr.mxu0 0.0
        %3697 = vmatpush2.msra.mxu0 0.0
        %3698 = vmatprep.subr.mxu0 0.0
        %3699 = vmatpush2.msra.mxu0 0.0
        %3700 = vmatprep.subr.mxu0 0.0
        %3701 = vmatpush2.msra.mxu0 0.0
        %3702 = vmatprep.subr.mxu0 0.0
        %3703 = vmatpush2.msra.mxu0 0.0
        %3704 = vmatprep.subr.mxu0 0.0
        %3705 = vmatpush2.msra.mxu0 0.0
        %3706 = vmatprep.subr.mxu0 0.0
        %3707 = vmatpush2.msra.mxu0 0.0
        %3708 = vmatprep.subr.mxu0 0.0
        %3709 = vmatpush2.msra.mxu0 0.0
        %3710 = vmatprep.subr.mxu0 0.0
        %3711 = vmatpush2.msra.mxu0 0.0
        %3712 = vmatprep.subr.mxu0 0.0
        %3713 = vmatpush2.msra.mxu0 0.0
        %3714 = vmatprep.subr.mxu0 0.0
        %3715 = vmatpush2.msra.mxu0 0.0
        %3716 = vmatprep.subr.mxu0 0.0
        %3717 = vmatpush2.msra.mxu0 0.0
        %3718 = vmatprep.subr.mxu0 0.0
        %3719 = vmatpush2.msra.mxu0 0.0
        %3720 = vmatprep.subr.mxu0 0.0
        %3721 = vmatpush2.msra.mxu0 0.0
        %3722 = vmatprep.subr.mxu0 0.0
        %3723 = vmatpush2.msra.mxu0 0.0
        %3724 = vmatprep.mubr.f32.mxu0 0.0
        %3725 = vmatmul.mubr.f32.gmra.mxu0 %v3658
        %v3726 = vpop.f32.mrf.mxu0
        %v3727 = vadd.f32 0.0, %v3726
        %v3728 = vpop.f32.mrf.mxu0
        %v3729 = vadd.f32 0.0, %v3728
        %3730 = vdwg.mxu0
        %3731 = vmatprep.subr.mxu0 0.0
        %3732 = vmatpush1.msra.mxu0 0.0
        %3733 = vmatprep.subr.mxu0 0.0
        %3734 = vmatpush1.msra.mxu0 0.0
        %3735 = vmatprep.subr.mxu0 0.0
        %3736 = vmatpush1.msra.mxu0 0.0
        %3737 = vmatprep.subr.mxu0 0.0
        %3738 = vmatpush1.msra.mxu0 0.0
        %3739 = vmatprep.subr.mxu0 0.0
        %3740 = vmatpush1.msra.mxu0 0.0
        %3741 = vmatprep.subr.mxu0 0.0
        %3742 = vmatpush1.msra.mxu0 0.0
        %3743 = vmatprep.subr.mxu0 0.0
        %3744 = vmatpush1.msra.mxu0 0.0
        %3745 = vmatprep.subr.mxu0 0.0
        %3746 = vmatpush1.msra.mxu0 0.0
        %3747 = vmatprep.subr.mxu0 0.0
        %3748 = vmatpush1.msra.mxu0 0.0
        %3749 = vmatprep.subr.mxu0 0.0
        %3750 = vmatpush1.msra.mxu0 0.0
        %3751 = vmatprep.subr.mxu0 0.0
        %3752 = vmatpush1.msra.mxu0 0.0
        %3753 = vmatprep.subr.mxu0 0.0
        %3754 = vmatpush1.msra.mxu0 0.0
        %3755 = vmatprep.subr.mxu0 0.0
        %3756 = vmatpush1.msra.mxu0 0.0
        %3757 = vmatprep.subr.mxu0 0.0
        %3758 = vmatpush1.msra.mxu0 0.0
        %3759 = vmatprep.subr.mxu0 0.0
        %3760 = vmatpush1.msra.mxu0 0.0
        %3761 = vmatprep.subr.mxu0 %v3651
        %3762 = vmatpush1.msra.mxu0 %v3650
        %3763 = vmatprep.subr.mxu0 0.0
        %3764 = vmatpush2.msra.mxu0 0.0
        %3765 = vmatprep.subr.mxu0 0.0
        %3766 = vmatpush2.msra.mxu0 0.0
        %3767 = vmatprep.subr.mxu0 0.0
        %3768 = vmatpush2.msra.mxu0 0.0
        %3769 = vmatprep.subr.mxu0 0.0
        %3770 = vmatpush2.msra.mxu0 0.0
        %3771 = vmatprep.subr.mxu0 0.0
        %3772 = vmatpush2.msra.mxu0 0.0
        %3773 = vmatprep.subr.mxu0 0.0
        %3774 = vmatpush2.msra.mxu0 0.0
        %3775 = vmatprep.subr.mxu0 0.0
        %3776 = vmatpush2.msra.mxu0 0.0
        %3777 = vmatprep.subr.mxu0 0.0
        %3778 = vmatpush2.msra.mxu0 0.0
        %3779 = vmatprep.subr.mxu0 0.0
        %3780 = vmatpush2.msra.mxu0 0.0
        %3781 = vmatprep.subr.mxu0 0.0
        %3782 = vmatpush2.msra.mxu0 0.0
        %3783 = vmatprep.subr.mxu0 0.0
        %3784 = vmatpush2.msra.mxu0 0.0
        %3785 = vmatprep.subr.mxu0 0.0
        %3786 = vmatpush2.msra.mxu0 0.0
        %3787 = vmatprep.subr.mxu0 0.0
        %3788 = vmatpush2.msra.mxu0 0.0
        %3789 = vmatprep.subr.mxu0 0.0
        %3790 = vmatpush2.msra.mxu0 0.0
        %3791 = vmatprep.subr.mxu0 0.0
        %3792 = vmatpush2.msra.mxu0 0.0
        %3793 = vmatprep.subr.mxu0 0.0
        %3794 = vmatpush2.msra.mxu0 0.0
        %3795 = vmatprep.mubr.f32.mxu0 0.0
        %3796 = vmatmul.mubr.f32.gmra.mxu0 %v3658
        %v3797 = vpop.f32.mrf.mxu0
        %v3798 = vadd.f32 0.0, %v3797
        %v3799 = vpop.f32.mrf.mxu0
        %v3800 = vadd.f32 0.0, %v3799
        %3801 = vdwg.mxu0
        %3802 = vmatprep.subr.mxu0 0.0
        %3803 = vmatpush1.msra.mxu0 0.0
        %3804 = vmatprep.subr.mxu0 0.0
        %3805 = vmatpush1.msra.mxu0 0.0
        %3806 = vmatprep.subr.mxu0 0.0
        %3807 = vmatpush1.msra.mxu0 0.0
        %3808 = vmatprep.subr.mxu0 0.0
        %3809 = vmatpush1.msra.mxu0 0.0
        %3810 = vmatprep.subr.mxu0 0.0
        %3811 = vmatpush1.msra.mxu0 0.0
        %3812 = vmatprep.subr.mxu0 0.0
        %3813 = vmatpush1.msra.mxu0 0.0
        %3814 = vmatprep.subr.mxu0 0.0
        %3815 = vmatpush1.msra.mxu0 0.0
        %3816 = vmatprep.subr.mxu0 0.0
        %3817 = vmatpush1.msra.mxu0 0.0
        %3818 = vmatprep.subr.mxu0 0.0
        %3819 = vmatpush1.msra.mxu0 0.0
        %3820 = vmatprep.subr.mxu0 0.0
        %3821 = vmatpush1.msra.mxu0 0.0
        %3822 = vmatprep.subr.mxu0 0.0
        %3823 = vmatpush1.msra.mxu0 0.0
        %3824 = vmatprep.subr.mxu0 0.0
        %3825 = vmatpush1.msra.mxu0 0.0
        %3826 = vmatprep.subr.mxu0 0.0
        %3827 = vmatpush1.msra.mxu0 0.0
        %3828 = vmatprep.subr.mxu0 0.0
        %3829 = vmatpush1.msra.mxu0 0.0
        %3830 = vmatprep.subr.mxu0 0.0
        %3831 = vmatpush1.msra.mxu0 0.0
        %3832 = vmatprep.subr.mxu0 %v3653
        %3833 = vmatpush1.msra.mxu0 %v3652
        %3834 = vmatprep.subr.mxu0 0.0
        %3835 = vmatpush2.msra.mxu0 0.0
        %3836 = vmatprep.subr.mxu0 0.0
        %3837 = vmatpush2.msra.mxu0 0.0
        %3838 = vmatprep.subr.mxu0 0.0
        %3839 = vmatpush2.msra.mxu0 0.0
        %3840 = vmatprep.subr.mxu0 0.0
        %3841 = vmatpush2.msra.mxu0 0.0
        %3842 = vmatprep.subr.mxu0 0.0
        %3843 = vmatpush2.msra.mxu0 0.0
        %3844 = vmatprep.subr.mxu0 0.0
        %3845 = vmatpush2.msra.mxu0 0.0
        %3846 = vmatprep.subr.mxu0 0.0
        %3847 = vmatpush2.msra.mxu0 0.0
        %3848 = vmatprep.subr.mxu0 0.0
        %3849 = vmatpush2.msra.mxu0 0.0
        %3850 = vmatprep.subr.mxu0 0.0
        %3851 = vmatpush2.msra.mxu0 0.0
        %3852 = vmatprep.subr.mxu0 0.0
        %3853 = vmatpush2.msra.mxu0 0.0
        %3854 = vmatprep.subr.mxu0 0.0
        %3855 = vmatpush2.msra.mxu0 0.0
        %3856 = vmatprep.subr.mxu0 0.0
        %3857 = vmatpush2.msra.mxu0 0.0
        %3858 = vmatprep.subr.mxu0 0.0
        %3859 = vmatpush2.msra.mxu0 0.0
        %3860 = vmatprep.subr.mxu0 0.0
        %3861 = vmatpush2.msra.mxu0 0.0
        %3862 = vmatprep.subr.mxu0 0.0
        %3863 = vmatpush2.msra.mxu0 0.0
        %3864 = vmatprep.subr.mxu0 0.0
        %3865 = vmatpush2.msra.mxu0 0.0
        %3866 = vmatprep.mubr.f32.mxu0 0.0
        %3867 = vmatmul.mubr.f32.gmra.mxu0 %v3658
        %v3868 = vpop.f32.mrf.mxu0
        %v3869 = vadd.f32 0.0, %v3868
        %v3870 = vpop.f32.mrf.mxu0
        %v3871 = vadd.f32 0.0, %v3870
        %3872 = vdwg.mxu0
        %3873 = vmatprep.subr.mxu0 0.0
        %3874 = vmatpush1.msra.mxu0 0.0
        %3875 = vmatprep.subr.mxu0 0.0
        %3876 = vmatpush1.msra.mxu0 0.0
        %3877 = vmatprep.subr.mxu0 0.0
        %3878 = vmatpush1.msra.mxu0 0.0
        %3879 = vmatprep.subr.mxu0 0.0
        %3880 = vmatpush1.msra.mxu0 0.0
        %3881 = vmatprep.subr.mxu0 0.0
        %3882 = vmatpush1.msra.mxu0 0.0
        %3883 = vmatprep.subr.mxu0 0.0
        %3884 = vmatpush1.msra.mxu0 0.0
        %3885 = vmatprep.subr.mxu0 0.0
        %3886 = vmatpush1.msra.mxu0 0.0
        %3887 = vmatprep.subr.mxu0 0.0
        %3888 = vmatpush1.msra.mxu0 0.0
        %3889 = vmatprep.subr.mxu0 0.0
        %3890 = vmatpush1.msra.mxu0 0.0
        %3891 = vmatprep.subr.mxu0 0.0
        %3892 = vmatpush1.msra.mxu0 0.0
        %3893 = vmatprep.subr.mxu0 0.0
        %3894 = vmatpush1.msra.mxu0 0.0
        %3895 = vmatprep.subr.mxu0 0.0
        %3896 = vmatpush1.msra.mxu0 0.0
        %3897 = vmatprep.subr.mxu0 0.0
        %3898 = vmatpush1.msra.mxu0 0.0
        %3899 = vmatprep.subr.mxu0 0.0
        %3900 = vmatpush1.msra.mxu0 0.0
        %3901 = vmatprep.subr.mxu0 0.0
        %3902 = vmatpush1.msra.mxu0 0.0
        %3903 = vmatprep.subr.mxu0 0.0
        %3904 = vmatpush1.msra.mxu0 %v3654
        %3905 = vmatprep.subr.mxu0 0.0
        %3906 = vmatpush2.msra.mxu0 0.0
        %3907 = vmatprep.subr.mxu0 0.0
        %3908 = vmatpush2.msra.mxu0 0.0
        %3909 = vmatprep.subr.mxu0 0.0
        %3910 = vmatpush2.msra.mxu0 0.0
        %3911 = vmatprep.subr.mxu0 0.0
        %3912 = vmatpush2.msra.mxu0 0.0
        %3913 = vmatprep.subr.mxu0 0.0
        %3914 = vmatpush2.msra.mxu0 0.0
        %3915 = vmatprep.subr.mxu0 0.0
        %3916 = vmatpush2.msra.mxu0 0.0
        %3917 = vmatprep.subr.mxu0 0.0
        %3918 = vmatpush2.msra.mxu0 0.0
        %3919 = vmatprep.subr.mxu0 0.0
        %3920 = vmatpush2.msra.mxu0 0.0
        %3921 = vmatprep.subr.mxu0 0.0
        %3922 = vmatpush2.msra.mxu0 0.0
        %3923 = vmatprep.subr.mxu0 0.0
        %3924 = vmatpush2.msra.mxu0 0.0
        %3925 = vmatprep.subr.mxu0 0.0
        %3926 = vmatpush2.msra.mxu0 0.0
        %3927 = vmatprep.subr.mxu0 0.0
        %3928 = vmatpush2.msra.mxu0 0.0
        %3929 = vmatprep.subr.mxu0 0.0
        %3930 = vmatpush2.msra.mxu0 0.0
        %3931 = vmatprep.subr.mxu0 0.0
        %3932 = vmatpush2.msra.mxu0 0.0
        %3933 = vmatprep.subr.mxu0 0.0
        %3934 = vmatpush2.msra.mxu0 0.0
        %3935 = vmatprep.subr.mxu0 0.0
        %3936 = vmatpush2.msra.mxu0 0.0
        %3937 = vmatprep.mubr.f32.mxu0 0.0
        %3938 = vmatmul.mubr.f32.gmra.mxu0 %v3658
        %v3939 = vpop.f32.mrf.mxu0
        %v3940 = vadd.f32 0.0, %v3939
        %v3941 = vpop.f32.mrf.mxu0
        %3942 = vdwg.mxu0
        %v3943 = vadd.f32 %v3584, %v3727
        %v3944 = vadd.f32 %v3585, %v3729
        %v3945 = vadd.f32 %v3586, %v3798
        %v3946 = vadd.f32 %v3587, %v3800
        %v3947 = vadd.f32 %v3588, %v3869
        %v3948 = vadd.f32 %v3589, %v3871
        %v3949 = vadd.f32 %v3590, %v3940
        %3950 = vrot.lane.b32.xlu0 %v1466, 100
        %v3951 = vpop.permute.xlu0 %3950
        %3952 = vrot.lane.b32.xlu0 %v1467, 100
        %v3953 = vpop.permute.xlu0 %3952
        %3954 = vrot.lane.b32.xlu0 %v1468, 100
        %v3955 = vpop.permute.xlu0 %3954
        %3956 = vrot.lane.b32.xlu0 %v1469, 100
        %v3957 = vpop.permute.xlu0 %3956
        %3958 = vrot.lane.b32.xlu0 %v1470, 100
        %v3959 = vpop.permute.xlu0 %3958
        %3960 = vrot.lane.b32.xlu0 %v1471, 100
        %v3961 = vpop.permute.xlu0 %3960
        %3962 = vrot.lane.b32.xlu0 %v1472, 100
        %v3963 = vpop.permute.xlu0 %3962
        %v3964 = vsel %vm1281, %v3951, %v3953
        %v3965 = vsel %vm1281, %v3953, %v3955
        %v3966 = vsel %vm1281, %v3955, %v3957
        %v3967 = vsel %vm1281, %v3957, %v3959
        %v3968 = vsel %vm1281, %v3959, %v3961
        %v3969 = vsel %vm1281, %v3961, %v3963
        %v3978 = vsel %vm1281, %v3963, %v3951
        %v3979 = vlaneseq
        %v3980 = vshrl.u32 %v3979, 7
        %v3981 = vsub.s32 7, %v3980
        %v3982 = vrot.slane %v519, %v3981
        %v3983 = vlaneseq
        %v3984 = vshrl.u32 %v3983, 7
        %v3985 = vsub.s32 7, %v3984
        %v3986 = vrot.slane %v520, %v3985
        %v3987 = vlaneseq
        %v3988 = vshrl.u32 %v3987, 7
        %v3989 = vsub.s32 7, %v3988
        %v3990 = vrot.slane %v521, %v3989
        %v3991 = vlaneseq
        %v3992 = vshrl.u32 %v3991, 7
        %v3993 = vsub.s32 7, %v3992
        %v3994 = vrot.slane %v522, %v3993
        %v3995 = vlaneseq
        %v3996 = vshrl.u32 %v3995, 7
        %v3997 = vsub.s32 7, %v3996
        %v3998 = vrot.slane %v523, %v3997
        %v3999 = vlaneseq
        %v4000 = vshrl.u32 %v3999, 7
        %v4001 = vsub.s32 7, %v4000
        %v4002 = vrot.slane %v524, %v4001
        %v4003 = vlaneseq
        %v4004 = vshrl.u32 %v4003, 7
        %v4005 = vsub.s32 7, %v4004
        %v4006 = vrot.slane %v525, %v4005
        %v4007 = vmul.f32 %v3964, %v3982
        %v4008 = vmul.f32 %v3965, %v3986
        %v4009 = vmul.f32 %v3966, %v3990
        %v4010 = vmul.f32 %v3967, %v3994
        %v4011 = vmul.f32 %v3968, %v3998
        %v4012 = vmul.f32 %v3969, %v4002
        %v4013 = vmul.f32 %v3978, %v4006
        %s4014 = scalar_lea.vmem %s3, 56
        %v4015 = vld [vmem:[%s4014] sm:$0xff]
        %v4017 = vsel %vm1611, %v4015, 0
        %4019 = vmatprep.subr.mxu0 0.0
        %4020 = vmatpush1.msra.mxu0 0.0
        %4021 = vmatprep.subr.mxu0 0.0
        %4022 = vmatpush1.msra.mxu0 0.0
        %4023 = vmatprep.subr.mxu0 0.0
        %4024 = vmatpush1.msra.mxu0 0.0
        %4025 = vmatprep.subr.mxu0 0.0
        %4026 = vmatpush1.msra.mxu0 0.0
        %4027 = vmatprep.subr.mxu0 0.0
        %4028 = vmatpush1.msra.mxu0 0.0
        %4029 = vmatprep.subr.mxu0 0.0
        %4030 = vmatpush1.msra.mxu0 0.0
        %4031 = vmatprep.subr.mxu0 0.0
        %4032 = vmatpush1.msra.mxu0 0.0
        %4033 = vmatprep.subr.mxu0 0.0
        %4034 = vmatpush1.msra.mxu0 0.0
        %4035 = vmatprep.subr.mxu0 0.0
        %4036 = vmatpush1.msra.mxu0 0.0
        %4037 = vmatprep.subr.mxu0 0.0
        %4038 = vmatpush1.msra.mxu0 0.0
        %4039 = vmatprep.subr.mxu0 0.0
        %4040 = vmatpush1.msra.mxu0 0.0
        %4041 = vmatprep.subr.mxu0 0.0
        %4042 = vmatpush1.msra.mxu0 0.0
        %4043 = vmatprep.subr.mxu0 0.0
        %4044 = vmatpush1.msra.mxu0 0.0
        %4045 = vmatprep.subr.mxu0 0.0
        %4046 = vmatpush1.msra.mxu0 0.0
        %4047 = vmatprep.subr.mxu0 0.0
        %4048 = vmatpush1.msra.mxu0 0.0
        %4049 = vmatprep.subr.mxu0 %v4008
        %4050 = vmatpush1.msra.mxu0 %v4007
        %4051 = vmatprep.subr.mxu0 0.0
        %4052 = vmatpush2.msra.mxu0 0.0
        %4053 = vmatprep.subr.mxu0 0.0
        %4054 = vmatpush2.msra.mxu0 0.0
        %4055 = vmatprep.subr.mxu0 0.0
        %4056 = vmatpush2.msra.mxu0 0.0
        %4057 = vmatprep.subr.mxu0 0.0
        %4058 = vmatpush2.msra.mxu0 0.0
        %4059 = vmatprep.subr.mxu0 0.0
        %4060 = vmatpush2.msra.mxu0 0.0
        %4061 = vmatprep.subr.mxu0 0.0
        %4062 = vmatpush2.msra.mxu0 0.0
        %4063 = vmatprep.subr.mxu0 0.0
        %4064 = vmatpush2.msra.mxu0 0.0
        %4065 = vmatprep.subr.mxu0 0.0
        %4066 = vmatpush2.msra.mxu0 0.0
        %4067 = vmatprep.subr.mxu0 0.0
        %4068 = vmatpush2.msra.mxu0 0.0
        %4069 = vmatprep.subr.mxu0 0.0
        %4070 = vmatpush2.msra.mxu0 0.0
        %4071 = vmatprep.subr.mxu0 0.0
        %4072 = vmatpush2.msra.mxu0 0.0
        %4073 = vmatprep.subr.mxu0 0.0
        %4074 = vmatpush2.msra.mxu0 0.0
        %4075 = vmatprep.subr.mxu0 0.0
        %4076 = vmatpush2.msra.mxu0 0.0
        %4077 = vmatprep.subr.mxu0 0.0
        %4078 = vmatpush2.msra.mxu0 0.0
        %4079 = vmatprep.subr.mxu0 0.0
        %4080 = vmatpush2.msra.mxu0 0.0
        %4081 = vmatprep.subr.mxu0 0.0
        %4082 = vmatpush2.msra.mxu0 0.0
        %4083 = vmatprep.mubr.f32.mxu0 0.0
        %4084 = vmatmul.mubr.f32.gmra.mxu0 %v4017
        %v4085 = vpop.f32.mrf.mxu0
        %v4086 = vadd.f32 0.0, %v4085
        %v4087 = vpop.f32.mrf.mxu0
        %v4088 = vadd.f32 0.0, %v4087
        %4089 = vdwg.mxu0
        %4090 = vmatprep.subr.mxu0 0.0
        %4091 = vmatpush1.msra.mxu0 0.0
        %4092 = vmatprep.subr.mxu0 0.0
        %4093 = vmatpush1.msra.mxu0 0.0
        %4094 = vmatprep.subr.mxu0 0.0
        %4095 = vmatpush1.msra.mxu0 0.0
        %4096 = vmatprep.subr.mxu0 0.0
        %4097 = vmatpush1.msra.mxu0 0.0
        %4098 = vmatprep.subr.mxu0 0.0
        %4099 = vmatpush1.msra.mxu0 0.0
        %4100 = vmatprep.subr.mxu0 0.0
        %4101 = vmatpush1.msra.mxu0 0.0
        %4102 = vmatprep.subr.mxu0 0.0
        %4103 = vmatpush1.msra.mxu0 0.0
        %4104 = vmatprep.subr.mxu0 0.0
        %4105 = vmatpush1.msra.mxu0 0.0
        %4106 = vmatprep.subr.mxu0 0.0
        %4107 = vmatpush1.msra.mxu0 0.0
        %4108 = vmatprep.subr.mxu0 0.0
        %4109 = vmatpush1.msra.mxu0 0.0
        %4110 = vmatprep.subr.mxu0 0.0
        %4111 = vmatpush1.msra.mxu0 0.0
        %4112 = vmatprep.subr.mxu0 0.0
        %4113 = vmatpush1.msra.mxu0 0.0
        %4114 = vmatprep.subr.mxu0 0.0
        %4115 = vmatpush1.msra.mxu0 0.0
        %4116 = vmatprep.subr.mxu0 0.0
        %4117 = vmatpush1.msra.mxu0 0.0
        %4118 = vmatprep.subr.mxu0 0.0
        %4119 = vmatpush1.msra.mxu0 0.0
        %4120 = vmatprep.subr.mxu0 %v4010
        %4121 = vmatpush1.msra.mxu0 %v4009
        %4122 = vmatprep.subr.mxu0 0.0
        %4123 = vmatpush2.msra.mxu0 0.0
        %4124 = vmatprep.subr.mxu0 0.0
        %4125 = vmatpush2.msra.mxu0 0.0
        %4126 = vmatprep.subr.mxu0 0.0
        %4127 = vmatpush2.msra.mxu0 0.0
        %4128 = vmatprep.subr.mxu0 0.0
        %4129 = vmatpush2.msra.mxu0 0.0
        %4130 = vmatprep.subr.mxu0 0.0
        %4131 = vmatpush2.msra.mxu0 0.0
        %4132 = vmatprep.subr.mxu0 0.0
        %4133 = vmatpush2.msra.mxu0 0.0
        %4134 = vmatprep.subr.mxu0 0.0
        %4135 = vmatpush2.msra.mxu0 0.0
        %4136 = vmatprep.subr.mxu0 0.0
        %4137 = vmatpush2.msra.mxu0 0.0
        %4138 = vmatprep.subr.mxu0 0.0
        %4139 = vmatpush2.msra.mxu0 0.0
        %4140 = vmatprep.subr.mxu0 0.0
        %4141 = vmatpush2.msra.mxu0 0.0
        %4142 = vmatprep.subr.mxu0 0.0
        %4143 = vmatpush2.msra.mxu0 0.0
        %4144 = vmatprep.subr.mxu0 0.0
        %4145 = vmatpush2.msra.mxu0 0.0
        %4146 = vmatprep.subr.mxu0 0.0
        %4147 = vmatpush2.msra.mxu0 0.0
        %4148 = vmatprep.subr.mxu0 0.0
        %4149 = vmatpush2.msra.mxu0 0.0
        %4150 = vmatprep.subr.mxu0 0.0
        %4151 = vmatpush2.msra.mxu0 0.0
        %4152 = vmatprep.subr.mxu0 0.0
        %4153 = vmatpush2.msra.mxu0 0.0
        %4154 = vmatprep.mubr.f32.mxu0 0.0
        %4155 = vmatmul.mubr.f32.gmra.mxu0 %v4017
        %v4156 = vpop.f32.mrf.mxu0
        %v4157 = vadd.f32 0.0, %v4156
        %v4158 = vpop.f32.mrf.mxu0
        %v4159 = vadd.f32 0.0, %v4158
        %4160 = vdwg.mxu0
        %4161 = vmatprep.subr.mxu0 0.0
        %4162 = vmatpush1.msra.mxu0 0.0
        %4163 = vmatprep.subr.mxu0 0.0
        %4164 = vmatpush1.msra.mxu0 0.0
        %4165 = vmatprep.subr.mxu0 0.0
        %4166 = vmatpush1.msra.mxu0 0.0
        %4167 = vmatprep.subr.mxu0 0.0
        %4168 = vmatpush1.msra.mxu0 0.0
        %4169 = vmatprep.subr.mxu0 0.0
        %4170 = vmatpush1.msra.mxu0 0.0
        %4171 = vmatprep.subr.mxu0 0.0
        %4172 = vmatpush1.msra.mxu0 0.0
        %4173 = vmatprep.subr.mxu0 0.0
        %4174 = vmatpush1.msra.mxu0 0.0
        %4175 = vmatprep.subr.mxu0 0.0
        %4176 = vmatpush1.msra.mxu0 0.0
        %4177 = vmatprep.subr.mxu0 0.0
        %4178 = vmatpush1.msra.mxu0 0.0
        %4179 = vmatprep.subr.mxu0 0.0
        %4180 = vmatpush1.msra.mxu0 0.0
        %4181 = vmatprep.subr.mxu0 0.0
        %4182 = vmatpush1.msra.mxu0 0.0
        %4183 = vmatprep.subr.mxu0 0.0
        %4184 = vmatpush1.msra.mxu0 0.0
        %4185 = vmatprep.subr.mxu0 0.0
        %4186 = vmatpush1.msra.mxu0 0.0
        %4187 = vmatprep.subr.mxu0 0.0
        %4188 = vmatpush1.msra.mxu0 0.0
        %4189 = vmatprep.subr.mxu0 0.0
        %4190 = vmatpush1.msra.mxu0 0.0
        %4191 = vmatprep.subr.mxu0 %v4012
        %4192 = vmatpush1.msra.mxu0 %v4011
        %4193 = vmatprep.subr.mxu0 0.0
        %4194 = vmatpush2.msra.mxu0 0.0
        %4195 = vmatprep.subr.mxu0 0.0
        %4196 = vmatpush2.msra.mxu0 0.0
        %4197 = vmatprep.subr.mxu0 0.0
        %4198 = vmatpush2.msra.mxu0 0.0
        %4199 = vmatprep.subr.mxu0 0.0
        %4200 = vmatpush2.msra.mxu0 0.0
        %4201 = vmatprep.subr.mxu0 0.0
        %4202 = vmatpush2.msra.mxu0 0.0
        %4203 = vmatprep.subr.mxu0 0.0
        %4204 = vmatpush2.msra.mxu0 0.0
        %4205 = vmatprep.subr.mxu0 0.0
        %4206 = vmatpush2.msra.mxu0 0.0
        %4207 = vmatprep.subr.mxu0 0.0
        %4208 = vmatpush2.msra.mxu0 0.0
        %4209 = vmatprep.subr.mxu0 0.0
        %4210 = vmatpush2.msra.mxu0 0.0
        %4211 = vmatprep.subr.mxu0 0.0
        %4212 = vmatpush2.msra.mxu0 0.0
        %4213 = vmatprep.subr.mxu0 0.0
        %4214 = vmatpush2.msra.mxu0 0.0
        %4215 = vmatprep.subr.mxu0 0.0
        %4216 = vmatpush2.msra.mxu0 0.0
        %4217 = vmatprep.subr.mxu0 0.0
        %4218 = vmatpush2.msra.mxu0 0.0
        %4219 = vmatprep.subr.mxu0 0.0
        %4220 = vmatpush2.msra.mxu0 0.0
        %4221 = vmatprep.subr.mxu0 0.0
        %4222 = vmatpush2.msra.mxu0 0.0
        %4223 = vmatprep.subr.mxu0 0.0
        %4224 = vmatpush2.msra.mxu0 0.0
        %4225 = vmatprep.mubr.f32.mxu0 0.0
        %4226 = vmatmul.mubr.f32.gmra.mxu0 %v4017
        %v4227 = vpop.f32.mrf.mxu0
        %v4228 = vadd.f32 0.0, %v4227
        %v4229 = vpop.f32.mrf.mxu0
        %v4230 = vadd.f32 0.0, %v4229
        %4231 = vdwg.mxu0
        %4232 = vmatprep.subr.mxu0 0.0
        %4233 = vmatpush1.msra.mxu0 0.0
        %4234 = vmatprep.subr.mxu0 0.0
        %4235 = vmatpush1.msra.mxu0 0.0
        %4236 = vmatprep.subr.mxu0 0.0
        %4237 = vmatpush1.msra.mxu0 0.0
        %4238 = vmatprep.subr.mxu0 0.0
        %4239 = vmatpush1.msra.mxu0 0.0
        %4240 = vmatprep.subr.mxu0 0.0
        %4241 = vmatpush1.msra.mxu0 0.0
        %4242 = vmatprep.subr.mxu0 0.0
        %4243 = vmatpush1.msra.mxu0 0.0
        %4244 = vmatprep.subr.mxu0 0.0
        %4245 = vmatpush1.msra.mxu0 0.0
        %4246 = vmatprep.subr.mxu0 0.0
        %4247 = vmatpush1.msra.mxu0 0.0
        %4248 = vmatprep.subr.mxu0 0.0
        %4249 = vmatpush1.msra.mxu0 0.0
        %4250 = vmatprep.subr.mxu0 0.0
        %4251 = vmatpush1.msra.mxu0 0.0
        %4252 = vmatprep.subr.mxu0 0.0
        %4253 = vmatpush1.msra.mxu0 0.0
        %4254 = vmatprep.subr.mxu0 0.0
        %4255 = vmatpush1.msra.mxu0 0.0
        %4256 = vmatprep.subr.mxu0 0.0
        %4257 = vmatpush1.msra.mxu0 0.0
        %4258 = vmatprep.subr.mxu0 0.0
        %4259 = vmatpush1.msra.mxu0 0.0
        %4260 = vmatprep.subr.mxu0 0.0
        %4261 = vmatpush1.msra.mxu0 0.0
        %4262 = vmatprep.subr.mxu0 0.0
        %4263 = vmatpush1.msra.mxu0 %v4013
        %4264 = vmatprep.subr.mxu0 0.0
        %4265 = vmatpush2.msra.mxu0 0.0
        %4266 = vmatprep.subr.mxu0 0.0
        %4267 = vmatpush2.msra.mxu0 0.0
        %4268 = vmatprep.subr.mxu0 0.0
        %4269 = vmatpush2.msra.mxu0 0.0
        %4270 = vmatprep.subr.mxu0 0.0
        %4271 = vmatpush2.msra.mxu0 0.0
        %4272 = vmatprep.subr.mxu0 0.0
        %4273 = vmatpush2.msra.mxu0 0.0
        %4274 = vmatprep.subr.mxu0 0.0
        %4275 = vmatpush2.msra.mxu0 0.0
        %4276 = vmatprep.subr.mxu0 0.0
        %4277 = vmatpush2.msra.mxu0 0.0
        %4278 = vmatprep.subr.mxu0 0.0
        %4279 = vmatpush2.msra.mxu0 0.0
        %4280 = vmatprep.subr.mxu0 0.0
        %4281 = vmatpush2.msra.mxu0 0.0
        %4282 = vmatprep.subr.mxu0 0.0
        %4283 = vmatpush2.msra.mxu0 0.0
        %4284 = vmatprep.subr.mxu0 0.0
        %4285 = vmatpush2.msra.mxu0 0.0
        %4286 = vmatprep.subr.mxu0 0.0
        %4287 = vmatpush2.msra.mxu0 0.0
        %4288 = vmatprep.subr.mxu0 0.0
        %4289 = vmatpush2.msra.mxu0 0.0
        %4290 = vmatprep.subr.mxu0 0.0
        %4291 = vmatpush2.msra.mxu0 0.0
        %4292 = vmatprep.subr.mxu0 0.0
        %4293 = vmatpush2.msra.mxu0 0.0
        %4294 = vmatprep.subr.mxu0 0.0
        %4295 = vmatpush2.msra.mxu0 0.0
        %4296 = vmatprep.mubr.f32.mxu0 0.0
        %4297 = vmatmul.mubr.f32.gmra.mxu0 %v4017
        %v4298 = vpop.f32.mrf.mxu0
        %v4299 = vadd.f32 0.0, %v4298
        %v4300 = vpop.f32.mrf.mxu0
        %4301 = vdwg.mxu0
        %v4302 = vadd.f32 %v3943, %v4086
        %v4303 = vadd.f32 %v3944, %v4088
        %v4304 = vadd.f32 %v3945, %v4157
        %v4305 = vadd.f32 %v3946, %v4159
        %v4306 = vadd.f32 %v3947, %v4228
        %v4307 = vadd.f32 %v3948, %v4230
        %v4308 = vadd.f32 %v3949, %v4299
        %4309 = vrot.lane.b32.xlu0 %v1466, 99
        %v4310 = vpop.permute.xlu0 %4309
        %4311 = vrot.lane.b32.xlu0 %v1467, 99
        %v4312 = vpop.permute.xlu0 %4311
        %4313 = vrot.lane.b32.xlu0 %v1468, 99
        %v4314 = vpop.permute.xlu0 %4313
        %4315 = vrot.lane.b32.xlu0 %v1469, 99
        %v4316 = vpop.permute.xlu0 %4315
        %4317 = vrot.lane.b32.xlu0 %v1470, 99
        %v4318 = vpop.permute.xlu0 %4317
        %4319 = vrot.lane.b32.xlu0 %v1471, 99
        %v4320 = vpop.permute.xlu0 %4319
        %4321 = vrot.lane.b32.xlu0 %v1472, 99
        %v4322 = vpop.permute.xlu0 %4321
        %v4323 = vsel %vm1381, %v4310, %v4312
        %v4324 = vsel %vm1381, %v4312, %v4314
        %v4325 = vsel %vm1381, %v4314, %v4316
        %v4326 = vsel %vm1381, %v4316, %v4318
        %v4327 = vsel %vm1381, %v4318, %v4320
        %v4328 = vsel %vm1381, %v4320, %v4322
        %v4337 = vsel %vm1381, %v4322, %v4310
        %v4338 = vlaneseq
        %v4339 = vshrl.u32 %v4338, 7
        %v4340 = vsub.s32 0, %v4339
        %v4341 = vrot.slane %v526, %v4340
        %v4342 = vlaneseq
        %v4343 = vshrl.u32 %v4342, 7
        %v4344 = vsub.s32 0, %v4343
        %v4345 = vrot.slane %v527, %v4344
        %v4346 = vlaneseq
        %v4347 = vshrl.u32 %v4346, 7
        %v4348 = vsub.s32 0, %v4347
        %v4349 = vrot.slane %v528, %v4348
        %v4350 = vlaneseq
        %v4351 = vshrl.u32 %v4350, 7
        %v4352 = vsub.s32 0, %v4351
        %v4353 = vrot.slane %v529, %v4352
        %v4354 = vlaneseq
        %v4355 = vshrl.u32 %v4354, 7
        %v4356 = vsub.s32 0, %v4355
        %v4357 = vrot.slane %v530, %v4356
        %v4358 = vlaneseq
        %v4359 = vshrl.u32 %v4358, 7
        %v4360 = vsub.s32 0, %v4359
        %v4361 = vrot.slane %v531, %v4360
        %v4362 = vlaneseq
        %v4363 = vshrl.u32 %v4362, 7
        %v4364 = vsub.s32 0, %v4363
        %v4365 = vrot.slane %v532, %v4364
        %v4366 = vmul.f32 %v4323, %v4341
        %v4367 = vmul.f32 %v4324, %v4345
        %v4368 = vmul.f32 %v4325, %v4349
        %v4369 = vmul.f32 %v4326, %v4353
        %v4370 = vmul.f32 %v4327, %v4357
        %v4371 = vmul.f32 %v4328, %v4361
        %v4372 = vmul.f32 %v4337, %v4365
        %s4373 = scalar_lea.vmem %s3, 64
        %v4374 = vld [vmem:[%s4373] sm:$0xff]
        %v4376 = vsel %vm1611, %v4374, 0
        %4378 = vmatprep.subr.mxu0 0.0
        %4379 = vmatpush1.msra.mxu0 0.0
        %4380 = vmatprep.subr.mxu0 0.0
        %4381 = vmatpush1.msra.mxu0 0.0
        %4382 = vmatprep.subr.mxu0 0.0
        %4383 = vmatpush1.msra.mxu0 0.0
        %4384 = vmatprep.subr.mxu0 0.0
        %4385 = vmatpush1.msra.mxu0 0.0
        %4386 = vmatprep.subr.mxu0 0.0
        %4387 = vmatpush1.msra.mxu0 0.0
        %4388 = vmatprep.subr.mxu0 0.0
        %4389 = vmatpush1.msra.mxu0 0.0
        %4390 = vmatprep.subr.mxu0 0.0
        %4391 = vmatpush1.msra.mxu0 0.0
        %4392 = vmatprep.subr.mxu0 0.0
        %4393 = vmatpush1.msra.mxu0 0.0
        %4394 = vmatprep.subr.mxu0 0.0
        %4395 = vmatpush1.msra.mxu0 0.0
        %4396 = vmatprep.subr.mxu0 0.0
        %4397 = vmatpush1.msra.mxu0 0.0
        %4398 = vmatprep.subr.mxu0 0.0
        %4399 = vmatpush1.msra.mxu0 0.0
        %4400 = vmatprep.subr.mxu0 0.0
        %4401 = vmatpush1.msra.mxu0 0.0
        %4402 = vmatprep.subr.mxu0 0.0
        %4403 = vmatpush1.msra.mxu0 0.0
        %4404 = vmatprep.subr.mxu0 0.0
        %4405 = vmatpush1.msra.mxu0 0.0
        %4406 = vmatprep.subr.mxu0 0.0
        %4407 = vmatpush1.msra.mxu0 0.0
        %4408 = vmatprep.subr.mxu0 %v4367
        %4409 = vmatpush1.msra.mxu0 %v4366
        %4410 = vmatprep.subr.mxu0 0.0
        %4411 = vmatpush2.msra.mxu0 0.0
        %4412 = vmatprep.subr.mxu0 0.0
        %4413 = vmatpush2.msra.mxu0 0.0
        %4414 = vmatprep.subr.mxu0 0.0
        %4415 = vmatpush2.msra.mxu0 0.0
        %4416 = vmatprep.subr.mxu0 0.0
        %4417 = vmatpush2.msra.mxu0 0.0
        %4418 = vmatprep.subr.mxu0 0.0
        %4419 = vmatpush2.msra.mxu0 0.0
        %4420 = vmatprep.subr.mxu0 0.0
        %4421 = vmatpush2.msra.mxu0 0.0
        %4422 = vmatprep.subr.mxu0 0.0
        %4423 = vmatpush2.msra.mxu0 0.0
        %4424 = vmatprep.subr.mxu0 0.0
        %4425 = vmatpush2.msra.mxu0 0.0
        %4426 = vmatprep.subr.mxu0 0.0
        %4427 = vmatpush2.msra.mxu0 0.0
        %4428 = vmatprep.subr.mxu0 0.0
        %4429 = vmatpush2.msra.mxu0 0.0
        %4430 = vmatprep.subr.mxu0 0.0
        %4431 = vmatpush2.msra.mxu0 0.0
        %4432 = vmatprep.subr.mxu0 0.0
        %4433 = vmatpush2.msra.mxu0 0.0
        %4434 = vmatprep.subr.mxu0 0.0
        %4435 = vmatpush2.msra.mxu0 0.0
        %4436 = vmatprep.subr.mxu0 0.0
        %4437 = vmatpush2.msra.mxu0 0.0
        %4438 = vmatprep.subr.mxu0 0.0
        %4439 = vmatpush2.msra.mxu0 0.0
        %4440 = vmatprep.subr.mxu0 0.0
        %4441 = vmatpush2.msra.mxu0 0.0
        %4442 = vmatprep.mubr.f32.mxu0 0.0
        %4443 = vmatmul.mubr.f32.gmra.mxu0 %v4376
        %v4444 = vpop.f32.mrf.mxu0
        %v4445 = vadd.f32 0.0, %v4444
        %v4446 = vpop.f32.mrf.mxu0
        %v4447 = vadd.f32 0.0, %v4446
        %4448 = vdwg.mxu0
        %4449 = vmatprep.subr.mxu0 0.0
        %4450 = vmatpush1.msra.mxu0 0.0
        %4451 = vmatprep.subr.mxu0 0.0
        %4452 = vmatpush1.msra.mxu0 0.0
        %4453 = vmatprep.subr.mxu0 0.0
        %4454 = vmatpush1.msra.mxu0 0.0
        %4455 = vmatprep.subr.mxu0 0.0
        %4456 = vmatpush1.msra.mxu0 0.0
        %4457 = vmatprep.subr.mxu0 0.0
        %4458 = vmatpush1.msra.mxu0 0.0
        %4459 = vmatprep.subr.mxu0 0.0
        %4460 = vmatpush1.msra.mxu0 0.0
        %4461 = vmatprep.subr.mxu0 0.0
        %4462 = vmatpush1.msra.mxu0 0.0
        %4463 = vmatprep.subr.mxu0 0.0
        %4464 = vmatpush1.msra.mxu0 0.0
        %4465 = vmatprep.subr.mxu0 0.0
        %4466 = vmatpush1.msra.mxu0 0.0
        %4467 = vmatprep.subr.mxu0 0.0
        %4468 = vmatpush1.msra.mxu0 0.0
        %4469 = vmatprep.subr.mxu0 0.0
        %4470 = vmatpush1.msra.mxu0 0.0
        %4471 = vmatprep.subr.mxu0 0.0
        %4472 = vmatpush1.msra.mxu0 0.0
        %4473 = vmatprep.subr.mxu0 0.0
        %4474 = vmatpush1.msra.mxu0 0.0
        %4475 = vmatprep.subr.mxu0 0.0
        %4476 = vmatpush1.msra.mxu0 0.0
        %4477 = vmatprep.subr.mxu0 0.0
        %4478 = vmatpush1.msra.mxu0 0.0
        %4479 = vmatprep.subr.mxu0 %v4369
        %4480 = vmatpush1.msra.mxu0 %v4368
        %4481 = vmatprep.subr.mxu0 0.0
        %4482 = vmatpush2.msra.mxu0 0.0
        %4483 = vmatprep.subr.mxu0 0.0
        %4484 = vmatpush2.msra.mxu0 0.0
        %4485 = vmatprep.subr.mxu0 0.0
        %4486 = vmatpush2.msra.mxu0 0.0
        %4487 = vmatprep.subr.mxu0 0.0
        %4488 = vmatpush2.msra.mxu0 0.0
        %4489 = vmatprep.subr.mxu0 0.0
        %4490 = vmatpush2.msra.mxu0 0.0
        %4491 = vmatprep.subr.mxu0 0.0
        %4492 = vmatpush2.msra.mxu0 0.0
        %4493 = vmatprep.subr.mxu0 0.0
        %4494 = vmatpush2.msra.mxu0 0.0
        %4495 = vmatprep.subr.mxu0 0.0
        %4496 = vmatpush2.msra.mxu0 0.0
        %4497 = vmatprep.subr.mxu0 0.0
        %4498 = vmatpush2.msra.mxu0 0.0
        %4499 = vmatprep.subr.mxu0 0.0
        %4500 = vmatpush2.msra.mxu0 0.0
        %4501 = vmatprep.subr.mxu0 0.0
        %4502 = vmatpush2.msra.mxu0 0.0
        %4503 = vmatprep.subr.mxu0 0.0
        %4504 = vmatpush2.msra.mxu0 0.0
        %4505 = vmatprep.subr.mxu0 0.0
        %4506 = vmatpush2.msra.mxu0 0.0
        %4507 = vmatprep.subr.mxu0 0.0
        %4508 = vmatpush2.msra.mxu0 0.0
        %4509 = vmatprep.subr.mxu0 0.0
        %4510 = vmatpush2.msra.mxu0 0.0
        %4511 = vmatprep.subr.mxu0 0.0
        %4512 = vmatpush2.msra.mxu0 0.0
        %4513 = vmatprep.mubr.f32.mxu0 0.0
        %4514 = vmatmul.mubr.f32.gmra.mxu0 %v4376
        %v4515 = vpop.f32.mrf.mxu0
        %v4516 = vadd.f32 0.0, %v4515
        %v4517 = vpop.f32.mrf.mxu0
        %v4518 = vadd.f32 0.0, %v4517
        %4519 = vdwg.mxu0
        %4520 = vmatprep.subr.mxu0 0.0
        %4521 = vmatpush1.msra.mxu0 0.0
        %4522 = vmatprep.subr.mxu0 0.0
        %4523 = vmatpush1.msra.mxu0 0.0
        %4524 = vmatprep.subr.mxu0 0.0
        %4525 = vmatpush1.msra.mxu0 0.0
        %4526 = vmatprep.subr.mxu0 0.0
        %4527 = vmatpush1.msra.mxu0 0.0
        %4528 = vmatprep.subr.mxu0 0.0
        %4529 = vmatpush1.msra.mxu0 0.0
        %4530 = vmatprep.subr.mxu0 0.0
        %4531 = vmatpush1.msra.mxu0 0.0
        %4532 = vmatprep.subr.mxu0 0.0
        %4533 = vmatpush1.msra.mxu0 0.0
        %4534 = vmatprep.subr.mxu0 0.0
        %4535 = vmatpush1.msra.mxu0 0.0
        %4536 = vmatprep.subr.mxu0 0.0
        %4537 = vmatpush1.msra.mxu0 0.0
        %4538 = vmatprep.subr.mxu0 0.0
        %4539 = vmatpush1.msra.mxu0 0.0
        %4540 = vmatprep.subr.mxu0 0.0
        %4541 = vmatpush1.msra.mxu0 0.0
        %4542 = vmatprep.subr.mxu0 0.0
        %4543 = vmatpush1.msra.mxu0 0.0
        %4544 = vmatprep.subr.mxu0 0.0
        %4545 = vmatpush1.msra.mxu0 0.0
        %4546 = vmatprep.subr.mxu0 0.0
        %4547 = vmatpush1.msra.mxu0 0.0
        %4548 = vmatprep.subr.mxu0 0.0
        %4549 = vmatpush1.msra.mxu0 0.0
        %4550 = vmatprep.subr.mxu0 %v4371
        %4551 = vmatpush1.msra.mxu0 %v4370
        %4552 = vmatprep.subr.mxu0 0.0
        %4553 = vmatpush2.msra.mxu0 0.0
        %4554 = vmatprep.subr.mxu0 0.0
        %4555 = vmatpush2.msra.mxu0 0.0
        %4556 = vmatprep.subr.mxu0 0.0
        %4557 = vmatpush2.msra.mxu0 0.0
        %4558 = vmatprep.subr.mxu0 0.0
        %4559 = vmatpush2.msra.mxu0 0.0
        %4560 = vmatprep.subr.mxu0 0.0
        %4561 = vmatpush2.msra.mxu0 0.0
        %4562 = vmatprep.subr.mxu0 0.0
        %4563 = vmatpush2.msra.mxu0 0.0
        %4564 = vmatprep.subr.mxu0 0.0
        %4565 = vmatpush2.msra.mxu0 0.0
        %4566 = vmatprep.subr.mxu0 0.0
        %4567 = vmatpush2.msra.mxu0 0.0
        %4568 = vmatprep.subr.mxu0 0.0
        %4569 = vmatpush2.msra.mxu0 0.0
        %4570 = vmatprep.subr.mxu0 0.0
        %4571 = vmatpush2.msra.mxu0 0.0
        %4572 = vmatprep.subr.mxu0 0.0
        %4573 = vmatpush2.msra.mxu0 0.0
        %4574 = vmatprep.subr.mxu0 0.0
        %4575 = vmatpush2.msra.mxu0 0.0
        %4576 = vmatprep.subr.mxu0 0.0
        %4577 = vmatpush2.msra.mxu0 0.0
        %4578 = vmatprep.subr.mxu0 0.0
        %4579 = vmatpush2.msra.mxu0 0.0
        %4580 = vmatprep.subr.mxu0 0.0
        %4581 = vmatpush2.msra.mxu0 0.0
        %4582 = vmatprep.subr.mxu0 0.0
        %4583 = vmatpush2.msra.mxu0 0.0
        %4584 = vmatprep.mubr.f32.mxu0 0.0
        %4585 = vmatmul.mubr.f32.gmra.mxu0 %v4376
        %v4586 = vpop.f32.mrf.mxu0
        %v4587 = vadd.f32 0.0, %v4586
        %v4588 = vpop.f32.mrf.mxu0
        %v4589 = vadd.f32 0.0, %v4588
        %4590 = vdwg.mxu0
        %4591 = vmatprep.subr.mxu0 0.0
        %4592 = vmatpush1.msra.mxu0 0.0
        %4593 = vmatprep.subr.mxu0 0.0
        %4594 = vmatpush1.msra.mxu0 0.0
        %4595 = vmatprep.subr.mxu0 0.0
        %4596 = vmatpush1.msra.mxu0 0.0
        %4597 = vmatprep.subr.mxu0 0.0
        %4598 = vmatpush1.msra.mxu0 0.0
        %4599 = vmatprep.subr.mxu0 0.0
        %4600 = vmatpush1.msra.mxu0 0.0
        %4601 = vmatprep.subr.mxu0 0.0
        %4602 = vmatpush1.msra.mxu0 0.0
        %4603 = vmatprep.subr.mxu0 0.0
        %4604 = vmatpush1.msra.mxu0 0.0
        %4605 = vmatprep.subr.mxu0 0.0
        %4606 = vmatpush1.msra.mxu0 0.0
        %4607 = vmatprep.subr.mxu0 0.0
        %4608 = vmatpush1.msra.mxu0 0.0
        %4609 = vmatprep.subr.mxu0 0.0
        %4610 = vmatpush1.msra.mxu0 0.0
        %4611 = vmatprep.subr.mxu0 0.0
        %4612 = vmatpush1.msra.mxu0 0.0
        %4613 = vmatprep.subr.mxu0 0.0
        %4614 = vmatpush1.msra.mxu0 0.0
        %4615 = vmatprep.subr.mxu0 0.0
        %4616 = vmatpush1.msra.mxu0 0.0
        %4617 = vmatprep.subr.mxu0 0.0
        %4618 = vmatpush1.msra.mxu0 0.0
        %4619 = vmatprep.subr.mxu0 0.0
        %4620 = vmatpush1.msra.mxu0 0.0
        %4621 = vmatprep.subr.mxu0 0.0
        %4622 = vmatpush1.msra.mxu0 %v4372
        %4623 = vmatprep.subr.mxu0 0.0
        %4624 = vmatpush2.msra.mxu0 0.0
        %4625 = vmatprep.subr.mxu0 0.0
        %4626 = vmatpush2.msra.mxu0 0.0
        %4627 = vmatprep.subr.mxu0 0.0
        %4628 = vmatpush2.msra.mxu0 0.0
        %4629 = vmatprep.subr.mxu0 0.0
        %4630 = vmatpush2.msra.mxu0 0.0
        %4631 = vmatprep.subr.mxu0 0.0
        %4632 = vmatpush2.msra.mxu0 0.0
        %4633 = vmatprep.subr.mxu0 0.0
        %4634 = vmatpush2.msra.mxu0 0.0
        %4635 = vmatprep.subr.mxu0 0.0
        %4636 = vmatpush2.msra.mxu0 0.0
        %4637 = vmatprep.subr.mxu0 0.0
        %4638 = vmatpush2.msra.mxu0 0.0
        %4639 = vmatprep.subr.mxu0 0.0
        %4640 = vmatpush2.msra.mxu0 0.0
        %4641 = vmatprep.subr.mxu0 0.0
        %4642 = vmatpush2.msra.mxu0 0.0
        %4643 = vmatprep.subr.mxu0 0.0
        %4644 = vmatpush2.msra.mxu0 0.0
        %4645 = vmatprep.subr.mxu0 0.0
        %4646 = vmatpush2.msra.mxu0 0.0
        %4647 = vmatprep.subr.mxu0 0.0
        %4648 = vmatpush2.msra.mxu0 0.0
        %4649 = vmatprep.subr.mxu0 0.0
        %4650 = vmatpush2.msra.mxu0 0.0
        %4651 = vmatprep.subr.mxu0 0.0
        %4652 = vmatpush2.msra.mxu0 0.0
        %4653 = vmatprep.subr.mxu0 0.0
        %4654 = vmatpush2.msra.mxu0 0.0
        %4655 = vmatprep.mubr.f32.mxu0 0.0
        %4656 = vmatmul.mubr.f32.gmra.mxu0 %v4376
        %v4657 = vpop.f32.mrf.mxu0
        %v4658 = vadd.f32 0.0, %v4657
        %v4659 = vpop.f32.mrf.mxu0
        %4660 = vdwg.mxu0
        %v4661 = vadd.f32 %v4302, %v4445
        %v4662 = vadd.f32 %v4303, %v4447
        %v4663 = vadd.f32 %v4304, %v4516
        %v4664 = vadd.f32 %v4305, %v4518
        %v4665 = vadd.f32 %v4306, %v4587
        %v4666 = vadd.f32 %v4307, %v4589
        %v4667 = vadd.f32 %v4308, %v4658
        %v4668 = vld [vmem:[%s4] sm:$0xff]
        %4670 = vset.pattern.permute.xlu0 0
        %4671 = vperm.xlu0 %4670, %v4668
        %v4672 = vpop.permute.xlu0 %4671
        %v4674 = vadd.f32 %v4661, %v4672
        %v4675 = vadd.f32 %v4662, %v4672
        %v4676 = vadd.f32 %v4663, %v4672
        %v4677 = vadd.f32 %v4664, %v4672
        %v4678 = vadd.f32 %v4665, %v4672
        %v4679 = vadd.f32 %v4666, %v4672
        %v4680 = vadd.f32 %v4667, %v4672
        %v4681 = vmax.f32 %v4674, 0.0
        %v4682 = vmax.f32 %v4675, 0.0
        %v4683 = vmax.f32 %v4676, 0.0
        %v4684 = vmax.f32 %v4677, 0.0
        %v4685 = vmax.f32 %v4678, 0.0
        %v4686 = vmax.f32 %v4679, 0.0
        %v4687 = vmax.f32 %v4680, 0.0
        %4695 = vrot.lane.b32.xlu0 %v4681, 127
        %v4696 = vpop.permute.xlu0 %4695
        %4697 = vrot.lane.b32.xlu0 %v4682, 127
        %v4698 = vpop.permute.xlu0 %4697
        %4699 = vrot.lane.b32.xlu0 %v4683, 127
        %v4700 = vpop.permute.xlu0 %4699
        %4701 = vrot.lane.b32.xlu0 %v4684, 127
        %v4702 = vpop.permute.xlu0 %4701
        %4703 = vrot.lane.b32.xlu0 %v4685, 127
        %v4704 = vpop.permute.xlu0 %4703
        %4705 = vrot.lane.b32.xlu0 %v4686, 127
        %v4706 = vpop.permute.xlu0 %4705
        %4707 = vrot.lane.b32.xlu0 %v4687, 127
        %v4708 = vpop.permute.xlu0 %4707
        %v4709 = vsel %vm1081, %v4696, %v4698
        %v4710 = vsel %vm1081, %v4698, %v4700
        %v4711 = vsel %vm1081, %v4700, %v4702
        %v4712 = vsel %vm1081, %v4702, %v4704
        %v4713 = vsel %vm1081, %v4704, %v4706
        %v4714 = vsel %vm1081, %v4706, %v4708
        %v4723 = vsel %vm1081, %v4708, %v4696
        %v4724 = vmax.f32 %v4681, %v4709
        %v4725 = vmax.f32 %v4682, %v4710
        %v4726 = vmax.f32 %v4683, %v4711
        %v4727 = vmax.f32 %v4684, %v4712
        %v4728 = vmax.f32 %v4685, %v4713
        %v4729 = vmax.f32 %v4686, %v4714
        %v4730 = vmax.f32 %v4687, %v4723
        %4738 = vrot.lane.b32.xlu0 %v4724, 100
        %v4739 = vpop.permute.xlu0 %4738
        %4740 = vrot.lane.b32.xlu0 %v4725, 100
        %v4741 = vpop.permute.xlu0 %4740
        %4742 = vrot.lane.b32.xlu0 %v4726, 100
        %v4743 = vpop.permute.xlu0 %4742
        %4744 = vrot.lane.b32.xlu0 %v4727, 100
        %v4745 = vpop.permute.xlu0 %4744
        %4746 = vrot.lane.b32.xlu0 %v4728, 100
        %v4747 = vpop.permute.xlu0 %4746
        %4748 = vrot.lane.b32.xlu0 %v4729, 100
        %v4749 = vpop.permute.xlu0 %4748
        %4750 = vrot.lane.b32.xlu0 %v4730, 100
        %v4751 = vpop.permute.xlu0 %4750
        %v4752 = vsel %vm1281, %v4739, %v4741
        %v4753 = vsel %vm1281, %v4741, %v4743
        %v4754 = vsel %vm1281, %v4743, %v4745
        %v4755 = vsel %vm1281, %v4745, %v4747
        %v4756 = vsel %vm1281, %v4747, %v4749
        %v4757 = vsel %vm1281, %v4749, %v4751
        %v4766 = vsel %vm1281, %v4751, %v4739
        %v4767 = vmax.f32 %v4724, %v4752
        %v4768 = vmax.f32 %v4725, %v4753
        %v4769 = vmax.f32 %v4726, %v4754
        %v4770 = vmax.f32 %v4727, %v4755
        %v4771 = vmax.f32 %v4728, %v4756
        %v4772 = vmax.f32 %v4729, %v4757
        %v4773 = vmax.f32 %v4730, %v4766
        %v4774 = vld [vmem:[#allocation5] sm:$0xff]
        %v4775 = vld [vmem:[#allocation5 + $0x8] sm:$0xff]
        %v4776 = vld [vmem:[#allocation5 + $0x10] sm:$0xff]
        %v4777 = vld [vmem:[#allocation5 + $0x18] sm:$0xff]
        %v4778 = vld [vmem:[#allocation5 + $0x20] sm:$0xff]
        %v4779 = vld [vmem:[#allocation5 + $0x28] sm:$0xff]
        %v4780 = vld [vmem:[#allocation5 + $0x30] sm:$0xff]
        %v4781 = vld [vmem:[#allocation5 + $0x38] sm:$0xff]
        %v4782 = vld [vmem:[#allocation5 + $0x40] sm:$0xff]
        %v4783 = vld [vmem:[#allocation5 + $0x48] sm:$0xff]
        %v4784 = vld [vmem:[#allocation5 + $0x50] sm:$0xff]
        %v4785 = vld [vmem:[#allocation5 + $0x58] sm:$0xff]
        %v4786 = vld [vmem:[#allocation5 + $0x60] sm:$0xff]
        %v4787 = vld [vmem:[#allocation5 + $0x68] sm:$0xff]
        %v4788 = vld [vmem:[#allocation5 + $0x70] sm:$0xff]
        %v4789 = vld [vmem:[#allocation5 + $0x78] sm:$0xff]
        %v4790 = vld [vmem:[#allocation5 + $0x80] sm:$0xff]
        %v4791 = vld [vmem:[#allocation5 + $0x88] sm:$0xff]
        %v4792 = vld [vmem:[#allocation5 + $0x90] sm:$0xff]
        %v4793 = vld [vmem:[#allocation5 + $0x98] sm:$0xff]
        %v4794 = vld [vmem:[#allocation5 + $0xa0] sm:$0xff]
        %v4795 = vld [vmem:[#allocation5 + $0xa8] sm:$0xff]
        %v4796 = vld [vmem:[#allocation5 + $0xb0] sm:$0xff]
        %v4797 = vld [vmem:[#allocation5 + $0xb8] sm:$0xff]
        %v4798 = vld [vmem:[#allocation5 + $0xc0] sm:$0xff]
        %v4799 = vld [vmem:[#allocation5 + $0xc8] sm:$0xff]
        %v4800 = vld [vmem:[#allocation5 + $0xd0] sm:$0xff]
        %v4801 = vld [vmem:[#allocation5 + $0xd8] sm:$0xff]
        %v4802 = vld [vmem:[#allocation5 + $0xe0] sm:$0xff]
        %v4803 = vld [vmem:[#allocation5 + $0xe8] sm:$0xff]
        %v4804 = vld [vmem:[#allocation5 + $0xf0] sm:$0xff]
        %v4805 = vld [vmem:[#allocation5 + $0xf8] sm:$0xff]
        %v4806 = vld [vmem:[#allocation5 + $0x100] sm:$0xff]
        %v4807 = vld [vmem:[#allocation5 + $0x108] sm:$0xff]
        %v4808 = vld [vmem:[#allocation5 + $0x110] sm:$0xff]
        %v4809 = vld [vmem:[#allocation5 + $0x118] sm:$0xff]
        %v4810 = vld [vmem:[#allocation5 + $0x120] sm:$0xff]
        %v4811 = vld [vmem:[#allocation5 + $0x128] sm:$0xff]
        %v4812 = vld [vmem:[#allocation5 + $0x130] sm:$0xff]
        %v4813 = vld [vmem:[#allocation5 + $0x138] sm:$0xff]
        %v4814 = vld [vmem:[#allocation5 + $0x140] sm:$0xff]
        %v4815 = vld [vmem:[#allocation5 + $0x148] sm:$0xff]
        %v4816 = vld [vmem:[#allocation5 + $0x150] sm:$0xff]
        %v4817 = vld [vmem:[#allocation5 + $0x158] sm:$0xff]
        %v4818 = vld [vmem:[#allocation5 + $0x160] sm:$0xff]
        %v4819 = vld [vmem:[#allocation5 + $0x168] sm:$0xff]
        %v4820 = vld [vmem:[#allocation5 + $0x170] sm:$0xff]
        %v4821 = vld [vmem:[#allocation5 + $0x178] sm:$0xff]
        %v4822 = vld [vmem:[#allocation5 + $0x180] sm:$0xff]
        %v4823 = vld [vmem:[#allocation5 + $0x188] sm:$0xff]
        %v4824 = vld [vmem:[#allocation5 + $0x190] sm:$0xff]
        %v4825 = vld [vmem:[#allocation5 + $0x198] sm:$0xff]
        %v4826 = vld [vmem:[#allocation5 + $0x1a0] sm:$0xff]
        %v4827 = vld [vmem:[#allocation5 + $0x1a8] sm:$0xff]
        %v4828 = vld [vmem:[#allocation5 + $0x1b0] sm:$0xff]
        %v4829 = vld [vmem:[#allocation5 + $0x1b8] sm:$0xff]
        %v4830 = vld [vmem:[#allocation5 + $0x1c0] sm:$0xff]
        %v4831 = vld [vmem:[#allocation5 + $0x1c8] sm:$0xff]
        %v4832 = vld [vmem:[#allocation5 + $0x1d0] sm:$0xff]
        %v4833 = vld [vmem:[#allocation5 + $0x1d8] sm:$0xff]
        %v4834 = vld [vmem:[#allocation5 + $0x1e0] sm:$0xff]
        %v4835 = vld [vmem:[#allocation5 + $0x1e8] sm:$0xff]
        %v4836 = vld [vmem:[#allocation5 + $0x1f0] sm:$0xff]
        %v4837 = vld [vmem:[#allocation5 + $0x1f8] sm:$0xff]
        %v4838 = vld [vmem:[#allocation5 + $0x200] sm:$0xff]
        %v4839 = vld [vmem:[#allocation5 + $0x208] sm:$0xff]
        %v4840 = vld [vmem:[#allocation5 + $0x210] sm:$0xff]
        %v4841 = vld [vmem:[#allocation5 + $0x218] sm:$0xff]
        %v4842 = vld [vmem:[#allocation5 + $0x220] sm:$0xff]
        %v4843 = vld [vmem:[#allocation5 + $0x228] sm:$0xff]
        %v4844 = vld [vmem:[#allocation5 + $0x230] sm:$0xff]
        %v4845 = vld [vmem:[#allocation5 + $0x238] sm:$0xff]
        %v4846 = vld [vmem:[#allocation5 + $0x240] sm:$0xff]
        %v4847 = vld [vmem:[#allocation5 + $0x248] sm:$0xff]
        %v4848 = vld [vmem:[#allocation5 + $0x250] sm:$0xff]
        %v4849 = vld [vmem:[#allocation5 + $0x258] sm:$0xff]
        %v4850 = vld [vmem:[#allocation5 + $0x260] sm:$0xff]
        %v4851 = vld [vmem:[#allocation5 + $0x268] sm:$0xff]
        %v4852 = vld [vmem:[#allocation5 + $0x270] sm:$0xff]
        %v4853 = vld [vmem:[#allocation5 + $0x278] sm:$0xff]
        %v4854 = vld [vmem:[#allocation5 + $0x280] sm:$0xff]
        %v4855 = vld [vmem:[#allocation5 + $0x288] sm:$0xff]
        %v4856 = vld [vmem:[#allocation5 + $0x290] sm:$0xff]
        %v4857 = vld [vmem:[#allocation5 + $0x298] sm:$0xff]
        %v4858 = vld [vmem:[#allocation5 + $0x2a0] sm:$0xff]
        %v4859 = vld [vmem:[#allocation5 + $0x2a8] sm:$0xff]
        %v4860 = vld [vmem:[#allocation5 + $0x2b0] sm:$0xff]
        %v4861 = vld [vmem:[#allocation5 + $0x2b8] sm:$0xff]
        %v4862 = vld [vmem:[#allocation5 + $0x2c0] sm:$0xff]
        %v4863 = vld [vmem:[#allocation5 + $0x2c8] sm:$0xff]
        %v4864 = vld [vmem:[#allocation5 + $0x2d0] sm:$0xff]
        %v4865 = vld [vmem:[#allocation5 + $0x2d8] sm:$0xff]
        %v4866 = vld [vmem:[#allocation5 + $0x2e0] sm:$0xff]
        %v4867 = vld [vmem:[#allocation5 + $0x2e8] sm:$0xff]
        %v4868 = vld [vmem:[#allocation5 + $0x2f0] sm:$0xff]
        %v4869 = vld [vmem:[#allocation5 + $0x2f8] sm:$0xff]
        %v4870 = vld [vmem:[#allocation5 + $0x300] sm:$0xff]
        %v4871 = vld [vmem:[#allocation5 + $0x308] sm:$0xff]
        %v4872 = vld [vmem:[#allocation5 + $0x310] sm:$0xff]
        %v4873 = vld [vmem:[#allocation5 + $0x318] sm:$0xff]
        %v4874 = vld [vmem:[#allocation5 + $0x320] sm:$0xff]
        %v4875 = vld [vmem:[#allocation5 + $0x328] sm:$0xff]
        %v4876 = vld [vmem:[#allocation5 + $0x330] sm:$0xff]
        %v4877 = vld [vmem:[#allocation5 + $0x338] sm:$0xff]
        %v4878 = vld [vmem:[#allocation5 + $0x340] sm:$0xff]
        %v4879 = vld [vmem:[#allocation5 + $0x348] sm:$0xff]
        %v4880 = vld [vmem:[#allocation5 + $0x350] sm:$0xff]
        %v4881 = vld [vmem:[#allocation5 + $0x358] sm:$0xff]
        %v4882 = vld [vmem:[#allocation5 + $0x360] sm:$0xff]
        %v4883 = vld [vmem:[#allocation5 + $0x368] sm:$0xff]
        %v4884 = vld [vmem:[#allocation5 + $0x370] sm:$0xff]
        %v4885 = vld [vmem:[#allocation5 + $0x378] sm:$0xff]
        %v4886 = vld [vmem:[#allocation5 + $0x380] sm:$0xff]
        %v4887 = vld [vmem:[#allocation5 + $0x388] sm:$0xff]
        %v4888 = vld [vmem:[#allocation5 + $0x390] sm:$0xff]
        %v4889 = vld [vmem:[#allocation5 + $0x398] sm:$0xff]
        %v4890 = vld [vmem:[#allocation5 + $0x3a0] sm:$0xff]
        %v4891 = vld [vmem:[#allocation5 + $0x3a8] sm:$0xff]
        %v4892 = vld [vmem:[#allocation5 + $0x3b0] sm:$0xff]
        %v4893 = vld [vmem:[#allocation5 + $0x3b8] sm:$0xff]
        %v4894 = vld [vmem:[#allocation5 + $0x3c0] sm:$0xff]
        %v4895 = vld [vmem:[#allocation5 + $0x3c8] sm:$0xff]
        %v4896 = vld [vmem:[#allocation5 + $0x3d0] sm:$0xff]
        %v4897 = vld [vmem:[#allocation5 + $0x3d8] sm:$0xff]
        %v4898 = vld [vmem:[#allocation5 + $0x3e0] sm:$0xff]
        %v4899 = vld [vmem:[#allocation5 + $0x3e8] sm:$0xff]
        %v4900 = vld [vmem:[#allocation5 + $0x3f0] sm:$0xff]
        %v4901 = vld [vmem:[#allocation5 + $0x3f8] sm:$0xff]
        %v4902 = vld [vmem:[#allocation5 + $0x400] sm:$0xff]
        %v4903 = vld [vmem:[#allocation5 + $0x408] sm:$0xff]
        %v4904 = vld [vmem:[#allocation5 + $0x410] sm:$0xff]
        %v4905 = vld [vmem:[#allocation5 + $0x418] sm:$0xff]
        %v4906 = vld [vmem:[#allocation5 + $0x420] sm:$0xff]
        %v4907 = vld [vmem:[#allocation5 + $0x428] sm:$0xff]
        %v4908 = vld [vmem:[#allocation5 + $0x430] sm:$0xff]
        %v4909 = vld [vmem:[#allocation5 + $0x438] sm:$0xff]
        %v4910 = vld [vmem:[#allocation5 + $0x440] sm:$0xff]
        %v4911 = vld [vmem:[#allocation5 + $0x448] sm:$0xff]
        %v4912 = vld [vmem:[#allocation5 + $0x450] sm:$0xff]
        %v4913 = vld [vmem:[#allocation5 + $0x458] sm:$0xff]
        %v4914 = vld [vmem:[#allocation5 + $0x460] sm:$0xff]
        %v4915 = vld [vmem:[#allocation5 + $0x468] sm:$0xff]
        %v4916 = vld [vmem:[#allocation5 + $0x470] sm:$0xff]
        %v4917 = vld [vmem:[#allocation5 + $0x478] sm:$0xff]
        %v4918 = vld [vmem:[#allocation5 + $0x480] sm:$0xff]
        %v4919 = vld [vmem:[#allocation5 + $0x488] sm:$0xff]
        %v4920 = vld [vmem:[#allocation5 + $0x490] sm:$0xff]
        %v4921 = vld [vmem:[#allocation5 + $0x498] sm:$0xff]
        %v4922 = vld [vmem:[#allocation5 + $0x4a0] sm:$0xff]
        %v4923 = vld [vmem:[#allocation5 + $0x4a8] sm:$0xff]
        %v4924 = vld [vmem:[#allocation5 + $0x4b0] sm:$0xff]
        %v4925 = vld [vmem:[#allocation5 + $0x4b8] sm:$0xff]
        %v4926 = vld [vmem:[#allocation5 + $0x4c0] sm:$0xff]
        %v4927 = vld [vmem:[#allocation5 + $0x4c8] sm:$0xff]
        %v4928 = vld [vmem:[#allocation5 + $0x4d0] sm:$0xff]
        %v4929 = vld [vmem:[#allocation5 + $0x4d8] sm:$0xff]
        %v4930 = vld [vmem:[#allocation5 + $0x4e0] sm:$0xff]
        %v4931 = vld [vmem:[#allocation5 + $0x4e8] sm:$0xff]
        %v4932 = vld [vmem:[#allocation5 + $0x4f0] sm:$0xff]
        %v4933 = vld [vmem:[#allocation5 + $0x4f8] sm:$0xff]
        %v4934 = vld [vmem:[#allocation5 + $0x500] sm:$0xff]
        %v4935 = vld [vmem:[#allocation5 + $0x508] sm:$0xff]
        %v4936 = vld [vmem:[#allocation5 + $0x510] sm:$0xff]
        %v4937 = vld [vmem:[#allocation5 + $0x518] sm:$0xff]
        %v4938 = vld [vmem:[#allocation5 + $0x520] sm:$0xff]
        %v4939 = vld [vmem:[#allocation5 + $0x528] sm:$0xff]
        %v4940 = vld [vmem:[#allocation5 + $0x530] sm:$0xff]
        %v4941 = vld [vmem:[#allocation5 + $0x538] sm:$0xff]
        %v4942 = vld [vmem:[#allocation5 + $0x540] sm:$0xff]
        %v4943 = vld [vmem:[#allocation5 + $0x548] sm:$0xff]
        %v4944 = vld [vmem:[#allocation5 + $0x550] sm:$0xff]
        %v4945 = vld [vmem:[#allocation5 + $0x558] sm:$0xff]
        %v4946 = vld [vmem:[#allocation5 + $0x560] sm:$0xff]
        %v4947 = vld [vmem:[#allocation5 + $0x568] sm:$0xff]
        %v4948 = vld [vmem:[#allocation5 + $0x570] sm:$0xff]
        %v4949 = vld [vmem:[#allocation5 + $0x578] sm:$0xff]
        %v4950 = vld [vmem:[#allocation5 + $0x580] sm:$0xff]
        %v4951 = vld [vmem:[#allocation5 + $0x588] sm:$0xff]
        %v4952 = vld [vmem:[#allocation5 + $0x590] sm:$0xff]
        %v4953 = vld [vmem:[#allocation5 + $0x598] sm:$0xff]
        %v4954 = vld [vmem:[#allocation5 + $0x5a0] sm:$0xff]
        %v4955 = vld [vmem:[#allocation5 + $0x5a8] sm:$0xff]
        %v4956 = vld [vmem:[#allocation5 + $0x5b0] sm:$0xff]
        %v4957 = vld [vmem:[#allocation5 + $0x5b8] sm:$0xff]
        %v4958 = vld [vmem:[#allocation5 + $0x5c0] sm:$0xff]
        %v4959 = vld [vmem:[#allocation5 + $0x5c8] sm:$0xff]
        %v4960 = vld [vmem:[#allocation5 + $0x5d0] sm:$0xff]
        %v4961 = vld [vmem:[#allocation5 + $0x5d8] sm:$0xff]
        %v4962 = vld [vmem:[#allocation5 + $0x5e0] sm:$0xff]
        %v4963 = vld [vmem:[#allocation5 + $0x5e8] sm:$0xff]
        %v4964 = vld [vmem:[#allocation5 + $0x5f0] sm:$0xff]
        %v4965 = vld [vmem:[#allocation5 + $0x5f8] sm:$0xff]
        %v4966 = vld [vmem:[#allocation5 + $0x600] sm:$0xff]
        %v4967 = vld [vmem:[#allocation5 + $0x608] sm:$0xff]
        %v4968 = vld [vmem:[#allocation5 + $0x610] sm:$0xff]
        %v4969 = vld [vmem:[#allocation5 + $0x618] sm:$0xff]
        %v4970 = vld [vmem:[#allocation5 + $0x620] sm:$0xff]
        %v4971 = vld [vmem:[#allocation5 + $0x628] sm:$0xff]
        %v4972 = vld [vmem:[#allocation5 + $0x630] sm:$0xff]
        %v4973 = vld [vmem:[#allocation5 + $0x638] sm:$0xff]
        %v4974 = vld [vmem:[#allocation5 + $0x640] sm:$0xff]
        %v4975 = vld [vmem:[#allocation5 + $0x648] sm:$0xff]
        %v4976 = vld [vmem:[#allocation5 + $0x650] sm:$0xff]
        %v4977 = vld [vmem:[#allocation5 + $0x658] sm:$0xff]
        %v4978 = vld [vmem:[#allocation5 + $0x660] sm:$0xff]
        %v4979 = vld [vmem:[#allocation5 + $0x668] sm:$0xff]
        %v4980 = vld [vmem:[#allocation5 + $0x670] sm:$0xff]
        %v4981 = vld [vmem:[#allocation5 + $0x678] sm:$0xff]
        %v4982 = vld [vmem:[#allocation5 + $0x680] sm:$0xff]
        %v4983 = vld [vmem:[#allocation5 + $0x688] sm:$0xff]
        %v4984 = vld [vmem:[#allocation5 + $0x690] sm:$0xff]
        %v4985 = vld [vmem:[#allocation5 + $0x698] sm:$0xff]
        %v4986 = vld [vmem:[#allocation5 + $0x6a0] sm:$0xff]
        %v4987 = vld [vmem:[#allocation5 + $0x6a8] sm:$0xff]
        %v4988 = vld [vmem:[#allocation5 + $0x6b0] sm:$0xff]
        %v4989 = vld [vmem:[#allocation5 + $0x6b8] sm:$0xff]
        %v4990 = vld [vmem:[#allocation5 + $0x6c0] sm:$0xff]
        %v4991 = vld [vmem:[#allocation5 + $0x6c8] sm:$0xff]
        %v4992 = vld [vmem:[#allocation5 + $0x6d0] sm:$0xff]
        %v4993 = vld [vmem:[#allocation5 + $0x6d8] sm:$0xff]
        %v4994 = vld [vmem:[#allocation5 + $0x6e0] sm:$0xff]
        %v4995 = vld [vmem:[#allocation5 + $0x6e8] sm:$0xff]
        %v4996 = vld [vmem:[#allocation5 + $0x6f0] sm:$0xff]
        %v4997 = vld [vmem:[#allocation5 + $0x6f8] sm:$0xff]
        %4998 = vmatprep.subr.mxu0 %v4805
        %4999 = vmatpush1.msra.mxu0 %v4804
        %5000 = vmatprep.subr.mxu0 %v4803
        %5001 = vmatpush1.msra.mxu0 %v4802
        %5002 = vmatprep.subr.mxu0 %v4801
        %5003 = vmatpush1.msra.mxu0 %v4800
        %5004 = vmatprep.subr.mxu0 %v4799
        %5005 = vmatpush1.msra.mxu0 %v4798
        %5006 = vmatprep.subr.mxu0 %v4797
        %5007 = vmatpush1.msra.mxu0 %v4796
        %5008 = vmatprep.subr.mxu0 %v4795
        %5009 = vmatpush1.msra.mxu0 %v4794
        %5010 = vmatprep.subr.mxu0 %v4793
        %5011 = vmatpush1.msra.mxu0 %v4792
        %5012 = vmatprep.subr.mxu0 %v4791
        %5013 = vmatpush1.msra.mxu0 %v4790
        %5014 = vmatprep.subr.mxu0 %v4789
        %5015 = vmatpush1.msra.mxu0 %v4788
        %5016 = vmatprep.subr.mxu0 %v4787
        %5017 = vmatpush1.msra.mxu0 %v4786
        %5018 = vmatprep.subr.mxu0 %v4785
        %5019 = vmatpush1.msra.mxu0 %v4784
        %5020 = vmatprep.subr.mxu0 %v4783
        %5021 = vmatpush1.msra.mxu0 %v4782
        %5022 = vmatprep.subr.mxu0 %v4781
        %5023 = vmatpush1.msra.mxu0 %v4780
        %5024 = vmatprep.subr.mxu0 %v4779
        %5025 = vmatpush1.msra.mxu0 %v4778
        %5026 = vmatprep.subr.mxu0 %v4777
        %5027 = vmatpush1.msra.mxu0 %v4776
        %5028 = vmatprep.subr.mxu0 %v4775
        %5029 = vmatpush1.msra.mxu0 %v4774
        %5030 = vmatprep.subr.mxu0 %v4837
        %5031 = vmatpush2.msra.mxu0 %v4836
        %5032 = vmatprep.subr.mxu0 %v4835
        %5033 = vmatpush2.msra.mxu0 %v4834
        %5034 = vmatprep.subr.mxu0 %v4833
        %5035 = vmatpush2.msra.mxu0 %v4832
        %5036 = vmatprep.subr.mxu0 %v4831
        %5037 = vmatpush2.msra.mxu0 %v4830
        %5038 = vmatprep.subr.mxu0 %v4829
        %5039 = vmatpush2.msra.mxu0 %v4828
        %5040 = vmatprep.subr.mxu0 %v4827
        %5041 = vmatpush2.msra.mxu0 %v4826
        %5042 = vmatprep.subr.mxu0 %v4825
        %5043 = vmatpush2.msra.mxu0 %v4824
        %5044 = vmatprep.subr.mxu0 %v4823
        %5045 = vmatpush2.msra.mxu0 %v4822
        %5046 = vmatprep.subr.mxu0 %v4821
        %5047 = vmatpush2.msra.mxu0 %v4820
        %5048 = vmatprep.subr.mxu0 %v4819
        %5049 = vmatpush2.msra.mxu0 %v4818
        %5050 = vmatprep.subr.mxu0 %v4817
        %5051 = vmatpush2.msra.mxu0 %v4816
        %5052 = vmatprep.subr.mxu0 %v4815
        %5053 = vmatpush2.msra.mxu0 %v4814
        %5054 = vmatprep.subr.mxu0 %v4813
        %5055 = vmatpush2.msra.mxu0 %v4812
        %5056 = vmatprep.subr.mxu0 %v4811
        %5057 = vmatpush2.msra.mxu0 %v4810
        %5058 = vmatprep.subr.mxu0 %v4809
        %5059 = vmatpush2.msra.mxu0 %v4808
        %5060 = vmatprep.subr.mxu0 %v4807
        %5061 = vmatpush2.msra.mxu0 %v4806
        %5062 = vmatprep.mubr.f32.mxu0 %v4768
        %5063 = vmatmul.mubr.f32.gmra.mxu0 %v4767
        %v5064 = vpop.f32.mrf.mxu0
        %v5065 = vadd.f32 0.0, %v5064
        %v5066 = vpop.f32.mrf.mxu0
        %v5067 = vadd.f32 0.0, %v5066
        %5068 = vdwg.mxu0
        %5069 = vmatprep.subr.mxu0 %v4869
        %5070 = vmatpush1.msra.mxu0 %v4868
        %5071 = vmatprep.subr.mxu0 %v4867
        %5072 = vmatpush1.msra.mxu0 %v4866
        %5073 = vmatprep.subr.mxu0 %v4865
        %5074 = vmatpush1.msra.mxu0 %v4864
        %5075 = vmatprep.subr.mxu0 %v4863
        %5076 = vmatpush1.msra.mxu0 %v4862
        %5077 = vmatprep.subr.mxu0 %v4861
        %5078 = vmatpush1.msra.mxu0 %v4860
        %5079 = vmatprep.subr.mxu0 %v4859
        %5080 = vmatpush1.msra.mxu0 %v4858
        %5081 = vmatprep.subr.mxu0 %v4857
        %5082 = vmatpush1.msra.mxu0 %v4856
        %5083 = vmatprep.subr.mxu0 %v4855
        %5084 = vmatpush1.msra.mxu0 %v4854
        %5085 = vmatprep.subr.mxu0 %v4853
        %5086 = vmatpush1.msra.mxu0 %v4852
        %5087 = vmatprep.subr.mxu0 %v4851
        %5088 = vmatpush1.msra.mxu0 %v4850
        %5089 = vmatprep.subr.mxu0 %v4849
        %5090 = vmatpush1.msra.mxu0 %v4848
        %5091 = vmatprep.subr.mxu0 %v4847
        %5092 = vmatpush1.msra.mxu0 %v4846
        %5093 = vmatprep.subr.mxu0 %v4845
        %5094 = vmatpush1.msra.mxu0 %v4844
        %5095 = vmatprep.subr.mxu0 %v4843
        %5096 = vmatpush1.msra.mxu0 %v4842
        %5097 = vmatprep.subr.mxu0 %v4841
        %5098 = vmatpush1.msra.mxu0 %v4840
        %5099 = vmatprep.subr.mxu0 %v4839
        %5100 = vmatpush1.msra.mxu0 %v4838
        %5101 = vmatprep.subr.mxu0 %v4901
        %5102 = vmatpush2.msra.mxu0 %v4900
        %5103 = vmatprep.subr.mxu0 %v4899
        %5104 = vmatpush2.msra.mxu0 %v4898
        %5105 = vmatprep.subr.mxu0 %v4897
        %5106 = vmatpush2.msra.mxu0 %v4896
        %5107 = vmatprep.subr.mxu0 %v4895
        %5108 = vmatpush2.msra.mxu0 %v4894
        %5109 = vmatprep.subr.mxu0 %v4893
        %5110 = vmatpush2.msra.mxu0 %v4892
        %5111 = vmatprep.subr.mxu0 %v4891
        %5112 = vmatpush2.msra.mxu0 %v4890
        %5113 = vmatprep.subr.mxu0 %v4889
        %5114 = vmatpush2.msra.mxu0 %v4888
        %5115 = vmatprep.subr.mxu0 %v4887
        %5116 = vmatpush2.msra.mxu0 %v4886
        %5117 = vmatprep.subr.mxu0 %v4885
        %5118 = vmatpush2.msra.mxu0 %v4884
        %5119 = vmatprep.subr.mxu0 %v4883
        %5120 = vmatpush2.msra.mxu0 %v4882
        %5121 = vmatprep.subr.mxu0 %v4881
        %5122 = vmatpush2.msra.mxu0 %v4880
        %5123 = vmatprep.subr.mxu0 %v4879
        %5124 = vmatpush2.msra.mxu0 %v4878
        %5125 = vmatprep.subr.mxu0 %v4877
        %5126 = vmatpush2.msra.mxu0 %v4876
        %5127 = vmatprep.subr.mxu0 %v4875
        %5128 = vmatpush2.msra.mxu0 %v4874
        %5129 = vmatprep.subr.mxu0 %v4873
        %5130 = vmatpush2.msra.mxu0 %v4872
        %5131 = vmatprep.subr.mxu0 %v4871
        %5132 = vmatpush2.msra.mxu0 %v4870
        %5133 = vmatprep.mubr.f32.mxu0 %v4770
        %5134 = vmatmul.mubr.f32.gmra.mxu0 %v4769
        %v5135 = vpop.f32.mrf.mxu0
        %v5136 = vadd.f32 %v5065, %v5135
        %v5137 = vpop.f32.mrf.mxu0
        %v5138 = vadd.f32 %v5067, %v5137
        %5139 = vdwg.mxu0
        %5140 = vmatprep.subr.mxu0 %v4933
        %5141 = vmatpush1.msra.mxu0 %v4932
        %5142 = vmatprep.subr.mxu0 %v4931
        %5143 = vmatpush1.msra.mxu0 %v4930
        %5144 = vmatprep.subr.mxu0 %v4929
        %5145 = vmatpush1.msra.mxu0 %v4928
        %5146 = vmatprep.subr.mxu0 %v4927
        %5147 = vmatpush1.msra.mxu0 %v4926
        %5148 = vmatprep.subr.mxu0 %v4925
        %5149 = vmatpush1.msra.mxu0 %v4924
        %5150 = vmatprep.subr.mxu0 %v4923
        %5151 = vmatpush1.msra.mxu0 %v4922
        %5152 = vmatprep.subr.mxu0 %v4921
        %5153 = vmatpush1.msra.mxu0 %v4920
        %5154 = vmatprep.subr.mxu0 %v4919
        %5155 = vmatpush1.msra.mxu0 %v4918
        %5156 = vmatprep.subr.mxu0 %v4917
        %5157 = vmatpush1.msra.mxu0 %v4916
        %5158 = vmatprep.subr.mxu0 %v4915
        %5159 = vmatpush1.msra.mxu0 %v4914
        %5160 = vmatprep.subr.mxu0 %v4913
        %5161 = vmatpush1.msra.mxu0 %v4912
        %5162 = vmatprep.subr.mxu0 %v4911
        %5163 = vmatpush1.msra.mxu0 %v4910
        %5164 = vmatprep.subr.mxu0 %v4909
        %5165 = vmatpush1.msra.mxu0 %v4908
        %5166 = vmatprep.subr.mxu0 %v4907
        %5167 = vmatpush1.msra.mxu0 %v4906
        %5168 = vmatprep.subr.mxu0 %v4905
        %5169 = vmatpush1.msra.mxu0 %v4904
        %5170 = vmatprep.subr.mxu0 %v4903
        %5171 = vmatpush1.msra.mxu0 %v4902
        %5172 = vmatprep.subr.mxu0 %v4965
        %5173 = vmatpush2.msra.mxu0 %v4964
        %5174 = vmatprep.subr.mxu0 %v4963
        %5175 = vmatpush2.msra.mxu0 %v4962
        %5176 = vmatprep.subr.mxu0 %v4961
        %5177 = vmatpush2.msra.mxu0 %v4960
        %5178 = vmatprep.subr.mxu0 %v4959
        %5179 = vmatpush2.msra.mxu0 %v4958
        %5180 = vmatprep.subr.mxu0 %v4957
        %5181 = vmatpush2.msra.mxu0 %v4956
        %5182 = vmatprep.subr.mxu0 %v4955
        %5183 = vmatpush2.msra.mxu0 %v4954
        %5184 = vmatprep.subr.mxu0 %v4953
        %5185 = vmatpush2.msra.mxu0 %v4952
        %5186 = vmatprep.subr.mxu0 %v4951
        %5187 = vmatpush2.msra.mxu0 %v4950
        %5188 = vmatprep.subr.mxu0 %v4949
        %5189 = vmatpush2.msra.mxu0 %v4948
        %5190 = vmatprep.subr.mxu0 %v4947
        %5191 = vmatpush2.msra.mxu0 %v4946
        %5192 = vmatprep.subr.mxu0 %v4945
        %5193 = vmatpush2.msra.mxu0 %v4944
        %5194 = vmatprep.subr.mxu0 %v4943
        %5195 = vmatpush2.msra.mxu0 %v4942
        %5196 = vmatprep.subr.mxu0 %v4941
        %5197 = vmatpush2.msra.mxu0 %v4940
        %5198 = vmatprep.subr.mxu0 %v4939
        %5199 = vmatpush2.msra.mxu0 %v4938
        %5200 = vmatprep.subr.mxu0 %v4937
        %5201 = vmatpush2.msra.mxu0 %v4936
        %5202 = vmatprep.subr.mxu0 %v4935
        %5203 = vmatpush2.msra.mxu0 %v4934
        %5204 = vmatprep.mubr.f32.mxu0 %v4772
        %5205 = vmatmul.mubr.f32.gmra.mxu0 %v4771
        %v5206 = vpop.f32.mrf.mxu0
        %v5207 = vadd.f32 %v5136, %v5206
        %v5208 = vpop.f32.mrf.mxu0
        %v5209 = vadd.f32 %v5138, %v5208
        %5210 = vdwg.mxu0
        %5211 = vmatprep.subr.mxu0 %v4997
        %5212 = vmatpush1.msra.mxu0 %v4996
        %5213 = vmatprep.subr.mxu0 %v4995
        %5214 = vmatpush1.msra.mxu0 %v4994
        %5215 = vmatprep.subr.mxu0 %v4993
        %5216 = vmatpush1.msra.mxu0 %v4992
        %5217 = vmatprep.subr.mxu0 %v4991
        %5218 = vmatpush1.msra.mxu0 %v4990
        %5219 = vmatprep.subr.mxu0 %v4989
        %5220 = vmatpush1.msra.mxu0 %v4988
        %5221 = vmatprep.subr.mxu0 %v4987
        %5222 = vmatpush1.msra.mxu0 %v4986
        %5223 = vmatprep.subr.mxu0 %v4985
        %5224 = vmatpush1.msra.mxu0 %v4984
        %5225 = vmatprep.subr.mxu0 %v4983
        %5226 = vmatpush1.msra.mxu0 %v4982
        %5227 = vmatprep.subr.mxu0 %v4981
        %5228 = vmatpush1.msra.mxu0 %v4980
        %5229 = vmatprep.subr.mxu0 %v4979
        %5230 = vmatpush1.msra.mxu0 %v4978
        %5231 = vmatprep.subr.mxu0 %v4977
        %5232 = vmatpush1.msra.mxu0 %v4976
        %5233 = vmatprep.subr.mxu0 %v4975
        %5234 = vmatpush1.msra.mxu0 %v4974
        %5235 = vmatprep.subr.mxu0 %v4973
        %5236 = vmatpush1.msra.mxu0 %v4972
        %5237 = vmatprep.subr.mxu0 %v4971
        %5238 = vmatpush1.msra.mxu0 %v4970
        %5239 = vmatprep.subr.mxu0 %v4969
        %5240 = vmatpush1.msra.mxu0 %v4968
        %5241 = vmatprep.subr.mxu0 %v4967
        %5242 = vmatpush1.msra.mxu0 %v4966
        %5243 = vmatprep.subr.mxu0 0.0
        %5244 = vmatpush2.msra.mxu0 0.0
        %5245 = vmatprep.subr.mxu0 0.0
        %5246 = vmatpush2.msra.mxu0 0.0
        %5247 = vmatprep.subr.mxu0 0.0
        %5248 = vmatpush2.msra.mxu0 0.0
        %5249 = vmatprep.subr.mxu0 0.0
        %5250 = vmatpush2.msra.mxu0 0.0
        %5251 = vmatprep.subr.mxu0 0.0
        %5252 = vmatpush2.msra.mxu0 0.0
        %5253 = vmatprep.subr.mxu0 0.0
        %5254 = vmatpush2.msra.mxu0 0.0
        %5255 = vmatprep.subr.mxu0 0.0
        %5256 = vmatpush2.msra.mxu0 0.0
        %5257 = vmatprep.subr.mxu0 0.0
        %5258 = vmatpush2.msra.mxu0 0.0
        %5259 = vmatprep.subr.mxu0 0.0
        %5260 = vmatpush2.msra.mxu0 0.0
        %5261 = vmatprep.subr.mxu0 0.0
        %5262 = vmatpush2.msra.mxu0 0.0
        %5263 = vmatprep.subr.mxu0 0.0
        %5264 = vmatpush2.msra.mxu0 0.0
        %5265 = vmatprep.subr.mxu0 0.0
        %5266 = vmatpush2.msra.mxu0 0.0
        %5267 = vmatprep.subr.mxu0 0.0
        %5268 = vmatpush2.msra.mxu0 0.0
        %5269 = vmatprep.subr.mxu0 0.0
        %5270 = vmatpush2.msra.mxu0 0.0
        %5271 = vmatprep.subr.mxu0 0.0
        %5272 = vmatpush2.msra.mxu0 0.0
        %5273 = vmatprep.subr.mxu0 0.0
        %5274 = vmatpush2.msra.mxu0 0.0
        %5275 = vmatprep.mubr.f32.mxu0 0.0
        %5276 = vmatmul.mubr.f32.gmra.mxu0 %v4773
        %v5277 = vpop.f32.mrf.mxu0
        %v5278 = vadd.f32 %v5207, %v5277
        %v5279 = vpop.f32.mrf.mxu0
        %v5280 = vadd.f32 %v5209, %v5279
        %5281 = vdwg.mxu0
        %5283 = vrot.lane.b32.xlu0 %v5280, 15
        %v5284 = vpop.permute.xlu0 %5283
        %5287 = vrot.lane.b32.xlu0 %v5278, 15
        %v5288 = vpop.permute.xlu0 %5287
        %vm5289 = vcmask 121856
        %v5290 = vsel %vm5289, %v5288, %v5284
        %v5293 = vsel %vm5289, %v5284, %v5288
        %v5294 = vlaneseq
        %v5295 = vshrl.u32 %v5294, 7
        %v5296 = vsub.s32 0, %v5295
        %v5297 = vrot.slane %v533, %v5296
        %v5298 = vlaneseq
        %v5299 = vshrl.u32 %v5298, 7
        %v5300 = vsub.s32 0, %v5299
        %v5301 = vrot.slane %v534, %v5300
        %v5302 = vmul.f32 %v5293, %v5297
        %v5303 = vmul.f32 %v5290, %v5301
        %v5304 = vld [vmem:[%s5] sm:$0xff]
        %5305 = vrot.lane.b32.xlu0 %v5280, 14
        %v5306 = vpop.permute.xlu0 %5305
        %5308 = vrot.lane.b32.xlu0 %v5278, 14
        %v5309 = vpop.permute.xlu0 %5308
        %vm5310 = vcmask 113664
        %v5311 = vsel %vm5310, %v5309, %v5306
        %v5314 = vsel %vm5310, %v5306, %v5309
        %v5315 = vlaneseq
        %v5316 = vshrl.u32 %v5315, 7
        %v5317 = vsub.s32 1, %v5316
        %v5318 = vrot.slane %v533, %v5317
        %v5319 = vlaneseq
        %v5320 = vshrl.u32 %v5319, 7
        %v5321 = vsub.s32 1, %v5320
        %v5322 = vrot.slane %v534, %v5321
        %v5323 = vmul.f32 %v5314, %v5318
        %v5324 = vmul.f32 %v5311, %v5322
        %s5325 = scalar_lea.vmem %s5, 8
        %v5326 = vld [vmem:[%s5325] sm:$0xff]
        %v5328 = vsel %vm1611, %v5326, 0
        %5330 = vmatprep.subr.mxu0 0.0
        %5331 = vmatpush1.msra.mxu0 0.0
        %5332 = vmatprep.subr.mxu0 0.0
        %5333 = vmatpush1.msra.mxu0 0.0
        %5334 = vmatprep.subr.mxu0 0.0
        %5335 = vmatpush1.msra.mxu0 0.0
        %5336 = vmatprep.subr.mxu0 0.0
        %5337 = vmatpush1.msra.mxu0 0.0
        %5338 = vmatprep.subr.mxu0 0.0
        %5339 = vmatpush1.msra.mxu0 0.0
        %5340 = vmatprep.subr.mxu0 0.0
        %5341 = vmatpush1.msra.mxu0 0.0
        %5342 = vmatprep.subr.mxu0 0.0
        %5343 = vmatpush1.msra.mxu0 0.0
        %5344 = vmatprep.subr.mxu0 0.0
        %5345 = vmatpush1.msra.mxu0 0.0
        %5346 = vmatprep.subr.mxu0 0.0
        %5347 = vmatpush1.msra.mxu0 0.0
        %5348 = vmatprep.subr.mxu0 0.0
        %5349 = vmatpush1.msra.mxu0 0.0
        %5350 = vmatprep.subr.mxu0 0.0
        %5351 = vmatpush1.msra.mxu0 0.0
        %5352 = vmatprep.subr.mxu0 0.0
        %5353 = vmatpush1.msra.mxu0 0.0
        %5354 = vmatprep.subr.mxu0 0.0
        %5355 = vmatpush1.msra.mxu0 0.0
        %5356 = vmatprep.subr.mxu0 0.0
        %5357 = vmatpush1.msra.mxu0 0.0
        %5358 = vmatprep.subr.mxu0 0.0
        %5359 = vmatpush1.msra.mxu0 0.0
        %5360 = vmatprep.subr.mxu0 %v5324
        %5361 = vmatpush1.msra.mxu0 %v5323
        %5362 = vmatprep.subr.mxu0 0.0
        %5363 = vmatpush2.msra.mxu0 0.0
        %5364 = vmatprep.subr.mxu0 0.0
        %5365 = vmatpush2.msra.mxu0 0.0
        %5366 = vmatprep.subr.mxu0 0.0
        %5367 = vmatpush2.msra.mxu0 0.0
        %5368 = vmatprep.subr.mxu0 0.0
        %5369 = vmatpush2.msra.mxu0 0.0
        %5370 = vmatprep.subr.mxu0 0.0
        %5371 = vmatpush2.msra.mxu0 0.0
        %5372 = vmatprep.subr.mxu0 0.0
        %5373 = vmatpush2.msra.mxu0 0.0
        %5374 = vmatprep.subr.mxu0 0.0
        %5375 = vmatpush2.msra.mxu0 0.0
        %5376 = vmatprep.subr.mxu0 0.0
        %5377 = vmatpush2.msra.mxu0 0.0
        %5378 = vmatprep.subr.mxu0 0.0
        %5379 = vmatpush2.msra.mxu0 0.0
        %5380 = vmatprep.subr.mxu0 0.0
        %5381 = vmatpush2.msra.mxu0 0.0
        %5382 = vmatprep.subr.mxu0 0.0
        %5383 = vmatpush2.msra.mxu0 0.0
        %5384 = vmatprep.subr.mxu0 0.0
        %5385 = vmatpush2.msra.mxu0 0.0
        %5386 = vmatprep.subr.mxu0 0.0
        %5387 = vmatpush2.msra.mxu0 0.0
        %5388 = vmatprep.subr.mxu0 0.0
        %5389 = vmatpush2.msra.mxu0 0.0
        %5390 = vmatprep.subr.mxu0 0.0
        %5391 = vmatpush2.msra.mxu0 0.0
        %5392 = vmatprep.subr.mxu0 0.0
        %5393 = vmatpush2.msra.mxu0 0.0
        %5394 = vmatprep.mubr.f32.mxu0 0.0
        %5395 = vmatmul.mubr.f32.gmra.mxu0 %v5328
        %v5396 = vpop.f32.mrf.mxu0
        %v5397 = vadd.f32 0.0, %v5396
        %v5398 = vpop.f32.mrf.mxu0
        %v5399 = vadd.f32 0.0, %v5398
        %5400 = vdwg.mxu0
        %v5402 = vsel %vm1611, %v5304, 0
        %5404 = vmatprep.subr.mxu0 0.0
        %5405 = vmatpush1.msra.mxu0 0.0
        %5406 = vmatprep.subr.mxu0 0.0
        %5407 = vmatpush1.msra.mxu0 0.0
        %5408 = vmatprep.subr.mxu0 0.0
        %5409 = vmatpush1.msra.mxu0 0.0
        %5410 = vmatprep.subr.mxu0 0.0
        %5411 = vmatpush1.msra.mxu0 0.0
        %5412 = vmatprep.subr.mxu0 0.0
        %5413 = vmatpush1.msra.mxu0 0.0
        %5414 = vmatprep.subr.mxu0 0.0
        %5415 = vmatpush1.msra.mxu0 0.0
        %5416 = vmatprep.subr.mxu0 0.0
        %5417 = vmatpush1.msra.mxu0 0.0
        %5418 = vmatprep.subr.mxu0 0.0
        %5419 = vmatpush1.msra.mxu0 0.0
        %5420 = vmatprep.subr.mxu0 0.0
        %5421 = vmatpush1.msra.mxu0 0.0
        %5422 = vmatprep.subr.mxu0 0.0
        %5423 = vmatpush1.msra.mxu0 0.0
        %5424 = vmatprep.subr.mxu0 0.0
        %5425 = vmatpush1.msra.mxu0 0.0
        %5426 = vmatprep.subr.mxu0 0.0
        %5427 = vmatpush1.msra.mxu0 0.0
        %5428 = vmatprep.subr.mxu0 0.0
        %5429 = vmatpush1.msra.mxu0 0.0
        %5430 = vmatprep.subr.mxu0 0.0
        %5431 = vmatpush1.msra.mxu0 0.0
        %5432 = vmatprep.subr.mxu0 0.0
        %5433 = vmatpush1.msra.mxu0 0.0
        %5434 = vmatprep.subr.mxu0 %v5303
        %5435 = vmatpush1.msra.mxu0 %v5302
        %5436 = vmatprep.subr.mxu0 0.0
        %5437 = vmatpush2.msra.mxu0 0.0
        %5438 = vmatprep.subr.mxu0 0.0
        %5439 = vmatpush2.msra.mxu0 0.0
        %5440 = vmatprep.subr.mxu0 0.0
        %5441 = vmatpush2.msra.mxu0 0.0
        %5442 = vmatprep.subr.mxu0 0.0
        %5443 = vmatpush2.msra.mxu0 0.0
        %5444 = vmatprep.subr.mxu0 0.0
        %5445 = vmatpush2.msra.mxu0 0.0
        %5446 = vmatprep.subr.mxu0 0.0
        %5447 = vmatpush2.msra.mxu0 0.0
        %5448 = vmatprep.subr.mxu0 0.0
        %5449 = vmatpush2.msra.mxu0 0.0
        %5450 = vmatprep.subr.mxu0 0.0
        %5451 = vmatpush2.msra.mxu0 0.0
        %5452 = vmatprep.subr.mxu0 0.0
        %5453 = vmatpush2.msra.mxu0 0.0
        %5454 = vmatprep.subr.mxu0 0.0
        %5455 = vmatpush2.msra.mxu0 0.0
        %5456 = vmatprep.subr.mxu0 0.0
        %5457 = vmatpush2.msra.mxu0 0.0
        %5458 = vmatprep.subr.mxu0 0.0
        %5459 = vmatpush2.msra.mxu0 0.0
        %5460 = vmatprep.subr.mxu0 0.0
        %5461 = vmatpush2.msra.mxu0 0.0
        %5462 = vmatprep.subr.mxu0 0.0
        %5463 = vmatpush2.msra.mxu0 0.0
        %5464 = vmatprep.subr.mxu0 0.0
        %5465 = vmatpush2.msra.mxu0 0.0
        %5466 = vmatprep.subr.mxu0 0.0
        %5467 = vmatpush2.msra.mxu0 0.0
        %5468 = vmatprep.mubr.f32.mxu0 0.0
        %5469 = vmatmul.mubr.f32.gmra.mxu0 %v5402
        %v5470 = vpop.f32.mrf.mxu0
        %v5471 = vadd.f32 %v5397, %v5470
        %v5472 = vpop.f32.mrf.mxu0
        %v5473 = vadd.f32 %v5399, %v5472
        %5474 = vdwg.mxu0
        %5475 = vrot.lane.b32.xlu0 %v5280, 13
        %v5476 = vpop.permute.xlu0 %5475
        %5478 = vrot.lane.b32.xlu0 %v5278, 13
        %v5479 = vpop.permute.xlu0 %5478
        %vm5480 = vcmask 105472
        %v5481 = vsel %vm5480, %v5479, %v5476
        %v5484 = vsel %vm5480, %v5476, %v5479
        %v5485 = vlaneseq
        %v5486 = vshrl.u32 %v5485, 7
        %v5487 = vsub.s32 2, %v5486
        %v5488 = vrot.slane %v533, %v5487
        %v5489 = vlaneseq
        %v5490 = vshrl.u32 %v5489, 7
        %v5491 = vsub.s32 2, %v5490
        %v5492 = vrot.slane %v534, %v5491
        %v5493 = vmul.f32 %v5484, %v5488
        %v5494 = vmul.f32 %v5481, %v5492
        %s5495 = scalar_lea.vmem %s5, 16
        %v5496 = vld [vmem:[%s5495] sm:$0xff]
        %v5498 = vsel %vm1611, %v5496, 0
        %5500 = vmatprep.subr.mxu0 0.0
        %5501 = vmatpush1.msra.mxu0 0.0
        %5502 = vmatprep.subr.mxu0 0.0
        %5503 = vmatpush1.msra.mxu0 0.0
        %5504 = vmatprep.subr.mxu0 0.0
        %5505 = vmatpush1.msra.mxu0 0.0
        %5506 = vmatprep.subr.mxu0 0.0
        %5507 = vmatpush1.msra.mxu0 0.0
        %5508 = vmatprep.subr.mxu0 0.0
        %5509 = vmatpush1.msra.mxu0 0.0
        %5510 = vmatprep.subr.mxu0 0.0
        %5511 = vmatpush1.msra.mxu0 0.0
        %5512 = vmatprep.subr.mxu0 0.0
        %5513 = vmatpush1.msra.mxu0 0.0
        %5514 = vmatprep.subr.mxu0 0.0
        %5515 = vmatpush1.msra.mxu0 0.0
        %5516 = vmatprep.subr.mxu0 0.0
        %5517 = vmatpush1.msra.mxu0 0.0
        %5518 = vmatprep.subr.mxu0 0.0
        %5519 = vmatpush1.msra.mxu0 0.0
        %5520 = vmatprep.subr.mxu0 0.0
        %5521 = vmatpush1.msra.mxu0 0.0
        %5522 = vmatprep.subr.mxu0 0.0
        %5523 = vmatpush1.msra.mxu0 0.0
        %5524 = vmatprep.subr.mxu0 0.0
        %5525 = vmatpush1.msra.mxu0 0.0
        %5526 = vmatprep.subr.mxu0 0.0
        %5527 = vmatpush1.msra.mxu0 0.0
        %5528 = vmatprep.subr.mxu0 0.0
        %5529 = vmatpush1.msra.mxu0 0.0
        %5530 = vmatprep.subr.mxu0 %v5494
        %5531 = vmatpush1.msra.mxu0 %v5493
        %5532 = vmatprep.subr.mxu0 0.0
        %5533 = vmatpush2.msra.mxu0 0.0
        %5534 = vmatprep.subr.mxu0 0.0
        %5535 = vmatpush2.msra.mxu0 0.0
        %5536 = vmatprep.subr.mxu0 0.0
        %5537 = vmatpush2.msra.mxu0 0.0
        %5538 = vmatprep.subr.mxu0 0.0
        %5539 = vmatpush2.msra.mxu0 0.0
        %5540 = vmatprep.subr.mxu0 0.0
        %5541 = vmatpush2.msra.mxu0 0.0
        %5542 = vmatprep.subr.mxu0 0.0
        %5543 = vmatpush2.msra.mxu0 0.0
        %5544 = vmatprep.subr.mxu0 0.0
        %5545 = vmatpush2.msra.mxu0 0.0
        %5546 = vmatprep.subr.mxu0 0.0
        %5547 = vmatpush2.msra.mxu0 0.0
        %5548 = vmatprep.subr.mxu0 0.0
        %5549 = vmatpush2.msra.mxu0 0.0
        %5550 = vmatprep.subr.mxu0 0.0
        %5551 = vmatpush2.msra.mxu0 0.0
        %5552 = vmatprep.subr.mxu0 0.0
        %5553 = vmatpush2.msra.mxu0 0.0
        %5554 = vmatprep.subr.mxu0 0.0
        %5555 = vmatpush2.msra.mxu0 0.0
        %5556 = vmatprep.subr.mxu0 0.0
        %5557 = vmatpush2.msra.mxu0 0.0
        %5558 = vmatprep.subr.mxu0 0.0
        %5559 = vmatpush2.msra.mxu0 0.0
        %5560 = vmatprep.subr.mxu0 0.0
        %5561 = vmatpush2.msra.mxu0 0.0
        %5562 = vmatprep.subr.mxu0 0.0
        %5563 = vmatpush2.msra.mxu0 0.0
        %5564 = vmatprep.mubr.f32.mxu0 0.0
        %5565 = vmatmul.mubr.f32.gmra.mxu0 %v5498
        %v5566 = vpop.f32.mrf.mxu0
        %v5567 = vadd.f32 0.0, %v5566
        %v5568 = vpop.f32.mrf.mxu0
        %v5569 = vadd.f32 0.0, %v5568
        %5570 = vdwg.mxu0
        %v5571 = vadd.f32 %v5471, %v5567
        %v5572 = vadd.f32 %v5473, %v5569
        %5573 = vrot.lane.b32.xlu0 %v5280, 1
        %v5574 = vpop.permute.xlu0 %5573
        %5576 = vrot.lane.b32.xlu0 %v5278, 1
        %v5577 = vpop.permute.xlu0 %5576
        %v5578 = vsel %vm874, %v5577, %v5574
        %v5581 = vsel %vm874, %v5574, %v5577
        %v5582 = vlaneseq
        %v5583 = vshrl.u32 %v5582, 7
        %v5584 = vsub.s32 3, %v5583
        %v5585 = vrot.slane %v533, %v5584
        %v5586 = vlaneseq
        %v5587 = vshrl.u32 %v5586, 7
        %v5588 = vsub.s32 3, %v5587
        %v5589 = vrot.slane %v534, %v5588
        %v5590 = vmul.f32 %v5581, %v5585
        %v5591 = vmul.f32 %v5578, %v5589
        %s5592 = scalar_lea.vmem %s5, 24
        %v5593 = vld [vmem:[%s5592] sm:$0xff]
        %v5595 = vsel %vm1611, %v5593, 0
        %5597 = vmatprep.subr.mxu0 0.0
        %5598 = vmatpush1.msra.mxu0 0.0
        %5599 = vmatprep.subr.mxu0 0.0
        %5600 = vmatpush1.msra.mxu0 0.0
        %5601 = vmatprep.subr.mxu0 0.0
        %5602 = vmatpush1.msra.mxu0 0.0
        %5603 = vmatprep.subr.mxu0 0.0
        %5604 = vmatpush1.msra.mxu0 0.0
        %5605 = vmatprep.subr.mxu0 0.0
        %5606 = vmatpush1.msra.mxu0 0.0
        %5607 = vmatprep.subr.mxu0 0.0
        %5608 = vmatpush1.msra.mxu0 0.0
        %5609 = vmatprep.subr.mxu0 0.0
        %5610 = vmatpush1.msra.mxu0 0.0
        %5611 = vmatprep.subr.mxu0 0.0
        %5612 = vmatpush1.msra.mxu0 0.0
        %5613 = vmatprep.subr.mxu0 0.0
        %5614 = vmatpush1.msra.mxu0 0.0
        %5615 = vmatprep.subr.mxu0 0.0
        %5616 = vmatpush1.msra.mxu0 0.0
        %5617 = vmatprep.subr.mxu0 0.0
        %5618 = vmatpush1.msra.mxu0 0.0
        %5619 = vmatprep.subr.mxu0 0.0
        %5620 = vmatpush1.msra.mxu0 0.0
        %5621 = vmatprep.subr.mxu0 0.0
        %5622 = vmatpush1.msra.mxu0 0.0
        %5623 = vmatprep.subr.mxu0 0.0
        %5624 = vmatpush1.msra.mxu0 0.0
        %5625 = vmatprep.subr.mxu0 0.0
        %5626 = vmatpush1.msra.mxu0 0.0
        %5627 = vmatprep.subr.mxu0 %v5591
        %5628 = vmatpush1.msra.mxu0 %v5590
        %5629 = vmatprep.subr.mxu0 0.0
        %5630 = vmatpush2.msra.mxu0 0.0
        %5631 = vmatprep.subr.mxu0 0.0
        %5632 = vmatpush2.msra.mxu0 0.0
        %5633 = vmatprep.subr.mxu0 0.0
        %5634 = vmatpush2.msra.mxu0 0.0
        %5635 = vmatprep.subr.mxu0 0.0
        %5636 = vmatpush2.msra.mxu0 0.0
        %5637 = vmatprep.subr.mxu0 0.0
        %5638 = vmatpush2.msra.mxu0 0.0
        %5639 = vmatprep.subr.mxu0 0.0
        %5640 = vmatpush2.msra.mxu0 0.0
        %5641 = vmatprep.subr.mxu0 0.0
        %5642 = vmatpush2.msra.mxu0 0.0
        %5643 = vmatprep.subr.mxu0 0.0
        %5644 = vmatpush2.msra.mxu0 0.0
        %5645 = vmatprep.subr.mxu0 0.0
        %5646 = vmatpush2.msra.mxu0 0.0
        %5647 = vmatprep.subr.mxu0 0.0
        %5648 = vmatpush2.msra.mxu0 0.0
        %5649 = vmatprep.subr.mxu0 0.0
        %5650 = vmatpush2.msra.mxu0 0.0
        %5651 = vmatprep.subr.mxu0 0.0
        %5652 = vmatpush2.msra.mxu0 0.0
        %5653 = vmatprep.subr.mxu0 0.0
        %5654 = vmatpush2.msra.mxu0 0.0
        %5655 = vmatprep.subr.mxu0 0.0
        %5656 = vmatpush2.msra.mxu0 0.0
        %5657 = vmatprep.subr.mxu0 0.0
        %5658 = vmatpush2.msra.mxu0 0.0
        %5659 = vmatprep.subr.mxu0 0.0
        %5660 = vmatpush2.msra.mxu0 0.0
        %5661 = vmatprep.mubr.f32.mxu0 0.0
        %5662 = vmatmul.mubr.f32.gmra.mxu0 %v5595
        %v5663 = vpop.f32.mrf.mxu0
        %v5664 = vadd.f32 0.0, %v5663
        %v5665 = vpop.f32.mrf.mxu0
        %v5666 = vadd.f32 0.0, %v5665
        %5667 = vdwg.mxu0
        %v5668 = vadd.f32 %v5571, %v5664
        %v5669 = vadd.f32 %v5572, %v5666
        %v5670 = vlaneseq
        %v5671 = vshrl.u32 %v5670, 7
        %v5672 = vsub.s32 4, %v5671
        %v5673 = vrot.slane %v533, %v5672
        %v5674 = vlaneseq
        %v5675 = vshrl.u32 %v5674, 7
        %v5676 = vsub.s32 4, %v5675
        %v5677 = vrot.slane %v534, %v5676
        %v5678 = vmul.f32 %v5278, %v5673
        %v5679 = vmul.f32 %v5280, %v5677
        %s5680 = scalar_lea.vmem %s5, 32
        %v5681 = vld [vmem:[%s5680] sm:$0xff]
        %v5683 = vsel %vm1611, %v5681, 0
        %5685 = vmatprep.subr.mxu0 0.0
        %5686 = vmatpush1.msra.mxu0 0.0
        %5687 = vmatprep.subr.mxu0 0.0
        %5688 = vmatpush1.msra.mxu0 0.0
        %5689 = vmatprep.subr.mxu0 0.0
        %5690 = vmatpush1.msra.mxu0 0.0
        %5691 = vmatprep.subr.mxu0 0.0
        %5692 = vmatpush1.msra.mxu0 0.0
        %5693 = vmatprep.subr.mxu0 0.0
        %5694 = vmatpush1.msra.mxu0 0.0
        %5695 = vmatprep.subr.mxu0 0.0
        %5696 = vmatpush1.msra.mxu0 0.0
        %5697 = vmatprep.subr.mxu0 0.0
        %5698 = vmatpush1.msra.mxu0 0.0
        %5699 = vmatprep.subr.mxu0 0.0
        %5700 = vmatpush1.msra.mxu0 0.0
        %5701 = vmatprep.subr.mxu0 0.0
        %5702 = vmatpush1.msra.mxu0 0.0
        %5703 = vmatprep.subr.mxu0 0.0
        %5704 = vmatpush1.msra.mxu0 0.0
        %5705 = vmatprep.subr.mxu0 0.0
        %5706 = vmatpush1.msra.mxu0 0.0
        %5707 = vmatprep.subr.mxu0 0.0
        %5708 = vmatpush1.msra.mxu0 0.0
        %5709 = vmatprep.subr.mxu0 0.0
        %5710 = vmatpush1.msra.mxu0 0.0
        %5711 = vmatprep.subr.mxu0 0.0
        %5712 = vmatpush1.msra.mxu0 0.0
        %5713 = vmatprep.subr.mxu0 0.0
        %5714 = vmatpush1.msra.mxu0 0.0
        %5715 = vmatprep.subr.mxu0 %v5679
        %5716 = vmatpush1.msra.mxu0 %v5678
        %5717 = vmatprep.subr.mxu0 0.0
        %5718 = vmatpush2.msra.mxu0 0.0
        %5719 = vmatprep.subr.mxu0 0.0
        %5720 = vmatpush2.msra.mxu0 0.0
        %5721 = vmatprep.subr.mxu0 0.0
        %5722 = vmatpush2.msra.mxu0 0.0
        %5723 = vmatprep.subr.mxu0 0.0
        %5724 = vmatpush2.msra.mxu0 0.0
        %5725 = vmatprep.subr.mxu0 0.0
        %5726 = vmatpush2.msra.mxu0 0.0
        %5727 = vmatprep.subr.mxu0 0.0
        %5728 = vmatpush2.msra.mxu0 0.0
        %5729 = vmatprep.subr.mxu0 0.0
        %5730 = vmatpush2.msra.mxu0 0.0
        %5731 = vmatprep.subr.mxu0 0.0
        %5732 = vmatpush2.msra.mxu0 0.0
        %5733 = vmatprep.subr.mxu0 0.0
        %5734 = vmatpush2.msra.mxu0 0.0
        %5735 = vmatprep.subr.mxu0 0.0
        %5736 = vmatpush2.msra.mxu0 0.0
        %5737 = vmatprep.subr.mxu0 0.0
        %5738 = vmatpush2.msra.mxu0 0.0
        %5739 = vmatprep.subr.mxu0 0.0
        %5740 = vmatpush2.msra.mxu0 0.0
        %5741 = vmatprep.subr.mxu0 0.0
        %5742 = vmatpush2.msra.mxu0 0.0
        %5743 = vmatprep.subr.mxu0 0.0
        %5744 = vmatpush2.msra.mxu0 0.0
        %5745 = vmatprep.subr.mxu0 0.0
        %5746 = vmatpush2.msra.mxu0 0.0
        %5747 = vmatprep.subr.mxu0 0.0
        %5748 = vmatpush2.msra.mxu0 0.0
        %5749 = vmatprep.mubr.f32.mxu0 0.0
        %5750 = vmatmul.mubr.f32.gmra.mxu0 %v5683
        %v5751 = vpop.f32.mrf.mxu0
        %v5752 = vadd.f32 0.0, %v5751
        %v5753 = vpop.f32.mrf.mxu0
        %v5754 = vadd.f32 0.0, %v5753
        %5755 = vdwg.mxu0
        %v5756 = vadd.f32 %v5668, %v5752
        %v5757 = vadd.f32 %v5669, %v5754
        %5758 = vrot.lane.b32.xlu0 %v5278, 127
        %v5759 = vpop.permute.xlu0 %5758
        %5760 = vrot.lane.b32.xlu0 %v5280, 127
        %v5761 = vpop.permute.xlu0 %5760
        %v5762 = vsel %vm1081, %v5759, %v5761
        %v5766 = vsel %vm1081, %v5761, %v5759
        %v5767 = vlaneseq
        %v5768 = vshrl.u32 %v5767, 7
        %v5769 = vsub.s32 5, %v5768
        %v5770 = vrot.slane %v533, %v5769
        %v5771 = vlaneseq
        %v5772 = vshrl.u32 %v5771, 7
        %v5773 = vsub.s32 5, %v5772
        %v5774 = vrot.slane %v534, %v5773
        %v5775 = vmul.f32 %v5762, %v5770
        %v5776 = vmul.f32 %v5766, %v5774
        %s5777 = scalar_lea.vmem %s5, 40
        %v5778 = vld [vmem:[%s5777] sm:$0xff]
        %v5780 = vsel %vm1611, %v5778, 0
        %5782 = vmatprep.subr.mxu0 0.0
        %5783 = vmatpush1.msra.mxu0 0.0
        %5784 = vmatprep.subr.mxu0 0.0
        %5785 = vmatpush1.msra.mxu0 0.0
        %5786 = vmatprep.subr.mxu0 0.0
        %5787 = vmatpush1.msra.mxu0 0.0
        %5788 = vmatprep.subr.mxu0 0.0
        %5789 = vmatpush1.msra.mxu0 0.0
        %5790 = vmatprep.subr.mxu0 0.0
        %5791 = vmatpush1.msra.mxu0 0.0
        %5792 = vmatprep.subr.mxu0 0.0
        %5793 = vmatpush1.msra.mxu0 0.0
        %5794 = vmatprep.subr.mxu0 0.0
        %5795 = vmatpush1.msra.mxu0 0.0
        %5796 = vmatprep.subr.mxu0 0.0
        %5797 = vmatpush1.msra.mxu0 0.0
        %5798 = vmatprep.subr.mxu0 0.0
        %5799 = vmatpush1.msra.mxu0 0.0
        %5800 = vmatprep.subr.mxu0 0.0
        %5801 = vmatpush1.msra.mxu0 0.0
        %5802 = vmatprep.subr.mxu0 0.0
        %5803 = vmatpush1.msra.mxu0 0.0
        %5804 = vmatprep.subr.mxu0 0.0
        %5805 = vmatpush1.msra.mxu0 0.0
        %5806 = vmatprep.subr.mxu0 0.0
        %5807 = vmatpush1.msra.mxu0 0.0
        %5808 = vmatprep.subr.mxu0 0.0
        %5809 = vmatpush1.msra.mxu0 0.0
        %5810 = vmatprep.subr.mxu0 0.0
        %5811 = vmatpush1.msra.mxu0 0.0
        %5812 = vmatprep.subr.mxu0 %v5776
        %5813 = vmatpush1.msra.mxu0 %v5775
        %5814 = vmatprep.subr.mxu0 0.0
        %5815 = vmatpush2.msra.mxu0 0.0
        %5816 = vmatprep.subr.mxu0 0.0
        %5817 = vmatpush2.msra.mxu0 0.0
        %5818 = vmatprep.subr.mxu0 0.0
        %5819 = vmatpush2.msra.mxu0 0.0
        %5820 = vmatprep.subr.mxu0 0.0
        %5821 = vmatpush2.msra.mxu0 0.0
        %5822 = vmatprep.subr.mxu0 0.0
        %5823 = vmatpush2.msra.mxu0 0.0
        %5824 = vmatprep.subr.mxu0 0.0
        %5825 = vmatpush2.msra.mxu0 0.0
        %5826 = vmatprep.subr.mxu0 0.0
        %5827 = vmatpush2.msra.mxu0 0.0
        %5828 = vmatprep.subr.mxu0 0.0
        %5829 = vmatpush2.msra.mxu0 0.0
        %5830 = vmatprep.subr.mxu0 0.0
        %5831 = vmatpush2.msra.mxu0 0.0
        %5832 = vmatprep.subr.mxu0 0.0
        %5833 = vmatpush2.msra.mxu0 0.0
        %5834 = vmatprep.subr.mxu0 0.0
        %5835 = vmatpush2.msra.mxu0 0.0
        %5836 = vmatprep.subr.mxu0 0.0
        %5837 = vmatpush2.msra.mxu0 0.0
        %5838 = vmatprep.subr.mxu0 0.0
        %5839 = vmatpush2.msra.mxu0 0.0
        %5840 = vmatprep.subr.mxu0 0.0
        %5841 = vmatpush2.msra.mxu0 0.0
        %5842 = vmatprep.subr.mxu0 0.0
        %5843 = vmatpush2.msra.mxu0 0.0
        %5844 = vmatprep.subr.mxu0 0.0
        %5845 = vmatpush2.msra.mxu0 0.0
        %5846 = vmatprep.mubr.f32.mxu0 0.0
        %5847 = vmatmul.mubr.f32.gmra.mxu0 %v5780
        %v5848 = vpop.f32.mrf.mxu0
        %v5849 = vadd.f32 0.0, %v5848
        %v5850 = vpop.f32.mrf.mxu0
        %v5851 = vadd.f32 0.0, %v5850
        %5852 = vdwg.mxu0
        %v5853 = vadd.f32 %v5756, %v5849
        %v5854 = vadd.f32 %v5757, %v5851
        %5855 = vrot.lane.b32.xlu0 %v5278, 115
        %v5856 = vpop.permute.xlu0 %5855
        %5857 = vrot.lane.b32.xlu0 %v5280, 115
        %v5858 = vpop.permute.xlu0 %5857
        %vm5859 = vcmask 941056
        %v5860 = vsel %vm5859, %v5856, %v5858
        %v5864 = vsel %vm5859, %v5858, %v5856
        %v5865 = vlaneseq
        %v5866 = vshrl.u32 %v5865, 7
        %v5867 = vsub.s32 6, %v5866
        %v5868 = vrot.slane %v533, %v5867
        %v5869 = vlaneseq
        %v5870 = vshrl.u32 %v5869, 7
        %v5871 = vsub.s32 6, %v5870
        %v5872 = vrot.slane %v534, %v5871
        %v5873 = vmul.f32 %v5860, %v5868
        %v5874 = vmul.f32 %v5864, %v5872
        %s5875 = scalar_lea.vmem %s5, 48
        %v5876 = vld [vmem:[%s5875] sm:$0xff]
        %v5878 = vsel %vm1611, %v5876, 0
        %5880 = vmatprep.subr.mxu0 0.0
        %5881 = vmatpush1.msra.mxu0 0.0
        %5882 = vmatprep.subr.mxu0 0.0
        %5883 = vmatpush1.msra.mxu0 0.0
        %5884 = vmatprep.subr.mxu0 0.0
        %5885 = vmatpush1.msra.mxu0 0.0
        %5886 = vmatprep.subr.mxu0 0.0
        %5887 = vmatpush1.msra.mxu0 0.0
        %5888 = vmatprep.subr.mxu0 0.0
        %5889 = vmatpush1.msra.mxu0 0.0
        %5890 = vmatprep.subr.mxu0 0.0
        %5891 = vmatpush1.msra.mxu0 0.0
        %5892 = vmatprep.subr.mxu0 0.0
        %5893 = vmatpush1.msra.mxu0 0.0
        %5894 = vmatprep.subr.mxu0 0.0
        %5895 = vmatpush1.msra.mxu0 0.0
        %5896 = vmatprep.subr.mxu0 0.0
        %5897 = vmatpush1.msra.mxu0 0.0
        %5898 = vmatprep.subr.mxu0 0.0
        %5899 = vmatpush1.msra.mxu0 0.0
        %5900 = vmatprep.subr.mxu0 0.0
        %5901 = vmatpush1.msra.mxu0 0.0
        %5902 = vmatprep.subr.mxu0 0.0
        %5903 = vmatpush1.msra.mxu0 0.0
        %5904 = vmatprep.subr.mxu0 0.0
        %5905 = vmatpush1.msra.mxu0 0.0
        %5906 = vmatprep.subr.mxu0 0.0
        %5907 = vmatpush1.msra.mxu0 0.0
        %5908 = vmatprep.subr.mxu0 0.0
        %5909 = vmatpush1.msra.mxu0 0.0
        %5910 = vmatprep.subr.mxu0 %v5874
        %5911 = vmatpush1.msra.mxu0 %v5873
        %5912 = vmatprep.subr.mxu0 0.0
        %5913 = vmatpush2.msra.mxu0 0.0
        %5914 = vmatprep.subr.mxu0 0.0
        %5915 = vmatpush2.msra.mxu0 0.0
        %5916 = vmatprep.subr.mxu0 0.0
        %5917 = vmatpush2.msra.mxu0 0.0
        %5918 = vmatprep.subr.mxu0 0.0
        %5919 = vmatpush2.msra.mxu0 0.0
        %5920 = vmatprep.subr.mxu0 0.0
        %5921 = vmatpush2.msra.mxu0 0.0
        %5922 = vmatprep.subr.mxu0 0.0
        %5923 = vmatpush2.msra.mxu0 0.0
        %5924 = vmatprep.subr.mxu0 0.0
        %5925 = vmatpush2.msra.mxu0 0.0
        %5926 = vmatprep.subr.mxu0 0.0
        %5927 = vmatpush2.msra.mxu0 0.0
        %5928 = vmatprep.subr.mxu0 0.0
        %5929 = vmatpush2.msra.mxu0 0.0
        %5930 = vmatprep.subr.mxu0 0.0
        %5931 = vmatpush2.msra.mxu0 0.0
        %5932 = vmatprep.subr.mxu0 0.0
        %5933 = vmatpush2.msra.mxu0 0.0
        %5934 = vmatprep.subr.mxu0 0.0
        %5935 = vmatpush2.msra.mxu0 0.0
        %5936 = vmatprep.subr.mxu0 0.0
        %5937 = vmatpush2.msra.mxu0 0.0
        %5938 = vmatprep.subr.mxu0 0.0
        %5939 = vmatpush2.msra.mxu0 0.0
        %5940 = vmatprep.subr.mxu0 0.0
        %5941 = vmatpush2.msra.mxu0 0.0
        %5942 = vmatprep.subr.mxu0 0.0
        %5943 = vmatpush2.msra.mxu0 0.0
        %5944 = vmatprep.mubr.f32.mxu0 0.0
        %5945 = vmatmul.mubr.f32.gmra.mxu0 %v5878
        %v5946 = vpop.f32.mrf.mxu0
        %v5947 = vadd.f32 0.0, %v5946
        %v5948 = vpop.f32.mrf.mxu0
        %v5949 = vadd.f32 0.0, %v5948
        %5950 = vdwg.mxu0
        %v5951 = vadd.f32 %v5853, %v5947
        %v5952 = vadd.f32 %v5854, %v5949
        %5953 = vrot.lane.b32.xlu0 %v5278, 114
        %v5954 = vpop.permute.xlu0 %5953
        %5955 = vrot.lane.b32.xlu0 %v5280, 114
        %v5956 = vpop.permute.xlu0 %5955
        %vm5957 = vcmask 932864
        %v5958 = vsel %vm5957, %v5954, %v5956
        %v5962 = vsel %vm5957, %v5956, %v5954
        %v5963 = vlaneseq
        %v5964 = vshrl.u32 %v5963, 7
        %v5965 = vsub.s32 7, %v5964
        %v5966 = vrot.slane %v533, %v5965
        %v5967 = vlaneseq
        %v5968 = vshrl.u32 %v5967, 7
        %v5969 = vsub.s32 7, %v5968
        %v5970 = vrot.slane %v534, %v5969
        %v5971 = vmul.f32 %v5958, %v5966
        %v5972 = vmul.f32 %v5962, %v5970
        %s5973 = scalar_lea.vmem %s5, 56
        %v5974 = vld [vmem:[%s5973] sm:$0xff]
        %v5976 = vsel %vm1611, %v5974, 0
        %5978 = vmatprep.subr.mxu0 0.0
        %5979 = vmatpush1.msra.mxu0 0.0
        %5980 = vmatprep.subr.mxu0 0.0
        %5981 = vmatpush1.msra.mxu0 0.0
        %5982 = vmatprep.subr.mxu0 0.0
        %5983 = vmatpush1.msra.mxu0 0.0
        %5984 = vmatprep.subr.mxu0 0.0
        %5985 = vmatpush1.msra.mxu0 0.0
        %5986 = vmatprep.subr.mxu0 0.0
        %5987 = vmatpush1.msra.mxu0 0.0
        %5988 = vmatprep.subr.mxu0 0.0
        %5989 = vmatpush1.msra.mxu0 0.0
        %5990 = vmatprep.subr.mxu0 0.0
        %5991 = vmatpush1.msra.mxu0 0.0
        %5992 = vmatprep.subr.mxu0 0.0
        %5993 = vmatpush1.msra.mxu0 0.0
        %5994 = vmatprep.subr.mxu0 0.0
        %5995 = vmatpush1.msra.mxu0 0.0
        %5996 = vmatprep.subr.mxu0 0.0
        %5997 = vmatpush1.msra.mxu0 0.0
        %5998 = vmatprep.subr.mxu0 0.0
        %5999 = vmatpush1.msra.mxu0 0.0
        %6000 = vmatprep.subr.mxu0 0.0
        %6001 = vmatpush1.msra.mxu0 0.0
        %6002 = vmatprep.subr.mxu0 0.0
        %6003 = vmatpush1.msra.mxu0 0.0
        %6004 = vmatprep.subr.mxu0 0.0
        %6005 = vmatpush1.msra.mxu0 0.0
        %6006 = vmatprep.subr.mxu0 0.0
        %6007 = vmatpush1.msra.mxu0 0.0
        %6008 = vmatprep.subr.mxu0 %v5972
        %6009 = vmatpush1.msra.mxu0 %v5971
        %6010 = vmatprep.subr.mxu0 0.0
        %6011 = vmatpush2.msra.mxu0 0.0
        %6012 = vmatprep.subr.mxu0 0.0
        %6013 = vmatpush2.msra.mxu0 0.0
        %6014 = vmatprep.subr.mxu0 0.0
        %6015 = vmatpush2.msra.mxu0 0.0
        %6016 = vmatprep.subr.mxu0 0.0
        %6017 = vmatpush2.msra.mxu0 0.0
        %6018 = vmatprep.subr.mxu0 0.0
        %6019 = vmatpush2.msra.mxu0 0.0
        %6020 = vmatprep.subr.mxu0 0.0
        %6021 = vmatpush2.msra.mxu0 0.0
        %6022 = vmatprep.subr.mxu0 0.0
        %6023 = vmatpush2.msra.mxu0 0.0
        %6024 = vmatprep.subr.mxu0 0.0
        %6025 = vmatpush2.msra.mxu0 0.0
        %6026 = vmatprep.subr.mxu0 0.0
        %6027 = vmatpush2.msra.mxu0 0.0
        %6028 = vmatprep.subr.mxu0 0.0
        %6029 = vmatpush2.msra.mxu0 0.0
        %6030 = vmatprep.subr.mxu0 0.0
        %6031 = vmatpush2.msra.mxu0 0.0
        %6032 = vmatprep.subr.mxu0 0.0
        %6033 = vmatpush2.msra.mxu0 0.0
        %6034 = vmatprep.subr.mxu0 0.0
        %6035 = vmatpush2.msra.mxu0 0.0
        %6036 = vmatprep.subr.mxu0 0.0
        %6037 = vmatpush2.msra.mxu0 0.0
        %6038 = vmatprep.subr.mxu0 0.0
        %6039 = vmatpush2.msra.mxu0 0.0
        %6040 = vmatprep.subr.mxu0 0.0
        %6041 = vmatpush2.msra.mxu0 0.0
        %6042 = vmatprep.mubr.f32.mxu0 0.0
        %6043 = vmatmul.mubr.f32.gmra.mxu0 %v5976
        %v6044 = vpop.f32.mrf.mxu0
        %v6045 = vadd.f32 0.0, %v6044
        %v6046 = vpop.f32.mrf.mxu0
        %v6047 = vadd.f32 0.0, %v6046
        %6048 = vdwg.mxu0
        %v6049 = vadd.f32 %v5951, %v6045
        %v6050 = vadd.f32 %v5952, %v6047
        %6051 = vrot.lane.b32.xlu0 %v5278, 113
        %v6052 = vpop.permute.xlu0 %6051
        %6053 = vrot.lane.b32.xlu0 %v5280, 113
        %v6054 = vpop.permute.xlu0 %6053
        %vm6055 = vcmask 924672
        %v6056 = vsel %vm6055, %v6052, %v6054
        %v6060 = vsel %vm6055, %v6054, %v6052
        %v6061 = vlaneseq
        %v6062 = vshrl.u32 %v6061, 7
        %v6063 = vsub.s32 0, %v6062
        %v6064 = vrot.slane %v535, %v6063
        %v6065 = vlaneseq
        %v6066 = vshrl.u32 %v6065, 7
        %v6067 = vsub.s32 0, %v6066
        %v6068 = vrot.slane %v536, %v6067
        %v6069 = vmul.f32 %v6056, %v6064
        %v6070 = vmul.f32 %v6060, %v6068
        %s6071 = scalar_lea.vmem %s5, 64
        %v6072 = vld [vmem:[%s6071] sm:$0xff]
        %v6074 = vsel %vm1611, %v6072, 0
        %6076 = vmatprep.subr.mxu0 0.0
        %6077 = vmatpush1.msra.mxu0 0.0
        %6078 = vmatprep.subr.mxu0 0.0
        %6079 = vmatpush1.msra.mxu0 0.0
        %6080 = vmatprep.subr.mxu0 0.0
        %6081 = vmatpush1.msra.mxu0 0.0
        %6082 = vmatprep.subr.mxu0 0.0
        %6083 = vmatpush1.msra.mxu0 0.0
        %6084 = vmatprep.subr.mxu0 0.0
        %6085 = vmatpush1.msra.mxu0 0.0
        %6086 = vmatprep.subr.mxu0 0.0
        %6087 = vmatpush1.msra.mxu0 0.0
        %6088 = vmatprep.subr.mxu0 0.0
        %6089 = vmatpush1.msra.mxu0 0.0
        %6090 = vmatprep.subr.mxu0 0.0
        %6091 = vmatpush1.msra.mxu0 0.0
        %6092 = vmatprep.subr.mxu0 0.0
        %6093 = vmatpush1.msra.mxu0 0.0
        %6094 = vmatprep.subr.mxu0 0.0
        %6095 = vmatpush1.msra.mxu0 0.0
        %6096 = vmatprep.subr.mxu0 0.0
        %6097 = vmatpush1.msra.mxu0 0.0
        %6098 = vmatprep.subr.mxu0 0.0
        %6099 = vmatpush1.msra.mxu0 0.0
        %6100 = vmatprep.subr.mxu0 0.0
        %6101 = vmatpush1.msra.mxu0 0.0
        %6102 = vmatprep.subr.mxu0 0.0
        %6103 = vmatpush1.msra.mxu0 0.0
        %6104 = vmatprep.subr.mxu0 0.0
        %6105 = vmatpush1.msra.mxu0 0.0
        %6106 = vmatprep.subr.mxu0 %v6070
        %6107 = vmatpush1.msra.mxu0 %v6069
        %6108 = vmatprep.subr.mxu0 0.0
        %6109 = vmatpush2.msra.mxu0 0.0
        %6110 = vmatprep.subr.mxu0 0.0
        %6111 = vmatpush2.msra.mxu0 0.0
        %6112 = vmatprep.subr.mxu0 0.0
        %6113 = vmatpush2.msra.mxu0 0.0
        %6114 = vmatprep.subr.mxu0 0.0
        %6115 = vmatpush2.msra.mxu0 0.0
        %6116 = vmatprep.subr.mxu0 0.0
        %6117 = vmatpush2.msra.mxu0 0.0
        %6118 = vmatprep.subr.mxu0 0.0
        %6119 = vmatpush2.msra.mxu0 0.0
        %6120 = vmatprep.subr.mxu0 0.0
        %6121 = vmatpush2.msra.mxu0 0.0
        %6122 = vmatprep.subr.mxu0 0.0
        %6123 = vmatpush2.msra.mxu0 0.0
        %6124 = vmatprep.subr.mxu0 0.0
        %6125 = vmatpush2.msra.mxu0 0.0
        %6126 = vmatprep.subr.mxu0 0.0
        %6127 = vmatpush2.msra.mxu0 0.0
        %6128 = vmatprep.subr.mxu0 0.0
        %6129 = vmatpush2.msra.mxu0 0.0
        %6130 = vmatprep.subr.mxu0 0.0
        %6131 = vmatpush2.msra.mxu0 0.0
        %6132 = vmatprep.subr.mxu0 0.0
        %6133 = vmatpush2.msra.mxu0 0.0
        %6134 = vmatprep.subr.mxu0 0.0
        %6135 = vmatpush2.msra.mxu0 0.0
        %6136 = vmatprep.subr.mxu0 0.0
        %6137 = vmatpush2.msra.mxu0 0.0
        %6138 = vmatprep.subr.mxu0 0.0
        %6139 = vmatpush2.msra.mxu0 0.0
        %6140 = vmatprep.mubr.f32.mxu0 0.0
        %6141 = vmatmul.mubr.f32.gmra.mxu0 %v6074
        %v6142 = vpop.f32.mrf.mxu0
        %v6143 = vadd.f32 0.0, %v6142
        %v6144 = vpop.f32.mrf.mxu0
        %v6145 = vadd.f32 0.0, %v6144
        %6146 = vdwg.mxu0
        %v6147 = vadd.f32 %v6049, %v6143
        %v6148 = vadd.f32 %v6050, %v6145
        %v6149 = vld [vmem:[%s6] sm:$0xff]
        %6151 = vset.pattern.permute.xlu0 0
        %6152 = vperm.xlu0 %6151, %v6149
        %v6153 = vpop.permute.xlu0 %6152
        %v6155 = vadd.f32 %v6147, %v6153
        %v6156 = vadd.f32 %v6148, %v6153
        %v6157 = vmax.f32 %v6155, 0.0
        %v6158 = vmax.f32 %v6156, 0.0
        %6160 = vrot.lane.b32.xlu0 %v6158, 15
        %v6161 = vpop.permute.xlu0 %6160
        %6164 = vrot.lane.b32.xlu0 %v6157, 15
        %v6165 = vpop.permute.xlu0 %6164
        %v6166 = vsel %vm5289, %v6165, %v6161
        %v6169 = vsel %vm5289, %v6161, %v6165
        %v6170 = vmul.f32 %v6169, %v5297
        %v6171 = vmul.f32 %v6166, %v5301
        %v6172 = vld [vmem:[%s7] sm:$0xff]
        %6173 = vrot.lane.b32.xlu0 %v6158, 14
        %v6174 = vpop.permute.xlu0 %6173
        %6176 = vrot.lane.b32.xlu0 %v6157, 14
        %v6177 = vpop.permute.xlu0 %6176
        %v6178 = vsel %vm5310, %v6177, %v6174
        %v6181 = vsel %vm5310, %v6174, %v6177
        %v6182 = vmul.f32 %v6181, %v5318
        %v6183 = vmul.f32 %v6178, %v5322
        %s6184 = scalar_lea.vmem %s7, 8
        %v6185 = vld [vmem:[%s6184] sm:$0xff]
        %v6187 = vsel %vm1611, %v6185, 0
        %6189 = vmatprep.subr.mxu0 0.0
        %6190 = vmatpush1.msra.mxu0 0.0
        %6191 = vmatprep.subr.mxu0 0.0
        %6192 = vmatpush1.msra.mxu0 0.0
        %6193 = vmatprep.subr.mxu0 0.0
        %6194 = vmatpush1.msra.mxu0 0.0
        %6195 = vmatprep.subr.mxu0 0.0
        %6196 = vmatpush1.msra.mxu0 0.0
        %6197 = vmatprep.subr.mxu0 0.0
        %6198 = vmatpush1.msra.mxu0 0.0
        %6199 = vmatprep.subr.mxu0 0.0
        %6200 = vmatpush1.msra.mxu0 0.0
        %6201 = vmatprep.subr.mxu0 0.0
        %6202 = vmatpush1.msra.mxu0 0.0
        %6203 = vmatprep.subr.mxu0 0.0
        %6204 = vmatpush1.msra.mxu0 0.0
        %6205 = vmatprep.subr.mxu0 0.0
        %6206 = vmatpush1.msra.mxu0 0.0
        %6207 = vmatprep.subr.mxu0 0.0
        %6208 = vmatpush1.msra.mxu0 0.0
        %6209 = vmatprep.subr.mxu0 0.0
        %6210 = vmatpush1.msra.mxu0 0.0
        %6211 = vmatprep.subr.mxu0 0.0
        %6212 = vmatpush1.msra.mxu0 0.0
        %6213 = vmatprep.subr.mxu0 0.0
        %6214 = vmatpush1.msra.mxu0 0.0
        %6215 = vmatprep.subr.mxu0 0.0
        %6216 = vmatpush1.msra.mxu0 0.0
        %6217 = vmatprep.subr.mxu0 0.0
        %6218 = vmatpush1.msra.mxu0 0.0
        %6219 = vmatprep.subr.mxu0 %v6183
        %6220 = vmatpush1.msra.mxu0 %v6182
        %6221 = vmatprep.subr.mxu0 0.0
        %6222 = vmatpush2.msra.mxu0 0.0
        %6223 = vmatprep.subr.mxu0 0.0
        %6224 = vmatpush2.msra.mxu0 0.0
        %6225 = vmatprep.subr.mxu0 0.0
        %6226 = vmatpush2.msra.mxu0 0.0
        %6227 = vmatprep.subr.mxu0 0.0
        %6228 = vmatpush2.msra.mxu0 0.0
        %6229 = vmatprep.subr.mxu0 0.0
        %6230 = vmatpush2.msra.mxu0 0.0
        %6231 = vmatprep.subr.mxu0 0.0
        %6232 = vmatpush2.msra.mxu0 0.0
        %6233 = vmatprep.subr.mxu0 0.0
        %6234 = vmatpush2.msra.mxu0 0.0
        %6235 = vmatprep.subr.mxu0 0.0
        %6236 = vmatpush2.msra.mxu0 0.0
        %6237 = vmatprep.subr.mxu0 0.0
        %6238 = vmatpush2.msra.mxu0 0.0
        %6239 = vmatprep.subr.mxu0 0.0
        %6240 = vmatpush2.msra.mxu0 0.0
        %6241 = vmatprep.subr.mxu0 0.0
        %6242 = vmatpush2.msra.mxu0 0.0
        %6243 = vmatprep.subr.mxu0 0.0
        %6244 = vmatpush2.msra.mxu0 0.0
        %6245 = vmatprep.subr.mxu0 0.0
        %6246 = vmatpush2.msra.mxu0 0.0
        %6247 = vmatprep.subr.mxu0 0.0
        %6248 = vmatpush2.msra.mxu0 0.0
        %6249 = vmatprep.subr.mxu0 0.0
        %6250 = vmatpush2.msra.mxu0 0.0
        %6251 = vmatprep.subr.mxu0 0.0
        %6252 = vmatpush2.msra.mxu0 0.0
        %6253 = vmatprep.mubr.f32.mxu0 0.0
        %6254 = vmatmul.mubr.f32.gmra.mxu0 %v6187
        %v6255 = vpop.f32.mrf.mxu0
        %v6256 = vadd.f32 0.0, %v6255
        %v6257 = vpop.f32.mrf.mxu0
        %v6258 = vadd.f32 0.0, %v6257
        %6259 = vdwg.mxu0
        %v6261 = vsel %vm1611, %v6172, 0
        %6263 = vmatprep.subr.mxu0 0.0
        %6264 = vmatpush1.msra.mxu0 0.0
        %6265 = vmatprep.subr.mxu0 0.0
        %6266 = vmatpush1.msra.mxu0 0.0
        %6267 = vmatprep.subr.mxu0 0.0
        %6268 = vmatpush1.msra.mxu0 0.0
        %6269 = vmatprep.subr.mxu0 0.0
        %6270 = vmatpush1.msra.mxu0 0.0
        %6271 = vmatprep.subr.mxu0 0.0
        %6272 = vmatpush1.msra.mxu0 0.0
        %6273 = vmatprep.subr.mxu0 0.0
        %6274 = vmatpush1.msra.mxu0 0.0
        %6275 = vmatprep.subr.mxu0 0.0
        %6276 = vmatpush1.msra.mxu0 0.0
        %6277 = vmatprep.subr.mxu0 0.0
        %6278 = vmatpush1.msra.mxu0 0.0
        %6279 = vmatprep.subr.mxu0 0.0
        %6280 = vmatpush1.msra.mxu0 0.0
        %6281 = vmatprep.subr.mxu0 0.0
        %6282 = vmatpush1.msra.mxu0 0.0
        %6283 = vmatprep.subr.mxu0 0.0
        %6284 = vmatpush1.msra.mxu0 0.0
        %6285 = vmatprep.subr.mxu0 0.0
        %6286 = vmatpush1.msra.mxu0 0.0
        %6287 = vmatprep.subr.mxu0 0.0
        %6288 = vmatpush1.msra.mxu0 0.0
        %6289 = vmatprep.subr.mxu0 0.0
        %6290 = vmatpush1.msra.mxu0 0.0
        %6291 = vmatprep.subr.mxu0 0.0
        %6292 = vmatpush1.msra.mxu0 0.0
        %6293 = vmatprep.subr.mxu0 %v6171
        %6294 = vmatpush1.msra.mxu0 %v6170
        %6295 = vmatprep.subr.mxu0 0.0
        %6296 = vmatpush2.msra.mxu0 0.0
        %6297 = vmatprep.subr.mxu0 0.0
        %6298 = vmatpush2.msra.mxu0 0.0
        %6299 = vmatprep.subr.mxu0 0.0
        %6300 = vmatpush2.msra.mxu0 0.0
        %6301 = vmatprep.subr.mxu0 0.0
        %6302 = vmatpush2.msra.mxu0 0.0
        %6303 = vmatprep.subr.mxu0 0.0
        %6304 = vmatpush2.msra.mxu0 0.0
        %6305 = vmatprep.subr.mxu0 0.0
        %6306 = vmatpush2.msra.mxu0 0.0
        %6307 = vmatprep.subr.mxu0 0.0
        %6308 = vmatpush2.msra.mxu0 0.0
        %6309 = vmatprep.subr.mxu0 0.0
        %6310 = vmatpush2.msra.mxu0 0.0
        %6311 = vmatprep.subr.mxu0 0.0
        %6312 = vmatpush2.msra.mxu0 0.0
        %6313 = vmatprep.subr.mxu0 0.0
        %6314 = vmatpush2.msra.mxu0 0.0
        %6315 = vmatprep.subr.mxu0 0.0
        %6316 = vmatpush2.msra.mxu0 0.0
        %6317 = vmatprep.subr.mxu0 0.0
        %6318 = vmatpush2.msra.mxu0 0.0
        %6319 = vmatprep.subr.mxu0 0.0
        %6320 = vmatpush2.msra.mxu0 0.0
        %6321 = vmatprep.subr.mxu0 0.0
        %6322 = vmatpush2.msra.mxu0 0.0
        %6323 = vmatprep.subr.mxu0 0.0
        %6324 = vmatpush2.msra.mxu0 0.0
        %6325 = vmatprep.subr.mxu0 0.0
        %6326 = vmatpush2.msra.mxu0 0.0
        %6327 = vmatprep.mubr.f32.mxu0 0.0
        %6328 = vmatmul.mubr.f32.gmra.mxu0 %v6261
        %v6329 = vpop.f32.mrf.mxu0
        %v6330 = vadd.f32 %v6256, %v6329
        %v6331 = vpop.f32.mrf.mxu0
        %v6332 = vadd.f32 %v6258, %v6331
        %6333 = vdwg.mxu0
        %6334 = vrot.lane.b32.xlu0 %v6158, 13
        %v6335 = vpop.permute.xlu0 %6334
        %6337 = vrot.lane.b32.xlu0 %v6157, 13
        %v6338 = vpop.permute.xlu0 %6337
        %v6339 = vsel %vm5480, %v6338, %v6335
        %v6342 = vsel %vm5480, %v6335, %v6338
        %v6343 = vmul.f32 %v6342, %v5488
        %v6344 = vmul.f32 %v6339, %v5492
        %s6345 = scalar_lea.vmem %s7, 16
        %v6346 = vld [vmem:[%s6345] sm:$0xff]
        %v6348 = vsel %vm1611, %v6346, 0
        %6350 = vmatprep.subr.mxu0 0.0
        %6351 = vmatpush1.msra.mxu0 0.0
        %6352 = vmatprep.subr.mxu0 0.0
        %6353 = vmatpush1.msra.mxu0 0.0
        %6354 = vmatprep.subr.mxu0 0.0
        %6355 = vmatpush1.msra.mxu0 0.0
        %6356 = vmatprep.subr.mxu0 0.0
        %6357 = vmatpush1.msra.mxu0 0.0
        %6358 = vmatprep.subr.mxu0 0.0
        %6359 = vmatpush1.msra.mxu0 0.0
        %6360 = vmatprep.subr.mxu0 0.0
        %6361 = vmatpush1.msra.mxu0 0.0
        %6362 = vmatprep.subr.mxu0 0.0
        %6363 = vmatpush1.msra.mxu0 0.0
        %6364 = vmatprep.subr.mxu0 0.0
        %6365 = vmatpush1.msra.mxu0 0.0
        %6366 = vmatprep.subr.mxu0 0.0
        %6367 = vmatpush1.msra.mxu0 0.0
        %6368 = vmatprep.subr.mxu0 0.0
        %6369 = vmatpush1.msra.mxu0 0.0
        %6370 = vmatprep.subr.mxu0 0.0
        %6371 = vmatpush1.msra.mxu0 0.0
        %6372 = vmatprep.subr.mxu0 0.0
        %6373 = vmatpush1.msra.mxu0 0.0
        %6374 = vmatprep.subr.mxu0 0.0
        %6375 = vmatpush1.msra.mxu0 0.0
        %6376 = vmatprep.subr.mxu0 0.0
        %6377 = vmatpush1.msra.mxu0 0.0
        %6378 = vmatprep.subr.mxu0 0.0
        %6379 = vmatpush1.msra.mxu0 0.0
        %6380 = vmatprep.subr.mxu0 %v6344
        %6381 = vmatpush1.msra.mxu0 %v6343
        %6382 = vmatprep.subr.mxu0 0.0
        %6383 = vmatpush2.msra.mxu0 0.0
        %6384 = vmatprep.subr.mxu0 0.0
        %6385 = vmatpush2.msra.mxu0 0.0
        %6386 = vmatprep.subr.mxu0 0.0
        %6387 = vmatpush2.msra.mxu0 0.0
        %6388 = vmatprep.subr.mxu0 0.0
        %6389 = vmatpush2.msra.mxu0 0.0
        %6390 = vmatprep.subr.mxu0 0.0
        %6391 = vmatpush2.msra.mxu0 0.0
        %6392 = vmatprep.subr.mxu0 0.0
        %6393 = vmatpush2.msra.mxu0 0.0
        %6394 = vmatprep.subr.mxu0 0.0
        %6395 = vmatpush2.msra.mxu0 0.0
        %6396 = vmatprep.subr.mxu0 0.0
        %6397 = vmatpush2.msra.mxu0 0.0
        %6398 = vmatprep.subr.mxu0 0.0
        %6399 = vmatpush2.msra.mxu0 0.0
        %6400 = vmatprep.subr.mxu0 0.0
        %6401 = vmatpush2.msra.mxu0 0.0
        %6402 = vmatprep.subr.mxu0 0.0
        %6403 = vmatpush2.msra.mxu0 0.0
        %6404 = vmatprep.subr.mxu0 0.0
        %6405 = vmatpush2.msra.mxu0 0.0
        %6406 = vmatprep.subr.mxu0 0.0
        %6407 = vmatpush2.msra.mxu0 0.0
        %6408 = vmatprep.subr.mxu0 0.0
        %6409 = vmatpush2.msra.mxu0 0.0
        %6410 = vmatprep.subr.mxu0 0.0
        %6411 = vmatpush2.msra.mxu0 0.0
        %6412 = vmatprep.subr.mxu0 0.0
        %6413 = vmatpush2.msra.mxu0 0.0
        %6414 = vmatprep.mubr.f32.mxu0 0.0
        %6415 = vmatmul.mubr.f32.gmra.mxu0 %v6348
        %v6416 = vpop.f32.mrf.mxu0
        %v6417 = vadd.f32 0.0, %v6416
        %v6418 = vpop.f32.mrf.mxu0
        %v6419 = vadd.f32 0.0, %v6418
        %6420 = vdwg.mxu0
        %v6421 = vadd.f32 %v6330, %v6417
        %v6422 = vadd.f32 %v6332, %v6419
        %6423 = vrot.lane.b32.xlu0 %v6158, 1
        %v6424 = vpop.permute.xlu0 %6423
        %6426 = vrot.lane.b32.xlu0 %v6157, 1
        %v6427 = vpop.permute.xlu0 %6426
        %v6428 = vsel %vm874, %v6427, %v6424
        %v6431 = vsel %vm874, %v6424, %v6427
        %v6432 = vmul.f32 %v6431, %v5585
        %v6433 = vmul.f32 %v6428, %v5589
        %s6434 = scalar_lea.vmem %s7, 24
        %v6435 = vld [vmem:[%s6434] sm:$0xff]
        %v6437 = vsel %vm1611, %v6435, 0
        %6439 = vmatprep.subr.mxu0 0.0
        %6440 = vmatpush1.msra.mxu0 0.0
        %6441 = vmatprep.subr.mxu0 0.0
        %6442 = vmatpush1.msra.mxu0 0.0
        %6443 = vmatprep.subr.mxu0 0.0
        %6444 = vmatpush1.msra.mxu0 0.0
        %6445 = vmatprep.subr.mxu0 0.0
        %6446 = vmatpush1.msra.mxu0 0.0
        %6447 = vmatprep.subr.mxu0 0.0
        %6448 = vmatpush1.msra.mxu0 0.0
        %6449 = vmatprep.subr.mxu0 0.0
        %6450 = vmatpush1.msra.mxu0 0.0
        %6451 = vmatprep.subr.mxu0 0.0
        %6452 = vmatpush1.msra.mxu0 0.0
        %6453 = vmatprep.subr.mxu0 0.0
        %6454 = vmatpush1.msra.mxu0 0.0
        %6455 = vmatprep.subr.mxu0 0.0
        %6456 = vmatpush1.msra.mxu0 0.0
        %6457 = vmatprep.subr.mxu0 0.0
        %6458 = vmatpush1.msra.mxu0 0.0
        %6459 = vmatprep.subr.mxu0 0.0
        %6460 = vmatpush1.msra.mxu0 0.0
        %6461 = vmatprep.subr.mxu0 0.0
        %6462 = vmatpush1.msra.mxu0 0.0
        %6463 = vmatprep.subr.mxu0 0.0
        %6464 = vmatpush1.msra.mxu0 0.0
        %6465 = vmatprep.subr.mxu0 0.0
        %6466 = vmatpush1.msra.mxu0 0.0
        %6467 = vmatprep.subr.mxu0 0.0
        %6468 = vmatpush1.msra.mxu0 0.0
        %6469 = vmatprep.subr.mxu0 %v6433
        %6470 = vmatpush1.msra.mxu0 %v6432
        %6471 = vmatprep.subr.mxu0 0.0
        %6472 = vmatpush2.msra.mxu0 0.0
        %6473 = vmatprep.subr.mxu0 0.0
        %6474 = vmatpush2.msra.mxu0 0.0
        %6475 = vmatprep.subr.mxu0 0.0
        %6476 = vmatpush2.msra.mxu0 0.0
        %6477 = vmatprep.subr.mxu0 0.0
        %6478 = vmatpush2.msra.mxu0 0.0
        %6479 = vmatprep.subr.mxu0 0.0
        %6480 = vmatpush2.msra.mxu0 0.0
        %6481 = vmatprep.subr.mxu0 0.0
        %6482 = vmatpush2.msra.mxu0 0.0
        %6483 = vmatprep.subr.mxu0 0.0
        %6484 = vmatpush2.msra.mxu0 0.0
        %6485 = vmatprep.subr.mxu0 0.0
        %6486 = vmatpush2.msra.mxu0 0.0
        %6487 = vmatprep.subr.mxu0 0.0
        %6488 = vmatpush2.msra.mxu0 0.0
        %6489 = vmatprep.subr.mxu0 0.0
        %6490 = vmatpush2.msra.mxu0 0.0
        %6491 = vmatprep.subr.mxu0 0.0
        %6492 = vmatpush2.msra.mxu0 0.0
        %6493 = vmatprep.subr.mxu0 0.0
        %6494 = vmatpush2.msra.mxu0 0.0
        %6495 = vmatprep.subr.mxu0 0.0
        %6496 = vmatpush2.msra.mxu0 0.0
        %6497 = vmatprep.subr.mxu0 0.0
        %6498 = vmatpush2.msra.mxu0 0.0
        %6499 = vmatprep.subr.mxu0 0.0
        %6500 = vmatpush2.msra.mxu0 0.0
        %6501 = vmatprep.subr.mxu0 0.0
        %6502 = vmatpush2.msra.mxu0 0.0
        %6503 = vmatprep.mubr.f32.mxu0 0.0
        %6504 = vmatmul.mubr.f32.gmra.mxu0 %v6437
        %v6505 = vpop.f32.mrf.mxu0
        %v6506 = vadd.f32 0.0, %v6505
        %v6507 = vpop.f32.mrf.mxu0
        %v6508 = vadd.f32 0.0, %v6507
        %6509 = vdwg.mxu0
        %v6510 = vadd.f32 %v6421, %v6506
        %v6511 = vadd.f32 %v6422, %v6508
        %v6512 = vmul.f32 %v6157, %v5673
        %v6513 = vmul.f32 %v6158, %v5677
        %s6514 = scalar_lea.vmem %s7, 32
        %v6515 = vld [vmem:[%s6514] sm:$0xff]
        %v6517 = vsel %vm1611, %v6515, 0
        %6519 = vmatprep.subr.mxu0 0.0
        %6520 = vmatpush1.msra.mxu0 0.0
        %6521 = vmatprep.subr.mxu0 0.0
        %6522 = vmatpush1.msra.mxu0 0.0
        %6523 = vmatprep.subr.mxu0 0.0
        %6524 = vmatpush1.msra.mxu0 0.0
        %6525 = vmatprep.subr.mxu0 0.0
        %6526 = vmatpush1.msra.mxu0 0.0
        %6527 = vmatprep.subr.mxu0 0.0
        %6528 = vmatpush1.msra.mxu0 0.0
        %6529 = vmatprep.subr.mxu0 0.0
        %6530 = vmatpush1.msra.mxu0 0.0
        %6531 = vmatprep.subr.mxu0 0.0
        %6532 = vmatpush1.msra.mxu0 0.0
        %6533 = vmatprep.subr.mxu0 0.0
        %6534 = vmatpush1.msra.mxu0 0.0
        %6535 = vmatprep.subr.mxu0 0.0
        %6536 = vmatpush1.msra.mxu0 0.0
        %6537 = vmatprep.subr.mxu0 0.0
        %6538 = vmatpush1.msra.mxu0 0.0
        %6539 = vmatprep.subr.mxu0 0.0
        %6540 = vmatpush1.msra.mxu0 0.0
        %6541 = vmatprep.subr.mxu0 0.0
        %6542 = vmatpush1.msra.mxu0 0.0
        %6543 = vmatprep.subr.mxu0 0.0
        %6544 = vmatpush1.msra.mxu0 0.0
        %6545 = vmatprep.subr.mxu0 0.0
        %6546 = vmatpush1.msra.mxu0 0.0
        %6547 = vmatprep.subr.mxu0 0.0
        %6548 = vmatpush1.msra.mxu0 0.0
        %6549 = vmatprep.subr.mxu0 %v6513
        %6550 = vmatpush1.msra.mxu0 %v6512
        %6551 = vmatprep.subr.mxu0 0.0
        %6552 = vmatpush2.msra.mxu0 0.0
        %6553 = vmatprep.subr.mxu0 0.0
        %6554 = vmatpush2.msra.mxu0 0.0
        %6555 = vmatprep.subr.mxu0 0.0
        %6556 = vmatpush2.msra.mxu0 0.0
        %6557 = vmatprep.subr.mxu0 0.0
        %6558 = vmatpush2.msra.mxu0 0.0
        %6559 = vmatprep.subr.mxu0 0.0
        %6560 = vmatpush2.msra.mxu0 0.0
        %6561 = vmatprep.subr.mxu0 0.0
        %6562 = vmatpush2.msra.mxu0 0.0
        %6563 = vmatprep.subr.mxu0 0.0
        %6564 = vmatpush2.msra.mxu0 0.0
        %6565 = vmatprep.subr.mxu0 0.0
        %6566 = vmatpush2.msra.mxu0 0.0
        %6567 = vmatprep.subr.mxu0 0.0
        %6568 = vmatpush2.msra.mxu0 0.0
        %6569 = vmatprep.subr.mxu0 0.0
        %6570 = vmatpush2.msra.mxu0 0.0
        %6571 = vmatprep.subr.mxu0 0.0
        %6572 = vmatpush2.msra.mxu0 0.0
        %6573 = vmatprep.subr.mxu0 0.0
        %6574 = vmatpush2.msra.mxu0 0.0
        %6575 = vmatprep.subr.mxu0 0.0
        %6576 = vmatpush2.msra.mxu0 0.0
        %6577 = vmatprep.subr.mxu0 0.0
        %6578 = vmatpush2.msra.mxu0 0.0
        %6579 = vmatprep.subr.mxu0 0.0
        %6580 = vmatpush2.msra.mxu0 0.0
        %6581 = vmatprep.subr.mxu0 0.0
        %6582 = vmatpush2.msra.mxu0 0.0
        %6583 = vmatprep.mubr.f32.mxu0 0.0
        %6584 = vmatmul.mubr.f32.gmra.mxu0 %v6517
        %v6585 = vpop.f32.mrf.mxu0
        %v6586 = vadd.f32 0.0, %v6585
        %v6587 = vpop.f32.mrf.mxu0
        %v6588 = vadd.f32 0.0, %v6587
        %6589 = vdwg.mxu0
        %v6590 = vadd.f32 %v6510, %v6586
        %v6591 = vadd.f32 %v6511, %v6588
        %6592 = vrot.lane.b32.xlu0 %v6157, 127
        %v6593 = vpop.permute.xlu0 %6592
        %6594 = vrot.lane.b32.xlu0 %v6158, 127
        %v6595 = vpop.permute.xlu0 %6594
        %v6596 = vsel %vm1081, %v6593, %v6595
        %v6600 = vsel %vm1081, %v6595, %v6593
        %v6601 = vmul.f32 %v6596, %v5770
        %v6602 = vmul.f32 %v6600, %v5774
        %s6603 = scalar_lea.vmem %s7, 40
        %v6604 = vld [vmem:[%s6603] sm:$0xff]
        %v6606 = vsel %vm1611, %v6604, 0
        %6608 = vmatprep.subr.mxu0 0.0
        %6609 = vmatpush1.msra.mxu0 0.0
        %6610 = vmatprep.subr.mxu0 0.0
        %6611 = vmatpush1.msra.mxu0 0.0
        %6612 = vmatprep.subr.mxu0 0.0
        %6613 = vmatpush1.msra.mxu0 0.0
        %6614 = vmatprep.subr.mxu0 0.0
        %6615 = vmatpush1.msra.mxu0 0.0
        %6616 = vmatprep.subr.mxu0 0.0
        %6617 = vmatpush1.msra.mxu0 0.0
        %6618 = vmatprep.subr.mxu0 0.0
        %6619 = vmatpush1.msra.mxu0 0.0
        %6620 = vmatprep.subr.mxu0 0.0
        %6621 = vmatpush1.msra.mxu0 0.0
        %6622 = vmatprep.subr.mxu0 0.0
        %6623 = vmatpush1.msra.mxu0 0.0
        %6624 = vmatprep.subr.mxu0 0.0
        %6625 = vmatpush1.msra.mxu0 0.0
        %6626 = vmatprep.subr.mxu0 0.0
        %6627 = vmatpush1.msra.mxu0 0.0
        %6628 = vmatprep.subr.mxu0 0.0
        %6629 = vmatpush1.msra.mxu0 0.0
        %6630 = vmatprep.subr.mxu0 0.0
        %6631 = vmatpush1.msra.mxu0 0.0
        %6632 = vmatprep.subr.mxu0 0.0
        %6633 = vmatpush1.msra.mxu0 0.0
        %6634 = vmatprep.subr.mxu0 0.0
        %6635 = vmatpush1.msra.mxu0 0.0
        %6636 = vmatprep.subr.mxu0 0.0
        %6637 = vmatpush1.msra.mxu0 0.0
        %6638 = vmatprep.subr.mxu0 %v6602
        %6639 = vmatpush1.msra.mxu0 %v6601
        %6640 = vmatprep.subr.mxu0 0.0
        %6641 = vmatpush2.msra.mxu0 0.0
        %6642 = vmatprep.subr.mxu0 0.0
        %6643 = vmatpush2.msra.mxu0 0.0
        %6644 = vmatprep.subr.mxu0 0.0
        %6645 = vmatpush2.msra.mxu0 0.0
        %6646 = vmatprep.subr.mxu0 0.0
        %6647 = vmatpush2.msra.mxu0 0.0
        %6648 = vmatprep.subr.mxu0 0.0
        %6649 = vmatpush2.msra.mxu0 0.0
        %6650 = vmatprep.subr.mxu0 0.0
        %6651 = vmatpush2.msra.mxu0 0.0
        %6652 = vmatprep.subr.mxu0 0.0
        %6653 = vmatpush2.msra.mxu0 0.0
        %6654 = vmatprep.subr.mxu0 0.0
        %6655 = vmatpush2.msra.mxu0 0.0
        %6656 = vmatprep.subr.mxu0 0.0
        %6657 = vmatpush2.msra.mxu0 0.0
        %6658 = vmatprep.subr.mxu0 0.0
        %6659 = vmatpush2.msra.mxu0 0.0
        %6660 = vmatprep.subr.mxu0 0.0
        %6661 = vmatpush2.msra.mxu0 0.0
        %6662 = vmatprep.subr.mxu0 0.0
        %6663 = vmatpush2.msra.mxu0 0.0
        %6664 = vmatprep.subr.mxu0 0.0
        %6665 = vmatpush2.msra.mxu0 0.0
        %6666 = vmatprep.subr.mxu0 0.0
        %6667 = vmatpush2.msra.mxu0 0.0
        %6668 = vmatprep.subr.mxu0 0.0
        %6669 = vmatpush2.msra.mxu0 0.0
        %6670 = vmatprep.subr.mxu0 0.0
        %6671 = vmatpush2.msra.mxu0 0.0
        %6672 = vmatprep.mubr.f32.mxu0 0.0
        %6673 = vmatmul.mubr.f32.gmra.mxu0 %v6606
        %v6674 = vpop.f32.mrf.mxu0
        %v6675 = vadd.f32 0.0, %v6674
        %v6676 = vpop.f32.mrf.mxu0
        %v6677 = vadd.f32 0.0, %v6676
        %6678 = vdwg.mxu0
        %v6679 = vadd.f32 %v6590, %v6675
        %v6680 = vadd.f32 %v6591, %v6677
        %6681 = vrot.lane.b32.xlu0 %v6157, 115
        %v6682 = vpop.permute.xlu0 %6681
        %6683 = vrot.lane.b32.xlu0 %v6158, 115
        %v6684 = vpop.permute.xlu0 %6683
        %v6685 = vsel %vm5859, %v6682, %v6684
        %v6689 = vsel %vm5859, %v6684, %v6682
        %v6690 = vmul.f32 %v6685, %v5868
        %v6691 = vmul.f32 %v6689, %v5872
        %s6692 = scalar_lea.vmem %s7, 48
        %v6693 = vld [vmem:[%s6692] sm:$0xff]
        %v6695 = vsel %vm1611, %v6693, 0
        %6697 = vmatprep.subr.mxu0 0.0
        %6698 = vmatpush1.msra.mxu0 0.0
        %6699 = vmatprep.subr.mxu0 0.0
        %6700 = vmatpush1.msra.mxu0 0.0
        %6701 = vmatprep.subr.mxu0 0.0
        %6702 = vmatpush1.msra.mxu0 0.0
        %6703 = vmatprep.subr.mxu0 0.0
        %6704 = vmatpush1.msra.mxu0 0.0
        %6705 = vmatprep.subr.mxu0 0.0
        %6706 = vmatpush1.msra.mxu0 0.0
        %6707 = vmatprep.subr.mxu0 0.0
        %6708 = vmatpush1.msra.mxu0 0.0
        %6709 = vmatprep.subr.mxu0 0.0
        %6710 = vmatpush1.msra.mxu0 0.0
        %6711 = vmatprep.subr.mxu0 0.0
        %6712 = vmatpush1.msra.mxu0 0.0
        %6713 = vmatprep.subr.mxu0 0.0
        %6714 = vmatpush1.msra.mxu0 0.0
        %6715 = vmatprep.subr.mxu0 0.0
        %6716 = vmatpush1.msra.mxu0 0.0
        %6717 = vmatprep.subr.mxu0 0.0
        %6718 = vmatpush1.msra.mxu0 0.0
        %6719 = vmatprep.subr.mxu0 0.0
        %6720 = vmatpush1.msra.mxu0 0.0
        %6721 = vmatprep.subr.mxu0 0.0
        %6722 = vmatpush1.msra.mxu0 0.0
        %6723 = vmatprep.subr.mxu0 0.0
        %6724 = vmatpush1.msra.mxu0 0.0
        %6725 = vmatprep.subr.mxu0 0.0
        %6726 = vmatpush1.msra.mxu0 0.0
        %6727 = vmatprep.subr.mxu0 %v6691
        %6728 = vmatpush1.msra.mxu0 %v6690
        %6729 = vmatprep.subr.mxu0 0.0
        %6730 = vmatpush2.msra.mxu0 0.0
        %6731 = vmatprep.subr.mxu0 0.0
        %6732 = vmatpush2.msra.mxu0 0.0
        %6733 = vmatprep.subr.mxu0 0.0
        %6734 = vmatpush2.msra.mxu0 0.0
        %6735 = vmatprep.subr.mxu0 0.0
        %6736 = vmatpush2.msra.mxu0 0.0
        %6737 = vmatprep.subr.mxu0 0.0
        %6738 = vmatpush2.msra.mxu0 0.0
        %6739 = vmatprep.subr.mxu0 0.0
        %6740 = vmatpush2.msra.mxu0 0.0
        %6741 = vmatprep.subr.mxu0 0.0
        %6742 = vmatpush2.msra.mxu0 0.0
        %6743 = vmatprep.subr.mxu0 0.0
        %6744 = vmatpush2.msra.mxu0 0.0
        %6745 = vmatprep.subr.mxu0 0.0
        %6746 = vmatpush2.msra.mxu0 0.0
        %6747 = vmatprep.subr.mxu0 0.0
        %6748 = vmatpush2.msra.mxu0 0.0
        %6749 = vmatprep.subr.mxu0 0.0
        %6750 = vmatpush2.msra.mxu0 0.0
        %6751 = vmatprep.subr.mxu0 0.0
        %6752 = vmatpush2.msra.mxu0 0.0
        %6753 = vmatprep.subr.mxu0 0.0
        %6754 = vmatpush2.msra.mxu0 0.0
        %6755 = vmatprep.subr.mxu0 0.0
        %6756 = vmatpush2.msra.mxu0 0.0
        %6757 = vmatprep.subr.mxu0 0.0
        %6758 = vmatpush2.msra.mxu0 0.0
        %6759 = vmatprep.subr.mxu0 0.0
        %6760 = vmatpush2.msra.mxu0 0.0
        %6761 = vmatprep.mubr.f32.mxu0 0.0
        %6762 = vmatmul.mubr.f32.gmra.mxu0 %v6695
        %v6763 = vpop.f32.mrf.mxu0
        %v6764 = vadd.f32 0.0, %v6763
        %v6765 = vpop.f32.mrf.mxu0
        %v6766 = vadd.f32 0.0, %v6765
        %6767 = vdwg.mxu0
        %v6768 = vadd.f32 %v6679, %v6764
        %v6769 = vadd.f32 %v6680, %v6766
        %6770 = vrot.lane.b32.xlu0 %v6157, 114
        %v6771 = vpop.permute.xlu0 %6770
        %6772 = vrot.lane.b32.xlu0 %v6158, 114
        %v6773 = vpop.permute.xlu0 %6772
        %v6774 = vsel %vm5957, %v6771, %v6773
        %v6778 = vsel %vm5957, %v6773, %v6771
        %v6779 = vmul.f32 %v6774, %v5966
        %v6780 = vmul.f32 %v6778, %v5970
        %s6781 = scalar_lea.vmem %s7, 56
        %v6782 = vld [vmem:[%s6781] sm:$0xff]
        %v6784 = vsel %vm1611, %v6782, 0
        %6786 = vmatprep.subr.mxu0 0.0
        %6787 = vmatpush1.msra.mxu0 0.0
        %6788 = vmatprep.subr.mxu0 0.0
        %6789 = vmatpush1.msra.mxu0 0.0
        %6790 = vmatprep.subr.mxu0 0.0
        %6791 = vmatpush1.msra.mxu0 0.0
        %6792 = vmatprep.subr.mxu0 0.0
        %6793 = vmatpush1.msra.mxu0 0.0
        %6794 = vmatprep.subr.mxu0 0.0
        %6795 = vmatpush1.msra.mxu0 0.0
        %6796 = vmatprep.subr.mxu0 0.0
        %6797 = vmatpush1.msra.mxu0 0.0
        %6798 = vmatprep.subr.mxu0 0.0
        %6799 = vmatpush1.msra.mxu0 0.0
        %6800 = vmatprep.subr.mxu0 0.0
        %6801 = vmatpush1.msra.mxu0 0.0
        %6802 = vmatprep.subr.mxu0 0.0
        %6803 = vmatpush1.msra.mxu0 0.0
        %6804 = vmatprep.subr.mxu0 0.0
        %6805 = vmatpush1.msra.mxu0 0.0
        %6806 = vmatprep.subr.mxu0 0.0
        %6807 = vmatpush1.msra.mxu0 0.0
        %6808 = vmatprep.subr.mxu0 0.0
        %6809 = vmatpush1.msra.mxu0 0.0
        %6810 = vmatprep.subr.mxu0 0.0
        %6811 = vmatpush1.msra.mxu0 0.0
        %6812 = vmatprep.subr.mxu0 0.0
        %6813 = vmatpush1.msra.mxu0 0.0
        %6814 = vmatprep.subr.mxu0 0.0
        %6815 = vmatpush1.msra.mxu0 0.0
        %6816 = vmatprep.subr.mxu0 %v6780
        %6817 = vmatpush1.msra.mxu0 %v6779
        %6818 = vmatprep.subr.mxu0 0.0
        %6819 = vmatpush2.msra.mxu0 0.0
        %6820 = vmatprep.subr.mxu0 0.0
        %6821 = vmatpush2.msra.mxu0 0.0
        %6822 = vmatprep.subr.mxu0 0.0
        %6823 = vmatpush2.msra.mxu0 0.0
        %6824 = vmatprep.subr.mxu0 0.0
        %6825 = vmatpush2.msra.mxu0 0.0
        %6826 = vmatprep.subr.mxu0 0.0
        %6827 = vmatpush2.msra.mxu0 0.0
        %6828 = vmatprep.subr.mxu0 0.0
        %6829 = vmatpush2.msra.mxu0 0.0
        %6830 = vmatprep.subr.mxu0 0.0
        %6831 = vmatpush2.msra.mxu0 0.0
        %6832 = vmatprep.subr.mxu0 0.0
        %6833 = vmatpush2.msra.mxu0 0.0
        %6834 = vmatprep.subr.mxu0 0.0
        %6835 = vmatpush2.msra.mxu0 0.0
        %6836 = vmatprep.subr.mxu0 0.0
        %6837 = vmatpush2.msra.mxu0 0.0
        %6838 = vmatprep.subr.mxu0 0.0
        %6839 = vmatpush2.msra.mxu0 0.0
        %6840 = vmatprep.subr.mxu0 0.0
        %6841 = vmatpush2.msra.mxu0 0.0
        %6842 = vmatprep.subr.mxu0 0.0
        %6843 = vmatpush2.msra.mxu0 0.0
        %6844 = vmatprep.subr.mxu0 0.0
        %6845 = vmatpush2.msra.mxu0 0.0
        %6846 = vmatprep.subr.mxu0 0.0
        %6847 = vmatpush2.msra.mxu0 0.0
        %6848 = vmatprep.subr.mxu0 0.0
        %6849 = vmatpush2.msra.mxu0 0.0
        %6850 = vmatprep.mubr.f32.mxu0 0.0
        %6851 = vmatmul.mubr.f32.gmra.mxu0 %v6784
        %v6852 = vpop.f32.mrf.mxu0
        %v6853 = vadd.f32 0.0, %v6852
        %v6854 = vpop.f32.mrf.mxu0
        %v6855 = vadd.f32 0.0, %v6854
        %6856 = vdwg.mxu0
        %v6857 = vadd.f32 %v6768, %v6853
        %v6858 = vadd.f32 %v6769, %v6855
        %6859 = vrot.lane.b32.xlu0 %v6157, 113
        %v6860 = vpop.permute.xlu0 %6859
        %6861 = vrot.lane.b32.xlu0 %v6158, 113
        %v6862 = vpop.permute.xlu0 %6861
        %v6863 = vsel %vm6055, %v6860, %v6862
        %v6867 = vsel %vm6055, %v6862, %v6860
        %v6868 = vmul.f32 %v6863, %v6064
        %v6869 = vmul.f32 %v6867, %v6068
        %s6870 = scalar_lea.vmem %s7, 64
        %v6871 = vld [vmem:[%s6870] sm:$0xff]
        %v6873 = vsel %vm1611, %v6871, 0
        %6875 = vmatprep.subr.mxu0 0.0
        %6876 = vmatpush1.msra.mxu0 0.0
        %6877 = vmatprep.subr.mxu0 0.0
        %6878 = vmatpush1.msra.mxu0 0.0
        %6879 = vmatprep.subr.mxu0 0.0
        %6880 = vmatpush1.msra.mxu0 0.0
        %6881 = vmatprep.subr.mxu0 0.0
        %6882 = vmatpush1.msra.mxu0 0.0
        %6883 = vmatprep.subr.mxu0 0.0
        %6884 = vmatpush1.msra.mxu0 0.0
        %6885 = vmatprep.subr.mxu0 0.0
        %6886 = vmatpush1.msra.mxu0 0.0
        %6887 = vmatprep.subr.mxu0 0.0
        %6888 = vmatpush1.msra.mxu0 0.0
        %6889 = vmatprep.subr.mxu0 0.0
        %6890 = vmatpush1.msra.mxu0 0.0
        %6891 = vmatprep.subr.mxu0 0.0
        %6892 = vmatpush1.msra.mxu0 0.0
        %6893 = vmatprep.subr.mxu0 0.0
        %6894 = vmatpush1.msra.mxu0 0.0
        %6895 = vmatprep.subr.mxu0 0.0
        %6896 = vmatpush1.msra.mxu0 0.0
        %6897 = vmatprep.subr.mxu0 0.0
        %6898 = vmatpush1.msra.mxu0 0.0
        %6899 = vmatprep.subr.mxu0 0.0
        %6900 = vmatpush1.msra.mxu0 0.0
        %6901 = vmatprep.subr.mxu0 0.0
        %6902 = vmatpush1.msra.mxu0 0.0
        %6903 = vmatprep.subr.mxu0 0.0
        %6904 = vmatpush1.msra.mxu0 0.0
        %6905 = vmatprep.subr.mxu0 %v6869
        %6906 = vmatpush1.msra.mxu0 %v6868
        %6907 = vmatprep.subr.mxu0 0.0
        %6908 = vmatpush2.msra.mxu0 0.0
        %6909 = vmatprep.subr.mxu0 0.0
        %6910 = vmatpush2.msra.mxu0 0.0
        %6911 = vmatprep.subr.mxu0 0.0
        %6912 = vmatpush2.msra.mxu0 0.0
        %6913 = vmatprep.subr.mxu0 0.0
        %6914 = vmatpush2.msra.mxu0 0.0
        %6915 = vmatprep.subr.mxu0 0.0
        %6916 = vmatpush2.msra.mxu0 0.0
        %6917 = vmatprep.subr.mxu0 0.0
        %6918 = vmatpush2.msra.mxu0 0.0
        %6919 = vmatprep.subr.mxu0 0.0
        %6920 = vmatpush2.msra.mxu0 0.0
        %6921 = vmatprep.subr.mxu0 0.0
        %6922 = vmatpush2.msra.mxu0 0.0
        %6923 = vmatprep.subr.mxu0 0.0
        %6924 = vmatpush2.msra.mxu0 0.0
        %6925 = vmatprep.subr.mxu0 0.0
        %6926 = vmatpush2.msra.mxu0 0.0
        %6927 = vmatprep.subr.mxu0 0.0
        %6928 = vmatpush2.msra.mxu0 0.0
        %6929 = vmatprep.subr.mxu0 0.0
        %6930 = vmatpush2.msra.mxu0 0.0
        %6931 = vmatprep.subr.mxu0 0.0
        %6932 = vmatpush2.msra.mxu0 0.0
        %6933 = vmatprep.subr.mxu0 0.0
        %6934 = vmatpush2.msra.mxu0 0.0
        %6935 = vmatprep.subr.mxu0 0.0
        %6936 = vmatpush2.msra.mxu0 0.0
        %6937 = vmatprep.subr.mxu0 0.0
        %6938 = vmatpush2.msra.mxu0 0.0
        %6939 = vmatprep.mubr.f32.mxu0 0.0
        %6940 = vmatmul.mubr.f32.gmra.mxu0 %v6873
        %v6941 = vpop.f32.mrf.mxu0
        %v6942 = vadd.f32 0.0, %v6941
        %v6943 = vpop.f32.mrf.mxu0
        %v6944 = vadd.f32 0.0, %v6943
        %6945 = vdwg.mxu0
        %v6946 = vadd.f32 %v6857, %v6942
        %v6947 = vadd.f32 %v6858, %v6944
        %v6948 = vld [vmem:[%s8] sm:$0xff]
        %6950 = vset.pattern.permute.xlu0 0
        %6951 = vperm.xlu0 %6950, %v6948
        %v6952 = vpop.permute.xlu0 %6951
        %v6954 = vadd.f32 %v6946, %v6952
        %v6955 = vadd.f32 %v6947, %v6952
        %v6956 = vmax.f32 %v6954, 0.0
        %v6957 = vmax.f32 %v6955, 0.0
        %6960 = vrot.lane.b32.xlu0 %v6956, 127
        %v6961 = vpop.permute.xlu0 %6960
        %6962 = vrot.lane.b32.xlu0 %v6957, 127
        %v6963 = vpop.permute.xlu0 %6962
        %v6964 = vsel %vm1081, %v6961, %v6963
        %v6968 = vsel %vm1081, %v6963, %v6961
        %v6969 = vmax.f32 %v6956, %v6964
        %v6970 = vmax.f32 %v6957, %v6968
        %6973 = vrot.lane.b32.xlu0 %v6969, 114
        %v6974 = vpop.permute.xlu0 %6973
        %6975 = vrot.lane.b32.xlu0 %v6970, 114
        %v6976 = vpop.permute.xlu0 %6975
        %v6977 = vsel %vm5957, %v6974, %v6976
        %v6981 = vsel %vm5957, %v6976, %v6974
        %v6982 = vmax.f32 %v6969, %v6977
        %v6983 = vmax.f32 %v6970, %v6981
        %v6984 = vld [vmem:[%s14] sm:$0xff]
        %v6985 = vld [vmem:[%s14 + $0x8] sm:$0xff]
        %v6986 = vld [vmem:[%s14 + $0x10] sm:$0xff]
        %v6987 = vld [vmem:[%s14 + $0x18] sm:$0xff]
        %v6988 = vld [vmem:[%s14 + $0x20] sm:$0xff]
        %v6989 = vld [vmem:[%s14 + $0x28] sm:$0xff]
        %v6990 = vld [vmem:[%s14 + $0x30] sm:$0xff]
        %v6991 = vld [vmem:[%s14 + $0x38] sm:$0xff]
        %v6992 = vld [vmem:[%s14 + $0x40] sm:$0xff]
        %v6993 = vld [vmem:[%s14 + $0x48] sm:$0xff]
        %v6994 = vld [vmem:[%s14 + $0x50] sm:$0xff]
        %v6995 = vld [vmem:[%s14 + $0x58] sm:$0xff]
        %v6996 = vld [vmem:[%s14 + $0x60] sm:$0xff]
        %v6997 = vld [vmem:[%s14 + $0x68] sm:$0xff]
        %v6998 = vld [vmem:[%s14 + $0x70] sm:$0xff]
        %v6999 = vld [vmem:[%s14 + $0x78] sm:$0xff]
        %v7000 = vld [vmem:[%s14 + $0x80] sm:$0xff]
        %v7001 = vld [vmem:[%s14 + $0x88] sm:$0xff]
        %v7002 = vld [vmem:[%s14 + $0x90] sm:$0xff]
        %v7003 = vld [vmem:[%s14 + $0x98] sm:$0xff]
        %v7004 = vld [vmem:[%s14 + $0xa0] sm:$0xff]
        %v7005 = vld [vmem:[%s14 + $0xa8] sm:$0xff]
        %v7006 = vld [vmem:[%s14 + $0xb0] sm:$0xff]
        %v7007 = vld [vmem:[%s14 + $0xb8] sm:$0xff]
        %v7008 = vld [vmem:[%s14 + $0xc0] sm:$0xff]
        %v7009 = vld [vmem:[%s14 + $0xc8] sm:$0xff]
        %v7010 = vld [vmem:[%s14 + $0xd0] sm:$0xff]
        %v7011 = vld [vmem:[%s14 + $0xd8] sm:$0xff]
        %v7012 = vld [vmem:[%s14 + $0xe0] sm:$0xff]
        %v7013 = vld [vmem:[%s14 + $0xe8] sm:$0xff]
        %v7014 = vld [vmem:[%s14 + $0xf0] sm:$0xff]
        %v7015 = vld [vmem:[%s14 + $0xf8] sm:$0xff]
        %7016 = vmatprep.subr.mxu0 0.0
        %7017 = vmatpush1.msra.mxu0 %v6999
        %7018 = vmatprep.subr.mxu0 0.0
        %7019 = vmatpush1.msra.mxu0 %v6998
        %7020 = vmatprep.subr.mxu0 0.0
        %7021 = vmatpush1.msra.mxu0 %v6997
        %7022 = vmatprep.subr.mxu0 0.0
        %7023 = vmatpush1.msra.mxu0 %v6996
        %7024 = vmatprep.subr.mxu0 0.0
        %7025 = vmatpush1.msra.mxu0 %v6995
        %7026 = vmatprep.subr.mxu0 0.0
        %7027 = vmatpush1.msra.mxu0 %v6994
        %7028 = vmatprep.subr.mxu0 0.0
        %7029 = vmatpush1.msra.mxu0 %v6993
        %7030 = vmatprep.subr.mxu0 0.0
        %7031 = vmatpush1.msra.mxu0 %v6992
        %7032 = vmatprep.subr.mxu0 0.0
        %7033 = vmatpush1.msra.mxu0 %v6991
        %7034 = vmatprep.subr.mxu0 0.0
        %7035 = vmatpush1.msra.mxu0 %v6990
        %7036 = vmatprep.subr.mxu0 0.0
        %7037 = vmatpush1.msra.mxu0 %v6989
        %7038 = vmatprep.subr.mxu0 0.0
        %7039 = vmatpush1.msra.mxu0 %v6988
        %7040 = vmatprep.subr.mxu0 0.0
        %7041 = vmatpush1.msra.mxu0 %v6987
        %7042 = vmatprep.subr.mxu0 0.0
        %7043 = vmatpush1.msra.mxu0 %v6986
        %7044 = vmatprep.subr.mxu0 0.0
        %7045 = vmatpush1.msra.mxu0 %v6985
        %7046 = vmatprep.subr.mxu0 0.0
        %7047 = vmatpush1.msra.mxu0 %v6984
        %7048 = vmatprep.subr.mxu0 0.0
        %7049 = vmatpush2.msra.mxu0 %v7015
        %7050 = vmatprep.subr.mxu0 0.0
        %7051 = vmatpush2.msra.mxu0 %v7014
        %7052 = vmatprep.subr.mxu0 0.0
        %7053 = vmatpush2.msra.mxu0 %v7013
        %7054 = vmatprep.subr.mxu0 0.0
        %7055 = vmatpush2.msra.mxu0 %v7012
        %7056 = vmatprep.subr.mxu0 0.0
        %7057 = vmatpush2.msra.mxu0 %v7011
        %7058 = vmatprep.subr.mxu0 0.0
        %7059 = vmatpush2.msra.mxu0 %v7010
        %7060 = vmatprep.subr.mxu0 0.0
        %7061 = vmatpush2.msra.mxu0 %v7009
        %7062 = vmatprep.subr.mxu0 0.0
        %7063 = vmatpush2.msra.mxu0 %v7008
        %7064 = vmatprep.subr.mxu0 0.0
        %7065 = vmatpush2.msra.mxu0 %v7007
        %7066 = vmatprep.subr.mxu0 0.0
        %7067 = vmatpush2.msra.mxu0 %v7006
        %7068 = vmatprep.subr.mxu0 0.0
        %7069 = vmatpush2.msra.mxu0 %v7005
        %7070 = vmatprep.subr.mxu0 0.0
        %7071 = vmatpush2.msra.mxu0 %v7004
        %7072 = vmatprep.subr.mxu0 0.0
        %7073 = vmatpush2.msra.mxu0 %v7003
        %7074 = vmatprep.subr.mxu0 0.0
        %7075 = vmatpush2.msra.mxu0 %v7002
        %7076 = vmatprep.subr.mxu0 0.0
        %7077 = vmatpush2.msra.mxu0 %v7001
        %7078 = vmatprep.subr.mxu0 0.0
        %7079 = vmatpush2.msra.mxu0 %v7000
        %7080 = vmatprep.mubr.f32.mxu0 %v6983
        %7081 = vmatmul.mubr.f32.gmra.mxu0 %v6982
        %v7082 = vpop.f32.mrf.mxu0
        %v7083 = vadd.f32 0.0, %v7082
        %v7084 = vpop.f32.mrf.mxu0
        %7085 = vdwg.mxu0
        %v7086 = vld [vmem:[%s10] sm:$0x1]
        %v7087 = vld [vmem:[#allocation2] sm:$0xff]
        %v7088 = vld [vmem:[#allocation2 + $0x8] sm:$0xff]
        %v7089 = vld [vmem:[#allocation2 + $0x10] sm:$0xff]
        %v7090 = vld [vmem:[#allocation2 + $0x18] sm:$0xff]
        %v7091 = vld [vmem:[#allocation2 + $0x20] sm:$0xff]
        %v7092 = vld [vmem:[#allocation2 + $0x28] sm:$0xff]
        %v7093 = vld [vmem:[#allocation2 + $0x30] sm:$0xff]
        %v7094 = vld [vmem:[#allocation2 + $0x38] sm:$0xff]
        %v7095 = vld [vmem:[#allocation2 + $0x40] sm:$0xff]
        %v7096 = vld [vmem:[#allocation2 + $0x48] sm:$0xff]
        %v7097 = vld [vmem:[#allocation2 + $0x50] sm:$0xff]
        %v7098 = vld [vmem:[#allocation2 + $0x58] sm:$0xff]
        %v7099 = vld [vmem:[#allocation2 + $0x60] sm:$0xff]
        %v7100 = vld [vmem:[#allocation2 + $0x68] sm:$0xff]
        %v7101 = vld [vmem:[#allocation2 + $0x70] sm:$0xff]
        %v7102 = vld [vmem:[#allocation2 + $0x78] sm:$0xff]
        %7103 = vmatprep.subr.mxu0 0.0
        %7104 = vmatpush1.msra.mxu0 %v7102
        %7105 = vmatprep.subr.mxu0 0.0
        %7106 = vmatpush1.msra.mxu0 %v7101
        %7107 = vmatprep.subr.mxu0 0.0
        %7108 = vmatpush1.msra.mxu0 %v7100
        %7109 = vmatprep.subr.mxu0 0.0
        %7110 = vmatpush1.msra.mxu0 %v7099
        %7111 = vmatprep.subr.mxu0 0.0
        %7112 = vmatpush1.msra.mxu0 %v7098
        %7113 = vmatprep.subr.mxu0 0.0
        %7114 = vmatpush1.msra.mxu0 %v7097
        %7115 = vmatprep.subr.mxu0 0.0
        %7116 = vmatpush1.msra.mxu0 %v7096
        %7117 = vmatprep.subr.mxu0 0.0
        %7118 = vmatpush1.msra.mxu0 %v7095
        %7119 = vmatprep.subr.mxu0 0.0
        %7120 = vmatpush1.msra.mxu0 %v7094
        %7121 = vmatprep.subr.mxu0 0.0
        %7122 = vmatpush1.msra.mxu0 %v7093
        %7123 = vmatprep.subr.mxu0 0.0
        %7124 = vmatpush1.msra.mxu0 %v7092
        %7125 = vmatprep.subr.mxu0 0.0
        %7126 = vmatpush1.msra.mxu0 %v7091
        %7127 = vmatprep.subr.mxu0 0.0
        %7128 = vmatpush1.msra.mxu0 %v7090
        %7129 = vmatprep.subr.mxu0 0.0
        %7130 = vmatpush1.msra.mxu0 %v7089
        %7131 = vmatprep.subr.mxu0 0.0
        %7132 = vmatpush1.msra.mxu0 %v7088
        %7133 = vmatprep.subr.mxu0 0.0
        %7134 = vmatpush1.msra.mxu0 %v7087
        %7135 = vmatprep.subr.mxu0 0.0
        %7136 = vmatpush2.msra.mxu0 0.0
        %7137 = vmatprep.subr.mxu0 0.0
        %7138 = vmatpush2.msra.mxu0 0.0
        %7139 = vmatprep.subr.mxu0 0.0
        %7140 = vmatpush2.msra.mxu0 0.0
        %7141 = vmatprep.subr.mxu0 0.0
        %7142 = vmatpush2.msra.mxu0 0.0
        %7143 = vmatprep.subr.mxu0 0.0
        %7144 = vmatpush2.msra.mxu0 0.0
        %7145 = vmatprep.subr.mxu0 0.0
        %7146 = vmatpush2.msra.mxu0 0.0
        %7147 = vmatprep.subr.mxu0 0.0
        %7148 = vmatpush2.msra.mxu0 0.0
        %7149 = vmatprep.subr.mxu0 0.0
        %7150 = vmatpush2.msra.mxu0 0.0
        %7151 = vmatprep.subr.mxu0 0.0
        %7152 = vmatpush2.msra.mxu0 0.0
        %7153 = vmatprep.subr.mxu0 0.0
        %7154 = vmatpush2.msra.mxu0 0.0
        %7155 = vmatprep.subr.mxu0 0.0
        %7156 = vmatpush2.msra.mxu0 0.0
        %7157 = vmatprep.subr.mxu0 0.0
        %7158 = vmatpush2.msra.mxu0 0.0
        %7159 = vmatprep.subr.mxu0 0.0
        %7160 = vmatpush2.msra.mxu0 0.0
        %7161 = vmatprep.subr.mxu0 0.0
        %7162 = vmatpush2.msra.mxu0 0.0
        %7163 = vmatprep.subr.mxu0 0.0
        %7164 = vmatpush2.msra.mxu0 0.0
        %7165 = vmatprep.subr.mxu0 0.0
        %7166 = vmatpush2.msra.mxu0 0.0
        %7167 = vmatprep.mubr.f32.mxu0 0.0
        %7168 = vmatmul.mubr.f32.gmra.mxu0 %v7083
        %v7169 = vpop.f32.mrf.mxu0
        %v7170 = vadd.f32 0.0, %v7169
        %v7171 = vpop.f32.mrf.mxu0
        %7172 = vdwg.mxu0
        %v7173 = vadd.f32 %v7086, %v7170
        %s7174 = scalar_lea.vmem [#allocation2], 128
        %v7175 = vld [vmem:[%s7174] sm:$0xff]
        %v7176 = vld [vmem:[%s7174 + $0x8] sm:$0xff]
        %v7177 = vld [vmem:[%s7174 + $0x10] sm:$0xff]
        %v7178 = vld [vmem:[%s7174 + $0x18] sm:$0xff]
        %v7179 = vld [vmem:[%s7174 + $0x20] sm:$0xff]
        %v7180 = vld [vmem:[%s7174 + $0x28] sm:$0xff]
        %v7181 = vld [vmem:[%s7174 + $0x30] sm:$0xff]
        %v7182 = vld [vmem:[%s7174 + $0x38] sm:$0xff]
        %v7183 = vld [vmem:[%s7174 + $0x40] sm:$0xff]
        %v7184 = vld [vmem:[%s7174 + $0x48] sm:$0xff]
        %v7185 = vld [vmem:[%s7174 + $0x50] sm:$0xff]
        %v7186 = vld [vmem:[%s7174 + $0x58] sm:$0xff]
        %v7187 = vld [vmem:[%s7174 + $0x60] sm:$0xff]
        %v7188 = vld [vmem:[%s7174 + $0x68] sm:$0xff]
        %v7189 = vld [vmem:[%s7174 + $0x70] sm:$0xff]
        %v7190 = vld [vmem:[%s7174 + $0x78] sm:$0xff]
        %v7192 = vrot.slane %v7083, 1
        %7194 = vmatprep.subr.mxu0 0.0
        %7195 = vmatpush1.msra.mxu0 %v7190
        %7196 = vmatprep.subr.mxu0 0.0
        %7197 = vmatpush1.msra.mxu0 %v7189
        %7198 = vmatprep.subr.mxu0 0.0
        %7199 = vmatpush1.msra.mxu0 %v7188
        %7200 = vmatprep.subr.mxu0 0.0
        %7201 = vmatpush1.msra.mxu0 %v7187
        %7202 = vmatprep.subr.mxu0 0.0
        %7203 = vmatpush1.msra.mxu0 %v7186
        %7204 = vmatprep.subr.mxu0 0.0
        %7205 = vmatpush1.msra.mxu0 %v7185
        %7206 = vmatprep.subr.mxu0 0.0
        %7207 = vmatpush1.msra.mxu0 %v7184
        %7208 = vmatprep.subr.mxu0 0.0
        %7209 = vmatpush1.msra.mxu0 %v7183
        %7210 = vmatprep.subr.mxu0 0.0
        %7211 = vmatpush1.msra.mxu0 %v7182
        %7212 = vmatprep.subr.mxu0 0.0
        %7213 = vmatpush1.msra.mxu0 %v7181
        %7214 = vmatprep.subr.mxu0 0.0
        %7215 = vmatpush1.msra.mxu0 %v7180
        %7216 = vmatprep.subr.mxu0 0.0
        %7217 = vmatpush1.msra.mxu0 %v7179
        %7218 = vmatprep.subr.mxu0 0.0
        %7219 = vmatpush1.msra.mxu0 %v7178
        %7220 = vmatprep.subr.mxu0 0.0
        %7221 = vmatpush1.msra.mxu0 %v7177
        %7222 = vmatprep.subr.mxu0 0.0
        %7223 = vmatpush1.msra.mxu0 %v7176
        %7224 = vmatprep.subr.mxu0 0.0
        %7225 = vmatpush1.msra.mxu0 %v7175
        %7226 = vmatprep.subr.mxu0 0.0
        %7227 = vmatpush2.msra.mxu0 0.0
        %7228 = vmatprep.subr.mxu0 0.0
        %7229 = vmatpush2.msra.mxu0 0.0
        %7230 = vmatprep.subr.mxu0 0.0
        %7231 = vmatpush2.msra.mxu0 0.0
        %7232 = vmatprep.subr.mxu0 0.0
        %7233 = vmatpush2.msra.mxu0 0.0
        %7234 = vmatprep.subr.mxu0 0.0
        %7235 = vmatpush2.msra.mxu0 0.0
        %7236 = vmatprep.subr.mxu0 0.0
        %7237 = vmatpush2.msra.mxu0 0.0
        %7238 = vmatprep.subr.mxu0 0.0
        %7239 = vmatpush2.msra.mxu0 0.0
        %7240 = vmatprep.subr.mxu0 0.0
        %7241 = vmatpush2.msra.mxu0 0.0
        %7242 = vmatprep.subr.mxu0 0.0
        %7243 = vmatpush2.msra.mxu0 0.0
        %7244 = vmatprep.subr.mxu0 0.0
        %7245 = vmatpush2.msra.mxu0 0.0
        %7246 = vmatprep.subr.mxu0 0.0
        %7247 = vmatpush2.msra.mxu0 0.0
        %7248 = vmatprep.subr.mxu0 0.0
        %7249 = vmatpush2.msra.mxu0 0.0
        %7250 = vmatprep.subr.mxu0 0.0
        %7251 = vmatpush2.msra.mxu0 0.0
        %7252 = vmatprep.subr.mxu0 0.0
        %7253 = vmatpush2.msra.mxu0 0.0
        %7254 = vmatprep.subr.mxu0 0.0
        %7255 = vmatpush2.msra.mxu0 0.0
        %7256 = vmatprep.subr.mxu0 0.0
        %7257 = vmatpush2.msra.mxu0 0.0
        %7258 = vmatprep.mubr.f32.mxu0 0.0
        %7259 = vmatmul.mubr.f32.gmra.mxu0 %v7192
        %v7260 = vpop.f32.mrf.mxu0
        %v7261 = vadd.f32 0.0, %v7260
        %v7262 = vpop.f32.mrf.mxu0
        %7263 = vdwg.mxu0
        %v7264 = vadd.f32 %v7173, %v7261
        %s7265 = scalar_lea.vmem [#allocation2], 256
        %v7266 = vld [vmem:[%s7265] sm:$0xff]
        %v7267 = vld [vmem:[%s7265 + $0x8] sm:$0xff]
        %v7268 = vld [vmem:[%s7265 + $0x10] sm:$0xff]
        %v7269 = vld [vmem:[%s7265 + $0x18] sm:$0xff]
        %v7270 = vld [vmem:[%s7265 + $0x20] sm:$0xff]
        %v7271 = vld [vmem:[%s7265 + $0x28] sm:$0xff]
        %v7272 = vld [vmem:[%s7265 + $0x30] sm:$0xff]
        %v7273 = vld [vmem:[%s7265 + $0x38] sm:$0xff]
        %v7274 = vld [vmem:[%s7265 + $0x40] sm:$0xff]
        %v7275 = vld [vmem:[%s7265 + $0x48] sm:$0xff]
        %v7276 = vld [vmem:[%s7265 + $0x50] sm:$0xff]
        %v7277 = vld [vmem:[%s7265 + $0x58] sm:$0xff]
        %v7278 = vld [vmem:[%s7265 + $0x60] sm:$0xff]
        %v7279 = vld [vmem:[%s7265 + $0x68] sm:$0xff]
        %v7280 = vld [vmem:[%s7265 + $0x70] sm:$0xff]
        %v7281 = vld [vmem:[%s7265 + $0x78] sm:$0xff]
        %v7282 = vrot.slane %v7083, 2
        %7284 = vmatprep.subr.mxu0 0.0
        %7285 = vmatpush1.msra.mxu0 %v7281
        %7286 = vmatprep.subr.mxu0 0.0
        %7287 = vmatpush1.msra.mxu0 %v7280
        %7288 = vmatprep.subr.mxu0 0.0
        %7289 = vmatpush1.msra.mxu0 %v7279
        %7290 = vmatprep.subr.mxu0 0.0
        %7291 = vmatpush1.msra.mxu0 %v7278
        %7292 = vmatprep.subr.mxu0 0.0
        %7293 = vmatpush1.msra.mxu0 %v7277
        %7294 = vmatprep.subr.mxu0 0.0
        %7295 = vmatpush1.msra.mxu0 %v7276
        %7296 = vmatprep.subr.mxu0 0.0
        %7297 = vmatpush1.msra.mxu0 %v7275
        %7298 = vmatprep.subr.mxu0 0.0
        %7299 = vmatpush1.msra.mxu0 %v7274
        %7300 = vmatprep.subr.mxu0 0.0
        %7301 = vmatpush1.msra.mxu0 %v7273
        %7302 = vmatprep.subr.mxu0 0.0
        %7303 = vmatpush1.msra.mxu0 %v7272
        %7304 = vmatprep.subr.mxu0 0.0
        %7305 = vmatpush1.msra.mxu0 %v7271
        %7306 = vmatprep.subr.mxu0 0.0
        %7307 = vmatpush1.msra.mxu0 %v7270
        %7308 = vmatprep.subr.mxu0 0.0
        %7309 = vmatpush1.msra.mxu0 %v7269
        %7310 = vmatprep.subr.mxu0 0.0
        %7311 = vmatpush1.msra.mxu0 %v7268
        %7312 = vmatprep.subr.mxu0 0.0
        %7313 = vmatpush1.msra.mxu0 %v7267
        %7314 = vmatprep.subr.mxu0 0.0
        %7315 = vmatpush1.msra.mxu0 %v7266
        %7316 = vmatprep.subr.mxu0 0.0
        %7317 = vmatpush2.msra.mxu0 0.0
        %7318 = vmatprep.subr.mxu0 0.0
        %7319 = vmatpush2.msra.mxu0 0.0
        %7320 = vmatprep.subr.mxu0 0.0
        %7321 = vmatpush2.msra.mxu0 0.0
        %7322 = vmatprep.subr.mxu0 0.0
        %7323 = vmatpush2.msra.mxu0 0.0
        %7324 = vmatprep.subr.mxu0 0.0
        %7325 = vmatpush2.msra.mxu0 0.0
        %7326 = vmatprep.subr.mxu0 0.0
        %7327 = vmatpush2.msra.mxu0 0.0
        %7328 = vmatprep.subr.mxu0 0.0
        %7329 = vmatpush2.msra.mxu0 0.0
        %7330 = vmatprep.subr.mxu0 0.0
        %7331 = vmatpush2.msra.mxu0 0.0
        %7332 = vmatprep.subr.mxu0 0.0
        %7333 = vmatpush2.msra.mxu0 0.0
        %7334 = vmatprep.subr.mxu0 0.0
        %7335 = vmatpush2.msra.mxu0 0.0
        %7336 = vmatprep.subr.mxu0 0.0
        %7337 = vmatpush2.msra.mxu0 0.0
        %7338 = vmatprep.subr.mxu0 0.0
        %7339 = vmatpush2.msra.mxu0 0.0
        %7340 = vmatprep.subr.mxu0 0.0
        %7341 = vmatpush2.msra.mxu0 0.0
        %7342 = vmatprep.subr.mxu0 0.0
        %7343 = vmatpush2.msra.mxu0 0.0
        %7344 = vmatprep.subr.mxu0 0.0
        %7345 = vmatpush2.msra.mxu0 0.0
        %7346 = vmatprep.subr.mxu0 0.0
        %7347 = vmatpush2.msra.mxu0 0.0
        %7348 = vmatprep.mubr.f32.mxu0 0.0
        %7349 = vmatmul.mubr.f32.gmra.mxu0 %v7282
        %v7350 = vpop.f32.mrf.mxu0
        %v7351 = vadd.f32 0.0, %v7350
        %v7352 = vpop.f32.mrf.mxu0
        %7353 = vdwg.mxu0
        %v7354 = vadd.f32 %v7264, %v7351
        %s7355 = scalar_lea.vmem [#allocation2], 384
        %v7356 = vld [vmem:[%s7355] sm:$0xff]
        %v7357 = vld [vmem:[%s7355 + $0x8] sm:$0xff]
        %v7358 = vld [vmem:[%s7355 + $0x10] sm:$0xff]
        %v7359 = vld [vmem:[%s7355 + $0x18] sm:$0xff]
        %v7360 = vld [vmem:[%s7355 + $0x20] sm:$0xff]
        %v7361 = vld [vmem:[%s7355 + $0x28] sm:$0xff]
        %v7362 = vld [vmem:[%s7355 + $0x30] sm:$0xff]
        %v7363 = vld [vmem:[%s7355 + $0x38] sm:$0xff]
        %v7364 = vld [vmem:[%s7355 + $0x40] sm:$0xff]
        %v7365 = vld [vmem:[%s7355 + $0x48] sm:$0xff]
        %v7366 = vld [vmem:[%s7355 + $0x50] sm:$0xff]
        %v7367 = vld [vmem:[%s7355 + $0x58] sm:$0xff]
        %v7368 = vld [vmem:[%s7355 + $0x60] sm:$0xff]
        %v7369 = vld [vmem:[%s7355 + $0x68] sm:$0xff]
        %v7370 = vld [vmem:[%s7355 + $0x70] sm:$0xff]
        %v7371 = vld [vmem:[%s7355 + $0x78] sm:$0xff]
        %v7372 = vrot.slane %v7083, 3
        %7374 = vmatprep.subr.mxu0 0.0
        %7375 = vmatpush1.msra.mxu0 %v7371
        %7376 = vmatprep.subr.mxu0 0.0
        %7377 = vmatpush1.msra.mxu0 %v7370
        %7378 = vmatprep.subr.mxu0 0.0
        %7379 = vmatpush1.msra.mxu0 %v7369
        %7380 = vmatprep.subr.mxu0 0.0
        %7381 = vmatpush1.msra.mxu0 %v7368
        %7382 = vmatprep.subr.mxu0 0.0
        %7383 = vmatpush1.msra.mxu0 %v7367
        %7384 = vmatprep.subr.mxu0 0.0
        %7385 = vmatpush1.msra.mxu0 %v7366
        %7386 = vmatprep.subr.mxu0 0.0
        %7387 = vmatpush1.msra.mxu0 %v7365
        %7388 = vmatprep.subr.mxu0 0.0
        %7389 = vmatpush1.msra.mxu0 %v7364
        %7390 = vmatprep.subr.mxu0 0.0
        %7391 = vmatpush1.msra.mxu0 %v7363
        %7392 = vmatprep.subr.mxu0 0.0
        %7393 = vmatpush1.msra.mxu0 %v7362
        %7394 = vmatprep.subr.mxu0 0.0
        %7395 = vmatpush1.msra.mxu0 %v7361
        %7396 = vmatprep.subr.mxu0 0.0
        %7397 = vmatpush1.msra.mxu0 %v7360
        %7398 = vmatprep.subr.mxu0 0.0
        %7399 = vmatpush1.msra.mxu0 %v7359
        %7400 = vmatprep.subr.mxu0 0.0
        %7401 = vmatpush1.msra.mxu0 %v7358
        %7402 = vmatprep.subr.mxu0 0.0
        %7403 = vmatpush1.msra.mxu0 %v7357
        %7404 = vmatprep.subr.mxu0 0.0
        %7405 = vmatpush1.msra.mxu0 %v7356
        %7406 = vmatprep.subr.mxu0 0.0
        %7407 = vmatpush2.msra.mxu0 0.0
        %7408 = vmatprep.subr.mxu0 0.0
        %7409 = vmatpush2.msra.mxu0 0.0
        %7410 = vmatprep.subr.mxu0 0.0
        %7411 = vmatpush2.msra.mxu0 0.0
        %7412 = vmatprep.subr.mxu0 0.0
        %7413 = vmatpush2.msra.mxu0 0.0
        %7414 = vmatprep.subr.mxu0 0.0
        %7415 = vmatpush2.msra.mxu0 0.0
        %7416 = vmatprep.subr.mxu0 0.0
        %7417 = vmatpush2.msra.mxu0 0.0
        %7418 = vmatprep.subr.mxu0 0.0
        %7419 = vmatpush2.msra.mxu0 0.0
        %7420 = vmatprep.subr.mxu0 0.0
        %7421 = vmatpush2.msra.mxu0 0.0
        %7422 = vmatprep.subr.mxu0 0.0
        %7423 = vmatpush2.msra.mxu0 0.0
        %7424 = vmatprep.subr.mxu0 0.0
        %7425 = vmatpush2.msra.mxu0 0.0
        %7426 = vmatprep.subr.mxu0 0.0
        %7427 = vmatpush2.msra.mxu0 0.0
        %7428 = vmatprep.subr.mxu0 0.0
        %7429 = vmatpush2.msra.mxu0 0.0
        %7430 = vmatprep.subr.mxu0 0.0
        %7431 = vmatpush2.msra.mxu0 0.0
        %7432 = vmatprep.subr.mxu0 0.0
        %7433 = vmatpush2.msra.mxu0 0.0
        %7434 = vmatprep.subr.mxu0 0.0
        %7435 = vmatpush2.msra.mxu0 0.0
        %7436 = vmatprep.subr.mxu0 0.0
        %7437 = vmatpush2.msra.mxu0 0.0
        %7438 = vmatprep.mubr.f32.mxu0 0.0
        %7439 = vmatmul.mubr.f32.gmra.mxu0 %v7372
        %v7440 = vpop.f32.mrf.mxu0
        %v7441 = vadd.f32 0.0, %v7440
        %v7442 = vpop.f32.mrf.mxu0
        %7443 = vdwg.mxu0
        %v7444 = vadd.f32 %v7354, %v7441
        %s7445 = scalar_lea.vmem [#allocation2], 512
        %v7446 = vld [vmem:[%s7445] sm:$0xff]
        %v7447 = vld [vmem:[%s7445 + $0x8] sm:$0xff]
        %v7448 = vld [vmem:[%s7445 + $0x10] sm:$0xff]
        %v7449 = vld [vmem:[%s7445 + $0x18] sm:$0xff]
        %v7450 = vld [vmem:[%s7445 + $0x20] sm:$0xff]
        %v7451 = vld [vmem:[%s7445 + $0x28] sm:$0xff]
        %v7452 = vld [vmem:[%s7445 + $0x30] sm:$0xff]
        %v7453 = vld [vmem:[%s7445 + $0x38] sm:$0xff]
        %v7454 = vld [vmem:[%s7445 + $0x40] sm:$0xff]
        %v7455 = vld [vmem:[%s7445 + $0x48] sm:$0xff]
        %v7456 = vld [vmem:[%s7445 + $0x50] sm:$0xff]
        %v7457 = vld [vmem:[%s7445 + $0x58] sm:$0xff]
        %v7458 = vld [vmem:[%s7445 + $0x60] sm:$0xff]
        %v7459 = vld [vmem:[%s7445 + $0x68] sm:$0xff]
        %v7460 = vld [vmem:[%s7445 + $0x70] sm:$0xff]
        %v7461 = vld [vmem:[%s7445 + $0x78] sm:$0xff]
        %v7462 = vrot.slane %v7083, 4
        %7464 = vmatprep.subr.mxu0 0.0
        %7465 = vmatpush1.msra.mxu0 %v7461
        %7466 = vmatprep.subr.mxu0 0.0
        %7467 = vmatpush1.msra.mxu0 %v7460
        %7468 = vmatprep.subr.mxu0 0.0
        %7469 = vmatpush1.msra.mxu0 %v7459
        %7470 = vmatprep.subr.mxu0 0.0
        %7471 = vmatpush1.msra.mxu0 %v7458
        %7472 = vmatprep.subr.mxu0 0.0
        %7473 = vmatpush1.msra.mxu0 %v7457
        %7474 = vmatprep.subr.mxu0 0.0
        %7475 = vmatpush1.msra.mxu0 %v7456
        %7476 = vmatprep.subr.mxu0 0.0
        %7477 = vmatpush1.msra.mxu0 %v7455
        %7478 = vmatprep.subr.mxu0 0.0
        %7479 = vmatpush1.msra.mxu0 %v7454
        %7480 = vmatprep.subr.mxu0 0.0
        %7481 = vmatpush1.msra.mxu0 %v7453
        %7482 = vmatprep.subr.mxu0 0.0
        %7483 = vmatpush1.msra.mxu0 %v7452
        %7484 = vmatprep.subr.mxu0 0.0
        %7485 = vmatpush1.msra.mxu0 %v7451
        %7486 = vmatprep.subr.mxu0 0.0
        %7487 = vmatpush1.msra.mxu0 %v7450
        %7488 = vmatprep.subr.mxu0 0.0
        %7489 = vmatpush1.msra.mxu0 %v7449
        %7490 = vmatprep.subr.mxu0 0.0
        %7491 = vmatpush1.msra.mxu0 %v7448
        %7492 = vmatprep.subr.mxu0 0.0
        %7493 = vmatpush1.msra.mxu0 %v7447
        %7494 = vmatprep.subr.mxu0 0.0
        %7495 = vmatpush1.msra.mxu0 %v7446
        %7496 = vmatprep.subr.mxu0 0.0
        %7497 = vmatpush2.msra.mxu0 0.0
        %7498 = vmatprep.subr.mxu0 0.0
        %7499 = vmatpush2.msra.mxu0 0.0
        %7500 = vmatprep.subr.mxu0 0.0
        %7501 = vmatpush2.msra.mxu0 0.0
        %7502 = vmatprep.subr.mxu0 0.0
        %7503 = vmatpush2.msra.mxu0 0.0
        %7504 = vmatprep.subr.mxu0 0.0
        %7505 = vmatpush2.msra.mxu0 0.0
        %7506 = vmatprep.subr.mxu0 0.0
        %7507 = vmatpush2.msra.mxu0 0.0
        %7508 = vmatprep.subr.mxu0 0.0
        %7509 = vmatpush2.msra.mxu0 0.0
        %7510 = vmatprep.subr.mxu0 0.0
        %7511 = vmatpush2.msra.mxu0 0.0
        %7512 = vmatprep.subr.mxu0 0.0
        %7513 = vmatpush2.msra.mxu0 0.0
        %7514 = vmatprep.subr.mxu0 0.0
        %7515 = vmatpush2.msra.mxu0 0.0
        %7516 = vmatprep.subr.mxu0 0.0
        %7517 = vmatpush2.msra.mxu0 0.0
        %7518 = vmatprep.subr.mxu0 0.0
        %7519 = vmatpush2.msra.mxu0 0.0
        %7520 = vmatprep.subr.mxu0 0.0
        %7521 = vmatpush2.msra.mxu0 0.0
        %7522 = vmatprep.subr.mxu0 0.0
        %7523 = vmatpush2.msra.mxu0 0.0
        %7524 = vmatprep.subr.mxu0 0.0
        %7525 = vmatpush2.msra.mxu0 0.0
        %7526 = vmatprep.subr.mxu0 0.0
        %7527 = vmatpush2.msra.mxu0 0.0
        %7528 = vmatprep.mubr.f32.mxu0 0.0
        %7529 = vmatmul.mubr.f32.gmra.mxu0 %v7462
        %v7530 = vpop.f32.mrf.mxu0
        %v7531 = vadd.f32 0.0, %v7530
        %v7532 = vpop.f32.mrf.mxu0
        %7533 = vdwg.mxu0
        %v7534 = vadd.f32 %v7444, %v7531
        %s7535 = scalar_lea.vmem [#allocation2], 640
        %v7536 = vld [vmem:[%s7535] sm:$0xff]
        %v7537 = vld [vmem:[%s7535 + $0x8] sm:$0xff]
        %v7538 = vld [vmem:[%s7535 + $0x10] sm:$0xff]
        %v7539 = vld [vmem:[%s7535 + $0x18] sm:$0xff]
        %v7540 = vld [vmem:[%s7535 + $0x20] sm:$0xff]
        %v7541 = vld [vmem:[%s7535 + $0x28] sm:$0xff]
        %v7542 = vld [vmem:[%s7535 + $0x30] sm:$0xff]
        %v7543 = vld [vmem:[%s7535 + $0x38] sm:$0xff]
        %v7544 = vld [vmem:[%s7535 + $0x40] sm:$0xff]
        %v7545 = vld [vmem:[%s7535 + $0x48] sm:$0xff]
        %v7546 = vld [vmem:[%s7535 + $0x50] sm:$0xff]
        %v7547 = vld [vmem:[%s7535 + $0x58] sm:$0xff]
        %v7548 = vld [vmem:[%s7535 + $0x60] sm:$0xff]
        %v7549 = vld [vmem:[%s7535 + $0x68] sm:$0xff]
        %v7550 = vld [vmem:[%s7535 + $0x70] sm:$0xff]
        %v7551 = vld [vmem:[%s7535 + $0x78] sm:$0xff]
        %v7552 = vrot.slane %v7083, 5
        %7554 = vmatprep.subr.mxu0 0.0
        %7555 = vmatpush1.msra.mxu0 %v7551
        %7556 = vmatprep.subr.mxu0 0.0
        %7557 = vmatpush1.msra.mxu0 %v7550
        %7558 = vmatprep.subr.mxu0 0.0
        %7559 = vmatpush1.msra.mxu0 %v7549
        %7560 = vmatprep.subr.mxu0 0.0
        %7561 = vmatpush1.msra.mxu0 %v7548
        %7562 = vmatprep.subr.mxu0 0.0
        %7563 = vmatpush1.msra.mxu0 %v7547
        %7564 = vmatprep.subr.mxu0 0.0
        %7565 = vmatpush1.msra.mxu0 %v7546
        %7566 = vmatprep.subr.mxu0 0.0
        %7567 = vmatpush1.msra.mxu0 %v7545
        %7568 = vmatprep.subr.mxu0 0.0
        %7569 = vmatpush1.msra.mxu0 %v7544
        %7570 = vmatprep.subr.mxu0 0.0
        %7571 = vmatpush1.msra.mxu0 %v7543
        %7572 = vmatprep.subr.mxu0 0.0
        %7573 = vmatpush1.msra.mxu0 %v7542
        %7574 = vmatprep.subr.mxu0 0.0
        %7575 = vmatpush1.msra.mxu0 %v7541
        %7576 = vmatprep.subr.mxu0 0.0
        %7577 = vmatpush1.msra.mxu0 %v7540
        %7578 = vmatprep.subr.mxu0 0.0
        %7579 = vmatpush1.msra.mxu0 %v7539
        %7580 = vmatprep.subr.mxu0 0.0
        %7581 = vmatpush1.msra.mxu0 %v7538
        %7582 = vmatprep.subr.mxu0 0.0
        %7583 = vmatpush1.msra.mxu0 %v7537
        %7584 = vmatprep.subr.mxu0 0.0
        %7585 = vmatpush1.msra.mxu0 %v7536
        %7586 = vmatprep.subr.mxu0 0.0
        %7587 = vmatpush2.msra.mxu0 0.0
        %7588 = vmatprep.subr.mxu0 0.0
        %7589 = vmatpush2.msra.mxu0 0.0
        %7590 = vmatprep.subr.mxu0 0.0
        %7591 = vmatpush2.msra.mxu0 0.0
        %7592 = vmatprep.subr.mxu0 0.0
        %7593 = vmatpush2.msra.mxu0 0.0
        %7594 = vmatprep.subr.mxu0 0.0
        %7595 = vmatpush2.msra.mxu0 0.0
        %7596 = vmatprep.subr.mxu0 0.0
        %7597 = vmatpush2.msra.mxu0 0.0
        %7598 = vmatprep.subr.mxu0 0.0
        %7599 = vmatpush2.msra.mxu0 0.0
        %7600 = vmatprep.subr.mxu0 0.0
        %7601 = vmatpush2.msra.mxu0 0.0
        %7602 = vmatprep.subr.mxu0 0.0
        %7603 = vmatpush2.msra.mxu0 0.0
        %7604 = vmatprep.subr.mxu0 0.0
        %7605 = vmatpush2.msra.mxu0 0.0
        %7606 = vmatprep.subr.mxu0 0.0
        %7607 = vmatpush2.msra.mxu0 0.0
        %7608 = vmatprep.subr.mxu0 0.0
        %7609 = vmatpush2.msra.mxu0 0.0
        %7610 = vmatprep.subr.mxu0 0.0
        %7611 = vmatpush2.msra.mxu0 0.0
        %7612 = vmatprep.subr.mxu0 0.0
        %7613 = vmatpush2.msra.mxu0 0.0
        %7614 = vmatprep.subr.mxu0 0.0
        %7615 = vmatpush2.msra.mxu0 0.0
        %7616 = vmatprep.subr.mxu0 0.0
        %7617 = vmatpush2.msra.mxu0 0.0
        %7618 = vmatprep.mubr.f32.mxu0 0.0
        %7619 = vmatmul.mubr.f32.gmra.mxu0 %v7552
        %v7620 = vpop.f32.mrf.mxu0
        %v7621 = vadd.f32 0.0, %v7620
        %v7622 = vpop.f32.mrf.mxu0
        %7623 = vdwg.mxu0
        %v7624 = vadd.f32 %v7534, %v7621
        %s7625 = scalar_lea.vmem [#allocation2], 768
        %v7626 = vld [vmem:[%s7625] sm:$0xff]
        %v7627 = vld [vmem:[%s7625 + $0x8] sm:$0xff]
        %v7628 = vld [vmem:[%s7625 + $0x10] sm:$0xff]
        %v7629 = vld [vmem:[%s7625 + $0x18] sm:$0xff]
        %v7630 = vld [vmem:[%s7625 + $0x20] sm:$0xff]
        %v7631 = vld [vmem:[%s7625 + $0x28] sm:$0xff]
        %v7632 = vld [vmem:[%s7625 + $0x30] sm:$0xff]
        %v7633 = vld [vmem:[%s7625 + $0x38] sm:$0xff]
        %v7634 = vld [vmem:[%s7625 + $0x40] sm:$0xff]
        %v7635 = vld [vmem:[%s7625 + $0x48] sm:$0xff]
        %v7636 = vld [vmem:[%s7625 + $0x50] sm:$0xff]
        %v7637 = vld [vmem:[%s7625 + $0x58] sm:$0xff]
        %v7638 = vld [vmem:[%s7625 + $0x60] sm:$0xff]
        %v7639 = vld [vmem:[%s7625 + $0x68] sm:$0xff]
        %v7640 = vld [vmem:[%s7625 + $0x70] sm:$0xff]
        %v7641 = vld [vmem:[%s7625 + $0x78] sm:$0xff]
        %v7642 = vrot.slane %v7083, 6
        %7644 = vmatprep.subr.mxu0 0.0
        %7645 = vmatpush1.msra.mxu0 %v7641
        %7646 = vmatprep.subr.mxu0 0.0
        %7647 = vmatpush1.msra.mxu0 %v7640
        %7648 = vmatprep.subr.mxu0 0.0
        %7649 = vmatpush1.msra.mxu0 %v7639
        %7650 = vmatprep.subr.mxu0 0.0
        %7651 = vmatpush1.msra.mxu0 %v7638
        %7652 = vmatprep.subr.mxu0 0.0
        %7653 = vmatpush1.msra.mxu0 %v7637
        %7654 = vmatprep.subr.mxu0 0.0
        %7655 = vmatpush1.msra.mxu0 %v7636
        %7656 = vmatprep.subr.mxu0 0.0
        %7657 = vmatpush1.msra.mxu0 %v7635
        %7658 = vmatprep.subr.mxu0 0.0
        %7659 = vmatpush1.msra.mxu0 %v7634
        %7660 = vmatprep.subr.mxu0 0.0
        %7661 = vmatpush1.msra.mxu0 %v7633
        %7662 = vmatprep.subr.mxu0 0.0
        %7663 = vmatpush1.msra.mxu0 %v7632
        %7664 = vmatprep.subr.mxu0 0.0
        %7665 = vmatpush1.msra.mxu0 %v7631
        %7666 = vmatprep.subr.mxu0 0.0
        %7667 = vmatpush1.msra.mxu0 %v7630
        %7668 = vmatprep.subr.mxu0 0.0
        %7669 = vmatpush1.msra.mxu0 %v7629
        %7670 = vmatprep.subr.mxu0 0.0
        %7671 = vmatpush1.msra.mxu0 %v7628
        %7672 = vmatprep.subr.mxu0 0.0
        %7673 = vmatpush1.msra.mxu0 %v7627
        %7674 = vmatprep.subr.mxu0 0.0
        %7675 = vmatpush1.msra.mxu0 %v7626
        %7676 = vmatprep.subr.mxu0 0.0
        %7677 = vmatpush2.msra.mxu0 0.0
        %7678 = vmatprep.subr.mxu0 0.0
        %7679 = vmatpush2.msra.mxu0 0.0
        %7680 = vmatprep.subr.mxu0 0.0
        %7681 = vmatpush2.msra.mxu0 0.0
        %7682 = vmatprep.subr.mxu0 0.0
        %7683 = vmatpush2.msra.mxu0 0.0
        %7684 = vmatprep.subr.mxu0 0.0
        %7685 = vmatpush2.msra.mxu0 0.0
        %7686 = vmatprep.subr.mxu0 0.0
        %7687 = vmatpush2.msra.mxu0 0.0
        %7688 = vmatprep.subr.mxu0 0.0
        %7689 = vmatpush2.msra.mxu0 0.0
        %7690 = vmatprep.subr.mxu0 0.0
        %7691 = vmatpush2.msra.mxu0 0.0
        %7692 = vmatprep.subr.mxu0 0.0
        %7693 = vmatpush2.msra.mxu0 0.0
        %7694 = vmatprep.subr.mxu0 0.0
        %7695 = vmatpush2.msra.mxu0 0.0
        %7696 = vmatprep.subr.mxu0 0.0
        %7697 = vmatpush2.msra.mxu0 0.0
        %7698 = vmatprep.subr.mxu0 0.0
        %7699 = vmatpush2.msra.mxu0 0.0
        %7700 = vmatprep.subr.mxu0 0.0
        %7701 = vmatpush2.msra.mxu0 0.0
        %7702 = vmatprep.subr.mxu0 0.0
        %7703 = vmatpush2.msra.mxu0 0.0
        %7704 = vmatprep.subr.mxu0 0.0
        %7705 = vmatpush2.msra.mxu0 0.0
        %7706 = vmatprep.subr.mxu0 0.0
        %7707 = vmatpush2.msra.mxu0 0.0
        %7708 = vmatprep.mubr.f32.mxu0 0.0
        %7709 = vmatmul.mubr.f32.gmra.mxu0 %v7642
        %v7710 = vpop.f32.mrf.mxu0
        %v7711 = vadd.f32 0.0, %v7710
        %v7712 = vpop.f32.mrf.mxu0
        %7713 = vdwg.mxu0
        %v7714 = vadd.f32 %v7624, %v7711
        %s7715 = scalar_lea.vmem [#allocation2], 896
        %v7716 = vld [vmem:[%s7715] sm:$0xff]
        %v7717 = vld [vmem:[%s7715 + $0x8] sm:$0xff]
        %v7718 = vld [vmem:[%s7715 + $0x10] sm:$0xff]
        %v7719 = vld [vmem:[%s7715 + $0x18] sm:$0xff]
        %v7720 = vld [vmem:[%s7715 + $0x20] sm:$0xff]
        %v7721 = vld [vmem:[%s7715 + $0x28] sm:$0xff]
        %v7722 = vld [vmem:[%s7715 + $0x30] sm:$0xff]
        %v7723 = vld [vmem:[%s7715 + $0x38] sm:$0xff]
        %v7724 = vld [vmem:[%s7715 + $0x40] sm:$0xff]
        %v7725 = vld [vmem:[%s7715 + $0x48] sm:$0xff]
        %v7726 = vld [vmem:[%s7715 + $0x50] sm:$0xff]
        %v7727 = vld [vmem:[%s7715 + $0x58] sm:$0xff]
        %v7728 = vld [vmem:[%s7715 + $0x60] sm:$0xff]
        %v7729 = vld [vmem:[%s7715 + $0x68] sm:$0xff]
        %v7730 = vld [vmem:[%s7715 + $0x70] sm:$0xff]
        %v7731 = vld [vmem:[%s7715 + $0x78] sm:$0xff]
        %v7732 = vrot.slane %v7083, 7
        %7734 = vmatprep.subr.mxu0 0.0
        %7735 = vmatpush1.msra.mxu0 %v7731
        %7736 = vmatprep.subr.mxu0 0.0
        %7737 = vmatpush1.msra.mxu0 %v7730
        %7738 = vmatprep.subr.mxu0 0.0
        %7739 = vmatpush1.msra.mxu0 %v7729
        %7740 = vmatprep.subr.mxu0 0.0
        %7741 = vmatpush1.msra.mxu0 %v7728
        %7742 = vmatprep.subr.mxu0 0.0
        %7743 = vmatpush1.msra.mxu0 %v7727
        %7744 = vmatprep.subr.mxu0 0.0
        %7745 = vmatpush1.msra.mxu0 %v7726
        %7746 = vmatprep.subr.mxu0 0.0
        %7747 = vmatpush1.msra.mxu0 %v7725
        %7748 = vmatprep.subr.mxu0 0.0
        %7749 = vmatpush1.msra.mxu0 %v7724
        %7750 = vmatprep.subr.mxu0 0.0
        %7751 = vmatpush1.msra.mxu0 %v7723
        %7752 = vmatprep.subr.mxu0 0.0
        %7753 = vmatpush1.msra.mxu0 %v7722
        %7754 = vmatprep.subr.mxu0 0.0
        %7755 = vmatpush1.msra.mxu0 %v7721
        %7756 = vmatprep.subr.mxu0 0.0
        %7757 = vmatpush1.msra.mxu0 %v7720
        %7758 = vmatprep.subr.mxu0 0.0
        %7759 = vmatpush1.msra.mxu0 %v7719
        %7760 = vmatprep.subr.mxu0 0.0
        %7761 = vmatpush1.msra.mxu0 %v7718
        %7762 = vmatprep.subr.mxu0 0.0
        %7763 = vmatpush1.msra.mxu0 %v7717
        %7764 = vmatprep.subr.mxu0 0.0
        %7765 = vmatpush1.msra.mxu0 %v7716
        %7766 = vmatprep.subr.mxu0 0.0
        %7767 = vmatpush2.msra.mxu0 0.0
        %7768 = vmatprep.subr.mxu0 0.0
        %7769 = vmatpush2.msra.mxu0 0.0
        %7770 = vmatprep.subr.mxu0 0.0
        %7771 = vmatpush2.msra.mxu0 0.0
        %7772 = vmatprep.subr.mxu0 0.0
        %7773 = vmatpush2.msra.mxu0 0.0
        %7774 = vmatprep.subr.mxu0 0.0
        %7775 = vmatpush2.msra.mxu0 0.0
        %7776 = vmatprep.subr.mxu0 0.0
        %7777 = vmatpush2.msra.mxu0 0.0
        %7778 = vmatprep.subr.mxu0 0.0
        %7779 = vmatpush2.msra.mxu0 0.0
        %7780 = vmatprep.subr.mxu0 0.0
        %7781 = vmatpush2.msra.mxu0 0.0
        %7782 = vmatprep.subr.mxu0 0.0
        %7783 = vmatpush2.msra.mxu0 0.0
        %7784 = vmatprep.subr.mxu0 0.0
        %7785 = vmatpush2.msra.mxu0 0.0
        %7786 = vmatprep.subr.mxu0 0.0
        %7787 = vmatpush2.msra.mxu0 0.0
        %7788 = vmatprep.subr.mxu0 0.0
        %7789 = vmatpush2.msra.mxu0 0.0
        %7790 = vmatprep.subr.mxu0 0.0
        %7791 = vmatpush2.msra.mxu0 0.0
        %7792 = vmatprep.subr.mxu0 0.0
        %7793 = vmatpush2.msra.mxu0 0.0
        %7794 = vmatprep.subr.mxu0 0.0
        %7795 = vmatpush2.msra.mxu0 0.0
        %7796 = vmatprep.subr.mxu0 0.0
        %7797 = vmatpush2.msra.mxu0 0.0
        %7798 = vmatprep.mubr.f32.mxu0 0.0
        %7799 = vmatmul.mubr.f32.gmra.mxu0 %v7732
        %v7800 = vpop.f32.mrf.mxu0
        %v7801 = vadd.f32 0.0, %v7800
        %v7802 = vpop.f32.mrf.mxu0
        %7803 = vdwg.mxu0
        %v7804 = vadd.f32 %v7714, %v7801
        %7805 = vst [vmem:[%s514] sm:$0x1] %v7804
        %s7806 = sand.u32 %s359, 1
        %s7807 = scalar_lea.sflag [#allocation4], %s7806
        %s7808 = sand.u32 %s359, 1
        %s7809 = scalar_lea.vmem [#allocation7], %s7808
        // Predicated region
        $region89: #{fashion_mnist_v2_forward.1} parent=79 // pred_check
          %p7810 = pneg %p369
        $region90: #{fashion_mnist_v2_forward.1} parent=79 // pred_check_branch
          %7812 = sbr.rel (%p7810) target = $region92
        $region91: #{fashion_mnist_v2_forward.1} parent=79 // pred_region
          %s7814 = ssub.s32 16, 16
          %7815 = vsyncadd %s7807, %s7814
          %s7816 = smul.addr %s31, 16
          %s7817 = scalar_lea.hbm %s15, %s7816
          %s7819 = sshll.u32 %s7809, 4
          %s7820 = int_to_ptr.vmem [resolvable:$true] %s7819
          %7822 = dma.vmem_to_hbm [thread:$0]  %s7820, 16, %s7817, %s7807
        $region92: #{fashion_mnist_v2_forward.1} parent=79 // pred_fallthru
          _
      $region80: #{fashion_mnist_v2_forward.1} parent=5 // pred_fallthru
        _
      %p7823 = scmp.le.s32.totalorder 2, %s26
      // Predicated region
      $region93: #{fashion_mnist_v2_forward.1} parent=5 // pred_check
        %p7824 = pneg %p7823
      $region94: #{fashion_mnist_v2_forward.1} parent=5 // pred_check_branch
        %7826 = sbr.rel (%p7824) target = $region96
      $region95: #{fashion_mnist_v2_forward.1} parent=5 // pred_region
        %s7827 = ssub.s32 %s26, 2
        // Predicated region
        $region97: #{fashion_mnist_v2_forward.1} parent=95 // pred_check
          %p7828 = pneg %p375
        $region98: #{fashion_mnist_v2_forward.1} parent=95 // pred_check_branch
          %7830 = sbr.rel (%p7828) target = $region100
        $region99: #{fashion_mnist_v2_forward.1} parent=95 // pred_region
          %s7831 = sand.u32 %s360, 1
          %s7832 = scalar_lea.sflag [#allocation4], %s7831
          %s7833 = sand.u32 %s360, 1
          %s7834 = scalar_lea.vmem [#allocation7], %s7833
          %7835 = dma.done %s7832, 16
        $region100: #{fashion_mnist_v2_forward.1} parent=95 // pred_fallthru
          _
      $region96: #{fashion_mnist_v2_forward.1} parent=5 // pred_fallthru
        _
    $region6: #{fashion_mnist_v2_forward.1} parent=1 // loop_footer
      %s30 = sadd.s32 1, %s26
    $region7: #{fashion_mnist_v2_forward.1} parent=1 // loop_footer_branch
      %25 = sbr.rel target = $region3
    $region8: #{fashion_mnist_v2_forward.1} parent=1 // loop_exit
      _
    %7836 = vsyncpa [#allocation3], 1
    %s7837 = scalar_lea.sflag [#allocation3], 1
    %7838 = vsyncpa %s7837, 1
    %7839 = vsyncpa [#allocation6], 1
    %7840 = vsyncpa [#allocation4], 1
    %s7841 = scalar_lea.sflag [#allocation4], 1
    %7842 = vsyncpa %s7841, 1

</llo_original>
